<compile_context>
chip_gen: v6e
topology: v6e:2x2x1
jax: 0.10.0
libtpu: 0.0.40
codegen_flags: <defaults>
</compile_context>

<pallas_src>
import numpy as np
import jax
import jax.numpy as jnp
from jax.experimental import pallas as pl
from jax.experimental.pallas import tpu as pltpu

OH = OW = 112        # ArcFace canonical input resolution
C_IN = 3             # RGB input channels
C_STEM = 8           # synthetic stem-conv output channels
EMB = 512            # ArcFace embedding dimension
K_TAPS = 9 * C_IN    # 27 conv taps (3x3 kernel x 3 input channels)
LANE = 128           # TPU lane width


# --------------------------------------------------------------------------
# Host-side (numpy) bilinear resize matrices (align_corners=False) with one
# zero row/col on each side: R_pad @ x @ Rw_pad is the resized image WITH the
# 1-pixel zero border the stride-1 / pad-1 stem conv needs.
# TODO(synk): no antialiasing (torchvision Resize antialiases on downscale).
# --------------------------------------------------------------------------
def _padded_resize_matrix(in_size: int, out_size: int) -> np.ndarray:
    i = np.arange(out_size, dtype=np.float32)
    src = (i + 0.5) * (in_size / out_size) - 0.5
    src = np.clip(src, 0.0, in_size - 1)
    i0 = np.floor(src).astype(np.int32)
    i1 = np.minimum(i0 + 1, in_size - 1)
    w1 = (src - i0).astype(np.float32)
    w0 = (1.0 - w1).astype(np.float32)
    r = np.zeros((out_size + 2, in_size), dtype=np.float32)
    rows = np.arange(out_size) + 1          # rows 0 and out_size+1 stay zero
    np.add.at(r, (rows, i0), w0)
    np.add.at(r, (rows, i1), w1)
    return r                                # (out_size + 2, in_size)


def _conv_folded_resize_operands(H: int, W: int):
    """Fold the 3x3 conv shifts into the separable resize.

    Returns
      a3 : (112, 3*Hp)  column block dh holds A_dh = Rh_pad[dh:dh+112, :]
                        (Hp = H rounded up to 8; pad columns are zero)
      b3 : (W, 3*128)   lane block dw holds B_dw = Rw_pad[:, dw:dw+112]
                        (lanes 112..127 of each block are zero)
    so tap(c,dh,dw) = A_dh @ x_c @ B_dw is the (dh,dw)-shifted 112x112 window
    of the zero-padded resized image, produced lane/sublane-aligned by matmuls.
    """
    Hp = ((H + 7) // 8) * 8
    rh = _padded_resize_matrix(H, OH)               # (114, H)
    rw = _padded_resize_matrix(W, OW)               # (114, W)
    a3 = np.zeros((OH, 3 * Hp), np.float32)
    b3 = np.zeros((W, 3 * LANE), np.float32)
    for d in range(3):
        a3[:, d * Hp:d * Hp + H] = rh[d:d + OH, :]
        b3[:, d * LANE:d * LANE + OW] = rw[d:d + OW, :].T
    return a3, b3, Hp


# --------------------------------------------------------------------------
# Fused kernel (Bt images per grid step)
# --------------------------------------------------------------------------
def _make_kernel(Bt: int, H: int, W: int, Hp: int):
    inv_hw = 1.0 / float(OH * OW)

    def kernel(x_ref, a3_ref, b3_ref, cw_ref, fcw_ref, fcb_ref, o_ref,
               u_ref, m_ref):
        # x_ref   : (Bt, C_IN, H, W)
        # a3_ref  : (112, 3*Hp)            row-resize matrices (dh-stacked)
        # b3_ref  : (W, 3*128)             col-resize matrices (dw lane blocks)
        # cw_ref  : (C_STEM, K_TAPS+2)     SMEM: [27 taps | bias | prelu alpha]
        # fcw_ref : (C_STEM, EMB)
        # fcb_ref : (1, EMB)
        # o_ref   : (Bt, 1, EMB)           L2-normalized embeddings
        # u_ref   : VMEM (C_IN, H, 3*128)  col-resized taps  x_c @ b3
        # m_ref   : VMEM (3*Hp, C_STEM*128) channel/tap-mixed small planes

        # The Hp padding rows of m_ref are multiplied by zero columns of a3,
        # but stale VMEM could hold NaN/Inf (0*NaN = NaN) -> zero them once.
        if Hp != H:
            for dh in range(3):
                m_ref[dh * Hp + H:(dh + 1) * Hp, :] = jnp.zeros(
                    (Hp - H, C_STEM * LANE), jnp.float32)

        for img in range(Bt):
            # 1) column resize with the 3 dw shifts batched into one matmul
            #    per channel (MXU): U[c] = x_c @ b3 -> (H, 3*128).
            for c in range(C_IN):
                u_ref[c] = jnp.dot(x_ref[img, c], b3_ref[...],
                                   preferred_element_type=jnp.float32)

            # 2) channel/tap mixing at the SMALL (H x 128) resolution (VPU,
            #    each tap block reused across all output channels, every slice
            #    start a multiple of 128 -> no relayouts):
            #    M[co,dh] = sum_{c,dw} w[co,c,dh,dw] * U[c][:, dw block]
            for co in range(C_STEM):
                for dh in range(3):
                    acc = None
                    for c in range(C_IN):
                        for dw in range(3):
                            wgt = cw_ref[co, c * 9 + dh * 3 + dw]
                            u = u_ref[c, :, dw * LANE:(dw + 1) * LANE]
                            term = wgt * u
                            acc = term if acc is None else acc + term
                    m_ref[dh * Hp:dh * Hp + H,
                          co * LANE:(co + 1) * LANE] = acc

            # 3) per output channel: row resize of the mixed plane on the MXU
            #    -> full 112x112 conv output, then bias + PReLU + GAP and the
            #    FC update.  One plane (~14 vregs) live at a time.
            emb = fcb_ref[...]                                       # (1, EMB)
            for co in range(C_STEM):
                plane = jnp.dot(a3_ref[...],
                                m_ref[:, co * LANE:(co + 1) * LANE],
                                preferred_element_type=jnp.float32)  # (112,128)
                z = plane[:, :OW] + cw_ref[co, K_TAPS]               # + bias
                alpha = cw_ref[co, K_TAPS + 1]
                z = jnp.where(z >= 0.0, z, z * alpha)                # PReLU
                pooled = jnp.sum(z, keepdims=True) * inv_hw          # GAP (1,1)
                emb = emb + pooled * fcw_ref[co:co + 1, :]

            # 4) exact L2 normalization (no eps, per spec; a zero embedding
            #    would produce NaN exactly like the PyTorch module).
            mag_sq = jnp.sum(emb * emb, keepdims=True)               # (1,1)
            o_ref[img] = emb * jax.lax.rsqrt(mag_sq)                 # EUP rsqrt

    return kernel


# --------------------------------------------------------------------------
# Wrapper
# --------------------------------------------------------------------------
def arcface_forward(x, params):
    B, C, H, W = x.shape
    assert C == C_IN, "ArcFace expects 3-channel images"

    a3_np, b3_np, Hp = _conv_folded_resize_operands(H, W)
    a3 = jnp.asarray(a3_np)                                   # (112, 3*Hp)
    b3 = jnp.asarray(b3_np)                                   # (W, 384)

    # Pack conv weights + bias + PReLU alpha into one small SMEM table.
    cw = jnp.concatenate(
        [params["conv_w"].reshape(C_STEM, K_TAPS),
         params["conv_b"].reshape(C_STEM, 1),
         params["prelu_a"].reshape(C_STEM, 1)], axis=1)       # (8, 29)
    fcw = params["fc_w"]                                      # (8, 512)
    fcb = params["fc_b"].reshape(1, EMB)                      # (1, 512)

    # Images per grid step: amortize per-step overhead but keep >= 2 grid
    # steps (both v7x TensorCores) and a bounded trace.
    Bt = 1
    for cand in (4, 2):
        if B % cand == 0 and B // cand >= 2:
            Bt = cand
            break

    kernel = _make_kernel(Bt, H, W, Hp)

    out = pl.pallas_call(
        kernel,
        out_shape=jax.ShapeDtypeStruct((B, 1, EMB), jnp.float32),
        grid=(B // Bt,),
        in_specs=[
            pl.BlockSpec((Bt, C_IN, H, W), lambda i: (i, 0, 0, 0)),
            pl.BlockSpec((OH, 3 * Hp), lambda i: (0, 0)),
            pl.BlockSpec((W, 3 * LANE), lambda i: (0, 0)),
            pl.BlockSpec(memory_space=pltpu.MemorySpace.SMEM),       # conv params
            pl.BlockSpec((C_STEM, EMB), lambda i: (0, 0)),
            pl.BlockSpec((1, EMB), lambda i: (0, 0)),
        ],
        out_specs=pl.BlockSpec((Bt, 1, EMB), lambda i: (i, 0, 0)),
        scratch_shapes=[
            pltpu.VMEM((C_IN, H, 3 * LANE), jnp.float32),            # U taps
            pltpu.VMEM((3 * Hp, C_STEM * LANE), jnp.float32),        # mixed M
        ],
        compiler_params=pltpu.CompilerParams(
            dimension_semantics=("parallel",),
            vmem_limit_bytes=32 * 1024 * 1024,
        ),
    )(x, a3, b3, cw, fcw, fcb)
    return out.reshape(B, EMB)


# --------------------------------------------------------------------------
# Deterministic parameter initialization for the synthetic backbone
# --------------------------------------------------------------------------
def init_params(key):
    k1, k2, k3, k4 = jax.random.split(key, 4)
    return dict(
        conv_w=0.1 * jax.random.normal(k1, (C_STEM, C_IN, 3, 3), jnp.float32),
        conv_b=0.01 * jax.random.normal(k2, (C_STEM,), jnp.float32),
        prelu_a=jnp.full((C_STEM,), 0.25, jnp.float32),   # torch PReLU default
        fc_w=0.05 * jax.random.normal(k3, (C_STEM, EMB), jnp.float32),
        fc_b=0.01 * jax.random.normal(k4, (EMB,), jnp.float32),
    )


# --------------------------------------------------------------------------
# Pure-JAX reference of the same pipeline (shifted-slice conv) to validate the
# folded-resize / mixed-plane algebra used inside the kernel.
# --------------------------------------------------------------------------
def reference_forward(x, params):
    B, C, H, W = x.shape
    rhp = jnp.asarray(_padded_resize_matrix(H, OH))       # (114, H)
    rwp = jnp.asarray(_padded_resize_matrix(W, OW).T)     # (W, 114)
    pad = jnp.einsum('oh,bchw,wp->bcop', rhp, x, rwp)     # (B,3,114,114)
    wconv = params["conv_w"]
    outp = jnp.zeros((B, C_STEM, OH, OW), jnp.float32)
    for dh in range(3):
        for dw in range(3):
            outp = outp + jnp.einsum('oc,bcij->boij', wconv[:, :, dh, dw],
                                     pad[:, :, dh:dh + OH, dw:dw + OW])
    outp = outp + params["conv_b"][None, :, None, None]
    alpha = params["prelu_a"][None, :, None, None]
    outp = jnp.where(outp >= 0, outp, outp * alpha)
    pooled = outp.mean(axis=(2, 3))                        # (B, 8)
    emb = pooled @ params["fc_w"] + params["fc_b"][None, :]
    return emb / jnp.sqrt(jnp.sum(emb ** 2, axis=1, keepdims=True))


if __name__ == "__main__":
    key = jax.random.PRNGKey(0)
    kx, kp = jax.random.split(key)
    # inputs in [-1, 1] as the docstring expects
    x = jax.random.uniform(kx, (2, C_IN, 16, 16), jnp.float32, -1.0, 1.0)
    params = init_params(kp)

    out = jax.jit(arcface_forward)(x, params)
    out = jax.block_until_ready(out)

    assert out.shape == (2, EMB), out.shape
    assert bool(jnp.all(jnp.isfinite(out)))
    norms = jnp.sqrt(jnp.sum(out ** 2, axis=1))
    assert bool(jnp.allclose(norms, 1.0, atol=1e-3)), norms

    ref = jax.block_until_ready(reference_forward(x, params))
    assert bool(jnp.allclose(out, ref, atol=1e-3)), float(
        jnp.max(jnp.abs(out - ref)))

    print("KERNEL_OK")
</pallas_src>

<mosaic_0001>
module attributes {stable_mosaic.version = 11 : i64} {
  func.func @kernel(%arg0: i32, %arg1: memref<1x3x16x16xf32, #tpu.memory_space<vmem>>, %arg2: memref<112x48xf32, #tpu.memory_space<vmem>>, %arg3: memref<16x384xf32, #tpu.memory_space<vmem>>, %arg4: memref<8x29xf32, #tpu.memory_space<smem>>, %arg5: memref<8x512xf32, #tpu.memory_space<vmem>>, %arg6: memref<1x512xf32, #tpu.memory_space<vmem>>, %arg7: memref<1x1x512xf32, #tpu.memory_space<vmem>>, %arg8: memref<3x16x384xf32, #tpu.memory_space<vmem>>, %arg9: memref<48x1024xf32, #tpu.memory_space<vmem>>) attributes {dimension_semantics = [#tpu.dimension_semantics<parallel>], iteration_bounds = array<i64: 2>, scalar_prefetch = 0 : i64, scratch_operands = 2 : i64, tpu.core_type = #tpu.core_type<tc>, window_params = [{transform_indices = @transform_0, window_bounds = array<i64: 1, 3, 16, 16>}, {pipeline_mode = #tpu.pipeline_mode<synchronous>, transform_indices = @transform_1, window_bounds = array<i64: 112, 48>}, {pipeline_mode = #tpu.pipeline_mode<synchronous>, transform_indices = @transform_2, window_bounds = array<i64: 16, 384>}, {transform_indices = @transform_3, window_bounds = array<i64: 8, 29>}, {pipeline_mode = #tpu.pipeline_mode<synchronous>, transform_indices = @transform_4, window_bounds = array<i64: 8, 512>}, {pipeline_mode = #tpu.pipeline_mode<synchronous>, transform_indices = @transform_5, window_bounds = array<i64: 1, 512>}, {transform_indices = @transform_6, window_bounds = array<i64: 1, 1, 512>}]} {
    %c0 = arith.constant 0 : index
    %c0_0 = arith.constant 0 : index
    %c0_1 = arith.constant 0 : index
    %c0_2 = arith.constant 0 : index
    %0 = vector.load %arg1[%c0, %c0_0, %c0_1, %c0_2] : memref<1x3x16x16xf32, #tpu.memory_space<vmem>>, vector<1x1x16x16xf32>
    %1 = vector.shape_cast %0 : vector<1x1x16x16xf32> to vector<16x16xf32>
    %c0_3 = arith.constant 0 : index
    %c0_4 = arith.constant 0 : index
    %2 = vector.load %arg3[%c0_3, %c0_4] : memref<16x384xf32, #tpu.memory_space<vmem>>, vector<16x384xf32>
    %cst = arith.constant dense<0.000000e+00> : vector<16x384xf32>
    %3 = tpu.matmul %1, %2, %cst {dimension_numbers = #tpu.dot_dimension_numbers<[1], [0], [0], [1], [0, 0, 1, 1], [], []>} : vector<16x16xf32>, vector<16x384xf32>, vector<16x384xf32> -> vector<16x384xf32>
    %c0_5 = arith.constant 0 : index
    %c0_6 = arith.constant 0 : index
    %c0_7 = arith.constant 0 : index
    %4 = vector.load %arg8[%c0_5, %c0_6, %c0_7] : memref<3x16x384xf32, #tpu.memory_space<vmem>>, vector<1x16x384xf32>
    %5 = vector.shape_cast %4 : vector<1x16x384xf32> to vector<16x384xf32>
    %6 = vector.shape_cast %3 : vector<16x384xf32> to vector<1x16x384xf32>
    tpu.vector_store %arg8[%c0_5, %c0_6, %c0_7], %6 {strides = array<i32>} : memref<3x16x384xf32, #tpu.memory_space<vmem>>, vector<1x16x384xf32>,
    %c0_8 = arith.constant 0 : index
    %c1 = arith.constant 1 : index
    %c0_9 = arith.constant 0 : index
    %c0_10 = arith.constant 0 : index
    %7 = vector.load %arg1[%c0_8, %c1, %c0_9, %c0_10] : memref<1x3x16x16xf32, #tpu.memory_space<vmem>>, vector<1x1x16x16xf32>
    %8 = vector.shape_cast %7 : vector<1x1x16x16xf32> to vector<16x16xf32>
    %c0_11 = arith.constant 0 : index
    %c0_12 = arith.constant 0 : index
    %9 = vector.load %arg3[%c0_11, %c0_12] : memref<16x384xf32, #tpu.memory_space<vmem>>, vector<16x384xf32>
    %cst_13 = arith.constant dense<0.000000e+00> : vector<16x384xf32>
    %10 = tpu.matmul %8, %9, %cst_13 {dimension_numbers = #tpu.dot_dimension_numbers<[1], [0], [0], [1], [0, 0, 1, 1], [], []>} : vector<16x16xf32>, vector<16x384xf32>, vector<16x384xf32> -> vector<16x384xf32>
    %c1_14 = arith.constant 1 : index
    %c0_15 = arith.constant 0 : index
    %c0_16 = arith.constant 0 : index
    %11 = vector.load %arg8[%c1_14, %c0_15, %c0_16] : memref<3x16x384xf32, #tpu.memory_space<vmem>>, vector<1x16x384xf32>
    %12 = vector.shape_cast %11 : vector<1x16x384xf32> to vector<16x384xf32>
    %13 = vector.shape_cast %10 : vector<16x384xf32> to vector<1x16x384xf32>
    tpu.vector_store %arg8[%c1_14, %c0_15, %c0_16], %13 {strides = array<i32>} : memref<3x16x384xf32, #tpu.memory_space<vmem>>, vector<1x16x384xf32>,
    %c0_17 = arith.constant 0 : index
    %c2 = arith.constant 2 : index
    %c0_18 = arith.constant 0 : index
    %c0_19 = arith.constant 0 : index
    %14 = vector.load %arg1[%c0_17, %c2, %c0_18, %c0_19] : memref<1x3x16x16xf32, #tpu.memory_space<vmem>>, vector<1x1x16x16xf32>
    %15 = vector.shape_cast %14 : vector<1x1x16x16xf32> to vector<16x16xf32>
    %c0_20 = arith.constant 0 : index
    %c0_21 = arith.constant 0 : index
    %16 = vector.load %arg3[%c0_20, %c0_21] : memref<16x384xf32, #tpu.memory_space<vmem>>, vector<16x384xf32>
    %cst_22 = arith.constant dense<0.000000e+00> : vector<16x384xf32>
    %17 = tpu.matmul %15, %16, %cst_22 {dimension_numbers = #tpu.dot_dimension_numbers<[1], [0], [0], [1], [0, 0, 1, 1], [], []>} : vector<16x16xf32>, vector<16x384xf32>, vector<16x384xf32> -> vector<16x384xf32>
    %c2_23 = arith.constant 2 : index
    %c0_24 = arith.constant 0 : index
    %c0_25 = arith.constant 0 : index
    %18 = vector.load %arg8[%c2_23, %c0_24, %c0_25] : memref<3x16x384xf32, #tpu.memory_space<vmem>>, vector<1x16x384xf32>
    %19 = vector.shape_cast %18 : vector<1x16x384xf32> to vector<16x384xf32>
    %20 = vector.shape_cast %17 : vector<16x384xf32> to vector<1x16x384xf32>
    tpu.vector_store %arg8[%c2_23, %c0_24, %c0_25], %20 {strides = array<i32>} : memref<3x16x384xf32, #tpu.memory_space<vmem>>, vector<1x16x384xf32>,
    %c0_26 = arith.constant 0 : index
    %c0_27 = arith.constant 0 : index
    %21 = memref.load %arg4[%c0_26, %c0_27] : memref<8x29xf32, #tpu.memory_space<smem>>
    %c0_28 = arith.constant 0 : index
    %c0_29 = arith.constant 0 : index
    %c0_30 = arith.constant 0 : index
    %22 = vector.load %arg8[%c0_28, %c0_29, %c0_30] : memref<3x16x384xf32, #tpu.memory_space<vmem>>, vector<1x16x128xf32>
    %23 = vector.shape_cast %22 : vector<1x16x128xf32> to vector<16x128xf32>
    %24 = vector.broadcast %21 : f32 to vector<16x128xf32>
    %25 = arith.mulf %24, %23 : vector<16x128xf32>
    %c0_31 = arith.constant 0 : index
    %c1_32 = arith.constant 1 : index
    %26 = memref.load %arg4[%c0_31, %c1_32] : memref<8x29xf32, #tpu.memory_space<smem>>
    %c0_33 = arith.constant 0 : index
    %c0_34 = arith.constant 0 : index
    %c128 = arith.constant 128 : index
    %27 = vector.load %arg8[%c0_33, %c0_34, %c128] : memref<3x16x384xf32, #tpu.memory_space<vmem>>, vector<1x16x128xf32>
    %28 = vector.shape_cast %27 : vector<1x16x128xf32> to vector<16x128xf32>
    %29 = vector.broadcast %26 : f32 to vector<16x128xf32>
    %30 = arith.mulf %29, %28 : vector<16x128xf32>
    %31 = arith.addf %25, %30 : vector<16x128xf32>
    %c0_35 = arith.constant 0 : index
    %c2_36 = arith.constant 2 : index
    %32 = memref.load %arg4[%c0_35, %c2_36] : memref<8x29xf32, #tpu.memory_space<smem>>
    %c0_37 = arith.constant 0 : index
    %c0_38 = arith.constant 0 : index
    %c256 = arith.constant 256 : index
    %33 = vector.load %arg8[%c0_37, %c0_38, %c256] : memref<3x16x384xf32, #tpu.memory_space<vmem>>, vector<1x16x128xf32>
    %34 = vector.shape_cast %33 : vector<1x16x128xf32> to vector<16x128xf32>
    %35 = vector.broadcast %32 : f32 to vector<16x128xf32>
    %36 = arith.mulf %35, %34 : vector<16x128xf32>
    %37 = arith.addf %31, %36 : vector<16x128xf32>
    %c0_39 = arith.constant 0 : index
    %c9 = arith.constant 9 : index
    %38 = memref.load %arg4[%c0_39, %c9] : memref<8x29xf32, #tpu.memory_space<smem>>
    %c1_40 = arith.constant 1 : index
    %c0_41 = arith.constant 0 : index
    %c0_42 = arith.constant 0 : index
    %39 = vector.load %arg8[%c1_40, %c0_41, %c0_42] : memref<3x16x384xf32, #tpu.memory_space<vmem>>, vector<1x16x128xf32>
    %40 = vector.shape_cast %39 : vector<1x16x128xf32> to vector<16x128xf32>
    %41 = vector.broadcast %38 : f32 to vector<16x128xf32>
    %42 = arith.mulf %41, %40 : vector<16x128xf32>
    %43 = arith.addf %37, %42 : vector<16x128xf32>
    %c0_43 = arith.constant 0 : index
    %c10 = arith.constant 10 : index
    %44 = memref.load %arg4[%c0_43, %c10] : memref<8x29xf32, #tpu.memory_space<smem>>
    %c1_44 = arith.constant 1 : index
    %c0_45 = arith.constant 0 : index
    %c128_46 = arith.constant 128 : index
    %45 = vector.load %arg8[%c1_44, %c0_45, %c128_46] : memref<3x16x384xf32, #tpu.memory_space<vmem>>, vector<1x16x128xf32>
    %46 = vector.shape_cast %45 : vector<1x16x128xf32> to vector<16x128xf32>
    %47 = vector.broadcast %44 : f32 to vector<16x128xf32>
    %48 = arith.mulf %47, %46 : vector<16x128xf32>
    %49 = arith.addf %43, %48 : vector<16x128xf32>
    %c0_47 = arith.constant 0 : index
    %c11 = arith.constant 11 : index
    %50 = memref.load %arg4[%c0_47, %c11] : memref<8x29xf32, #tpu.memory_space<smem>>
    %c1_48 = arith.constant 1 : index
    %c0_49 = arith.constant 0 : index
    %c256_50 = arith.constant 256 : index
    %51 = vector.load %arg8[%c1_48, %c0_49, %c256_50] : memref<3x16x384xf32, #tpu.memory_space<vmem>>, vector<1x16x128xf32>
    %52 = vector.shape_cast %51 : vector<1x16x128xf32> to vector<16x128xf32>
    %53 = vector.broadcast %50 : f32 to vector<16x128xf32>
    %54 = arith.mulf %53, %52 : vector<16x128xf32>
    %55 = arith.addf %49, %54 : vector<16x128xf32>
    %c0_51 = arith.constant 0 : index
    %c18 = arith.constant 18 : index
    %56 = memref.load %arg4[%c0_51, %c18] : memref<8x29xf32, #tpu.memory_space<smem>>
    %c2_52 = arith.constant 2 : index
    %c0_53 = arith.constant 0 : index
    %c0_54 = arith.constant 0 : index
    %57 = vector.load %arg8[%c2_52, %c0_53, %c0_54] : memref<3x16x384xf32, #tpu.memory_space<vmem>>, vector<1x16x128xf32>
    %58 = vector.shape_cast %57 : vector<1x16x128xf32> to vector<16x128xf32>
    %59 = vector.broadcast %56 : f32 to vector<16x128xf32>
    %60 = arith.mulf %59, %58 : vector<16x128xf32>
    %61 = arith.addf %55, %60 : vector<16x128xf32>
    %c0_55 = arith.constant 0 : index
    %c19 = arith.constant 19 : index
    %62 = memref.load %arg4[%c0_55, %c19] : memref<8x29xf32, #tpu.memory_space<smem>>
    %c2_56 = arith.constant 2 : index
    %c0_57 = arith.constant 0 : index
    %c128_58 = arith.constant 128 : index
    %63 = vector.load %arg8[%c2_56, %c0_57, %c128_58] : memref<3x16x384xf32, #tpu.memory_space<vmem>>, vector<1x16x128xf32>
    %64 = vector.shape_cast %63 : vector<1x16x128xf32> to vector<16x128xf32>
    %65 = vector.broadcast %62 : f32 to vector<16x128xf32>
    %66 = arith.mulf %65, %64 : vector<16x128xf32>
    %67 = arith.addf %61, %66 : vector<16x128xf32>
    %c0_59 = arith.constant 0 : index
    %c20 = arith.constant 20 : index
    %68 = memref.load %arg4[%c0_59, %c20] : memref<8x29xf32, #tpu.memory_space<smem>>
    %c2_60 = arith.constant 2 : index
    %c0_61 = arith.constant 0 : index
    %c256_62 = arith.constant 256 : index
    %69 = vector.load %arg8[%c2_60, %c0_61, %c256_62] : memref<3x16x384xf32, #tpu.memory_space<vmem>>, vector<1x16x128xf32>
    %70 = vector.shape_cast %69 : vector<1x16x128xf32> to vector<16x128xf32>
    %71 = vector.broadcast %68 : f32 to vector<16x128xf32>
    %72 = arith.mulf %71, %70 : vector<16x128xf32>
    %73 = arith.addf %67, %72 : vector<16x128xf32>
    %c0_63 = arith.constant 0 : index
    %c0_64 = arith.constant 0 : index
    %74 = vector.load %arg9[%c0_63, %c0_64] : memref<48x1024xf32, #tpu.memory_space<vmem>>, vector<16x128xf32>
    tpu.vector_store %arg9[%c0_63, %c0_64], %73 {strides = array<i32>} : memref<48x1024xf32, #tpu.memory_space<vmem>>, vector<16x128xf32>,
    %c0_65 = arith.constant 0 : index
    %c3 = arith.constant 3 : index
    %75 = memref.load %arg4[%c0_65, %c3] : memref<8x29xf32, #tpu.memory_space<smem>>
    %c0_66 = arith.constant 0 : index
    %c0_67 = arith.constant 0 : index
    %c0_68 = arith.constant 0 : index
    %76 = vector.load %arg8[%c0_66, %c0_67, %c0_68] : memref<3x16x384xf32, #tpu.memory_space<vmem>>, vector<1x16x128xf32>
    %77 = vector.shape_cast %76 : vector<1x16x128xf32> to vector<16x128xf32>
    %78 = vector.broadcast %75 : f32 to vector<16x128xf32>
    %79 = arith.mulf %78, %77 : vector<16x128xf32>
    %c0_69 = arith.constant 0 : index
    %c4 = arith.constant 4 : index
    %80 = memref.load %arg4[%c0_69, %c4] : memref<8x29xf32, #tpu.memory_space<smem>>
    %c0_70 = arith.constant 0 : index
    %c0_71 = arith.constant 0 : index
    %c128_72 = arith.constant 128 : index
    %81 = vector.load %arg8[%c0_70, %c0_71, %c128_72] : memref<3x16x384xf32, #tpu.memory_space<vmem>>, vector<1x16x128xf32>
    %82 = vector.shape_cast %81 : vector<1x16x128xf32> to vector<16x128xf32>
    %83 = vector.broadcast %80 : f32 to vector<16x128xf32>
    %84 = arith.mulf %83, %82 : vector<16x128xf32>
    %85 = arith.addf %79, %84 : vector<16x128xf32>
    %c0_73 = arith.constant 0 : index
    %c5 = arith.constant 5 : index
    %86 = memref.load %arg4[%c0_73, %c5] : memref<8x29xf32, #tpu.memory_space<smem>>
    %c0_74 = arith.constant 0 : index
    %c0_75 = arith.constant 0 : index
    %c256_76 = arith.constant 256 : index
    %87 = vector.load %arg8[%c0_74, %c0_75, %c256_76] : memref<3x16x384xf32, #tpu.memory_space<vmem>>, vector<1x16x128xf32>
    %88 = vector.shape_cast %87 : vector<1x16x128xf32> to vector<16x128xf32>
    %89 = vector.broadcast %86 : f32 to vector<16x128xf32>
    %90 = arith.mulf %89, %88 : vector<16x128xf32>
    %91 = arith.addf %85, %90 : vector<16x128xf32>
    %c0_77 = arith.constant 0 : index
    %c12 = arith.constant 12 : index
    %92 = memref.load %arg4[%c0_77, %c12] : memref<8x29xf32, #tpu.memory_space<smem>>
    %c1_78 = arith.constant 1 : index
    %c0_79 = arith.constant 0 : index
    %c0_80 = arith.constant 0 : index
    %93 = vector.load %arg8[%c1_78, %c0_79, %c0_80] : memref<3x16x384xf32, #tpu.memory_space<vmem>>, vector<1x16x128xf32>
    %94 = vector.shape_cast %93 : vector<1x16x128xf32> to vector<16x128xf32>
    %95 = vector.broadcast %92 : f32 to vector<16x128xf32>
    %96 = arith.mulf %95, %94 : vector<16x128xf32>
    %97 = arith.addf %91, %96 : vector<16x128xf32>
    %c0_81 = arith.constant 0 : index
    %c13 = arith.constant 13 : index
    %98 = memref.load %arg4[%c0_81, %c13] : memref<8x29xf32, #tpu.memory_space<smem>>
    %c1_82 = arith.constant 1 : index
    %c0_83 = arith.constant 0 : index
    %c128_84 = arith.constant 128 : index
    %99 = vector.load %arg8[%c1_82, %c0_83, %c128_84] : memref<3x16x384xf32, #tpu.memory_space<vmem>>, vector<1x16x128xf32>
    %100 = vector.shape_cast %99 : vector<1x16x128xf32> to vector<16x128xf32>
    %101 = vector.broadcast %98 : f32 to vector<16x128xf32>
    %102 = arith.mulf %101, %100 : vector<16x128xf32>
    %103 = arith.addf %97, %102 : vector<16x128xf32>
    %c0_85 = arith.constant 0 : index
    %c14 = arith.constant 14 : index
    %104 = memref.load %arg4[%c0_85, %c14] : memref<8x29xf32, #tpu.memory_space<smem>>
    %c1_86 = arith.constant 1 : index
    %c0_87 = arith.constant 0 : index
    %c256_88 = arith.constant 256 : index
    %105 = vector.load %arg8[%c1_86, %c0_87, %c256_88] : memref<3x16x384xf32, #tpu.memory_space<vmem>>, vector<1x16x128xf32>
    %106 = vector.shape_cast %105 : vector<1x16x128xf32> to vector<16x128xf32>
    %107 = vector.broadcast %104 : f32 to vector<16x128xf32>
    %108 = arith.mulf %107, %106 : vector<16x128xf32>
    %109 = arith.addf %103, %108 : vector<16x128xf32>
    %c0_89 = arith.constant 0 : index
    %c21 = arith.constant 21 : index
    %110 = memref.load %arg4[%c0_89, %c21] : memref<8x29xf32, #tpu.memory_space<smem>>
    %c2_90 = arith.constant 2 : index
    %c0_91 = arith.constant 0 : index
    %c0_92 = arith.constant 0 : index
    %111 = vector.load %arg8[%c2_90, %c0_91, %c0_92] : memref<3x16x384xf32, #tpu.memory_space<vmem>>, vector<1x16x128xf32>
    %112 = vector.shape_cast %111 : vector<1x16x128xf32> to vector<16x128xf32>
    %113 = vector.broadcast %110 : f32 to vector<16x128xf32>
    %114 = arith.mulf %113, %112 : vector<16x128xf32>
    %115 = arith.addf %109, %114 : vector<16x128xf32>
    %c0_93 = arith.constant 0 : index
    %c22 = arith.constant 22 : index
    %116 = memref.load %arg4[%c0_93, %c22] : memref<8x29xf32, #tpu.memory_space<smem>>
    %c2_94 = arith.constant 2 : index
    %c0_95 = arith.constant 0 : index
    %c128_96 = arith.constant 128 : index
    %117 = vector.load %arg8[%c2_94, %c0_95, %c128_96] : memref<3x16x384xf32, #tpu.memory_space<vmem>>, vector<1x16x128xf32>
    %118 = vector.shape_cast %117 : vector<1x16x128xf32> to vector<16x128xf32>
    %119 = vector.broadcast %116 : f32 to vector<16x128xf32>
    %120 = arith.mulf %119, %118 : vector<16x128xf32>
    %121 = arith.addf %115, %120 : vector<16x128xf32>
    %c0_97 = arith.constant 0 : index
    %c23 = arith.constant 23 : index
    %122 = memref.load %arg4[%c0_97, %c23] : memref<8x29xf32, #tpu.memory_space<smem>>
    %c2_98 = arith.constant 2 : index
    %c0_99 = arith.constant 0 : index
    %c256_100 = arith.constant 256 : index
    %123 = vector.load %arg8[%c2_98, %c0_99, %c256_100] : memref<3x16x384xf32, #tpu.memory_space<vmem>>, vector<1x16x128xf32>
    %124 = vector.shape_cast %123 : vector<1x16x128xf32> to vector<16x128xf32>
    %125 = vector.broadcast %122 : f32 to vector<16x128xf32>
    %126 = arith.mulf %125, %124 : vector<16x128xf32>
    %127 = arith.addf %121, %126 : vector<16x128xf32>
    %c16 = arith.constant 16 : index
    %c0_101 = arith.constant 0 : index
    %128 = vector.load %arg9[%c16, %c0_101] : memref<48x1024xf32, #tpu.memory_space<vmem>>, vector<16x128xf32>
    tpu.vector_store %arg9[%c16, %c0_101], %127 {strides = array<i32>} : memref<48x1024xf32, #tpu.memory_space<vmem>>, vector<16x128xf32>,
    %c0_102 = arith.constant 0 : index
    %c6 = arith.constant 6 : index
    %129 = memref.load %arg4[%c0_102, %c6] : memref<8x29xf32, #tpu.memory_space<smem>>
    %c0_103 = arith.constant 0 : index
    %c0_104 = arith.constant 0 : index
    %c0_105 = arith.constant 0 : index
    %130 = vector.load %arg8[%c0_103, %c0_104, %c0_105] : memref<3x16x384xf32, #tpu.memory_space<vmem>>, vector<1x16x128xf32>
    %131 = vector.shape_cast %130 : vector<1x16x128xf32> to vector<16x128xf32>
    %132 = vector.broadcast %129 : f32 to vector<16x128xf32>
    %133 = arith.mulf %132, %131 : vector<16x128xf32>
    %c0_106 = arith.constant 0 : index
    %c7 = arith.constant 7 : index
    %134 = memref.load %arg4[%c0_106, %c7] : memref<8x29xf32, #tpu.memory_space<smem>>
    %c0_107 = arith.constant 0 : index
    %c0_108 = arith.constant 0 : index
    %c128_109 = arith.constant 128 : index
    %135 = vector.load %arg8[%c0_107, %c0_108, %c128_109] : memref<3x16x384xf32, #tpu.memory_space<vmem>>, vector<1x16x128xf32>
    %136 = vector.shape_cast %135 : vector<1x16x128xf32> to vector<16x128xf32>
    %137 = vector.broadcast %134 : f32 to vector<16x128xf32>
    %138 = arith.mulf %137, %136 : vector<16x128xf32>
    %139 = arith.addf %133, %138 : vector<16x128xf32>
    %c0_110 = arith.constant 0 : index
    %c8 = arith.constant 8 : index
    %140 = memref.load %arg4[%c0_110, %c8] : memref<8x29xf32, #tpu.memory_space<smem>>
    %c0_111 = arith.constant 0 : index
    %c0_112 = arith.constant 0 : index
    %c256_113 = arith.constant 256 : index
    %141 = vector.load %arg8[%c0_111, %c0_112, %c256_113] : memref<3x16x384xf32, #tpu.memory_space<vmem>>, vector<1x16x128xf32>
    %142 = vector.shape_cast %141 : vector<1x16x128xf32> to vector<16x128xf32>
    %143 = vector.broadcast %140 : f32 to vector<16x128xf32>
    %144 = arith.mulf %143, %142 : vector<16x128xf32>
    %145 = arith.addf %139, %144 : vector<16x128xf32>
    %c0_114 = arith.constant 0 : index
    %c15 = arith.constant 15 : index
    %146 = memref.load %arg4[%c0_114, %c15] : memref<8x29xf32, #tpu.memory_space<smem>>
    %c1_115 = arith.constant 1 : index
    %c0_116 = arith.constant 0 : index
    %c0_117 = arith.constant 0 : index
    %147 = vector.load %arg8[%c1_115, %c0_116, %c0_117] : memref<3x16x384xf32, #tpu.memory_space<vmem>>, vector<1x16x128xf32>
    %148 = vector.shape_cast %147 : vector<1x16x128xf32> to vector<16x128xf32>
    %149 = vector.broadcast %146 : f32 to vector<16x128xf32>
    %150 = arith.mulf %149, %148 : vector<16x128xf32>
    %151 = arith.addf %145, %150 : vector<16x128xf32>
    %c0_118 = arith.constant 0 : index
    %c16_119 = arith.constant 16 : index
    %152 = memref.load %arg4[%c0_118, %c16_119] : memref<8x29xf32, #tpu.memory_space<smem>>
    %c1_120 = arith.constant 1 : index
    %c0_121 = arith.constant 0 : index
    %c128_122 = arith.constant 128 : index
    %153 = vector.load %arg8[%c1_120, %c0_121, %c128_122] : memref<3x16x384xf32, #tpu.memory_space<vmem>>, vector<1x16x128xf32>
    %154 = vector.shape_cast %153 : vector<1x16x128xf32> to vector<16x128xf32>
    %155 = vector.broadcast %152 : f32 to vector<16x128xf32>
    %156 = arith.mulf %155, %154 : vector<16x128xf32>
    %157 = arith.addf %151, %156 : vector<16x128xf32>
    %c0_123 = arith.constant 0 : index
    %c17 = arith.constant 17 : index
    %158 = memref.load %arg4[%c0_123, %c17] : memref<8x29xf32, #tpu.memory_space<smem>>
    %c1_124 = arith.constant 1 : index
    %c0_125 = arith.constant 0 : index
    %c256_126 = arith.constant 256 : index
    %159 = vector.load %arg8[%c1_124, %c0_125, %c256_126] : memref<3x16x384xf32, #tpu.memory_space<vmem>>, vector<1x16x128xf32>
    %160 = vector.shape_cast %159 : vector<1x16x128xf32> to vector<16x128xf32>
    %161 = vector.broadcast %158 : f32 to vector<16x128xf32>
    %162 = arith.mulf %161, %160 : vector<16x128xf32>
    %163 = arith.addf %157, %162 : vector<16x128xf32>
    %c0_127 = arith.constant 0 : index
    %c24 = arith.constant 24 : index
    %164 = memref.load %arg4[%c0_127, %c24] : memref<8x29xf32, #tpu.memory_space<smem>>
    %c2_128 = arith.constant 2 : index
    %c0_129 = arith.constant 0 : index
    %c0_130 = arith.constant 0 : index
    %165 = vector.load %arg8[%c2_128, %c0_129, %c0_130] : memref<3x16x384xf32, #tpu.memory_space<vmem>>, vector<1x16x128xf32>
    %166 = vector.shape_cast %165 : vector<1x16x128xf32> to vector<16x128xf32>
    %167 = vector.broadcast %164 : f32 to vector<16x128xf32>
    %168 = arith.mulf %167, %166 : vector<16x128xf32>
    %169 = arith.addf %163, %168 : vector<16x128xf32>
    %c0_131 = arith.constant 0 : index
    %c25 = arith.constant 25 : index
    %170 = memref.load %arg4[%c0_131, %c25] : memref<8x29xf32, #tpu.memory_space<smem>>
    %c2_132 = arith.constant 2 : index
    %c0_133 = arith.constant 0 : index
    %c128_134 = arith.constant 128 : index
    %171 = vector.load %arg8[%c2_132, %c0_133, %c128_134] : memref<3x16x384xf32, #tpu.memory_space<vmem>>, vector<1x16x128xf32>
    %172 = vector.shape_cast %171 : vector<1x16x128xf32> to vector<16x128xf32>
    %173 = vector.broadcast %170 : f32 to vector<16x128xf32>
    %174 = arith.mulf %173, %172 : vector<16x128xf32>
    %175 = arith.addf %169, %174 : vector<16x128xf32>
    %c0_135 = arith.constant 0 : index
    %c26 = arith.constant 26 : index
    %176 = memref.load %arg4[%c0_135, %c26] : memref<8x29xf32, #tpu.memory_space<smem>>
    %c2_136 = arith.constant 2 : index
    %c0_137 = arith.constant 0 : index
    %c256_138 = arith.constant 256 : index
    %177 = vector.load %arg8[%c2_136, %c0_137, %c256_138] : memref<3x16x384xf32, #tpu.memory_space<vmem>>, vector<1x16x128xf32>
    %178 = vector.shape_cast %177 : vector<1x16x128xf32> to vector<16x128xf32>
    %179 = vector.broadcast %176 : f32 to vector<16x128xf32>
    %180 = arith.mulf %179, %178 : vector<16x128xf32>
    %181 = arith.addf %175, %180 : vector<16x128xf32>
    %c32 = arith.constant 32 : index
    %c0_139 = arith.constant 0 : index
    %182 = vector.load %arg9[%c32, %c0_139] : memref<48x1024xf32, #tpu.memory_space<vmem>>, vector<16x128xf32>
    tpu.vector_store %arg9[%c32, %c0_139], %181 {strides = array<i32>} : memref<48x1024xf32, #tpu.memory_space<vmem>>, vector<16x128xf32>,
    %c1_140 = arith.constant 1 : index
    %c0_141 = arith.constant 0 : index
    %183 = memref.load %arg4[%c1_140, %c0_141] : memref<8x29xf32, #tpu.memory_space<smem>>
    %c0_142 = arith.constant 0 : index
    %c0_143 = arith.constant 0 : index
    %c0_144 = arith.constant 0 : index
    %184 = vector.load %arg8[%c0_142, %c0_143, %c0_144] : memref<3x16x384xf32, #tpu.memory_space<vmem>>, vector<1x16x128xf32>
    %185 = vector.shape_cast %184 : vector<1x16x128xf32> to vector<16x128xf32>
    %186 = vector.broadcast %183 : f32 to vector<16x128xf32>
    %187 = arith.mulf %186, %185 : vector<16x128xf32>
    %c1_145 = arith.constant 1 : index
    %c1_146 = arith.constant 1 : index
    %188 = memref.load %arg4[%c1_145, %c1_146] : memref<8x29xf32, #tpu.memory_space<smem>>
    %c0_147 = arith.constant 0 : index
    %c0_148 = arith.constant 0 : index
    %c128_149 = arith.constant 128 : index
    %189 = vector.load %arg8[%c0_147, %c0_148, %c128_149] : memref<3x16x384xf32, #tpu.memory_space<vmem>>, vector<1x16x128xf32>
    %190 = vector.shape_cast %189 : vector<1x16x128xf32> to vector<16x128xf32>
    %191 = vector.broadcast %188 : f32 to vector<16x128xf32>
    %192 = arith.mulf %191, %190 : vector<16x128xf32>
    %193 = arith.addf %187, %192 : vector<16x128xf32>
    %c1_150 = arith.constant 1 : index
    %c2_151 = arith.constant 2 : index
    %194 = memref.load %arg4[%c1_150, %c2_151] : memref<8x29xf32, #tpu.memory_space<smem>>
    %c0_152 = arith.constant 0 : index
    %c0_153 = arith.constant 0 : index
    %c256_154 = arith.constant 256 : index
    %195 = vector.load %arg8[%c0_152, %c0_153, %c256_154] : memref<3x16x384xf32, #tpu.memory_space<vmem>>, vector<1x16x128xf32>
    %196 = vector.shape_cast %195 : vector<1x16x128xf32> to vector<16x128xf32>
    %197 = vector.broadcast %194 : f32 to vector<16x128xf32>
    %198 = arith.mulf %197, %196 : vector<16x128xf32>
    %199 = arith.addf %193, %198 : vector<16x128xf32>
    %c1_155 = arith.constant 1 : index
    %c9_156 = arith.constant 9 : index
    %200 = memref.load %arg4[%c1_155, %c9_156] : memref<8x29xf32, #tpu.memory_space<smem>>
    %c1_157 = arith.constant 1 : index
    %c0_158 = arith.constant 0 : index
    %c0_159 = arith.constant 0 : index
    %201 = vector.load %arg8[%c1_157, %c0_158, %c0_159] : memref<3x16x384xf32, #tpu.memory_space<vmem>>, vector<1x16x128xf32>
    %202 = vector.shape_cast %201 : vector<1x16x128xf32> to vector<16x128xf32>
    %203 = vector.broadcast %200 : f32 to vector<16x128xf32>
    %204 = arith.mulf %203, %202 : vector<16x128xf32>
    %205 = arith.addf %199, %204 : vector<16x128xf32>
    %c1_160 = arith.constant 1 : index
    %c10_161 = arith.constant 10 : index
    %206 = memref.load %arg4[%c1_160, %c10_161] : memref<8x29xf32, #tpu.memory_space<smem>>
    %c1_162 = arith.constant 1 : index
    %c0_163 = arith.constant 0 : index
    %c128_164 = arith.constant 128 : index
    %207 = vector.load %arg8[%c1_162, %c0_163, %c128_164] : memref<3x16x384xf32, #tpu.memory_space<vmem>>, vector<1x16x128xf32>
    %208 = vector.shape_cast %207 : vector<1x16x128xf32> to vector<16x128xf32>
    %209 = vector.broadcast %206 : f32 to vector<16x128xf32>
    %210 = arith.mulf %209, %208 : vector<16x128xf32>
    %211 = arith.addf %205, %210 : vector<16x128xf32>
    %c1_165 = arith.constant 1 : index
    %c11_166 = arith.constant 11 : index
    %212 = memref.load %arg4[%c1_165, %c11_166] : memref<8x29xf32, #tpu.memory_space<smem>>
    %c1_167 = arith.constant 1 : index
    %c0_168 = arith.constant 0 : index
    %c256_169 = arith.constant 256 : index
    %213 = vector.load %arg8[%c1_167, %c0_168, %c256_169] : memref<3x16x384xf32, #tpu.memory_space<vmem>>, vector<1x16x128xf32>
    %214 = vector.shape_cast %213 : vector<1x16x128xf32> to vector<16x128xf32>
    %215 = vector.broadcast %212 : f32 to vector<16x128xf32>
    %216 = arith.mulf %215, %214 : vector<16x128xf32>
    %217 = arith.addf %211, %216 : vector<16x128xf32>
    %c1_170 = arith.constant 1 : index
    %c18_171 = arith.constant 18 : index
    %218 = memref.load %arg4[%c1_170, %c18_171] : memref<8x29xf32, #tpu.memory_space<smem>>
    %c2_172 = arith.constant 2 : index
    %c0_173 = arith.constant 0 : index
    %c0_174 = arith.constant 0 : index
    %219 = vector.load %arg8[%c2_172, %c0_173, %c0_174] : memref<3x16x384xf32, #tpu.memory_space<vmem>>, vector<1x16x128xf32>
    %220 = vector.shape_cast %219 : vector<1x16x128xf32> to vector<16x128xf32>
    %221 = vector.broadcast %218 : f32 to vector<16x128xf32>
    %222 = arith.mulf %221, %220 : vector<16x128xf32>
    %223 = arith.addf %217, %222 : vector<16x128xf32>
    %c1_175 = arith.constant 1 : index
    %c19_176 = arith.constant 19 : index
    %224 = memref.load %arg4[%c1_175, %c19_176] : memref<8x29xf32, #tpu.memory_space<smem>>
    %c2_177 = arith.constant 2 : index
    %c0_178 = arith.constant 0 : index
    %c128_179 = arith.constant 128 : index
    %225 = vector.load %arg8[%c2_177, %c0_178, %c128_179] : memref<3x16x384xf32, #tpu.memory_space<vmem>>, vector<1x16x128xf32>
    %226 = vector.shape_cast %225 : vector<1x16x128xf32> to vector<16x128xf32>
    %227 = vector.broadcast %224 : f32 to vector<16x128xf32>
    %228 = arith.mulf %227, %226 : vector<16x128xf32>
    %229 = arith.addf %223, %228 : vector<16x128xf32>
    %c1_180 = arith.constant 1 : index
    %c20_181 = arith.constant 20 : index
    %230 = memref.load %arg4[%c1_180, %c20_181] : memref<8x29xf32, #tpu.memory_space<smem>>
    %c2_182 = arith.constant 2 : index
    %c0_183 = arith.constant 0 : index
    %c256_184 = arith.constant 256 : index
    %231 = vector.load %arg8[%c2_182, %c0_183, %c256_184] : memref<3x16x384xf32, #tpu.memory_space<vmem>>, vector<1x16x128xf32>
    %232 = vector.shape_cast %231 : vector<1x16x128xf32> to vector<16x128xf32>
    %233 = vector.broadcast %230 : f32 to vector<16x128xf32>
    %234 = arith.mulf %233, %232 : vector<16x128xf32>
    %235 = arith.addf %229, %234 : vector<16x128xf32>
    %c0_185 = arith.constant 0 : index
    %c128_186 = arith.constant 128 : index
    %236 = vector.load %arg9[%c0_185, %c128_186] : memref<48x1024xf32, #tpu.memory_space<vmem>>, vector<16x128xf32>
    tpu.vector_store %arg9[%c0_185, %c128_186], %235 {strides = array<i32>} : memref<48x1024xf32, #tpu.memory_space<vmem>>, vector<16x128xf32>,
    %c1_187 = arith.constant 1 : index
    %c3_188 = arith.constant 3 : index
    %237 = memref.load %arg4[%c1_187, %c3_188] : memref<8x29xf32, #tpu.memory_space<smem>>
    %c0_189 = arith.constant 0 : index
    %c0_190 = arith.constant 0 : index
    %c0_191 = arith.constant 0 : index
    %238 = vector.load %arg8[%c0_189, %c0_190, %c0_191] : memref<3x16x384xf32, #tpu.memory_space<vmem>>, vector<1x16x128xf32>
    %239 = vector.shape_cast %238 : vector<1x16x128xf32> to vector<16x128xf32>
    %240 = vector.broadcast %237 : f32 to vector<16x128xf32>
    %241 = arith.mulf %240, %239 : vector<16x128xf32>
    %c1_192 = arith.constant 1 : index
    %c4_193 = arith.constant 4 : index
    %242 = memref.load %arg4[%c1_192, %c4_193] : memref<8x29xf32, #tpu.memory_space<smem>>
    %c0_194 = arith.constant 0 : index
    %c0_195 = arith.constant 0 : index
    %c128_196 = arith.constant 128 : index
    %243 = vector.load %arg8[%c0_194, %c0_195, %c128_196] : memref<3x16x384xf32, #tpu.memory_space<vmem>>, vector<1x16x128xf32>
    %244 = vector.shape_cast %243 : vector<1x16x128xf32> to vector<16x128xf32>
    %245 = vector.broadcast %242 : f32 to vector<16x128xf32>
    %246 = arith.mulf %245, %244 : vector<16x128xf32>
    %247 = arith.addf %241, %246 : vector<16x128xf32>
    %c1_197 = arith.constant 1 : index
    %c5_198 = arith.constant 5 : index
    %248 = memref.load %arg4[%c1_197, %c5_198] : memref<8x29xf32, #tpu.memory_space<smem>>
    %c0_199 = arith.constant 0 : index
    %c0_200 = arith.constant 0 : index
    %c256_201 = arith.constant 256 : index
    %249 = vector.load %arg8[%c0_199, %c0_200, %c256_201] : memref<3x16x384xf32, #tpu.memory_space<vmem>>, vector<1x16x128xf32>
    %250 = vector.shape_cast %249 : vector<1x16x128xf32> to vector<16x128xf32>
    %251 = vector.broadcast %248 : f32 to vector<16x128xf32>
    %252 = arith.mulf %251, %250 : vector<16x128xf32>
    %253 = arith.addf %247, %252 : vector<16x128xf32>
    %c1_202 = arith.constant 1 : index
    %c12_203 = arith.constant 12 : index
    %254 = memref.load %arg4[%c1_202, %c12_203] : memref<8x29xf32, #tpu.memory_space<smem>>
    %c1_204 = arith.constant 1 : index
    %c0_205 = arith.constant 0 : index
    %c0_206 = arith.constant 0 : index
    %255 = vector.load %arg8[%c1_204, %c0_205, %c0_206] : memref<3x16x384xf32, #tpu.memory_space<vmem>>, vector<1x16x128xf32>
    %256 = vector.shape_cast %255 : vector<1x16x128xf32> to vector<16x128xf32>
    %257 = vector.broadcast %254 : f32 to vector<16x128xf32>
    %258 = arith.mulf %257, %256 : vector<16x128xf32>
    %259 = arith.addf %253, %258 : vector<16x128xf32>
    %c1_207 = arith.constant 1 : index
    %c13_208 = arith.constant 13 : index
    %260 = memref.load %arg4[%c1_207, %c13_208] : memref<8x29xf32, #tpu.memory_space<smem>>
    %c1_209 = arith.constant 1 : index
    %c0_210 = arith.constant 0 : index
    %c128_211 = arith.constant 128 : index
    %261 = vector.load %arg8[%c1_209, %c0_210, %c128_211] : memref<3x16x384xf32, #tpu.memory_space<vmem>>, vector<1x16x128xf32>
    %262 = vector.shape_cast %261 : vector<1x16x128xf32> to vector<16x128xf32>
    %263 = vector.broadcast %260 : f32 to vector<16x128xf32>
    %264 = arith.mulf %263, %262 : vector<16x128xf32>
    %265 = arith.addf %259, %264 : vector<16x128xf32>
    %c1_212 = arith.constant 1 : index
    %c14_213 = arith.constant 14 : index
    %266 = memref.load %arg4[%c1_212, %c14_213] : memref<8x29xf32, #tpu.memory_space<smem>>
    %c1_214 = arith.constant 1 : index
    %c0_215 = arith.constant 0 : index
    %c256_216 = arith.constant 256 : index
    %267 = vector.load %arg8[%c1_214, %c0_215, %c256_216] : memref<3x16x384xf32, #tpu.memory_space<vmem>>, vector<1x16x128xf32>
    %268 = vector.shape_cast %267 : vector<1x16x128xf32> to vector<16x128xf32>
    %269 = vector.broadcast %266 : f32 to vector<16x128xf32>
    %270 = arith.mulf %269, %268 : vector<16x128xf32>
    %271 = arith.addf %265, %270 : vector<16x128xf32>
    %c1_217 = arith.constant 1 : index
    %c21_218 = arith.constant 21 : index
    %272 = memref.load %arg4[%c1_217, %c21_218] : memref<8x29xf32, #tpu.memory_space<smem>>
    %c2_219 = arith.constant 2 : index
    %c0_220 = arith.constant 0 : index
    %c0_221 = arith.constant 0 : index
    %273 = vector.load %arg8[%c2_219, %c0_220, %c0_221] : memref<3x16x384xf32, #tpu.memory_space<vmem>>, vector<1x16x128xf32>
    %274 = vector.shape_cast %273 : vector<1x16x128xf32> to vector<16x128xf32>
    %275 = vector.broadcast %272 : f32 to vector<16x128xf32>
    %276 = arith.mulf %275, %274 : vector<16x128xf32>
    %277 = arith.addf %271, %276 : vector<16x128xf32>
    %c1_222 = arith.constant 1 : index
    %c22_223 = arith.constant 22 : index
    %278 = memref.load %arg4[%c1_222, %c22_223] : memref<8x29xf32, #tpu.memory_space<smem>>
    %c2_224 = arith.constant 2 : index
    %c0_225 = arith.constant 0 : index
    %c128_226 = arith.constant 128 : index
    %279 = vector.load %arg8[%c2_224, %c0_225, %c128_226] : memref<3x16x384xf32, #tpu.memory_space<vmem>>, vector<1x16x128xf32>
    %280 = vector.shape_cast %279 : vector<1x16x128xf32> to vector<16x128xf32>
    %281 = vector.broadcast %278 : f32 to vector<16x128xf32>
    %282 = arith.mulf %281, %280 : vector<16x128xf32>
    %283 = arith.addf %277, %282 : vector<16x128xf32>
    %c1_227 = arith.constant 1 : index
    %c23_228 = arith.constant 23 : index
    %284 = memref.load %arg4[%c1_227, %c23_228] : memref<8x29xf32, #tpu.memory_space<smem>>
    %c2_229 = arith.constant 2 : index
    %c0_230 = arith.constant 0 : index
    %c256_231 = arith.constant 256 : index
    %285 = vector.load %arg8[%c2_229, %c0_230, %c256_231] : memref<3x16x384xf32, #tpu.memory_space<vmem>>, vector<1x16x128xf32>
    %286 = vector.shape_cast %285 : vector<1x16x128xf32> to vector<16x128xf32>
    %287 = vector.broadcast %284 : f32 to vector<16x128xf32>
    %288 = arith.mulf %287, %286 : vector<16x128xf32>
    %289 = arith.addf %283, %288 : vector<16x128xf32>
    %c16_232 = arith.constant 16 : index
    %c128_233 = arith.constant 128 : index
    %290 = vector.load %arg9[%c16_232, %c128_233] : memref<48x1024xf32, #tpu.memory_space<vmem>>, vector<16x128xf32>
    tpu.vector_store %arg9[%c16_232, %c128_233], %289 {strides = array<i32>} : memref<48x1024xf32, #tpu.memory_space<vmem>>, vector<16x128xf32>,
    %c1_234 = arith.constant 1 : index
    %c6_235 = arith.constant 6 : index
    %291 = memref.load %arg4[%c1_234, %c6_235] : memref<8x29xf32, #tpu.memory_space<smem>>
    %c0_236 = arith.constant 0 : index
    %c0_237 = arith.constant 0 : index
    %c0_238 = arith.constant 0 : index
    %292 = vector.load %arg8[%c0_236, %c0_237, %c0_238] : memref<3x16x384xf32, #tpu.memory_space<vmem>>, vector<1x16x128xf32>
    %293 = vector.shape_cast %292 : vector<1x16x128xf32> to vector<16x128xf32>
    %294 = vector.broadcast %291 : f32 to vector<16x128xf32>
    %295 = arith.mulf %294, %293 : vector<16x128xf32>
    %c1_239 = arith.constant 1 : index
    %c7_240 = arith.constant 7 : index
    %296 = memref.load %arg4[%c1_239, %c7_240] : memref<8x29xf32, #tpu.memory_space<smem>>
    %c0_241 = arith.constant 0 : index
    %c0_242 = arith.constant 0 : index
    %c128_243 = arith.constant 128 : index
    %297 = vector.load %arg8[%c0_241, %c0_242, %c128_243] : memref<3x16x384xf32, #tpu.memory_space<vmem>>, vector<1x16x128xf32>
    %298 = vector.shape_cast %297 : vector<1x16x128xf32> to vector<16x128xf32>
    %299 = vector.broadcast %296 : f32 to vector<16x128xf32>
    %300 = arith.mulf %299, %298 : vector<16x128xf32>
    %301 = arith.addf %295, %300 : vector<16x128xf32>
    %c1_244 = arith.constant 1 : index
    %c8_245 = arith.constant 8 : index
    %302 = memref.load %arg4[%c1_244, %c8_245] : memref<8x29xf32, #tpu.memory_space<smem>>
    %c0_246 = arith.constant 0 : index
    %c0_247 = arith.constant 0 : index
    %c256_248 = arith.constant 256 : index
    %303 = vector.load %arg8[%c0_246, %c0_247, %c256_248] : memref<3x16x384xf32, #tpu.memory_space<vmem>>, vector<1x16x128xf32>
    %304 = vector.shape_cast %303 : vector<1x16x128xf32> to vector<16x128xf32>
    %305 = vector.broadcast %302 : f32 to vector<16x128xf32>
    %306 = arith.mulf %305, %304 : vector<16x128xf32>
    %307 = arith.addf %301, %306 : vector<16x128xf32>
    %c1_249 = arith.constant 1 : index
    %c15_250 = arith.constant 15 : index
    %308 = memref.load %arg4[%c1_249, %c15_250] : memref<8x29xf32, #tpu.memory_space<smem>>
    %c1_251 = arith.constant 1 : index
    %c0_252 = arith.constant 0 : index
    %c0_253 = arith.constant 0 : index
    %309 = vector.load %arg8[%c1_251, %c0_252, %c0_253] : memref<3x16x384xf32, #tpu.memory_space<vmem>>, vector<1x16x128xf32>
    %310 = vector.shape_cast %309 : vector<1x16x128xf32> to vector<16x128xf32>
    %311 = vector.broadcast %308 : f32 to vector<16x128xf32>
    %312 = arith.mulf %311, %310 : vector<16x128xf32>
    %313 = arith.addf %307, %312 : vector<16x128xf32>
    %c1_254 = arith.constant 1 : index
    %c16_255 = arith.constant 16 : index
    %314 = memref.load %arg4[%c1_254, %c16_255] : memref<8x29xf32, #tpu.memory_space<smem>>
    %c1_256 = arith.constant 1 : index
    %c0_257 = arith.constant 0 : index
    %c128_258 = arith.constant 128 : index
    %315 = vector.load %arg8[%c1_256, %c0_257, %c128_258] : memref<3x16x384xf32, #tpu.memory_space<vmem>>, vector<1x16x128xf32>
    %316 = vector.shape_cast %315 : vector<1x16x128xf32> to vector<16x128xf32>
    %317 = vector.broadcast %314 : f32 to vector<16x128xf32>
    %318 = arith.mulf %317, %316 : vector<16x128xf32>
    %319 = arith.addf %313, %318 : vector<16x128xf32>
    %c1_259 = arith.constant 1 : index
    %c17_260 = arith.constant 17 : index
    %320 = memref.load %arg4[%c1_259, %c17_260] : memref<8x29xf32, #tpu.memory_space<smem>>
    %c1_261 = arith.constant 1 : index
    %c0_262 = arith.constant 0 : index
    %c256_263 = arith.constant 256 : index
    %321 = vector.load %arg8[%c1_261, %c0_262, %c256_263] : memref<3x16x384xf32, #tpu.memory_space<vmem>>, vector<1x16x128xf32>
    %322 = vector.shape_cast %321 : vector<1x16x128xf32> to vector<16x128xf32>
    %323 = vector.broadcast %320 : f32 to vector<16x128xf32>
    %324 = arith.mulf %323, %322 : vector<16x128xf32>
    %325 = arith.addf %319, %324 : vector<16x128xf32>
    %c1_264 = arith.constant 1 : index
    %c24_265 = arith.constant 24 : index
    %326 = memref.load %arg4[%c1_264, %c24_265] : memref<8x29xf32, #tpu.memory_space<smem>>
    %c2_266 = arith.constant 2 : index
    %c0_267 = arith.constant 0 : index
    %c0_268 = arith.constant 0 : index
    %327 = vector.load %arg8[%c2_266, %c0_267, %c0_268] : memref<3x16x384xf32, #tpu.memory_space<vmem>>, vector<1x16x128xf32>
    %328 = vector.shape_cast %327 : vector<1x16x128xf32> to vector<16x128xf32>
    %329 = vector.broadcast %326 : f32 to vector<16x128xf32>
    %330 = arith.mulf %329, %328 : vector<16x128xf32>
    %331 = arith.addf %325, %330 : vector<16x128xf32>
    %c1_269 = arith.constant 1 : index
    %c25_270 = arith.constant 25 : index
    %332 = memref.load %arg4[%c1_269, %c25_270] : memref<8x29xf32, #tpu.memory_space<smem>>
    %c2_271 = arith.constant 2 : index
    %c0_272 = arith.constant 0 : index
    %c128_273 = arith.constant 128 : index
    %333 = vector.load %arg8[%c2_271, %c0_272, %c128_273] : memref<3x16x384xf32, #tpu.memory_space<vmem>>, vector<1x16x128xf32>
    %334 = vector.shape_cast %333 : vector<1x16x128xf32> to vector<16x128xf32>
    %335 = vector.broadcast %332 : f32 to vector<16x128xf32>
    %336 = arith.mulf %335, %334 : vector<16x128xf32>
    %337 = arith.addf %331, %336 : vector<16x128xf32>
    %c1_274 = arith.constant 1 : index
    %c26_275 = arith.constant 26 : index
    %338 = memref.load %arg4[%c1_274, %c26_275] : memref<8x29xf32, #tpu.memory_space<smem>>
    %c2_276 = arith.constant 2 : index
    %c0_277 = arith.constant 0 : index
    %c256_278 = arith.constant 256 : index
    %339 = vector.load %arg8[%c2_276, %c0_277, %c256_278] : memref<3x16x384xf32, #tpu.memory_space<vmem>>, vector<1x16x128xf32>
    %340 = vector.shape_cast %339 : vector<1x16x128xf32> to vector<16x128xf32>
    %341 = vector.broadcast %338 : f32 to vector<16x128xf32>
    %342 = arith.mulf %341, %340 : vector<16x128xf32>
    %343 = arith.addf %337, %342 : vector<16x128xf32>
    %c32_279 = arith.constant 32 : index
    %c128_280 = arith.constant 128 : index
    %344 = vector.load %arg9[%c32_279, %c128_280] : memref<48x1024xf32, #tpu.memory_space<vmem>>, vector<16x128xf32>
    tpu.vector_store %arg9[%c32_279, %c128_280], %343 {strides = array<i32>} : memref<48x1024xf32, #tpu.memory_space<vmem>>, vector<16x128xf32>,
    %c2_281 = arith.constant 2 : index
    %c0_282 = arith.constant 0 : index
    %345 = memref.load %arg4[%c2_281, %c0_282] : memref<8x29xf32, #tpu.memory_space<smem>>
    %c0_283 = arith.constant 0 : index
    %c0_284 = arith.constant 0 : index
    %c0_285 = arith.constant 0 : index
    %346 = vector.load %arg8[%c0_283, %c0_284, %c0_285] : memref<3x16x384xf32, #tpu.memory_space<vmem>>, vector<1x16x128xf32>
    %347 = vector.shape_cast %346 : vector<1x16x128xf32> to vector<16x128xf32>
    %348 = vector.broadcast %345 : f32 to vector<16x128xf32>
    %349 = arith.mulf %348, %347 : vector<16x128xf32>
    %c2_286 = arith.constant 2 : index
    %c1_287 = arith.constant 1 : index
    %350 = memref.load %arg4[%c2_286, %c1_287] : memref<8x29xf32, #tpu.memory_space<smem>>
    %c0_288 = arith.constant 0 : index
    %c0_289 = arith.constant 0 : index
    %c128_290 = arith.constant 128 : index
    %351 = vector.load %arg8[%c0_288, %c0_289, %c128_290] : memref<3x16x384xf32, #tpu.memory_space<vmem>>, vector<1x16x128xf32>
    %352 = vector.shape_cast %351 : vector<1x16x128xf32> to vector<16x128xf32>
    %353 = vector.broadcast %350 : f32 to vector<16x128xf32>
    %354 = arith.mulf %353, %352 : vector<16x128xf32>
    %355 = arith.addf %349, %354 : vector<16x128xf32>
    %c2_291 = arith.constant 2 : index
    %c2_292 = arith.constant 2 : index
    %356 = memref.load %arg4[%c2_291, %c2_292] : memref<8x29xf32, #tpu.memory_space<smem>>
    %c0_293 = arith.constant 0 : index
    %c0_294 = arith.constant 0 : index
    %c256_295 = arith.constant 256 : index
    %357 = vector.load %arg8[%c0_293, %c0_294, %c256_295] : memref<3x16x384xf32, #tpu.memory_space<vmem>>, vector<1x16x128xf32>
    %358 = vector.shape_cast %357 : vector<1x16x128xf32> to vector<16x128xf32>
    %359 = vector.broadcast %356 : f32 to vector<16x128xf32>
    %360 = arith.mulf %359, %358 : vector<16x128xf32>
    %361 = arith.addf %355, %360 : vector<16x128xf32>
    %c2_296 = arith.constant 2 : index
    %c9_297 = arith.constant 9 : index
    %362 = memref.load %arg4[%c2_296, %c9_297] : memref<8x29xf32, #tpu.memory_space<smem>>
    %c1_298 = arith.constant 1 : index
    %c0_299 = arith.constant 0 : index
    %c0_300 = arith.constant 0 : index
    %363 = vector.load %arg8[%c1_298, %c0_299, %c0_300] : memref<3x16x384xf32, #tpu.memory_space<vmem>>, vector<1x16x128xf32>
    %364 = vector.shape_cast %363 : vector<1x16x128xf32> to vector<16x128xf32>
    %365 = vector.broadcast %362 : f32 to vector<16x128xf32>
    %366 = arith.mulf %365, %364 : vector<16x128xf32>
    %367 = arith.addf %361, %366 : vector<16x128xf32>
    %c2_301 = arith.constant 2 : index
    %c10_302 = arith.constant 10 : index
    %368 = memref.load %arg4[%c2_301, %c10_302] : memref<8x29xf32, #tpu.memory_space<smem>>
    %c1_303 = arith.constant 1 : index
    %c0_304 = arith.constant 0 : index
    %c128_305 = arith.constant 128 : index
    %369 = vector.load %arg8[%c1_303, %c0_304, %c128_305] : memref<3x16x384xf32, #tpu.memory_space<vmem>>, vector<1x16x128xf32>
    %370 = vector.shape_cast %369 : vector<1x16x128xf32> to vector<16x128xf32>
    %371 = vector.broadcast %368 : f32 to vector<16x128xf32>
    %372 = arith.mulf %371, %370 : vector<16x128xf32>
    %373 = arith.addf %367, %372 : vector<16x128xf32>
    %c2_306 = arith.constant 2 : index
    %c11_307 = arith.constant 11 : index
    %374 = memref.load %arg4[%c2_306, %c11_307] : memref<8x29xf32, #tpu.memory_space<smem>>
    %c1_308 = arith.constant 1 : index
    %c0_309 = arith.constant 0 : index
    %c256_310 = arith.constant 256 : index
    %375 = vector.load %arg8[%c1_308, %c0_309, %c256_310] : memref<3x16x384xf32, #tpu.memory_space<vmem>>, vector<1x16x128xf32>
    %376 = vector.shape_cast %375 : vector<1x16x128xf32> to vector<16x128xf32>
    %377 = vector.broadcast %374 : f32 to vector<16x128xf32>
    %378 = arith.mulf %377, %376 : vector<16x128xf32>
    %379 = arith.addf %373, %378 : vector<16x128xf32>
    %c2_311 = arith.constant 2 : index
    %c18_312 = arith.constant 18 : index
    %380 = memref.load %arg4[%c2_311, %c18_312] : memref<8x29xf32, #tpu.memory_space<smem>>
    %c2_313 = arith.constant 2 : index
    %c0_314 = arith.constant 0 : index
    %c0_315 = arith.constant 0 : index
    %381 = vector.load %arg8[%c2_313, %c0_314, %c0_315] : memref<3x16x384xf32, #tpu.memory_space<vmem>>, vector<1x16x128xf32>
    %382 = vector.shape_cast %381 : vector<1x16x128xf32> to vector<16x128xf32>
    %383 = vector.broadcast %380 : f32 to vector<16x128xf32>
    %384 = arith.mulf %383, %382 : vector<16x128xf32>
    %385 = arith.addf %379, %384 : vector<16x128xf32>
    %c2_316 = arith.constant 2 : index
    %c19_317 = arith.constant 19 : index
    %386 = memref.load %arg4[%c2_316, %c19_317] : memref<8x29xf32, #tpu.memory_space<smem>>
    %c2_318 = arith.constant 2 : index
    %c0_319 = arith.constant 0 : index
    %c128_320 = arith.constant 128 : index
    %387 = vector.load %arg8[%c2_318, %c0_319, %c128_320] : memref<3x16x384xf32, #tpu.memory_space<vmem>>, vector<1x16x128xf32>
    %388 = vector.shape_cast %387 : vector<1x16x128xf32> to vector<16x128xf32>
    %389 = vector.broadcast %386 : f32 to vector<16x128xf32>
    %390 = arith.mulf %389, %388 : vector<16x128xf32>
    %391 = arith.addf %385, %390 : vector<16x128xf32>
    %c2_321 = arith.constant 2 : index
    %c20_322 = arith.constant 20 : index
    %392 = memref.load %arg4[%c2_321, %c20_322] : memref<8x29xf32, #tpu.memory_space<smem>>
    %c2_323 = arith.constant 2 : index
    %c0_324 = arith.constant 0 : index
    %c256_325 = arith.constant 256 : index
    %393 = vector.load %arg8[%c2_323, %c0_324, %c256_325] : memref<3x16x384xf32, #tpu.memory_space<vmem>>, vector<1x16x128xf32>
    %394 = vector.shape_cast %393 : vector<1x16x128xf32> to vector<16x128xf32>
    %395 = vector.broadcast %392 : f32 to vector<16x128xf32>
    %396 = arith.mulf %395, %394 : vector<16x128xf32>
    %397 = arith.addf %391, %396 : vector<16x128xf32>
    %c0_326 = arith.constant 0 : index
    %c256_327 = arith.constant 256 : index
    %398 = vector.load %arg9[%c0_326, %c256_327] : memref<48x1024xf32, #tpu.memory_space<vmem>>, vector<16x128xf32>
    tpu.vector_store %arg9[%c0_326, %c256_327], %397 {strides = array<i32>} : memref<48x1024xf32, #tpu.memory_space<vmem>>, vector<16x128xf32>,
    %c2_328 = arith.constant 2 : index
    %c3_329 = arith.constant 3 : index
    %399 = memref.load %arg4[%c2_328, %c3_329] : memref<8x29xf32, #tpu.memory_space<smem>>
    %c0_330 = arith.constant 0 : index
    %c0_331 = arith.constant 0 : index
    %c0_332 = arith.constant 0 : index
    %400 = vector.load %arg8[%c0_330, %c0_331, %c0_332] : memref<3x16x384xf32, #tpu.memory_space<vmem>>, vector<1x16x128xf32>
    %401 = vector.shape_cast %400 : vector<1x16x128xf32> to vector<16x128xf32>
    %402 = vector.broadcast %399 : f32 to vector<16x128xf32>
    %403 = arith.mulf %402, %401 : vector<16x128xf32>
    %c2_333 = arith.constant 2 : index
    %c4_334 = arith.constant 4 : index
    %404 = memref.load %arg4[%c2_333, %c4_334] : memref<8x29xf32, #tpu.memory_space<smem>>
    %c0_335 = arith.constant 0 : index
    %c0_336 = arith.constant 0 : index
    %c128_337 = arith.constant 128 : index
    %405 = vector.load %arg8[%c0_335, %c0_336, %c128_337] : memref<3x16x384xf32, #tpu.memory_space<vmem>>, vector<1x16x128xf32>
    %406 = vector.shape_cast %405 : vector<1x16x128xf32> to vector<16x128xf32>
    %407 = vector.broadcast %404 : f32 to vector<16x128xf32>
    %408 = arith.mulf %407, %406 : vector<16x128xf32>
    %409 = arith.addf %403, %408 : vector<16x128xf32>
    %c2_338 = arith.constant 2 : index
    %c5_339 = arith.constant 5 : index
    %410 = memref.load %arg4[%c2_338, %c5_339] : memref<8x29xf32, #tpu.memory_space<smem>>
    %c0_340 = arith.constant 0 : index
    %c0_341 = arith.constant 0 : index
    %c256_342 = arith.constant 256 : index
    %411 = vector.load %arg8[%c0_340, %c0_341, %c256_342] : memref<3x16x384xf32, #tpu.memory_space<vmem>>, vector<1x16x128xf32>
    %412 = vector.shape_cast %411 : vector<1x16x128xf32> to vector<16x128xf32>
    %413 = vector.broadcast %410 : f32 to vector<16x128xf32>
    %414 = arith.mulf %413, %412 : vector<16x128xf32>
    %415 = arith.addf %409, %414 : vector<16x128xf32>
    %c2_343 = arith.constant 2 : index
    %c12_344 = arith.constant 12 : index
    %416 = memref.load %arg4[%c2_343, %c12_344] : memref<8x29xf32, #tpu.memory_space<smem>>
    %c1_345 = arith.constant 1 : index
    %c0_346 = arith.constant 0 : index
    %c0_347 = arith.constant 0 : index
    %417 = vector.load %arg8[%c1_345, %c0_346, %c0_347] : memref<3x16x384xf32, #tpu.memory_space<vmem>>, vector<1x16x128xf32>
    %418 = vector.shape_cast %417 : vector<1x16x128xf32> to vector<16x128xf32>
    %419 = vector.broadcast %416 : f32 to vector<16x128xf32>
    %420 = arith.mulf %419, %418 : vector<16x128xf32>
    %421 = arith.addf %415, %420 : vector<16x128xf32>
    %c2_348 = arith.constant 2 : index
    %c13_349 = arith.constant 13 : index
    %422 = memref.load %arg4[%c2_348, %c13_349] : memref<8x29xf32, #tpu.memory_space<smem>>
    %c1_350 = arith.constant 1 : index
    %c0_351 = arith.constant 0 : index
    %c128_352 = arith.constant 128 : index
    %423 = vector.load %arg8[%c1_350, %c0_351, %c128_352] : memref<3x16x384xf32, #tpu.memory_space<vmem>>, vector<1x16x128xf32>
    %424 = vector.shape_cast %423 : vector<1x16x128xf32> to vector<16x128xf32>
    %425 = vector.broadcast %422 : f32 to vector<16x128xf32>
    %426 = arith.mulf %425, %424 : vector<16x128xf32>
    %427 = arith.addf %421, %426 : vector<16x128xf32>
    %c2_353 = arith.constant 2 : index
    %c14_354 = arith.constant 14 : index
    %428 = memref.load %arg4[%c2_353, %c14_354] : memref<8x29xf32, #tpu.memory_space<smem>>
    %c1_355 = arith.constant 1 : index
    %c0_356 = arith.constant 0 : index
    %c256_357 = arith.constant 256 : index
    %429 = vector.load %arg8[%c1_355, %c0_356, %c256_357] : memref<3x16x384xf32, #tpu.memory_space<vmem>>, vector<1x16x128xf32>
    %430 = vector.shape_cast %429 : vector<1x16x128xf32> to vector<16x128xf32>
    %431 = vector.broadcast %428 : f32 to vector<16x128xf32>
    %432 = arith.mulf %431, %430 : vector<16x128xf32>
    %433 = arith.addf %427, %432 : vector<16x128xf32>
    %c2_358 = arith.constant 2 : index
    %c21_359 = arith.constant 21 : index
    %434 = memref.load %arg4[%c2_358, %c21_359] : memref<8x29xf32, #tpu.memory_space<smem>>
    %c2_360 = arith.constant 2 : index
    %c0_361 = arith.constant 0 : index
    %c0_362 = arith.constant 0 : index
    %435 = vector.load %arg8[%c2_360, %c0_361, %c0_362] : memref<3x16x384xf32, #tpu.memory_space<vmem>>, vector<1x16x128xf32>
    %436 = vector.shape_cast %435 : vector<1x16x128xf32> to vector<16x128xf32>
    %437 = vector.broadcast %434 : f32 to vector<16x128xf32>
    %438 = arith.mulf %437, %436 : vector<16x128xf32>
    %439 = arith.addf %433, %438 : vector<16x128xf32>
    %c2_363 = arith.constant 2 : index
    %c22_364 = arith.constant 22 : index
    %440 = memref.load %arg4[%c2_363, %c22_364] : memref<8x29xf32, #tpu.memory_space<smem>>
    %c2_365 = arith.constant 2 : index
    %c0_366 = arith.constant 0 : index
    %c128_367 = arith.constant 128 : index
    %441 = vector.load %arg8[%c2_365, %c0_366, %c128_367] : memref<3x16x384xf32, #tpu.memory_space<vmem>>, vector<1x16x128xf32>
    %442 = vector.shape_cast %441 : vector<1x16x128xf32> to vector<16x128xf32>
    %443 = vector.broadcast %440 : f32 to vector<16x128xf32>
    %444 = arith.mulf %443, %442 : vector<16x128xf32>
    %445 = arith.addf %439, %444 : vector<16x128xf32>
    %c2_368 = arith.constant 2 : index
    %c23_369 = arith.constant 23 : index
    %446 = memref.load %arg4[%c2_368, %c23_369] : memref<8x29xf32, #tpu.memory_space<smem>>
    %c2_370 = arith.constant 2 : index
    %c0_371 = arith.constant 0 : index
    %c256_372 = arith.constant 256 : index
    %447 = vector.load %arg8[%c2_370, %c0_371, %c256_372] : memref<3x16x384xf32, #tpu.memory_space<vmem>>, vector<1x16x128xf32>
    %448 = vector.shape_cast %447 : vector<1x16x128xf32> to vector<16x128xf32>
    %449 = vector.broadcast %446 : f32 to vector<16x128xf32>
    %450 = arith.mulf %449, %448 : vector<16x128xf32>
    %451 = arith.addf %445, %450 : vector<16x128xf32>
    %c16_373 = arith.constant 16 : index
    %c256_374 = arith.constant 256 : index
    %452 = vector.load %arg9[%c16_373, %c256_374] : memref<48x1024xf32, #tpu.memory_space<vmem>>, vector<16x128xf32>
    tpu.vector_store %arg9[%c16_373, %c256_374], %451 {strides = array<i32>} : memref<48x1024xf32, #tpu.memory_space<vmem>>, vector<16x128xf32>,
    %c2_375 = arith.constant 2 : index
    %c6_376 = arith.constant 6 : index
    %453 = memref.load %arg4[%c2_375, %c6_376] : memref<8x29xf32, #tpu.memory_space<smem>>
    %c0_377 = arith.constant 0 : index
    %c0_378 = arith.constant 0 : index
    %c0_379 = arith.constant 0 : index
    %454 = vector.load %arg8[%c0_377, %c0_378, %c0_379] : memref<3x16x384xf32, #tpu.memory_space<vmem>>, vector<1x16x128xf32>
    %455 = vector.shape_cast %454 : vector<1x16x128xf32> to vector<16x128xf32>
    %456 = vector.broadcast %453 : f32 to vector<16x128xf32>
    %457 = arith.mulf %456, %455 : vector<16x128xf32>
    %c2_380 = arith.constant 2 : index
    %c7_381 = arith.constant 7 : index
    %458 = memref.load %arg4[%c2_380, %c7_381] : memref<8x29xf32, #tpu.memory_space<smem>>
    %c0_382 = arith.constant 0 : index
    %c0_383 = arith.constant 0 : index
    %c128_384 = arith.constant 128 : index
    %459 = vector.load %arg8[%c0_382, %c0_383, %c128_384] : memref<3x16x384xf32, #tpu.memory_space<vmem>>, vector<1x16x128xf32>
    %460 = vector.shape_cast %459 : vector<1x16x128xf32> to vector<16x128xf32>
    %461 = vector.broadcast %458 : f32 to vector<16x128xf32>
    %462 = arith.mulf %461, %460 : vector<16x128xf32>
    %463 = arith.addf %457, %462 : vector<16x128xf32>
    %c2_385 = arith.constant 2 : index
    %c8_386 = arith.constant 8 : index
    %464 = memref.load %arg4[%c2_385, %c8_386] : memref<8x29xf32, #tpu.memory_space<smem>>
    %c0_387 = arith.constant 0 : index
    %c0_388 = arith.constant 0 : index
    %c256_389 = arith.constant 256 : index
    %465 = vector.load %arg8[%c0_387, %c0_388, %c256_389] : memref<3x16x384xf32, #tpu.memory_space<vmem>>, vector<1x16x128xf32>
    %466 = vector.shape_cast %465 : vector<1x16x128xf32> to vector<16x128xf32>
    %467 = vector.broadcast %464 : f32 to vector<16x128xf32>
    %468 = arith.mulf %467, %466 : vector<16x128xf32>
    %469 = arith.addf %463, %468 : vector<16x128xf32>
    %c2_390 = arith.constant 2 : index
    %c15_391 = arith.constant 15 : index
    %470 = memref.load %arg4[%c2_390, %c15_391] : memref<8x29xf32, #tpu.memory_space<smem>>
    %c1_392 = arith.constant 1 : index
    %c0_393 = arith.constant 0 : index
    %c0_394 = arith.constant 0 : index
    %471 = vector.load %arg8[%c1_392, %c0_393, %c0_394] : memref<3x16x384xf32, #tpu.memory_space<vmem>>, vector<1x16x128xf32>
    %472 = vector.shape_cast %471 : vector<1x16x128xf32> to vector<16x128xf32>
    %473 = vector.broadcast %470 : f32 to vector<16x128xf32>
    %474 = arith.mulf %473, %472 : vector<16x128xf32>
    %475 = arith.addf %469, %474 : vector<16x128xf32>
    %c2_395 = arith.constant 2 : index
    %c16_396 = arith.constant 16 : index
    %476 = memref.load %arg4[%c2_395, %c16_396] : memref<8x29xf32, #tpu.memory_space<smem>>
    %c1_397 = arith.constant 1 : index
    %c0_398 = arith.constant 0 : index
    %c128_399 = arith.constant 128 : index
    %477 = vector.load %arg8[%c1_397, %c0_398, %c128_399] : memref<3x16x384xf32, #tpu.memory_space<vmem>>, vector<1x16x128xf32>
    %478 = vector.shape_cast %477 : vector<1x16x128xf32> to vector<16x128xf32>
    %479 = vector.broadcast %476 : f32 to vector<16x128xf32>
    %480 = arith.mulf %479, %478 : vector<16x128xf32>
    %481 = arith.addf %475, %480 : vector<16x128xf32>
    %c2_400 = arith.constant 2 : index
    %c17_401 = arith.constant 17 : index
    %482 = memref.load %arg4[%c2_400, %c17_401] : memref<8x29xf32, #tpu.memory_space<smem>>
    %c1_402 = arith.constant 1 : index
    %c0_403 = arith.constant 0 : index
    %c256_404 = arith.constant 256 : index
    %483 = vector.load %arg8[%c1_402, %c0_403, %c256_404] : memref<3x16x384xf32, #tpu.memory_space<vmem>>, vector<1x16x128xf32>
    %484 = vector.shape_cast %483 : vector<1x16x128xf32> to vector<16x128xf32>
    %485 = vector.broadcast %482 : f32 to vector<16x128xf32>
    %486 = arith.mulf %485, %484 : vector<16x128xf32>
    %487 = arith.addf %481, %486 : vector<16x128xf32>
    %c2_405 = arith.constant 2 : index
    %c24_406 = arith.constant 24 : index
    %488 = memref.load %arg4[%c2_405, %c24_406] : memref<8x29xf32, #tpu.memory_space<smem>>
    %c2_407 = arith.constant 2 : index
    %c0_408 = arith.constant 0 : index
    %c0_409 = arith.constant 0 : index
    %489 = vector.load %arg8[%c2_407, %c0_408, %c0_409] : memref<3x16x384xf32, #tpu.memory_space<vmem>>, vector<1x16x128xf32>
    %490 = vector.shape_cast %489 : vector<1x16x128xf32> to vector<16x128xf32>
    %491 = vector.broadcast %488 : f32 to vector<16x128xf32>
    %492 = arith.mulf %491, %490 : vector<16x128xf32>
    %493 = arith.addf %487, %492 : vector<16x128xf32>
    %c2_410 = arith.constant 2 : index
    %c25_411 = arith.constant 25 : index
    %494 = memref.load %arg4[%c2_410, %c25_411] : memref<8x29xf32, #tpu.memory_space<smem>>
    %c2_412 = arith.constant 2 : index
    %c0_413 = arith.constant 0 : index
    %c128_414 = arith.constant 128 : index
    %495 = vector.load %arg8[%c2_412, %c0_413, %c128_414] : memref<3x16x384xf32, #tpu.memory_space<vmem>>, vector<1x16x128xf32>
    %496 = vector.shape_cast %495 : vector<1x16x128xf32> to vector<16x128xf32>
    %497 = vector.broadcast %494 : f32 to vector<16x128xf32>
    %498 = arith.mulf %497, %496 : vector<16x128xf32>
    %499 = arith.addf %493, %498 : vector<16x128xf32>
    %c2_415 = arith.constant 2 : index
    %c26_416 = arith.constant 26 : index
    %500 = memref.load %arg4[%c2_415, %c26_416] : memref<8x29xf32, #tpu.memory_space<smem>>
    %c2_417 = arith.constant 2 : index
    %c0_418 = arith.constant 0 : index
    %c256_419 = arith.constant 256 : index
    %501 = vector.load %arg8[%c2_417, %c0_418, %c256_419] : memref<3x16x384xf32, #tpu.memory_space<vmem>>, vector<1x16x128xf32>
    %502 = vector.shape_cast %501 : vector<1x16x128xf32> to vector<16x128xf32>
    %503 = vector.broadcast %500 : f32 to vector<16x128xf32>
    %504 = arith.mulf %503, %502 : vector<16x128xf32>
    %505 = arith.addf %499, %504 : vector<16x128xf32>
    %c32_420 = arith.constant 32 : index
    %c256_421 = arith.constant 256 : index
    %506 = vector.load %arg9[%c32_420, %c256_421] : memref<48x1024xf32, #tpu.memory_space<vmem>>, vector<16x128xf32>
    tpu.vector_store %arg9[%c32_420, %c256_421], %505 {strides = array<i32>} : memref<48x1024xf32, #tpu.memory_space<vmem>>, vector<16x128xf32>,
    %c3_422 = arith.constant 3 : index
    %c0_423 = arith.constant 0 : index
    %507 = memref.load %arg4[%c3_422, %c0_423] : memref<8x29xf32, #tpu.memory_space<smem>>
    %c0_424 = arith.constant 0 : index
    %c0_425 = arith.constant 0 : index
    %c0_426 = arith.constant 0 : index
    %508 = vector.load %arg8[%c0_424, %c0_425, %c0_426] : memref<3x16x384xf32, #tpu.memory_space<vmem>>, vector<1x16x128xf32>
    %509 = vector.shape_cast %508 : vector<1x16x128xf32> to vector<16x128xf32>
    %510 = vector.broadcast %507 : f32 to vector<16x128xf32>
    %511 = arith.mulf %510, %509 : vector<16x128xf32>
    %c3_427 = arith.constant 3 : index
    %c1_428 = arith.constant 1 : index
    %512 = memref.load %arg4[%c3_427, %c1_428] : memref<8x29xf32, #tpu.memory_space<smem>>
    %c0_429 = arith.constant 0 : index
    %c0_430 = arith.constant 0 : index
    %c128_431 = arith.constant 128 : index
    %513 = vector.load %arg8[%c0_429, %c0_430, %c128_431] : memref<3x16x384xf32, #tpu.memory_space<vmem>>, vector<1x16x128xf32>
    %514 = vector.shape_cast %513 : vector<1x16x128xf32> to vector<16x128xf32>
    %515 = vector.broadcast %512 : f32 to vector<16x128xf32>
    %516 = arith.mulf %515, %514 : vector<16x128xf32>
    %517 = arith.addf %511, %516 : vector<16x128xf32>
    %c3_432 = arith.constant 3 : index
    %c2_433 = arith.constant 2 : index
    %518 = memref.load %arg4[%c3_432, %c2_433] : memref<8x29xf32, #tpu.memory_space<smem>>
    %c0_434 = arith.constant 0 : index
    %c0_435 = arith.constant 0 : index
    %c256_436 = arith.constant 256 : index
    %519 = vector.load %arg8[%c0_434, %c0_435, %c256_436] : memref<3x16x384xf32, #tpu.memory_space<vmem>>, vector<1x16x128xf32>
    %520 = vector.shape_cast %519 : vector<1x16x128xf32> to vector<16x128xf32>
    %521 = vector.broadcast %518 : f32 to vector<16x128xf32>
    %522 = arith.mulf %521, %520 : vector<16x128xf32>
    %523 = arith.addf %517, %522 : vector<16x128xf32>
    %c3_437 = arith.constant 3 : index
    %c9_438 = arith.constant 9 : index
    %524 = memref.load %arg4[%c3_437, %c9_438] : memref<8x29xf32, #tpu.memory_space<smem>>
    %c1_439 = arith.constant 1 : index
    %c0_440 = arith.constant 0 : index
    %c0_441 = arith.constant 0 : index
    %525 = vector.load %arg8[%c1_439, %c0_440, %c0_441] : memref<3x16x384xf32, #tpu.memory_space<vmem>>, vector<1x16x128xf32>
    %526 = vector.shape_cast %525 : vector<1x16x128xf32> to vector<16x128xf32>
    %527 = vector.broadcast %524 : f32 to vector<16x128xf32>
    %528 = arith.mulf %527, %526 : vector<16x128xf32>
    %529 = arith.addf %523, %528 : vector<16x128xf32>
    %c3_442 = arith.constant 3 : index
    %c10_443 = arith.constant 10 : index
    %530 = memref.load %arg4[%c3_442, %c10_443] : memref<8x29xf32, #tpu.memory_space<smem>>
    %c1_444 = arith.constant 1 : index
    %c0_445 = arith.constant 0 : index
    %c128_446 = arith.constant 128 : index
    %531 = vector.load %arg8[%c1_444, %c0_445, %c128_446] : memref<3x16x384xf32, #tpu.memory_space<vmem>>, vector<1x16x128xf32>
    %532 = vector.shape_cast %531 : vector<1x16x128xf32> to vector<16x128xf32>
    %533 = vector.broadcast %530 : f32 to vector<16x128xf32>
    %534 = arith.mulf %533, %532 : vector<16x128xf32>
    %535 = arith.addf %529, %534 : vector<16x128xf32>
    %c3_447 = arith.constant 3 : index
    %c11_448 = arith.constant 11 : index
    %536 = memref.load %arg4[%c3_447, %c11_448] : memref<8x29xf32, #tpu.memory_space<smem>>
    %c1_449 = arith.constant 1 : index
    %c0_450 = arith.constant 0 : index
    %c256_451 = arith.constant 256 : index
    %537 = vector.load %arg8[%c1_449, %c0_450, %c256_451] : memref<3x16x384xf32, #tpu.memory_space<vmem>>, vector<1x16x128xf32>
    %538 = vector.shape_cast %537 : vector<1x16x128xf32> to vector<16x128xf32>
    %539 = vector.broadcast %536 : f32 to vector<16x128xf32>
    %540 = arith.mulf %539, %538 : vector<16x128xf32>
    %541 = arith.addf %535, %540 : vector<16x128xf32>
    %c3_452 = arith.constant 3 : index
    %c18_453 = arith.constant 18 : index
    %542 = memref.load %arg4[%c3_452, %c18_453] : memref<8x29xf32, #tpu.memory_space<smem>>
    %c2_454 = arith.constant 2 : index
    %c0_455 = arith.constant 0 : index
    %c0_456 = arith.constant 0 : index
    %543 = vector.load %arg8[%c2_454, %c0_455, %c0_456] : memref<3x16x384xf32, #tpu.memory_space<vmem>>, vector<1x16x128xf32>
    %544 = vector.shape_cast %543 : vector<1x16x128xf32> to vector<16x128xf32>
    %545 = vector.broadcast %542 : f32 to vector<16x128xf32>
    %546 = arith.mulf %545, %544 : vector<16x128xf32>
    %547 = arith.addf %541, %546 : vector<16x128xf32>
    %c3_457 = arith.constant 3 : index
    %c19_458 = arith.constant 19 : index
    %548 = memref.load %arg4[%c3_457, %c19_458] : memref<8x29xf32, #tpu.memory_space<smem>>
    %c2_459 = arith.constant 2 : index
    %c0_460 = arith.constant 0 : index
    %c128_461 = arith.constant 128 : index
    %549 = vector.load %arg8[%c2_459, %c0_460, %c128_461] : memref<3x16x384xf32, #tpu.memory_space<vmem>>, vector<1x16x128xf32>
    %550 = vector.shape_cast %549 : vector<1x16x128xf32> to vector<16x128xf32>
    %551 = vector.broadcast %548 : f32 to vector<16x128xf32>
    %552 = arith.mulf %551, %550 : vector<16x128xf32>
    %553 = arith.addf %547, %552 : vector<16x128xf32>
    %c3_462 = arith.constant 3 : index
    %c20_463 = arith.constant 20 : index
    %554 = memref.load %arg4[%c3_462, %c20_463] : memref<8x29xf32, #tpu.memory_space<smem>>
    %c2_464 = arith.constant 2 : index
    %c0_465 = arith.constant 0 : index
    %c256_466 = arith.constant 256 : index
    %555 = vector.load %arg8[%c2_464, %c0_465, %c256_466] : memref<3x16x384xf32, #tpu.memory_space<vmem>>, vector<1x16x128xf32>
    %556 = vector.shape_cast %555 : vector<1x16x128xf32> to vector<16x128xf32>
    %557 = vector.broadcast %554 : f32 to vector<16x128xf32>
    %558 = arith.mulf %557, %556 : vector<16x128xf32>
    %559 = arith.addf %553, %558 : vector<16x128xf32>
    %c0_467 = arith.constant 0 : index
    %c384 = arith.constant 384 : index
    %560 = vector.load %arg9[%c0_467, %c384] : memref<48x1024xf32, #tpu.memory_space<vmem>>, vector<16x128xf32>
    tpu.vector_store %arg9[%c0_467, %c384], %559 {strides = array<i32>} : memref<48x1024xf32, #tpu.memory_space<vmem>>, vector<16x128xf32>,
    %c3_468 = arith.constant 3 : index
    %c3_469 = arith.constant 3 : index
    %561 = memref.load %arg4[%c3_468, %c3_469] : memref<8x29xf32, #tpu.memory_space<smem>>
    %c0_470 = arith.constant 0 : index
    %c0_471 = arith.constant 0 : index
    %c0_472 = arith.constant 0 : index
    %562 = vector.load %arg8[%c0_470, %c0_471, %c0_472] : memref<3x16x384xf32, #tpu.memory_space<vmem>>, vector<1x16x128xf32>
    %563 = vector.shape_cast %562 : vector<1x16x128xf32> to vector<16x128xf32>
    %564 = vector.broadcast %561 : f32 to vector<16x128xf32>
    %565 = arith.mulf %564, %563 : vector<16x128xf32>
    %c3_473 = arith.constant 3 : index
    %c4_474 = arith.constant 4 : index
    %566 = memref.load %arg4[%c3_473, %c4_474] : memref<8x29xf32, #tpu.memory_space<smem>>
    %c0_475 = arith.constant 0 : index
    %c0_476 = arith.constant 0 : index
    %c128_477 = arith.constant 128 : index
    %567 = vector.load %arg8[%c0_475, %c0_476, %c128_477] : memref<3x16x384xf32, #tpu.memory_space<vmem>>, vector<1x16x128xf32>
    %568 = vector.shape_cast %567 : vector<1x16x128xf32> to vector<16x128xf32>
    %569 = vector.broadcast %566 : f32 to vector<16x128xf32>
    %570 = arith.mulf %569, %568 : vector<16x128xf32>
    %571 = arith.addf %565, %570 : vector<16x128xf32>
    %c3_478 = arith.constant 3 : index
    %c5_479 = arith.constant 5 : index
    %572 = memref.load %arg4[%c3_478, %c5_479] : memref<8x29xf32, #tpu.memory_space<smem>>
    %c0_480 = arith.constant 0 : index
    %c0_481 = arith.constant 0 : index
    %c256_482 = arith.constant 256 : index
    %573 = vector.load %arg8[%c0_480, %c0_481, %c256_482] : memref<3x16x384xf32, #tpu.memory_space<vmem>>, vector<1x16x128xf32>
    %574 = vector.shape_cast %573 : vector<1x16x128xf32> to vector<16x128xf32>
    %575 = vector.broadcast %572 : f32 to vector<16x128xf32>
    %576 = arith.mulf %575, %574 : vector<16x128xf32>
    %577 = arith.addf %571, %576 : vector<16x128xf32>
    %c3_483 = arith.constant 3 : index
    %c12_484 = arith.constant 12 : index
    %578 = memref.load %arg4[%c3_483, %c12_484] : memref<8x29xf32, #tpu.memory_space<smem>>
    %c1_485 = arith.constant 1 : index
    %c0_486 = arith.constant 0 : index
    %c0_487 = arith.constant 0 : index
    %579 = vector.load %arg8[%c1_485, %c0_486, %c0_487] : memref<3x16x384xf32, #tpu.memory_space<vmem>>, vector<1x16x128xf32>
    %580 = vector.shape_cast %579 : vector<1x16x128xf32> to vector<16x128xf32>
    %581 = vector.broadcast %578 : f32 to vector<16x128xf32>
    %582 = arith.mulf %581, %580 : vector<16x128xf32>
    %583 = arith.addf %577, %582 : vector<16x128xf32>
    %c3_488 = arith.constant 3 : index
    %c13_489 = arith.constant 13 : index
    %584 = memref.load %arg4[%c3_488, %c13_489] : memref<8x29xf32, #tpu.memory_space<smem>>
    %c1_490 = arith.constant 1 : index
    %c0_491 = arith.constant 0 : index
    %c128_492 = arith.constant 128 : index
    %585 = vector.load %arg8[%c1_490, %c0_491, %c128_492] : memref<3x16x384xf32, #tpu.memory_space<vmem>>, vector<1x16x128xf32>
    %586 = vector.shape_cast %585 : vector<1x16x128xf32> to vector<16x128xf32>
    %587 = vector.broadcast %584 : f32 to vector<16x128xf32>
    %588 = arith.mulf %587, %586 : vector<16x128xf32>
    %589 = arith.addf %583, %588 : vector<16x128xf32>
    %c3_493 = arith.constant 3 : index
    %c14_494 = arith.constant 14 : index
    %590 = memref.load %arg4[%c3_493, %c14_494] : memref<8x29xf32, #tpu.memory_space<smem>>
    %c1_495 = arith.constant 1 : index
    %c0_496 = arith.constant 0 : index
    %c256_497 = arith.constant 256 : index
    %591 = vector.load %arg8[%c1_495, %c0_496, %c256_497] : memref<3x16x384xf32, #tpu.memory_space<vmem>>, vector<1x16x128xf32>
    %592 = vector.shape_cast %591 : vector<1x16x128xf32> to vector<16x128xf32>
    %593 = vector.broadcast %590 : f32 to vector<16x128xf32>
    %594 = arith.mulf %593, %592 : vector<16x128xf32>
    %595 = arith.addf %589, %594 : vector<16x128xf32>
    %c3_498 = arith.constant 3 : index
    %c21_499 = arith.constant 21 : index
    %596 = memref.load %arg4[%c3_498, %c21_499] : memref<8x29xf32, #tpu.memory_space<smem>>
    %c2_500 = arith.constant 2 : index
    %c0_501 = arith.constant 0 : index
    %c0_502 = arith.constant 0 : index
    %597 = vector.load %arg8[%c2_500, %c0_501, %c0_502] : memref<3x16x384xf32, #tpu.memory_space<vmem>>, vector<1x16x128xf32>
    %598 = vector.shape_cast %597 : vector<1x16x128xf32> to vector<16x128xf32>
    %599 = vector.broadcast %596 : f32 to vector<16x128xf32>
    %600 = arith.mulf %599, %598 : vector<16x128xf32>
    %601 = arith.addf %595, %600 : vector<16x128xf32>
    %c3_503 = arith.constant 3 : index
    %c22_504 = arith.constant 22 : index
    %602 = memref.load %arg4[%c3_503, %c22_504] : memref<8x29xf32, #tpu.memory_space<smem>>
    %c2_505 = arith.constant 2 : index
    %c0_506 = arith.constant 0 : index
    %c128_507 = arith.constant 128 : index
    %603 = vector.load %arg8[%c2_505, %c0_506, %c128_507] : memref<3x16x384xf32, #tpu.memory_space<vmem>>, vector<1x16x128xf32>
    %604 = vector.shape_cast %603 : vector<1x16x128xf32> to vector<16x128xf32>
    %605 = vector.broadcast %602 : f32 to vector<16x128xf32>
    %606 = arith.mulf %605, %604 : vector<16x128xf32>
    %607 = arith.addf %601, %606 : vector<16x128xf32>
    %c3_508 = arith.constant 3 : index
    %c23_509 = arith.constant 23 : index
    %608 = memref.load %arg4[%c3_508, %c23_509] : memref<8x29xf32, #tpu.memory_space<smem>>
    %c2_510 = arith.constant 2 : index
    %c0_511 = arith.constant 0 : index
    %c256_512 = arith.constant 256 : index
    %609 = vector.load %arg8[%c2_510, %c0_511, %c256_512] : memref<3x16x384xf32, #tpu.memory_space<vmem>>, vector<1x16x128xf32>
    %610 = vector.shape_cast %609 : vector<1x16x128xf32> to vector<16x128xf32>
    %611 = vector.broadcast %608 : f32 to vector<16x128xf32>
    %612 = arith.mulf %611, %610 : vector<16x128xf32>
    %613 = arith.addf %607, %612 : vector<16x128xf32>
    %c16_513 = arith.constant 16 : index
    %c384_514 = arith.constant 384 : index
    %614 = vector.load %arg9[%c16_513, %c384_514] : memref<48x1024xf32, #tpu.memory_space<vmem>>, vector<16x128xf32>
    tpu.vector_store %arg9[%c16_513, %c384_514], %613 {strides = array<i32>} : memref<48x1024xf32, #tpu.memory_space<vmem>>, vector<16x128xf32>,
    %c3_515 = arith.constant 3 : index
    %c6_516 = arith.constant 6 : index
    %615 = memref.load %arg4[%c3_515, %c6_516] : memref<8x29xf32, #tpu.memory_space<smem>>
    %c0_517 = arith.constant 0 : index
    %c0_518 = arith.constant 0 : index
    %c0_519 = arith.constant 0 : index
    %616 = vector.load %arg8[%c0_517, %c0_518, %c0_519] : memref<3x16x384xf32, #tpu.memory_space<vmem>>, vector<1x16x128xf32>
    %617 = vector.shape_cast %616 : vector<1x16x128xf32> to vector<16x128xf32>
    %618 = vector.broadcast %615 : f32 to vector<16x128xf32>
    %619 = arith.mulf %618, %617 : vector<16x128xf32>
    %c3_520 = arith.constant 3 : index
    %c7_521 = arith.constant 7 : index
    %620 = memref.load %arg4[%c3_520, %c7_521] : memref<8x29xf32, #tpu.memory_space<smem>>
    %c0_522 = arith.constant 0 : index
    %c0_523 = arith.constant 0 : index
    %c128_524 = arith.constant 128 : index
    %621 = vector.load %arg8[%c0_522, %c0_523, %c128_524] : memref<3x16x384xf32, #tpu.memory_space<vmem>>, vector<1x16x128xf32>
    %622 = vector.shape_cast %621 : vector<1x16x128xf32> to vector<16x128xf32>
    %623 = vector.broadcast %620 : f32 to vector<16x128xf32>
    %624 = arith.mulf %623, %622 : vector<16x128xf32>
    %625 = arith.addf %619, %624 : vector<16x128xf32>
    %c3_525 = arith.constant 3 : index
    %c8_526 = arith.constant 8 : index
    %626 = memref.load %arg4[%c3_525, %c8_526] : memref<8x29xf32, #tpu.memory_space<smem>>
    %c0_527 = arith.constant 0 : index
    %c0_528 = arith.constant 0 : index
    %c256_529 = arith.constant 256 : index
    %627 = vector.load %arg8[%c0_527, %c0_528, %c256_529] : memref<3x16x384xf32, #tpu.memory_space<vmem>>, vector<1x16x128xf32>
    %628 = vector.shape_cast %627 : vector<1x16x128xf32> to vector<16x128xf32>
    %629 = vector.broadcast %626 : f32 to vector<16x128xf32>
    %630 = arith.mulf %629, %628 : vector<16x128xf32>
    %631 = arith.addf %625, %630 : vector<16x128xf32>
    %c3_530 = arith.constant 3 : index
    %c15_531 = arith.constant 15 : index
    %632 = memref.load %arg4[%c3_530, %c15_531] : memref<8x29xf32, #tpu.memory_space<smem>>
    %c1_532 = arith.constant 1 : index
    %c0_533 = arith.constant 0 : index
    %c0_534 = arith.constant 0 : index
    %633 = vector.load %arg8[%c1_532, %c0_533, %c0_534] : memref<3x16x384xf32, #tpu.memory_space<vmem>>, vector<1x16x128xf32>
    %634 = vector.shape_cast %633 : vector<1x16x128xf32> to vector<16x128xf32>
    %635 = vector.broadcast %632 : f32 to vector<16x128xf32>
    %636 = arith.mulf %635, %634 : vector<16x128xf32>
    %637 = arith.addf %631, %636 : vector<16x128xf32>
    %c3_535 = arith.constant 3 : index
    %c16_536 = arith.constant 16 : index
    %638 = memref.load %arg4[%c3_535, %c16_536] : memref<8x29xf32, #tpu.memory_space<smem>>
    %c1_537 = arith.constant 1 : index
    %c0_538 = arith.constant 0 : index
    %c128_539 = arith.constant 128 : index
    %639 = vector.load %arg8[%c1_537, %c0_538, %c128_539] : memref<3x16x384xf32, #tpu.memory_space<vmem>>, vector<1x16x128xf32>
    %640 = vector.shape_cast %639 : vector<1x16x128xf32> to vector<16x128xf32>
    %641 = vector.broadcast %638 : f32 to vector<16x128xf32>
    %642 = arith.mulf %641, %640 : vector<16x128xf32>
    %643 = arith.addf %637, %642 : vector<16x128xf32>
    %c3_540 = arith.constant 3 : index
    %c17_541 = arith.constant 17 : index
    %644 = memref.load %arg4[%c3_540, %c17_541] : memref<8x29xf32, #tpu.memory_space<smem>>
    %c1_542 = arith.constant 1 : index
    %c0_543 = arith.constant 0 : index
    %c256_544 = arith.constant 256 : index
    %645 = vector.load %arg8[%c1_542, %c0_543, %c256_544] : memref<3x16x384xf32, #tpu.memory_space<vmem>>, vector<1x16x128xf32>
    %646 = vector.shape_cast %645 : vector<1x16x128xf32> to vector<16x128xf32>
    %647 = vector.broadcast %644 : f32 to vector<16x128xf32>
    %648 = arith.mulf %647, %646 : vector<16x128xf32>
    %649 = arith.addf %643, %648 : vector<16x128xf32>
    %c3_545 = arith.constant 3 : index
    %c24_546 = arith.constant 24 : index
    %650 = memref.load %arg4[%c3_545, %c24_546] : memref<8x29xf32, #tpu.memory_space<smem>>
    %c2_547 = arith.constant 2 : index
    %c0_548 = arith.constant 0 : index
    %c0_549 = arith.constant 0 : index
    %651 = vector.load %arg8[%c2_547, %c0_548, %c0_549] : memref<3x16x384xf32, #tpu.memory_space<vmem>>, vector<1x16x128xf32>
    %652 = vector.shape_cast %651 : vector<1x16x128xf32> to vector<16x128xf32>
    %653 = vector.broadcast %650 : f32 to vector<16x128xf32>
    %654 = arith.mulf %653, %652 : vector<16x128xf32>
    %655 = arith.addf %649, %654 : vector<16x128xf32>
    %c3_550 = arith.constant 3 : index
    %c25_551 = arith.constant 25 : index
    %656 = memref.load %arg4[%c3_550, %c25_551] : memref<8x29xf32, #tpu.memory_space<smem>>
    %c2_552 = arith.constant 2 : index
    %c0_553 = arith.constant 0 : index
    %c128_554 = arith.constant 128 : index
    %657 = vector.load %arg8[%c2_552, %c0_553, %c128_554] : memref<3x16x384xf32, #tpu.memory_space<vmem>>, vector<1x16x128xf32>
    %658 = vector.shape_cast %657 : vector<1x16x128xf32> to vector<16x128xf32>
    %659 = vector.broadcast %656 : f32 to vector<16x128xf32>
    %660 = arith.mulf %659, %658 : vector<16x128xf32>
    %661 = arith.addf %655, %660 : vector<16x128xf32>
    %c3_555 = arith.constant 3 : index
    %c26_556 = arith.constant 26 : index
    %662 = memref.load %arg4[%c3_555, %c26_556] : memref<8x29xf32, #tpu.memory_space<smem>>
    %c2_557 = arith.constant 2 : index
    %c0_558 = arith.constant 0 : index
    %c256_559 = arith.constant 256 : index
    %663 = vector.load %arg8[%c2_557, %c0_558, %c256_559] : memref<3x16x384xf32, #tpu.memory_space<vmem>>, vector<1x16x128xf32>
    %664 = vector.shape_cast %663 : vector<1x16x128xf32> to vector<16x128xf32>
    %665 = vector.broadcast %662 : f32 to vector<16x128xf32>
    %666 = arith.mulf %665, %664 : vector<16x128xf32>
    %667 = arith.addf %661, %666 : vector<16x128xf32>
    %c32_560 = arith.constant 32 : index
    %c384_561 = arith.constant 384 : index
    %668 = vector.load %arg9[%c32_560, %c384_561] : memref<48x1024xf32, #tpu.memory_space<vmem>>, vector<16x128xf32>
    tpu.vector_store %arg9[%c32_560, %c384_561], %667 {strides = array<i32>} : memref<48x1024xf32, #tpu.memory_space<vmem>>, vector<16x128xf32>,
    %c4_562 = arith.constant 4 : index
    %c0_563 = arith.constant 0 : index
    %669 = memref.load %arg4[%c4_562, %c0_563] : memref<8x29xf32, #tpu.memory_space<smem>>
    %c0_564 = arith.constant 0 : index
    %c0_565 = arith.constant 0 : index
    %c0_566 = arith.constant 0 : index
    %670 = vector.load %arg8[%c0_564, %c0_565, %c0_566] : memref<3x16x384xf32, #tpu.memory_space<vmem>>, vector<1x16x128xf32>
    %671 = vector.shape_cast %670 : vector<1x16x128xf32> to vector<16x128xf32>
    %672 = vector.broadcast %669 : f32 to vector<16x128xf32>
    %673 = arith.mulf %672, %671 : vector<16x128xf32>
    %c4_567 = arith.constant 4 : index
    %c1_568 = arith.constant 1 : index
    %674 = memref.load %arg4[%c4_567, %c1_568] : memref<8x29xf32, #tpu.memory_space<smem>>
    %c0_569 = arith.constant 0 : index
    %c0_570 = arith.constant 0 : index
    %c128_571 = arith.constant 128 : index
    %675 = vector.load %arg8[%c0_569, %c0_570, %c128_571] : memref<3x16x384xf32, #tpu.memory_space<vmem>>, vector<1x16x128xf32>
    %676 = vector.shape_cast %675 : vector<1x16x128xf32> to vector<16x128xf32>
    %677 = vector.broadcast %674 : f32 to vector<16x128xf32>
    %678 = arith.mulf %677, %676 : vector<16x128xf32>
    %679 = arith.addf %673, %678 : vector<16x128xf32>
    %c4_572 = arith.constant 4 : index
    %c2_573 = arith.constant 2 : index
    %680 = memref.load %arg4[%c4_572, %c2_573] : memref<8x29xf32, #tpu.memory_space<smem>>
    %c0_574 = arith.constant 0 : index
    %c0_575 = arith.constant 0 : index
    %c256_576 = arith.constant 256 : index
    %681 = vector.load %arg8[%c0_574, %c0_575, %c256_576] : memref<3x16x384xf32, #tpu.memory_space<vmem>>, vector<1x16x128xf32>
    %682 = vector.shape_cast %681 : vector<1x16x128xf32> to vector<16x128xf32>
    %683 = vector.broadcast %680 : f32 to vector<16x128xf32>
    %684 = arith.mulf %683, %682 : vector<16x128xf32>
    %685 = arith.addf %679, %684 : vector<16x128xf32>
    %c4_577 = arith.constant 4 : index
    %c9_578 = arith.constant 9 : index
    %686 = memref.load %arg4[%c4_577, %c9_578] : memref<8x29xf32, #tpu.memory_space<smem>>
    %c1_579 = arith.constant 1 : index
    %c0_580 = arith.constant 0 : index
    %c0_581 = arith.constant 0 : index
    %687 = vector.load %arg8[%c1_579, %c0_580, %c0_581] : memref<3x16x384xf32, #tpu.memory_space<vmem>>, vector<1x16x128xf32>
    %688 = vector.shape_cast %687 : vector<1x16x128xf32> to vector<16x128xf32>
    %689 = vector.broadcast %686 : f32 to vector<16x128xf32>
    %690 = arith.mulf %689, %688 : vector<16x128xf32>
    %691 = arith.addf %685, %690 : vector<16x128xf32>
    %c4_582 = arith.constant 4 : index
    %c10_583 = arith.constant 10 : index
    %692 = memref.load %arg4[%c4_582, %c10_583] : memref<8x29xf32, #tpu.memory_space<smem>>
    %c1_584 = arith.constant 1 : index
    %c0_585 = arith.constant 0 : index
    %c128_586 = arith.constant 128 : index
    %693 = vector.load %arg8[%c1_584, %c0_585, %c128_586] : memref<3x16x384xf32, #tpu.memory_space<vmem>>, vector<1x16x128xf32>
    %694 = vector.shape_cast %693 : vector<1x16x128xf32> to vector<16x128xf32>
    %695 = vector.broadcast %692 : f32 to vector<16x128xf32>
    %696 = arith.mulf %695, %694 : vector<16x128xf32>
    %697 = arith.addf %691, %696 : vector<16x128xf32>
    %c4_587 = arith.constant 4 : index
    %c11_588 = arith.constant 11 : index
    %698 = memref.load %arg4[%c4_587, %c11_588] : memref<8x29xf32, #tpu.memory_space<smem>>
    %c1_589 = arith.constant 1 : index
    %c0_590 = arith.constant 0 : index
    %c256_591 = arith.constant 256 : index
    %699 = vector.load %arg8[%c1_589, %c0_590, %c256_591] : memref<3x16x384xf32, #tpu.memory_space<vmem>>, vector<1x16x128xf32>
    %700 = vector.shape_cast %699 : vector<1x16x128xf32> to vector<16x128xf32>
    %701 = vector.broadcast %698 : f32 to vector<16x128xf32>
    %702 = arith.mulf %701, %700 : vector<16x128xf32>
    %703 = arith.addf %697, %702 : vector<16x128xf32>
    %c4_592 = arith.constant 4 : index
    %c18_593 = arith.constant 18 : index
    %704 = memref.load %arg4[%c4_592, %c18_593] : memref<8x29xf32, #tpu.memory_space<smem>>
    %c2_594 = arith.constant 2 : index
    %c0_595 = arith.constant 0 : index
    %c0_596 = arith.constant 0 : index
    %705 = vector.load %arg8[%c2_594, %c0_595, %c0_596] : memref<3x16x384xf32, #tpu.memory_space<vmem>>, vector<1x16x128xf32>
    %706 = vector.shape_cast %705 : vector<1x16x128xf32> to vector<16x128xf32>
    %707 = vector.broadcast %704 : f32 to vector<16x128xf32>
    %708 = arith.mulf %707, %706 : vector<16x128xf32>
    %709 = arith.addf %703, %708 : vector<16x128xf32>
    %c4_597 = arith.constant 4 : index
    %c19_598 = arith.constant 19 : index
    %710 = memref.load %arg4[%c4_597, %c19_598] : memref<8x29xf32, #tpu.memory_space<smem>>
    %c2_599 = arith.constant 2 : index
    %c0_600 = arith.constant 0 : index
    %c128_601 = arith.constant 128 : index
    %711 = vector.load %arg8[%c2_599, %c0_600, %c128_601] : memref<3x16x384xf32, #tpu.memory_space<vmem>>, vector<1x16x128xf32>
    %712 = vector.shape_cast %711 : vector<1x16x128xf32> to vector<16x128xf32>
    %713 = vector.broadcast %710 : f32 to vector<16x128xf32>
    %714 = arith.mulf %713, %712 : vector<16x128xf32>
    %715 = arith.addf %709, %714 : vector<16x128xf32>
    %c4_602 = arith.constant 4 : index
    %c20_603 = arith.constant 20 : index
    %716 = memref.load %arg4[%c4_602, %c20_603] : memref<8x29xf32, #tpu.memory_space<smem>>
    %c2_604 = arith.constant 2 : index
    %c0_605 = arith.constant 0 : index
    %c256_606 = arith.constant 256 : index
    %717 = vector.load %arg8[%c2_604, %c0_605, %c256_606] : memref<3x16x384xf32, #tpu.memory_space<vmem>>, vector<1x16x128xf32>
    %718 = vector.shape_cast %717 : vector<1x16x128xf32> to vector<16x128xf32>
    %719 = vector.broadcast %716 : f32 to vector<16x128xf32>
    %720 = arith.mulf %719, %718 : vector<16x128xf32>
    %721 = arith.addf %715, %720 : vector<16x128xf32>
    %c0_607 = arith.constant 0 : index
    %c512 = arith.constant 512 : index
    %722 = vector.load %arg9[%c0_607, %c512] : memref<48x1024xf32, #tpu.memory_space<vmem>>, vector<16x128xf32>
    tpu.vector_store %arg9[%c0_607, %c512], %721 {strides = array<i32>} : memref<48x1024xf32, #tpu.memory_space<vmem>>, vector<16x128xf32>,
    %c4_608 = arith.constant 4 : index
    %c3_609 = arith.constant 3 : index
    %723 = memref.load %arg4[%c4_608, %c3_609] : memref<8x29xf32, #tpu.memory_space<smem>>
    %c0_610 = arith.constant 0 : index
    %c0_611 = arith.constant 0 : index
    %c0_612 = arith.constant 0 : index
    %724 = vector.load %arg8[%c0_610, %c0_611, %c0_612] : memref<3x16x384xf32, #tpu.memory_space<vmem>>, vector<1x16x128xf32>
    %725 = vector.shape_cast %724 : vector<1x16x128xf32> to vector<16x128xf32>
    %726 = vector.broadcast %723 : f32 to vector<16x128xf32>
    %727 = arith.mulf %726, %725 : vector<16x128xf32>
    %c4_613 = arith.constant 4 : index
    %c4_614 = arith.constant 4 : index
    %728 = memref.load %arg4[%c4_613, %c4_614] : memref<8x29xf32, #tpu.memory_space<smem>>
    %c0_615 = arith.constant 0 : index
    %c0_616 = arith.constant 0 : index
    %c128_617 = arith.constant 128 : index
    %729 = vector.load %arg8[%c0_615, %c0_616, %c128_617] : memref<3x16x384xf32, #tpu.memory_space<vmem>>, vector<1x16x128xf32>
    %730 = vector.shape_cast %729 : vector<1x16x128xf32> to vector<16x128xf32>
    %731 = vector.broadcast %728 : f32 to vector<16x128xf32>
    %732 = arith.mulf %731, %730 : vector<16x128xf32>
    %733 = arith.addf %727, %732 : vector<16x128xf32>
    %c4_618 = arith.constant 4 : index
    %c5_619 = arith.constant 5 : index
    %734 = memref.load %arg4[%c4_618, %c5_619] : memref<8x29xf32, #tpu.memory_space<smem>>
    %c0_620 = arith.constant 0 : index
    %c0_621 = arith.constant 0 : index
    %c256_622 = arith.constant 256 : index
    %735 = vector.load %arg8[%c0_620, %c0_621, %c256_622] : memref<3x16x384xf32, #tpu.memory_space<vmem>>, vector<1x16x128xf32>
    %736 = vector.shape_cast %735 : vector<1x16x128xf32> to vector<16x128xf32>
    %737 = vector.broadcast %734 : f32 to vector<16x128xf32>
    %738 = arith.mulf %737, %736 : vector<16x128xf32>
    %739 = arith.addf %733, %738 : vector<16x128xf32>
    %c4_623 = arith.constant 4 : index
    %c12_624 = arith.constant 12 : index
    %740 = memref.load %arg4[%c4_623, %c12_624] : memref<8x29xf32, #tpu.memory_space<smem>>
    %c1_625 = arith.constant 1 : index
    %c0_626 = arith.constant 0 : index
    %c0_627 = arith.constant 0 : index
    %741 = vector.load %arg8[%c1_625, %c0_626, %c0_627] : memref<3x16x384xf32, #tpu.memory_space<vmem>>, vector<1x16x128xf32>
    %742 = vector.shape_cast %741 : vector<1x16x128xf32> to vector<16x128xf32>
    %743 = vector.broadcast %740 : f32 to vector<16x128xf32>
    %744 = arith.mulf %743, %742 : vector<16x128xf32>
    %745 = arith.addf %739, %744 : vector<16x128xf32>
    %c4_628 = arith.constant 4 : index
    %c13_629 = arith.constant 13 : index
    %746 = memref.load %arg4[%c4_628, %c13_629] : memref<8x29xf32, #tpu.memory_space<smem>>
    %c1_630 = arith.constant 1 : index
    %c0_631 = arith.constant 0 : index
    %c128_632 = arith.constant 128 : index
    %747 = vector.load %arg8[%c1_630, %c0_631, %c128_632] : memref<3x16x384xf32, #tpu.memory_space<vmem>>, vector<1x16x128xf32>
    %748 = vector.shape_cast %747 : vector<1x16x128xf32> to vector<16x128xf32>
    %749 = vector.broadcast %746 : f32 to vector<16x128xf32>
    %750 = arith.mulf %749, %748 : vector<16x128xf32>
    %751 = arith.addf %745, %750 : vector<16x128xf32>
    %c4_633 = arith.constant 4 : index
    %c14_634 = arith.constant 14 : index
    %752 = memref.load %arg4[%c4_633, %c14_634] : memref<8x29xf32, #tpu.memory_space<smem>>
    %c1_635 = arith.constant 1 : index
    %c0_636 = arith.constant 0 : index
    %c256_637 = arith.constant 256 : index
    %753 = vector.load %arg8[%c1_635, %c0_636, %c256_637] : memref<3x16x384xf32, #tpu.memory_space<vmem>>, vector<1x16x128xf32>
    %754 = vector.shape_cast %753 : vector<1x16x128xf32> to vector<16x128xf32>
    %755 = vector.broadcast %752 : f32 to vector<16x128xf32>
    %756 = arith.mulf %755, %754 : vector<16x128xf32>
    %757 = arith.addf %751, %756 : vector<16x128xf32>
    %c4_638 = arith.constant 4 : index
    %c21_639 = arith.constant 21 : index
    %758 = memref.load %arg4[%c4_638, %c21_639] : memref<8x29xf32, #tpu.memory_space<smem>>
    %c2_640 = arith.constant 2 : index
    %c0_641 = arith.constant 0 : index
    %c0_642 = arith.constant 0 : index
    %759 = vector.load %arg8[%c2_640, %c0_641, %c0_642] : memref<3x16x384xf32, #tpu.memory_space<vmem>>, vector<1x16x128xf32>
    %760 = vector.shape_cast %759 : vector<1x16x128xf32> to vector<16x128xf32>
    %761 = vector.broadcast %758 : f32 to vector<16x128xf32>
    %762 = arith.mulf %761, %760 : vector<16x128xf32>
    %763 = arith.addf %757, %762 : vector<16x128xf32>
    %c4_643 = arith.constant 4 : index
    %c22_644 = arith.constant 22 : index
    %764 = memref.load %arg4[%c4_643, %c22_644] : memref<8x29xf32, #tpu.memory_space<smem>>
    %c2_645 = arith.constant 2 : index
    %c0_646 = arith.constant 0 : index
    %c128_647 = arith.constant 128 : index
    %765 = vector.load %arg8[%c2_645, %c0_646, %c128_647] : memref<3x16x384xf32, #tpu.memory_space<vmem>>, vector<1x16x128xf32>
    %766 = vector.shape_cast %765 : vector<1x16x128xf32> to vector<16x128xf32>
    %767 = vector.broadcast %764 : f32 to vector<16x128xf32>
    %768 = arith.mulf %767, %766 : vector<16x128xf32>
    %769 = arith.addf %763, %768 : vector<16x128xf32>
    %c4_648 = arith.constant 4 : index
    %c23_649 = arith.constant 23 : index
    %770 = memref.load %arg4[%c4_648, %c23_649] : memref<8x29xf32, #tpu.memory_space<smem>>
    %c2_650 = arith.constant 2 : index
    %c0_651 = arith.constant 0 : index
    %c256_652 = arith.constant 256 : index
    %771 = vector.load %arg8[%c2_650, %c0_651, %c256_652] : memref<3x16x384xf32, #tpu.memory_space<vmem>>, vector<1x16x128xf32>
    %772 = vector.shape_cast %771 : vector<1x16x128xf32> to vector<16x128xf32>
    %773 = vector.broadcast %770 : f32 to vector<16x128xf32>
    %774 = arith.mulf %773, %772 : vector<16x128xf32>
    %775 = arith.addf %769, %774 : vector<16x128xf32>
    %c16_653 = arith.constant 16 : index
    %c512_654 = arith.constant 512 : index
    %776 = vector.load %arg9[%c16_653, %c512_654] : memref<48x1024xf32, #tpu.memory_space<vmem>>, vector<16x128xf32>
    tpu.vector_store %arg9[%c16_653, %c512_654], %775 {strides = array<i32>} : memref<48x1024xf32, #tpu.memory_space<vmem>>, vector<16x128xf32>,
    %c4_655 = arith.constant 4 : index
    %c6_656 = arith.constant 6 : index
    %777 = memref.load %arg4[%c4_655, %c6_656] : memref<8x29xf32, #tpu.memory_space<smem>>
    %c0_657 = arith.constant 0 : index
    %c0_658 = arith.constant 0 : index
    %c0_659 = arith.constant 0 : index
    %778 = vector.load %arg8[%c0_657, %c0_658, %c0_659] : memref<3x16x384xf32, #tpu.memory_space<vmem>>, vector<1x16x128xf32>
    %779 = vector.shape_cast %778 : vector<1x16x128xf32> to vector<16x128xf32>
    %780 = vector.broadcast %777 : f32 to vector<16x128xf32>
    %781 = arith.mulf %780, %779 : vector<16x128xf32>
    %c4_660 = arith.constant 4 : index
    %c7_661 = arith.constant 7 : index
    %782 = memref.load %arg4[%c4_660, %c7_661] : memref<8x29xf32, #tpu.memory_space<smem>>
    %c0_662 = arith.constant 0 : index
    %c0_663 = arith.constant 0 : index
    %c128_664 = arith.constant 128 : index
    %783 = vector.load %arg8[%c0_662, %c0_663, %c128_664] : memref<3x16x384xf32, #tpu.memory_space<vmem>>, vector<1x16x128xf32>
    %784 = vector.shape_cast %783 : vector<1x16x128xf32> to vector<16x128xf32>
    %785 = vector.broadcast %782 : f32 to vector<16x128xf32>
    %786 = arith.mulf %785, %784 : vector<16x128xf32>
    %787 = arith.addf %781, %786 : vector<16x128xf32>
    %c4_665 = arith.constant 4 : index
    %c8_666 = arith.constant 8 : index
    %788 = memref.load %arg4[%c4_665, %c8_666] : memref<8x29xf32, #tpu.memory_space<smem>>
    %c0_667 = arith.constant 0 : index
    %c0_668 = arith.constant 0 : index
    %c256_669 = arith.constant 256 : index
    %789 = vector.load %arg8[%c0_667, %c0_668, %c256_669] : memref<3x16x384xf32, #tpu.memory_space<vmem>>, vector<1x16x128xf32>
    %790 = vector.shape_cast %789 : vector<1x16x128xf32> to vector<16x128xf32>
    %791 = vector.broadcast %788 : f32 to vector<16x128xf32>
    %792 = arith.mulf %791, %790 : vector<16x128xf32>
    %793 = arith.addf %787, %792 : vector<16x128xf32>
    %c4_670 = arith.constant 4 : index
    %c15_671 = arith.constant 15 : index
    %794 = memref.load %arg4[%c4_670, %c15_671] : memref<8x29xf32, #tpu.memory_space<smem>>
    %c1_672 = arith.constant 1 : index
    %c0_673 = arith.constant 0 : index
    %c0_674 = arith.constant 0 : index
    %795 = vector.load %arg8[%c1_672, %c0_673, %c0_674] : memref<3x16x384xf32, #tpu.memory_space<vmem>>, vector<1x16x128xf32>
    %796 = vector.shape_cast %795 : vector<1x16x128xf32> to vector<16x128xf32>
    %797 = vector.broadcast %794 : f32 to vector<16x128xf32>
    %798 = arith.mulf %797, %796 : vector<16x128xf32>
    %799 = arith.addf %793, %798 : vector<16x128xf32>
    %c4_675 = arith.constant 4 : index
    %c16_676 = arith.constant 16 : index
    %800 = memref.load %arg4[%c4_675, %c16_676] : memref<8x29xf32, #tpu.memory_space<smem>>
    %c1_677 = arith.constant 1 : index
    %c0_678 = arith.constant 0 : index
    %c128_679 = arith.constant 128 : index
    %801 = vector.load %arg8[%c1_677, %c0_678, %c128_679] : memref<3x16x384xf32, #tpu.memory_space<vmem>>, vector<1x16x128xf32>
    %802 = vector.shape_cast %801 : vector<1x16x128xf32> to vector<16x128xf32>
    %803 = vector.broadcast %800 : f32 to vector<16x128xf32>
    %804 = arith.mulf %803, %802 : vector<16x128xf32>
    %805 = arith.addf %799, %804 : vector<16x128xf32>
    %c4_680 = arith.constant 4 : index
    %c17_681 = arith.constant 17 : index
    %806 = memref.load %arg4[%c4_680, %c17_681] : memref<8x29xf32, #tpu.memory_space<smem>>
    %c1_682 = arith.constant 1 : index
    %c0_683 = arith.constant 0 : index
    %c256_684 = arith.constant 256 : index
    %807 = vector.load %arg8[%c1_682, %c0_683, %c256_684] : memref<3x16x384xf32, #tpu.memory_space<vmem>>, vector<1x16x128xf32>
    %808 = vector.shape_cast %807 : vector<1x16x128xf32> to vector<16x128xf32>
    %809 = vector.broadcast %806 : f32 to vector<16x128xf32>
    %810 = arith.mulf %809, %808 : vector<16x128xf32>
    %811 = arith.addf %805, %810 : vector<16x128xf32>
    %c4_685 = arith.constant 4 : index
    %c24_686 = arith.constant 24 : index
    %812 = memref.load %arg4[%c4_685, %c24_686] : memref<8x29xf32, #tpu.memory_space<smem>>
    %c2_687 = arith.constant 2 : index
    %c0_688 = arith.constant 0 : index
    %c0_689 = arith.constant 0 : index
    %813 = vector.load %arg8[%c2_687, %c0_688, %c0_689] : memref<3x16x384xf32, #tpu.memory_space<vmem>>, vector<1x16x128xf32>
    %814 = vector.shape_cast %813 : vector<1x16x128xf32> to vector<16x128xf32>
    %815 = vector.broadcast %812 : f32 to vector<16x128xf32>
    %816 = arith.mulf %815, %814 : vector<16x128xf32>
    %817 = arith.addf %811, %816 : vector<16x128xf32>
    %c4_690 = arith.constant 4 : index
    %c25_691 = arith.constant 25 : index
    %818 = memref.load %arg4[%c4_690, %c25_691] : memref<8x29xf32, #tpu.memory_space<smem>>
    %c2_692 = arith.constant 2 : index
    %c0_693 = arith.constant 0 : index
    %c128_694 = arith.constant 128 : index
    %819 = vector.load %arg8[%c2_692, %c0_693, %c128_694] : memref<3x16x384xf32, #tpu.memory_space<vmem>>, vector<1x16x128xf32>
    %820 = vector.shape_cast %819 : vector<1x16x128xf32> to vector<16x128xf32>
    %821 = vector.broadcast %818 : f32 to vector<16x128xf32>
    %822 = arith.mulf %821, %820 : vector<16x128xf32>
    %823 = arith.addf %817, %822 : vector<16x128xf32>
    %c4_695 = arith.constant 4 : index
    %c26_696 = arith.constant 26 : index
    %824 = memref.load %arg4[%c4_695, %c26_696] : memref<8x29xf32, #tpu.memory_space<smem>>
    %c2_697 = arith.constant 2 : index
    %c0_698 = arith.constant 0 : index
    %c256_699 = arith.constant 256 : index
    %825 = vector.load %arg8[%c2_697, %c0_698, %c256_699] : memref<3x16x384xf32, #tpu.memory_space<vmem>>, vector<1x16x128xf32>
    %826 = vector.shape_cast %825 : vector<1x16x128xf32> to vector<16x128xf32>
    %827 = vector.broadcast %824 : f32 to vector<16x128xf32>
    %828 = arith.mulf %827, %826 : vector<16x128xf32>
    %829 = arith.addf %823, %828 : vector<16x128xf32>
    %c32_700 = arith.constant 32 : index
    %c512_701 = arith.constant 512 : index
    %830 = vector.load %arg9[%c32_700, %c512_701] : memref<48x1024xf32, #tpu.memory_space<vmem>>, vector<16x128xf32>
    tpu.vector_store %arg9[%c32_700, %c512_701], %829 {strides = array<i32>} : memref<48x1024xf32, #tpu.memory_space<vmem>>, vector<16x128xf32>,
    %c5_702 = arith.constant 5 : index
    %c0_703 = arith.constant 0 : index
    %831 = memref.load %arg4[%c5_702, %c0_703] : memref<8x29xf32, #tpu.memory_space<smem>>
    %c0_704 = arith.constant 0 : index
    %c0_705 = arith.constant 0 : index
    %c0_706 = arith.constant 0 : index
    %832 = vector.load %arg8[%c0_704, %c0_705, %c0_706] : memref<3x16x384xf32, #tpu.memory_space<vmem>>, vector<1x16x128xf32>
    %833 = vector.shape_cast %832 : vector<1x16x128xf32> to vector<16x128xf32>
    %834 = vector.broadcast %831 : f32 to vector<16x128xf32>
    %835 = arith.mulf %834, %833 : vector<16x128xf32>
    %c5_707 = arith.constant 5 : index
    %c1_708 = arith.constant 1 : index
    %836 = memref.load %arg4[%c5_707, %c1_708] : memref<8x29xf32, #tpu.memory_space<smem>>
    %c0_709 = arith.constant 0 : index
    %c0_710 = arith.constant 0 : index
    %c128_711 = arith.constant 128 : index
    %837 = vector.load %arg8[%c0_709, %c0_710, %c128_711] : memref<3x16x384xf32, #tpu.memory_space<vmem>>, vector<1x16x128xf32>
    %838 = vector.shape_cast %837 : vector<1x16x128xf32> to vector<16x128xf32>
    %839 = vector.broadcast %836 : f32 to vector<16x128xf32>
    %840 = arith.mulf %839, %838 : vector<16x128xf32>
    %841 = arith.addf %835, %840 : vector<16x128xf32>
    %c5_712 = arith.constant 5 : index
    %c2_713 = arith.constant 2 : index
    %842 = memref.load %arg4[%c5_712, %c2_713] : memref<8x29xf32, #tpu.memory_space<smem>>
    %c0_714 = arith.constant 0 : index
    %c0_715 = arith.constant 0 : index
    %c256_716 = arith.constant 256 : index
    %843 = vector.load %arg8[%c0_714, %c0_715, %c256_716] : memref<3x16x384xf32, #tpu.memory_space<vmem>>, vector<1x16x128xf32>
    %844 = vector.shape_cast %843 : vector<1x16x128xf32> to vector<16x128xf32>
    %845 = vector.broadcast %842 : f32 to vector<16x128xf32>
    %846 = arith.mulf %845, %844 : vector<16x128xf32>
    %847 = arith.addf %841, %846 : vector<16x128xf32>
    %c5_717 = arith.constant 5 : index
    %c9_718 = arith.constant 9 : index
    %848 = memref.load %arg4[%c5_717, %c9_718] : memref<8x29xf32, #tpu.memory_space<smem>>
    %c1_719 = arith.constant 1 : index
    %c0_720 = arith.constant 0 : index
    %c0_721 = arith.constant 0 : index
    %849 = vector.load %arg8[%c1_719, %c0_720, %c0_721] : memref<3x16x384xf32, #tpu.memory_space<vmem>>, vector<1x16x128xf32>
    %850 = vector.shape_cast %849 : vector<1x16x128xf32> to vector<16x128xf32>
    %851 = vector.broadcast %848 : f32 to vector<16x128xf32>
    %852 = arith.mulf %851, %850 : vector<16x128xf32>
    %853 = arith.addf %847, %852 : vector<16x128xf32>
    %c5_722 = arith.constant 5 : index
    %c10_723 = arith.constant 10 : index
    %854 = memref.load %arg4[%c5_722, %c10_723] : memref<8x29xf32, #tpu.memory_space<smem>>
    %c1_724 = arith.constant 1 : index
    %c0_725 = arith.constant 0 : index
    %c128_726 = arith.constant 128 : index
    %855 = vector.load %arg8[%c1_724, %c0_725, %c128_726] : memref<3x16x384xf32, #tpu.memory_space<vmem>>, vector<1x16x128xf32>
    %856 = vector.shape_cast %855 : vector<1x16x128xf32> to vector<16x128xf32>
    %857 = vector.broadcast %854 : f32 to vector<16x128xf32>
    %858 = arith.mulf %857, %856 : vector<16x128xf32>
    %859 = arith.addf %853, %858 : vector<16x128xf32>
    %c5_727 = arith.constant 5 : index
    %c11_728 = arith.constant 11 : index
    %860 = memref.load %arg4[%c5_727, %c11_728] : memref<8x29xf32, #tpu.memory_space<smem>>
    %c1_729 = arith.constant 1 : index
    %c0_730 = arith.constant 0 : index
    %c256_731 = arith.constant 256 : index
    %861 = vector.load %arg8[%c1_729, %c0_730, %c256_731] : memref<3x16x384xf32, #tpu.memory_space<vmem>>, vector<1x16x128xf32>
    %862 = vector.shape_cast %861 : vector<1x16x128xf32> to vector<16x128xf32>
    %863 = vector.broadcast %860 : f32 to vector<16x128xf32>
    %864 = arith.mulf %863, %862 : vector<16x128xf32>
    %865 = arith.addf %859, %864 : vector<16x128xf32>
    %c5_732 = arith.constant 5 : index
    %c18_733 = arith.constant 18 : index
    %866 = memref.load %arg4[%c5_732, %c18_733] : memref<8x29xf32, #tpu.memory_space<smem>>
    %c2_734 = arith.constant 2 : index
    %c0_735 = arith.constant 0 : index
    %c0_736 = arith.constant 0 : index
    %867 = vector.load %arg8[%c2_734, %c0_735, %c0_736] : memref<3x16x384xf32, #tpu.memory_space<vmem>>, vector<1x16x128xf32>
    %868 = vector.shape_cast %867 : vector<1x16x128xf32> to vector<16x128xf32>
    %869 = vector.broadcast %866 : f32 to vector<16x128xf32>
    %870 = arith.mulf %869, %868 : vector<16x128xf32>
    %871 = arith.addf %865, %870 : vector<16x128xf32>
    %c5_737 = arith.constant 5 : index
    %c19_738 = arith.constant 19 : index
    %872 = memref.load %arg4[%c5_737, %c19_738] : memref<8x29xf32, #tpu.memory_space<smem>>
    %c2_739 = arith.constant 2 : index
    %c0_740 = arith.constant 0 : index
    %c128_741 = arith.constant 128 : index
    %873 = vector.load %arg8[%c2_739, %c0_740, %c128_741] : memref<3x16x384xf32, #tpu.memory_space<vmem>>, vector<1x16x128xf32>
    %874 = vector.shape_cast %873 : vector<1x16x128xf32> to vector<16x128xf32>
    %875 = vector.broadcast %872 : f32 to vector<16x128xf32>
    %876 = arith.mulf %875, %874 : vector<16x128xf32>
    %877 = arith.addf %871, %876 : vector<16x128xf32>
    %c5_742 = arith.constant 5 : index
    %c20_743 = arith.constant 20 : index
    %878 = memref.load %arg4[%c5_742, %c20_743] : memref<8x29xf32, #tpu.memory_space<smem>>
    %c2_744 = arith.constant 2 : index
    %c0_745 = arith.constant 0 : index
    %c256_746 = arith.constant 256 : index
    %879 = vector.load %arg8[%c2_744, %c0_745, %c256_746] : memref<3x16x384xf32, #tpu.memory_space<vmem>>, vector<1x16x128xf32>
    %880 = vector.shape_cast %879 : vector<1x16x128xf32> to vector<16x128xf32>
    %881 = vector.broadcast %878 : f32 to vector<16x128xf32>
    %882 = arith.mulf %881, %880 : vector<16x128xf32>
    %883 = arith.addf %877, %882 : vector<16x128xf32>
    %c0_747 = arith.constant 0 : index
    %c640 = arith.constant 640 : index
    %884 = vector.load %arg9[%c0_747, %c640] : memref<48x1024xf32, #tpu.memory_space<vmem>>, vector<16x128xf32>
    tpu.vector_store %arg9[%c0_747, %c640], %883 {strides = array<i32>} : memref<48x1024xf32, #tpu.memory_space<vmem>>, vector<16x128xf32>,
    %c5_748 = arith.constant 5 : index
    %c3_749 = arith.constant 3 : index
    %885 = memref.load %arg4[%c5_748, %c3_749] : memref<8x29xf32, #tpu.memory_space<smem>>
    %c0_750 = arith.constant 0 : index
    %c0_751 = arith.constant 0 : index
    %c0_752 = arith.constant 0 : index
    %886 = vector.load %arg8[%c0_750, %c0_751, %c0_752] : memref<3x16x384xf32, #tpu.memory_space<vmem>>, vector<1x16x128xf32>
    %887 = vector.shape_cast %886 : vector<1x16x128xf32> to vector<16x128xf32>
    %888 = vector.broadcast %885 : f32 to vector<16x128xf32>
    %889 = arith.mulf %888, %887 : vector<16x128xf32>
    %c5_753 = arith.constant 5 : index
    %c4_754 = arith.constant 4 : index
    %890 = memref.load %arg4[%c5_753, %c4_754] : memref<8x29xf32, #tpu.memory_space<smem>>
    %c0_755 = arith.constant 0 : index
    %c0_756 = arith.constant 0 : index
    %c128_757 = arith.constant 128 : index
    %891 = vector.load %arg8[%c0_755, %c0_756, %c128_757] : memref<3x16x384xf32, #tpu.memory_space<vmem>>, vector<1x16x128xf32>
    %892 = vector.shape_cast %891 : vector<1x16x128xf32> to vector<16x128xf32>
    %893 = vector.broadcast %890 : f32 to vector<16x128xf32>
    %894 = arith.mulf %893, %892 : vector<16x128xf32>
    %895 = arith.addf %889, %894 : vector<16x128xf32>
    %c5_758 = arith.constant 5 : index
    %c5_759 = arith.constant 5 : index
    %896 = memref.load %arg4[%c5_758, %c5_759] : memref<8x29xf32, #tpu.memory_space<smem>>
    %c0_760 = arith.constant 0 : index
    %c0_761 = arith.constant 0 : index
    %c256_762 = arith.constant 256 : index
    %897 = vector.load %arg8[%c0_760, %c0_761, %c256_762] : memref<3x16x384xf32, #tpu.memory_space<vmem>>, vector<1x16x128xf32>
    %898 = vector.shape_cast %897 : vector<1x16x128xf32> to vector<16x128xf32>
    %899 = vector.broadcast %896 : f32 to vector<16x128xf32>
    %900 = arith.mulf %899, %898 : vector<16x128xf32>
    %901 = arith.addf %895, %900 : vector<16x128xf32>
    %c5_763 = arith.constant 5 : index
    %c12_764 = arith.constant 12 : index
    %902 = memref.load %arg4[%c5_763, %c12_764] : memref<8x29xf32, #tpu.memory_space<smem>>
    %c1_765 = arith.constant 1 : index
    %c0_766 = arith.constant 0 : index
    %c0_767 = arith.constant 0 : index
    %903 = vector.load %arg8[%c1_765, %c0_766, %c0_767] : memref<3x16x384xf32, #tpu.memory_space<vmem>>, vector<1x16x128xf32>
    %904 = vector.shape_cast %903 : vector<1x16x128xf32> to vector<16x128xf32>
    %905 = vector.broadcast %902 : f32 to vector<16x128xf32>
    %906 = arith.mulf %905, %904 : vector<16x128xf32>
    %907 = arith.addf %901, %906 : vector<16x128xf32>
    %c5_768 = arith.constant 5 : index
    %c13_769 = arith.constant 13 : index
    %908 = memref.load %arg4[%c5_768, %c13_769] : memref<8x29xf32, #tpu.memory_space<smem>>
    %c1_770 = arith.constant 1 : index
    %c0_771 = arith.constant 0 : index
    %c128_772 = arith.constant 128 : index
    %909 = vector.load %arg8[%c1_770, %c0_771, %c128_772] : memref<3x16x384xf32, #tpu.memory_space<vmem>>, vector<1x16x128xf32>
    %910 = vector.shape_cast %909 : vector<1x16x128xf32> to vector<16x128xf32>
    %911 = vector.broadcast %908 : f32 to vector<16x128xf32>
    %912 = arith.mulf %911, %910 : vector<16x128xf32>
    %913 = arith.addf %907, %912 : vector<16x128xf32>
    %c5_773 = arith.constant 5 : index
    %c14_774 = arith.constant 14 : index
    %914 = memref.load %arg4[%c5_773, %c14_774] : memref<8x29xf32, #tpu.memory_space<smem>>
    %c1_775 = arith.constant 1 : index
    %c0_776 = arith.constant 0 : index
    %c256_777 = arith.constant 256 : index
    %915 = vector.load %arg8[%c1_775, %c0_776, %c256_777] : memref<3x16x384xf32, #tpu.memory_space<vmem>>, vector<1x16x128xf32>
    %916 = vector.shape_cast %915 : vector<1x16x128xf32> to vector<16x128xf32>
    %917 = vector.broadcast %914 : f32 to vector<16x128xf32>
    %918 = arith.mulf %917, %916 : vector<16x128xf32>
    %919 = arith.addf %913, %918 : vector<16x128xf32>
    %c5_778 = arith.constant 5 : index
    %c21_779 = arith.constant 21 : index
    %920 = memref.load %arg4[%c5_778, %c21_779] : memref<8x29xf32, #tpu.memory_space<smem>>
    %c2_780 = arith.constant 2 : index
    %c0_781 = arith.constant 0 : index
    %c0_782 = arith.constant 0 : index
    %921 = vector.load %arg8[%c2_780, %c0_781, %c0_782] : memref<3x16x384xf32, #tpu.memory_space<vmem>>, vector<1x16x128xf32>
    %922 = vector.shape_cast %921 : vector<1x16x128xf32> to vector<16x128xf32>
    %923 = vector.broadcast %920 : f32 to vector<16x128xf32>
    %924 = arith.mulf %923, %922 : vector<16x128xf32>
    %925 = arith.addf %919, %924 : vector<16x128xf32>
    %c5_783 = arith.constant 5 : index
    %c22_784 = arith.constant 22 : index
    %926 = memref.load %arg4[%c5_783, %c22_784] : memref<8x29xf32, #tpu.memory_space<smem>>
    %c2_785 = arith.constant 2 : index
    %c0_786 = arith.constant 0 : index
    %c128_787 = arith.constant 128 : index
    %927 = vector.load %arg8[%c2_785, %c0_786, %c128_787] : memref<3x16x384xf32, #tpu.memory_space<vmem>>, vector<1x16x128xf32>
    %928 = vector.shape_cast %927 : vector<1x16x128xf32> to vector<16x128xf32>
    %929 = vector.broadcast %926 : f32 to vector<16x128xf32>
    %930 = arith.mulf %929, %928 : vector<16x128xf32>
    %931 = arith.addf %925, %930 : vector<16x128xf32>
    %c5_788 = arith.constant 5 : index
    %c23_789 = arith.constant 23 : index
    %932 = memref.load %arg4[%c5_788, %c23_789] : memref<8x29xf32, #tpu.memory_space<smem>>
    %c2_790 = arith.constant 2 : index
    %c0_791 = arith.constant 0 : index
    %c256_792 = arith.constant 256 : index
    %933 = vector.load %arg8[%c2_790, %c0_791, %c256_792] : memref<3x16x384xf32, #tpu.memory_space<vmem>>, vector<1x16x128xf32>
    %934 = vector.shape_cast %933 : vector<1x16x128xf32> to vector<16x128xf32>
    %935 = vector.broadcast %932 : f32 to vector<16x128xf32>
    %936 = arith.mulf %935, %934 : vector<16x128xf32>
    %937 = arith.addf %931, %936 : vector<16x128xf32>
    %c16_793 = arith.constant 16 : index
    %c640_794 = arith.constant 640 : index
    %938 = vector.load %arg9[%c16_793, %c640_794] : memref<48x1024xf32, #tpu.memory_space<vmem>>, vector<16x128xf32>
    tpu.vector_store %arg9[%c16_793, %c640_794], %937 {strides = array<i32>} : memref<48x1024xf32, #tpu.memory_space<vmem>>, vector<16x128xf32>,
    %c5_795 = arith.constant 5 : index
    %c6_796 = arith.constant 6 : index
    %939 = memref.load %arg4[%c5_795, %c6_796] : memref<8x29xf32, #tpu.memory_space<smem>>
    %c0_797 = arith.constant 0 : index
    %c0_798 = arith.constant 0 : index
    %c0_799 = arith.constant 0 : index
    %940 = vector.load %arg8[%c0_797, %c0_798, %c0_799] : memref<3x16x384xf32, #tpu.memory_space<vmem>>, vector<1x16x128xf32>
    %941 = vector.shape_cast %940 : vector<1x16x128xf32> to vector<16x128xf32>
    %942 = vector.broadcast %939 : f32 to vector<16x128xf32>
    %943 = arith.mulf %942, %941 : vector<16x128xf32>
    %c5_800 = arith.constant 5 : index
    %c7_801 = arith.constant 7 : index
    %944 = memref.load %arg4[%c5_800, %c7_801] : memref<8x29xf32, #tpu.memory_space<smem>>
    %c0_802 = arith.constant 0 : index
    %c0_803 = arith.constant 0 : index
    %c128_804 = arith.constant 128 : index
    %945 = vector.load %arg8[%c0_802, %c0_803, %c128_804] : memref<3x16x384xf32, #tpu.memory_space<vmem>>, vector<1x16x128xf32>
    %946 = vector.shape_cast %945 : vector<1x16x128xf32> to vector<16x128xf32>
    %947 = vector.broadcast %944 : f32 to vector<16x128xf32>
    %948 = arith.mulf %947, %946 : vector<16x128xf32>
    %949 = arith.addf %943, %948 : vector<16x128xf32>
    %c5_805 = arith.constant 5 : index
    %c8_806 = arith.constant 8 : index
    %950 = memref.load %arg4[%c5_805, %c8_806] : memref<8x29xf32, #tpu.memory_space<smem>>
    %c0_807 = arith.constant 0 : index
    %c0_808 = arith.constant 0 : index
    %c256_809 = arith.constant 256 : index
    %951 = vector.load %arg8[%c0_807, %c0_808, %c256_809] : memref<3x16x384xf32, #tpu.memory_space<vmem>>, vector<1x16x128xf32>
    %952 = vector.shape_cast %951 : vector<1x16x128xf32> to vector<16x128xf32>
    %953 = vector.broadcast %950 : f32 to vector<16x128xf32>
    %954 = arith.mulf %953, %952 : vector<16x128xf32>
    %955 = arith.addf %949, %954 : vector<16x128xf32>
    %c5_810 = arith.constant 5 : index
    %c15_811 = arith.constant 15 : index
    %956 = memref.load %arg4[%c5_810, %c15_811] : memref<8x29xf32, #tpu.memory_space<smem>>
    %c1_812 = arith.constant 1 : index
    %c0_813 = arith.constant 0 : index
    %c0_814 = arith.constant 0 : index
    %957 = vector.load %arg8[%c1_812, %c0_813, %c0_814] : memref<3x16x384xf32, #tpu.memory_space<vmem>>, vector<1x16x128xf32>
    %958 = vector.shape_cast %957 : vector<1x16x128xf32> to vector<16x128xf32>
    %959 = vector.broadcast %956 : f32 to vector<16x128xf32>
    %960 = arith.mulf %959, %958 : vector<16x128xf32>
    %961 = arith.addf %955, %960 : vector<16x128xf32>
    %c5_815 = arith.constant 5 : index
    %c16_816 = arith.constant 16 : index
    %962 = memref.load %arg4[%c5_815, %c16_816] : memref<8x29xf32, #tpu.memory_space<smem>>
    %c1_817 = arith.constant 1 : index
    %c0_818 = arith.constant 0 : index
    %c128_819 = arith.constant 128 : index
    %963 = vector.load %arg8[%c1_817, %c0_818, %c128_819] : memref<3x16x384xf32, #tpu.memory_space<vmem>>, vector<1x16x128xf32>
    %964 = vector.shape_cast %963 : vector<1x16x128xf32> to vector<16x128xf32>
    %965 = vector.broadcast %962 : f32 to vector<16x128xf32>
    %966 = arith.mulf %965, %964 : vector<16x128xf32>
    %967 = arith.addf %961, %966 : vector<16x128xf32>
    %c5_820 = arith.constant 5 : index
    %c17_821 = arith.constant 17 : index
    %968 = memref.load %arg4[%c5_820, %c17_821] : memref<8x29xf32, #tpu.memory_space<smem>>
    %c1_822 = arith.constant 1 : index
    %c0_823 = arith.constant 0 : index
    %c256_824 = arith.constant 256 : index
    %969 = vector.load %arg8[%c1_822, %c0_823, %c256_824] : memref<3x16x384xf32, #tpu.memory_space<vmem>>, vector<1x16x128xf32>
    %970 = vector.shape_cast %969 : vector<1x16x128xf32> to vector<16x128xf32>
    %971 = vector.broadcast %968 : f32 to vector<16x128xf32>
    %972 = arith.mulf %971, %970 : vector<16x128xf32>
    %973 = arith.addf %967, %972 : vector<16x128xf32>
    %c5_825 = arith.constant 5 : index
    %c24_826 = arith.constant 24 : index
    %974 = memref.load %arg4[%c5_825, %c24_826] : memref<8x29xf32, #tpu.memory_space<smem>>
    %c2_827 = arith.constant 2 : index
    %c0_828 = arith.constant 0 : index
    %c0_829 = arith.constant 0 : index
    %975 = vector.load %arg8[%c2_827, %c0_828, %c0_829] : memref<3x16x384xf32, #tpu.memory_space<vmem>>, vector<1x16x128xf32>
    %976 = vector.shape_cast %975 : vector<1x16x128xf32> to vector<16x128xf32>
    %977 = vector.broadcast %974 : f32 to vector<16x128xf32>
    %978 = arith.mulf %977, %976 : vector<16x128xf32>
    %979 = arith.addf %973, %978 : vector<16x128xf32>
    %c5_830 = arith.constant 5 : index
    %c25_831 = arith.constant 25 : index
    %980 = memref.load %arg4[%c5_830, %c25_831] : memref<8x29xf32, #tpu.memory_space<smem>>
    %c2_832 = arith.constant 2 : index
    %c0_833 = arith.constant 0 : index
    %c128_834 = arith.constant 128 : index
    %981 = vector.load %arg8[%c2_832, %c0_833, %c128_834] : memref<3x16x384xf32, #tpu.memory_space<vmem>>, vector<1x16x128xf32>
    %982 = vector.shape_cast %981 : vector<1x16x128xf32> to vector<16x128xf32>
    %983 = vector.broadcast %980 : f32 to vector<16x128xf32>
    %984 = arith.mulf %983, %982 : vector<16x128xf32>
    %985 = arith.addf %979, %984 : vector<16x128xf32>
    %c5_835 = arith.constant 5 : index
    %c26_836 = arith.constant 26 : index
    %986 = memref.load %arg4[%c5_835, %c26_836] : memref<8x29xf32, #tpu.memory_space<smem>>
    %c2_837 = arith.constant 2 : index
    %c0_838 = arith.constant 0 : index
    %c256_839 = arith.constant 256 : index
    %987 = vector.load %arg8[%c2_837, %c0_838, %c256_839] : memref<3x16x384xf32, #tpu.memory_space<vmem>>, vector<1x16x128xf32>
    %988 = vector.shape_cast %987 : vector<1x16x128xf32> to vector<16x128xf32>
    %989 = vector.broadcast %986 : f32 to vector<16x128xf32>
    %990 = arith.mulf %989, %988 : vector<16x128xf32>
    %991 = arith.addf %985, %990 : vector<16x128xf32>
    %c32_840 = arith.constant 32 : index
    %c640_841 = arith.constant 640 : index
    %992 = vector.load %arg9[%c32_840, %c640_841] : memref<48x1024xf32, #tpu.memory_space<vmem>>, vector<16x128xf32>
    tpu.vector_store %arg9[%c32_840, %c640_841], %991 {strides = array<i32>} : memref<48x1024xf32, #tpu.memory_space<vmem>>, vector<16x128xf32>,
    %c6_842 = arith.constant 6 : index
    %c0_843 = arith.constant 0 : index
    %993 = memref.load %arg4[%c6_842, %c0_843] : memref<8x29xf32, #tpu.memory_space<smem>>
    %c0_844 = arith.constant 0 : index
    %c0_845 = arith.constant 0 : index
    %c0_846 = arith.constant 0 : index
    %994 = vector.load %arg8[%c0_844, %c0_845, %c0_846] : memref<3x16x384xf32, #tpu.memory_space<vmem>>, vector<1x16x128xf32>
    %995 = vector.shape_cast %994 : vector<1x16x128xf32> to vector<16x128xf32>
    %996 = vector.broadcast %993 : f32 to vector<16x128xf32>
    %997 = arith.mulf %996, %995 : vector<16x128xf32>
    %c6_847 = arith.constant 6 : index
    %c1_848 = arith.constant 1 : index
    %998 = memref.load %arg4[%c6_847, %c1_848] : memref<8x29xf32, #tpu.memory_space<smem>>
    %c0_849 = arith.constant 0 : index
    %c0_850 = arith.constant 0 : index
    %c128_851 = arith.constant 128 : index
    %999 = vector.load %arg8[%c0_849, %c0_850, %c128_851] : memref<3x16x384xf32, #tpu.memory_space<vmem>>, vector<1x16x128xf32>
    %1000 = vector.shape_cast %999 : vector<1x16x128xf32> to vector<16x128xf32>
    %1001 = vector.broadcast %998 : f32 to vector<16x128xf32>
    %1002 = arith.mulf %1001, %1000 : vector<16x128xf32>
    %1003 = arith.addf %997, %1002 : vector<16x128xf32>
    %c6_852 = arith.constant 6 : index
    %c2_853 = arith.constant 2 : index
    %1004 = memref.load %arg4[%c6_852, %c2_853] : memref<8x29xf32, #tpu.memory_space<smem>>
    %c0_854 = arith.constant 0 : index
    %c0_855 = arith.constant 0 : index
    %c256_856 = arith.constant 256 : index
    %1005 = vector.load %arg8[%c0_854, %c0_855, %c256_856] : memref<3x16x384xf32, #tpu.memory_space<vmem>>, vector<1x16x128xf32>
    %1006 = vector.shape_cast %1005 : vector<1x16x128xf32> to vector<16x128xf32>
    %1007 = vector.broadcast %1004 : f32 to vector<16x128xf32>
    %1008 = arith.mulf %1007, %1006 : vector<16x128xf32>
    %1009 = arith.addf %1003, %1008 : vector<16x128xf32>
    %c6_857 = arith.constant 6 : index
    %c9_858 = arith.constant 9 : index
    %1010 = memref.load %arg4[%c6_857, %c9_858] : memref<8x29xf32, #tpu.memory_space<smem>>
    %c1_859 = arith.constant 1 : index
    %c0_860 = arith.constant 0 : index
    %c0_861 = arith.constant 0 : index
    %1011 = vector.load %arg8[%c1_859, %c0_860, %c0_861] : memref<3x16x384xf32, #tpu.memory_space<vmem>>, vector<1x16x128xf32>
    %1012 = vector.shape_cast %1011 : vector<1x16x128xf32> to vector<16x128xf32>
    %1013 = vector.broadcast %1010 : f32 to vector<16x128xf32>
    %1014 = arith.mulf %1013, %1012 : vector<16x128xf32>
    %1015 = arith.addf %1009, %1014 : vector<16x128xf32>
    %c6_862 = arith.constant 6 : index
    %c10_863 = arith.constant 10 : index
    %1016 = memref.load %arg4[%c6_862, %c10_863] : memref<8x29xf32, #tpu.memory_space<smem>>
    %c1_864 = arith.constant 1 : index
    %c0_865 = arith.constant 0 : index
    %c128_866 = arith.constant 128 : index
    %1017 = vector.load %arg8[%c1_864, %c0_865, %c128_866] : memref<3x16x384xf32, #tpu.memory_space<vmem>>, vector<1x16x128xf32>
    %1018 = vector.shape_cast %1017 : vector<1x16x128xf32> to vector<16x128xf32>
    %1019 = vector.broadcast %1016 : f32 to vector<16x128xf32>
    %1020 = arith.mulf %1019, %1018 : vector<16x128xf32>
    %1021 = arith.addf %1015, %1020 : vector<16x128xf32>
    %c6_867 = arith.constant 6 : index
    %c11_868 = arith.constant 11 : index
    %1022 = memref.load %arg4[%c6_867, %c11_868] : memref<8x29xf32, #tpu.memory_space<smem>>
    %c1_869 = arith.constant 1 : index
    %c0_870 = arith.constant 0 : index
    %c256_871 = arith.constant 256 : index
    %1023 = vector.load %arg8[%c1_869, %c0_870, %c256_871] : memref<3x16x384xf32, #tpu.memory_space<vmem>>, vector<1x16x128xf32>
    %1024 = vector.shape_cast %1023 : vector<1x16x128xf32> to vector<16x128xf32>
    %1025 = vector.broadcast %1022 : f32 to vector<16x128xf32>
    %1026 = arith.mulf %1025, %1024 : vector<16x128xf32>
    %1027 = arith.addf %1021, %1026 : vector<16x128xf32>
    %c6_872 = arith.constant 6 : index
    %c18_873 = arith.constant 18 : index
    %1028 = memref.load %arg4[%c6_872, %c18_873] : memref<8x29xf32, #tpu.memory_space<smem>>
    %c2_874 = arith.constant 2 : index
    %c0_875 = arith.constant 0 : index
    %c0_876 = arith.constant 0 : index
    %1029 = vector.load %arg8[%c2_874, %c0_875, %c0_876] : memref<3x16x384xf32, #tpu.memory_space<vmem>>, vector<1x16x128xf32>
    %1030 = vector.shape_cast %1029 : vector<1x16x128xf32> to vector<16x128xf32>
    %1031 = vector.broadcast %1028 : f32 to vector<16x128xf32>
    %1032 = arith.mulf %1031, %1030 : vector<16x128xf32>
    %1033 = arith.addf %1027, %1032 : vector<16x128xf32>
    %c6_877 = arith.constant 6 : index
    %c19_878 = arith.constant 19 : index
    %1034 = memref.load %arg4[%c6_877, %c19_878] : memref<8x29xf32, #tpu.memory_space<smem>>
    %c2_879 = arith.constant 2 : index
    %c0_880 = arith.constant 0 : index
    %c128_881 = arith.constant 128 : index
    %1035 = vector.load %arg8[%c2_879, %c0_880, %c128_881] : memref<3x16x384xf32, #tpu.memory_space<vmem>>, vector<1x16x128xf32>
    %1036 = vector.shape_cast %1035 : vector<1x16x128xf32> to vector<16x128xf32>
    %1037 = vector.broadcast %1034 : f32 to vector<16x128xf32>
    %1038 = arith.mulf %1037, %1036 : vector<16x128xf32>
    %1039 = arith.addf %1033, %1038 : vector<16x128xf32>
    %c6_882 = arith.constant 6 : index
    %c20_883 = arith.constant 20 : index
    %1040 = memref.load %arg4[%c6_882, %c20_883] : memref<8x29xf32, #tpu.memory_space<smem>>
    %c2_884 = arith.constant 2 : index
    %c0_885 = arith.constant 0 : index
    %c256_886 = arith.constant 256 : index
    %1041 = vector.load %arg8[%c2_884, %c0_885, %c256_886] : memref<3x16x384xf32, #tpu.memory_space<vmem>>, vector<1x16x128xf32>
    %1042 = vector.shape_cast %1041 : vector<1x16x128xf32> to vector<16x128xf32>
    %1043 = vector.broadcast %1040 : f32 to vector<16x128xf32>
    %1044 = arith.mulf %1043, %1042 : vector<16x128xf32>
    %1045 = arith.addf %1039, %1044 : vector<16x128xf32>
    %c0_887 = arith.constant 0 : index
    %c768 = arith.constant 768 : index
    %1046 = vector.load %arg9[%c0_887, %c768] : memref<48x1024xf32, #tpu.memory_space<vmem>>, vector<16x128xf32>
    tpu.vector_store %arg9[%c0_887, %c768], %1045 {strides = array<i32>} : memref<48x1024xf32, #tpu.memory_space<vmem>>, vector<16x128xf32>,
    %c6_888 = arith.constant 6 : index
    %c3_889 = arith.constant 3 : index
    %1047 = memref.load %arg4[%c6_888, %c3_889] : memref<8x29xf32, #tpu.memory_space<smem>>
    %c0_890 = arith.constant 0 : index
    %c0_891 = arith.constant 0 : index
    %c0_892 = arith.constant 0 : index
    %1048 = vector.load %arg8[%c0_890, %c0_891, %c0_892] : memref<3x16x384xf32, #tpu.memory_space<vmem>>, vector<1x16x128xf32>
    %1049 = vector.shape_cast %1048 : vector<1x16x128xf32> to vector<16x128xf32>
    %1050 = vector.broadcast %1047 : f32 to vector<16x128xf32>
    %1051 = arith.mulf %1050, %1049 : vector<16x128xf32>
    %c6_893 = arith.constant 6 : index
    %c4_894 = arith.constant 4 : index
    %1052 = memref.load %arg4[%c6_893, %c4_894] : memref<8x29xf32, #tpu.memory_space<smem>>
    %c0_895 = arith.constant 0 : index
    %c0_896 = arith.constant 0 : index
    %c128_897 = arith.constant 128 : index
    %1053 = vector.load %arg8[%c0_895, %c0_896, %c128_897] : memref<3x16x384xf32, #tpu.memory_space<vmem>>, vector<1x16x128xf32>
    %1054 = vector.shape_cast %1053 : vector<1x16x128xf32> to vector<16x128xf32>
    %1055 = vector.broadcast %1052 : f32 to vector<16x128xf32>
    %1056 = arith.mulf %1055, %1054 : vector<16x128xf32>
    %1057 = arith.addf %1051, %1056 : vector<16x128xf32>
    %c6_898 = arith.constant 6 : index
    %c5_899 = arith.constant 5 : index
    %1058 = memref.load %arg4[%c6_898, %c5_899] : memref<8x29xf32, #tpu.memory_space<smem>>
    %c0_900 = arith.constant 0 : index
    %c0_901 = arith.constant 0 : index
    %c256_902 = arith.constant 256 : index
    %1059 = vector.load %arg8[%c0_900, %c0_901, %c256_902] : memref<3x16x384xf32, #tpu.memory_space<vmem>>, vector<1x16x128xf32>
    %1060 = vector.shape_cast %1059 : vector<1x16x128xf32> to vector<16x128xf32>
    %1061 = vector.broadcast %1058 : f32 to vector<16x128xf32>
    %1062 = arith.mulf %1061, %1060 : vector<16x128xf32>
    %1063 = arith.addf %1057, %1062 : vector<16x128xf32>
    %c6_903 = arith.constant 6 : index
    %c12_904 = arith.constant 12 : index
    %1064 = memref.load %arg4[%c6_903, %c12_904] : memref<8x29xf32, #tpu.memory_space<smem>>
    %c1_905 = arith.constant 1 : index
    %c0_906 = arith.constant 0 : index
    %c0_907 = arith.constant 0 : index
    %1065 = vector.load %arg8[%c1_905, %c0_906, %c0_907] : memref<3x16x384xf32, #tpu.memory_space<vmem>>, vector<1x16x128xf32>
    %1066 = vector.shape_cast %1065 : vector<1x16x128xf32> to vector<16x128xf32>
    %1067 = vector.broadcast %1064 : f32 to vector<16x128xf32>
    %1068 = arith.mulf %1067, %1066 : vector<16x128xf32>
    %1069 = arith.addf %1063, %1068 : vector<16x128xf32>
    %c6_908 = arith.constant 6 : index
    %c13_909 = arith.constant 13 : index
    %1070 = memref.load %arg4[%c6_908, %c13_909] : memref<8x29xf32, #tpu.memory_space<smem>>
    %c1_910 = arith.constant 1 : index
    %c0_911 = arith.constant 0 : index
    %c128_912 = arith.constant 128 : index
    %1071 = vector.load %arg8[%c1_910, %c0_911, %c128_912] : memref<3x16x384xf32, #tpu.memory_space<vmem>>, vector<1x16x128xf32>
    %1072 = vector.shape_cast %1071 : vector<1x16x128xf32> to vector<16x128xf32>
    %1073 = vector.broadcast %1070 : f32 to vector<16x128xf32>
    %1074 = arith.mulf %1073, %1072 : vector<16x128xf32>
    %1075 = arith.addf %1069, %1074 : vector<16x128xf32>
    %c6_913 = arith.constant 6 : index
    %c14_914 = arith.constant 14 : index
    %1076 = memref.load %arg4[%c6_913, %c14_914] : memref<8x29xf32, #tpu.memory_space<smem>>
    %c1_915 = arith.constant 1 : index
    %c0_916 = arith.constant 0 : index
    %c256_917 = arith.constant 256 : index
    %1077 = vector.load %arg8[%c1_915, %c0_916, %c256_917] : memref<3x16x384xf32, #tpu.memory_space<vmem>>, vector<1x16x128xf32>
    %1078 = vector.shape_cast %1077 : vector<1x16x128xf32> to vector<16x128xf32>
    %1079 = vector.broadcast %1076 : f32 to vector<16x128xf32>
    %1080 = arith.mulf %1079, %1078 : vector<16x128xf32>
    %1081 = arith.addf %1075, %1080 : vector<16x128xf32>
    %c6_918 = arith.constant 6 : index
    %c21_919 = arith.constant 21 : index
    %1082 = memref.load %arg4[%c6_918, %c21_919] : memref<8x29xf32, #tpu.memory_space<smem>>
    %c2_920 = arith.constant 2 : index
    %c0_921 = arith.constant 0 : index
    %c0_922 = arith.constant 0 : index
    %1083 = vector.load %arg8[%c2_920, %c0_921, %c0_922] : memref<3x16x384xf32, #tpu.memory_space<vmem>>, vector<1x16x128xf32>
    %1084 = vector.shape_cast %1083 : vector<1x16x128xf32> to vector<16x128xf32>
    %1085 = vector.broadcast %1082 : f32 to vector<16x128xf32>
    %1086 = arith.mulf %1085, %1084 : vector<16x128xf32>
    %1087 = arith.addf %1081, %1086 : vector<16x128xf32>
    %c6_923 = arith.constant 6 : index
    %c22_924 = arith.constant 22 : index
    %1088 = memref.load %arg4[%c6_923, %c22_924] : memref<8x29xf32, #tpu.memory_space<smem>>
    %c2_925 = arith.constant 2 : index
    %c0_926 = arith.constant 0 : index
    %c128_927 = arith.constant 128 : index
    %1089 = vector.load %arg8[%c2_925, %c0_926, %c128_927] : memref<3x16x384xf32, #tpu.memory_space<vmem>>, vector<1x16x128xf32>
    %1090 = vector.shape_cast %1089 : vector<1x16x128xf32> to vector<16x128xf32>
    %1091 = vector.broadcast %1088 : f32 to vector<16x128xf32>
    %1092 = arith.mulf %1091, %1090 : vector<16x128xf32>
    %1093 = arith.addf %1087, %1092 : vector<16x128xf32>
    %c6_928 = arith.constant 6 : index
    %c23_929 = arith.constant 23 : index
    %1094 = memref.load %arg4[%c6_928, %c23_929] : memref<8x29xf32, #tpu.memory_space<smem>>
    %c2_930 = arith.constant 2 : index
    %c0_931 = arith.constant 0 : index
    %c256_932 = arith.constant 256 : index
    %1095 = vector.load %arg8[%c2_930, %c0_931, %c256_932] : memref<3x16x384xf32, #tpu.memory_space<vmem>>, vector<1x16x128xf32>
    %1096 = vector.shape_cast %1095 : vector<1x16x128xf32> to vector<16x128xf32>
    %1097 = vector.broadcast %1094 : f32 to vector<16x128xf32>
    %1098 = arith.mulf %1097, %1096 : vector<16x128xf32>
    %1099 = arith.addf %1093, %1098 : vector<16x128xf32>
    %c16_933 = arith.constant 16 : index
    %c768_934 = arith.constant 768 : index
    %1100 = vector.load %arg9[%c16_933, %c768_934] : memref<48x1024xf32, #tpu.memory_space<vmem>>, vector<16x128xf32>
    tpu.vector_store %arg9[%c16_933, %c768_934], %1099 {strides = array<i32>} : memref<48x1024xf32, #tpu.memory_space<vmem>>, vector<16x128xf32>,
    %c6_935 = arith.constant 6 : index
    %c6_936 = arith.constant 6 : index
    %1101 = memref.load %arg4[%c6_935, %c6_936] : memref<8x29xf32, #tpu.memory_space<smem>>
    %c0_937 = arith.constant 0 : index
    %c0_938 = arith.constant 0 : index
    %c0_939 = arith.constant 0 : index
    %1102 = vector.load %arg8[%c0_937, %c0_938, %c0_939] : memref<3x16x384xf32, #tpu.memory_space<vmem>>, vector<1x16x128xf32>
    %1103 = vector.shape_cast %1102 : vector<1x16x128xf32> to vector<16x128xf32>
    %1104 = vector.broadcast %1101 : f32 to vector<16x128xf32>
    %1105 = arith.mulf %1104, %1103 : vector<16x128xf32>
    %c6_940 = arith.constant 6 : index
    %c7_941 = arith.constant 7 : index
    %1106 = memref.load %arg4[%c6_940, %c7_941] : memref<8x29xf32, #tpu.memory_space<smem>>
    %c0_942 = arith.constant 0 : index
    %c0_943 = arith.constant 0 : index
    %c128_944 = arith.constant 128 : index
    %1107 = vector.load %arg8[%c0_942, %c0_943, %c128_944] : memref<3x16x384xf32, #tpu.memory_space<vmem>>, vector<1x16x128xf32>
    %1108 = vector.shape_cast %1107 : vector<1x16x128xf32> to vector<16x128xf32>
    %1109 = vector.broadcast %1106 : f32 to vector<16x128xf32>
    %1110 = arith.mulf %1109, %1108 : vector<16x128xf32>
    %1111 = arith.addf %1105, %1110 : vector<16x128xf32>
    %c6_945 = arith.constant 6 : index
    %c8_946 = arith.constant 8 : index
    %1112 = memref.load %arg4[%c6_945, %c8_946] : memref<8x29xf32, #tpu.memory_space<smem>>
    %c0_947 = arith.constant 0 : index
    %c0_948 = arith.constant 0 : index
    %c256_949 = arith.constant 256 : index
    %1113 = vector.load %arg8[%c0_947, %c0_948, %c256_949] : memref<3x16x384xf32, #tpu.memory_space<vmem>>, vector<1x16x128xf32>
    %1114 = vector.shape_cast %1113 : vector<1x16x128xf32> to vector<16x128xf32>
    %1115 = vector.broadcast %1112 : f32 to vector<16x128xf32>
    %1116 = arith.mulf %1115, %1114 : vector<16x128xf32>
    %1117 = arith.addf %1111, %1116 : vector<16x128xf32>
    %c6_950 = arith.constant 6 : index
    %c15_951 = arith.constant 15 : index
    %1118 = memref.load %arg4[%c6_950, %c15_951] : memref<8x29xf32, #tpu.memory_space<smem>>
    %c1_952 = arith.constant 1 : index
    %c0_953 = arith.constant 0 : index
    %c0_954 = arith.constant 0 : index
    %1119 = vector.load %arg8[%c1_952, %c0_953, %c0_954] : memref<3x16x384xf32, #tpu.memory_space<vmem>>, vector<1x16x128xf32>
    %1120 = vector.shape_cast %1119 : vector<1x16x128xf32> to vector<16x128xf32>
    %1121 = vector.broadcast %1118 : f32 to vector<16x128xf32>
    %1122 = arith.mulf %1121, %1120 : vector<16x128xf32>
    %1123 = arith.addf %1117, %1122 : vector<16x128xf32>
    %c6_955 = arith.constant 6 : index
    %c16_956 = arith.constant 16 : index
    %1124 = memref.load %arg4[%c6_955, %c16_956] : memref<8x29xf32, #tpu.memory_space<smem>>
    %c1_957 = arith.constant 1 : index
    %c0_958 = arith.constant 0 : index
    %c128_959 = arith.constant 128 : index
    %1125 = vector.load %arg8[%c1_957, %c0_958, %c128_959] : memref<3x16x384xf32, #tpu.memory_space<vmem>>, vector<1x16x128xf32>
    %1126 = vector.shape_cast %1125 : vector<1x16x128xf32> to vector<16x128xf32>
    %1127 = vector.broadcast %1124 : f32 to vector<16x128xf32>
    %1128 = arith.mulf %1127, %1126 : vector<16x128xf32>
    %1129 = arith.addf %1123, %1128 : vector<16x128xf32>
    %c6_960 = arith.constant 6 : index
    %c17_961 = arith.constant 17 : index
    %1130 = memref.load %arg4[%c6_960, %c17_961] : memref<8x29xf32, #tpu.memory_space<smem>>
    %c1_962 = arith.constant 1 : index
    %c0_963 = arith.constant 0 : index
    %c256_964 = arith.constant 256 : index
    %1131 = vector.load %arg8[%c1_962, %c0_963, %c256_964] : memref<3x16x384xf32, #tpu.memory_space<vmem>>, vector<1x16x128xf32>
    %1132 = vector.shape_cast %1131 : vector<1x16x128xf32> to vector<16x128xf32>
    %1133 = vector.broadcast %1130 : f32 to vector<16x128xf32>
    %1134 = arith.mulf %1133, %1132 : vector<16x128xf32>
    %1135 = arith.addf %1129, %1134 : vector<16x128xf32>
    %c6_965 = arith.constant 6 : index
    %c24_966 = arith.constant 24 : index
    %1136 = memref.load %arg4[%c6_965, %c24_966] : memref<8x29xf32, #tpu.memory_space<smem>>
    %c2_967 = arith.constant 2 : index
    %c0_968 = arith.constant 0 : index
    %c0_969 = arith.constant 0 : index
    %1137 = vector.load %arg8[%c2_967, %c0_968, %c0_969] : memref<3x16x384xf32, #tpu.memory_space<vmem>>, vector<1x16x128xf32>
    %1138 = vector.shape_cast %1137 : vector<1x16x128xf32> to vector<16x128xf32>
    %1139 = vector.broadcast %1136 : f32 to vector<16x128xf32>
    %1140 = arith.mulf %1139, %1138 : vector<16x128xf32>
    %1141 = arith.addf %1135, %1140 : vector<16x128xf32>
    %c6_970 = arith.constant 6 : index
    %c25_971 = arith.constant 25 : index
    %1142 = memref.load %arg4[%c6_970, %c25_971] : memref<8x29xf32, #tpu.memory_space<smem>>
    %c2_972 = arith.constant 2 : index
    %c0_973 = arith.constant 0 : index
    %c128_974 = arith.constant 128 : index
    %1143 = vector.load %arg8[%c2_972, %c0_973, %c128_974] : memref<3x16x384xf32, #tpu.memory_space<vmem>>, vector<1x16x128xf32>
    %1144 = vector.shape_cast %1143 : vector<1x16x128xf32> to vector<16x128xf32>
    %1145 = vector.broadcast %1142 : f32 to vector<16x128xf32>
    %1146 = arith.mulf %1145, %1144 : vector<16x128xf32>
    %1147 = arith.addf %1141, %1146 : vector<16x128xf32>
    %c6_975 = arith.constant 6 : index
    %c26_976 = arith.constant 26 : index
    %1148 = memref.load %arg4[%c6_975, %c26_976] : memref<8x29xf32, #tpu.memory_space<smem>>
    %c2_977 = arith.constant 2 : index
    %c0_978 = arith.constant 0 : index
    %c256_979 = arith.constant 256 : index
    %1149 = vector.load %arg8[%c2_977, %c0_978, %c256_979] : memref<3x16x384xf32, #tpu.memory_space<vmem>>, vector<1x16x128xf32>
    %1150 = vector.shape_cast %1149 : vector<1x16x128xf32> to vector<16x128xf32>
    %1151 = vector.broadcast %1148 : f32 to vector<16x128xf32>
    %1152 = arith.mulf %1151, %1150 : vector<16x128xf32>
    %1153 = arith.addf %1147, %1152 : vector<16x128xf32>
    %c32_980 = arith.constant 32 : index
    %c768_981 = arith.constant 768 : index
    %1154 = vector.load %arg9[%c32_980, %c768_981] : memref<48x1024xf32, #tpu.memory_space<vmem>>, vector<16x128xf32>
    tpu.vector_store %arg9[%c32_980, %c768_981], %1153 {strides = array<i32>} : memref<48x1024xf32, #tpu.memory_space<vmem>>, vector<16x128xf32>,
    %c7_982 = arith.constant 7 : index
    %c0_983 = arith.constant 0 : index
    %1155 = memref.load %arg4[%c7_982, %c0_983] : memref<8x29xf32, #tpu.memory_space<smem>>
    %c0_984 = arith.constant 0 : index
    %c0_985 = arith.constant 0 : index
    %c0_986 = arith.constant 0 : index
    %1156 = vector.load %arg8[%c0_984, %c0_985, %c0_986] : memref<3x16x384xf32, #tpu.memory_space<vmem>>, vector<1x16x128xf32>
    %1157 = vector.shape_cast %1156 : vector<1x16x128xf32> to vector<16x128xf32>
    %1158 = vector.broadcast %1155 : f32 to vector<16x128xf32>
    %1159 = arith.mulf %1158, %1157 : vector<16x128xf32>
    %c7_987 = arith.constant 7 : index
    %c1_988 = arith.constant 1 : index
    %1160 = memref.load %arg4[%c7_987, %c1_988] : memref<8x29xf32, #tpu.memory_space<smem>>
    %c0_989 = arith.constant 0 : index
    %c0_990 = arith.constant 0 : index
    %c128_991 = arith.constant 128 : index
    %1161 = vector.load %arg8[%c0_989, %c0_990, %c128_991] : memref<3x16x384xf32, #tpu.memory_space<vmem>>, vector<1x16x128xf32>
    %1162 = vector.shape_cast %1161 : vector<1x16x128xf32> to vector<16x128xf32>
    %1163 = vector.broadcast %1160 : f32 to vector<16x128xf32>
    %1164 = arith.mulf %1163, %1162 : vector<16x128xf32>
    %1165 = arith.addf %1159, %1164 : vector<16x128xf32>
    %c7_992 = arith.constant 7 : index
    %c2_993 = arith.constant 2 : index
    %1166 = memref.load %arg4[%c7_992, %c2_993] : memref<8x29xf32, #tpu.memory_space<smem>>
    %c0_994 = arith.constant 0 : index
    %c0_995 = arith.constant 0 : index
    %c256_996 = arith.constant 256 : index
    %1167 = vector.load %arg8[%c0_994, %c0_995, %c256_996] : memref<3x16x384xf32, #tpu.memory_space<vmem>>, vector<1x16x128xf32>
    %1168 = vector.shape_cast %1167 : vector<1x16x128xf32> to vector<16x128xf32>
    %1169 = vector.broadcast %1166 : f32 to vector<16x128xf32>
    %1170 = arith.mulf %1169, %1168 : vector<16x128xf32>
    %1171 = arith.addf %1165, %1170 : vector<16x128xf32>
    %c7_997 = arith.constant 7 : index
    %c9_998 = arith.constant 9 : index
    %1172 = memref.load %arg4[%c7_997, %c9_998] : memref<8x29xf32, #tpu.memory_space<smem>>
    %c1_999 = arith.constant 1 : index
    %c0_1000 = arith.constant 0 : index
    %c0_1001 = arith.constant 0 : index
    %1173 = vector.load %arg8[%c1_999, %c0_1000, %c0_1001] : memref<3x16x384xf32, #tpu.memory_space<vmem>>, vector<1x16x128xf32>
    %1174 = vector.shape_cast %1173 : vector<1x16x128xf32> to vector<16x128xf32>
    %1175 = vector.broadcast %1172 : f32 to vector<16x128xf32>
    %1176 = arith.mulf %1175, %1174 : vector<16x128xf32>
    %1177 = arith.addf %1171, %1176 : vector<16x128xf32>
    %c7_1002 = arith.constant 7 : index
    %c10_1003 = arith.constant 10 : index
    %1178 = memref.load %arg4[%c7_1002, %c10_1003] : memref<8x29xf32, #tpu.memory_space<smem>>
    %c1_1004 = arith.constant 1 : index
    %c0_1005 = arith.constant 0 : index
    %c128_1006 = arith.constant 128 : index
    %1179 = vector.load %arg8[%c1_1004, %c0_1005, %c128_1006] : memref<3x16x384xf32, #tpu.memory_space<vmem>>, vector<1x16x128xf32>
    %1180 = vector.shape_cast %1179 : vector<1x16x128xf32> to vector<16x128xf32>
    %1181 = vector.broadcast %1178 : f32 to vector<16x128xf32>
    %1182 = arith.mulf %1181, %1180 : vector<16x128xf32>
    %1183 = arith.addf %1177, %1182 : vector<16x128xf32>
    %c7_1007 = arith.constant 7 : index
    %c11_1008 = arith.constant 11 : index
    %1184 = memref.load %arg4[%c7_1007, %c11_1008] : memref<8x29xf32, #tpu.memory_space<smem>>
    %c1_1009 = arith.constant 1 : index
    %c0_1010 = arith.constant 0 : index
    %c256_1011 = arith.constant 256 : index
    %1185 = vector.load %arg8[%c1_1009, %c0_1010, %c256_1011] : memref<3x16x384xf32, #tpu.memory_space<vmem>>, vector<1x16x128xf32>
    %1186 = vector.shape_cast %1185 : vector<1x16x128xf32> to vector<16x128xf32>
    %1187 = vector.broadcast %1184 : f32 to vector<16x128xf32>
    %1188 = arith.mulf %1187, %1186 : vector<16x128xf32>
    %1189 = arith.addf %1183, %1188 : vector<16x128xf32>
    %c7_1012 = arith.constant 7 : index
    %c18_1013 = arith.constant 18 : index
    %1190 = memref.load %arg4[%c7_1012, %c18_1013] : memref<8x29xf32, #tpu.memory_space<smem>>
    %c2_1014 = arith.constant 2 : index
    %c0_1015 = arith.constant 0 : index
    %c0_1016 = arith.constant 0 : index
    %1191 = vector.load %arg8[%c2_1014, %c0_1015, %c0_1016] : memref<3x16x384xf32, #tpu.memory_space<vmem>>, vector<1x16x128xf32>
    %1192 = vector.shape_cast %1191 : vector<1x16x128xf32> to vector<16x128xf32>
    %1193 = vector.broadcast %1190 : f32 to vector<16x128xf32>
    %1194 = arith.mulf %1193, %1192 : vector<16x128xf32>
    %1195 = arith.addf %1189, %1194 : vector<16x128xf32>
    %c7_1017 = arith.constant 7 : index
    %c19_1018 = arith.constant 19 : index
    %1196 = memref.load %arg4[%c7_1017, %c19_1018] : memref<8x29xf32, #tpu.memory_space<smem>>
    %c2_1019 = arith.constant 2 : index
    %c0_1020 = arith.constant 0 : index
    %c128_1021 = arith.constant 128 : index
    %1197 = vector.load %arg8[%c2_1019, %c0_1020, %c128_1021] : memref<3x16x384xf32, #tpu.memory_space<vmem>>, vector<1x16x128xf32>
    %1198 = vector.shape_cast %1197 : vector<1x16x128xf32> to vector<16x128xf32>
    %1199 = vector.broadcast %1196 : f32 to vector<16x128xf32>
    %1200 = arith.mulf %1199, %1198 : vector<16x128xf32>
    %1201 = arith.addf %1195, %1200 : vector<16x128xf32>
    %c7_1022 = arith.constant 7 : index
    %c20_1023 = arith.constant 20 : index
    %1202 = memref.load %arg4[%c7_1022, %c20_1023] : memref<8x29xf32, #tpu.memory_space<smem>>
    %c2_1024 = arith.constant 2 : index
    %c0_1025 = arith.constant 0 : index
    %c256_1026 = arith.constant 256 : index
    %1203 = vector.load %arg8[%c2_1024, %c0_1025, %c256_1026] : memref<3x16x384xf32, #tpu.memory_space<vmem>>, vector<1x16x128xf32>
    %1204 = vector.shape_cast %1203 : vector<1x16x128xf32> to vector<16x128xf32>
    %1205 = vector.broadcast %1202 : f32 to vector<16x128xf32>
    %1206 = arith.mulf %1205, %1204 : vector<16x128xf32>
    %1207 = arith.addf %1201, %1206 : vector<16x128xf32>
    %c0_1027 = arith.constant 0 : index
    %c896 = arith.constant 896 : index
    %1208 = vector.load %arg9[%c0_1027, %c896] : memref<48x1024xf32, #tpu.memory_space<vmem>>, vector<16x128xf32>
    tpu.vector_store %arg9[%c0_1027, %c896], %1207 {strides = array<i32>} : memref<48x1024xf32, #tpu.memory_space<vmem>>, vector<16x128xf32>,
    %c7_1028 = arith.constant 7 : index
    %c3_1029 = arith.constant 3 : index
    %1209 = memref.load %arg4[%c7_1028, %c3_1029] : memref<8x29xf32, #tpu.memory_space<smem>>
    %c0_1030 = arith.constant 0 : index
    %c0_1031 = arith.constant 0 : index
    %c0_1032 = arith.constant 0 : index
    %1210 = vector.load %arg8[%c0_1030, %c0_1031, %c0_1032] : memref<3x16x384xf32, #tpu.memory_space<vmem>>, vector<1x16x128xf32>
    %1211 = vector.shape_cast %1210 : vector<1x16x128xf32> to vector<16x128xf32>
    %1212 = vector.broadcast %1209 : f32 to vector<16x128xf32>
    %1213 = arith.mulf %1212, %1211 : vector<16x128xf32>
    %c7_1033 = arith.constant 7 : index
    %c4_1034 = arith.constant 4 : index
    %1214 = memref.load %arg4[%c7_1033, %c4_1034] : memref<8x29xf32, #tpu.memory_space<smem>>
    %c0_1035 = arith.constant 0 : index
    %c0_1036 = arith.constant 0 : index
    %c128_1037 = arith.constant 128 : index
    %1215 = vector.load %arg8[%c0_1035, %c0_1036, %c128_1037] : memref<3x16x384xf32, #tpu.memory_space<vmem>>, vector<1x16x128xf32>
    %1216 = vector.shape_cast %1215 : vector<1x16x128xf32> to vector<16x128xf32>
    %1217 = vector.broadcast %1214 : f32 to vector<16x128xf32>
    %1218 = arith.mulf %1217, %1216 : vector<16x128xf32>
    %1219 = arith.addf %1213, %1218 : vector<16x128xf32>
    %c7_1038 = arith.constant 7 : index
    %c5_1039 = arith.constant 5 : index
    %1220 = memref.load %arg4[%c7_1038, %c5_1039] : memref<8x29xf32, #tpu.memory_space<smem>>
    %c0_1040 = arith.constant 0 : index
    %c0_1041 = arith.constant 0 : index
    %c256_1042 = arith.constant 256 : index
    %1221 = vector.load %arg8[%c0_1040, %c0_1041, %c256_1042] : memref<3x16x384xf32, #tpu.memory_space<vmem>>, vector<1x16x128xf32>
    %1222 = vector.shape_cast %1221 : vector<1x16x128xf32> to vector<16x128xf32>
    %1223 = vector.broadcast %1220 : f32 to vector<16x128xf32>
    %1224 = arith.mulf %1223, %1222 : vector<16x128xf32>
    %1225 = arith.addf %1219, %1224 : vector<16x128xf32>
    %c7_1043 = arith.constant 7 : index
    %c12_1044 = arith.constant 12 : index
    %1226 = memref.load %arg4[%c7_1043, %c12_1044] : memref<8x29xf32, #tpu.memory_space<smem>>
    %c1_1045 = arith.constant 1 : index
    %c0_1046 = arith.constant 0 : index
    %c0_1047 = arith.constant 0 : index
    %1227 = vector.load %arg8[%c1_1045, %c0_1046, %c0_1047] : memref<3x16x384xf32, #tpu.memory_space<vmem>>, vector<1x16x128xf32>
    %1228 = vector.shape_cast %1227 : vector<1x16x128xf32> to vector<16x128xf32>
    %1229 = vector.broadcast %1226 : f32 to vector<16x128xf32>
    %1230 = arith.mulf %1229, %1228 : vector<16x128xf32>
    %1231 = arith.addf %1225, %1230 : vector<16x128xf32>
    %c7_1048 = arith.constant 7 : index
    %c13_1049 = arith.constant 13 : index
    %1232 = memref.load %arg4[%c7_1048, %c13_1049] : memref<8x29xf32, #tpu.memory_space<smem>>
    %c1_1050 = arith.constant 1 : index
    %c0_1051 = arith.constant 0 : index
    %c128_1052 = arith.constant 128 : index
    %1233 = vector.load %arg8[%c1_1050, %c0_1051, %c128_1052] : memref<3x16x384xf32, #tpu.memory_space<vmem>>, vector<1x16x128xf32>
    %1234 = vector.shape_cast %1233 : vector<1x16x128xf32> to vector<16x128xf32>
    %1235 = vector.broadcast %1232 : f32 to vector<16x128xf32>
    %1236 = arith.mulf %1235, %1234 : vector<16x128xf32>
    %1237 = arith.addf %1231, %1236 : vector<16x128xf32>
    %c7_1053 = arith.constant 7 : index
    %c14_1054 = arith.constant 14 : index
    %1238 = memref.load %arg4[%c7_1053, %c14_1054] : memref<8x29xf32, #tpu.memory_space<smem>>
    %c1_1055 = arith.constant 1 : index
    %c0_1056 = arith.constant 0 : index
    %c256_1057 = arith.constant 256 : index
    %1239 = vector.load %arg8[%c1_1055, %c0_1056, %c256_1057] : memref<3x16x384xf32, #tpu.memory_space<vmem>>, vector<1x16x128xf32>
    %1240 = vector.shape_cast %1239 : vector<1x16x128xf32> to vector<16x128xf32>
    %1241 = vector.broadcast %1238 : f32 to vector<16x128xf32>
    %1242 = arith.mulf %1241, %1240 : vector<16x128xf32>
    %1243 = arith.addf %1237, %1242 : vector<16x128xf32>
    %c7_1058 = arith.constant 7 : index
    %c21_1059 = arith.constant 21 : index
    %1244 = memref.load %arg4[%c7_1058, %c21_1059] : memref<8x29xf32, #tpu.memory_space<smem>>
    %c2_1060 = arith.constant 2 : index
    %c0_1061 = arith.constant 0 : index
    %c0_1062 = arith.constant 0 : index
    %1245 = vector.load %arg8[%c2_1060, %c0_1061, %c0_1062] : memref<3x16x384xf32, #tpu.memory_space<vmem>>, vector<1x16x128xf32>
    %1246 = vector.shape_cast %1245 : vector<1x16x128xf32> to vector<16x128xf32>
    %1247 = vector.broadcast %1244 : f32 to vector<16x128xf32>
    %1248 = arith.mulf %1247, %1246 : vector<16x128xf32>
    %1249 = arith.addf %1243, %1248 : vector<16x128xf32>
    %c7_1063 = arith.constant 7 : index
    %c22_1064 = arith.constant 22 : index
    %1250 = memref.load %arg4[%c7_1063, %c22_1064] : memref<8x29xf32, #tpu.memory_space<smem>>
    %c2_1065 = arith.constant 2 : index
    %c0_1066 = arith.constant 0 : index
    %c128_1067 = arith.constant 128 : index
    %1251 = vector.load %arg8[%c2_1065, %c0_1066, %c128_1067] : memref<3x16x384xf32, #tpu.memory_space<vmem>>, vector<1x16x128xf32>
    %1252 = vector.shape_cast %1251 : vector<1x16x128xf32> to vector<16x128xf32>
    %1253 = vector.broadcast %1250 : f32 to vector<16x128xf32>
    %1254 = arith.mulf %1253, %1252 : vector<16x128xf32>
    %1255 = arith.addf %1249, %1254 : vector<16x128xf32>
    %c7_1068 = arith.constant 7 : index
    %c23_1069 = arith.constant 23 : index
    %1256 = memref.load %arg4[%c7_1068, %c23_1069] : memref<8x29xf32, #tpu.memory_space<smem>>
    %c2_1070 = arith.constant 2 : index
    %c0_1071 = arith.constant 0 : index
    %c256_1072 = arith.constant 256 : index
    %1257 = vector.load %arg8[%c2_1070, %c0_1071, %c256_1072] : memref<3x16x384xf32, #tpu.memory_space<vmem>>, vector<1x16x128xf32>
    %1258 = vector.shape_cast %1257 : vector<1x16x128xf32> to vector<16x128xf32>
    %1259 = vector.broadcast %1256 : f32 to vector<16x128xf32>
    %1260 = arith.mulf %1259, %1258 : vector<16x128xf32>
    %1261 = arith.addf %1255, %1260 : vector<16x128xf32>
    %c16_1073 = arith.constant 16 : index
    %c896_1074 = arith.constant 896 : index
    %1262 = vector.load %arg9[%c16_1073, %c896_1074] : memref<48x1024xf32, #tpu.memory_space<vmem>>, vector<16x128xf32>
    tpu.vector_store %arg9[%c16_1073, %c896_1074], %1261 {strides = array<i32>} : memref<48x1024xf32, #tpu.memory_space<vmem>>, vector<16x128xf32>,
    %c7_1075 = arith.constant 7 : index
    %c6_1076 = arith.constant 6 : index
    %1263 = memref.load %arg4[%c7_1075, %c6_1076] : memref<8x29xf32, #tpu.memory_space<smem>>
    %c0_1077 = arith.constant 0 : index
    %c0_1078 = arith.constant 0 : index
    %c0_1079 = arith.constant 0 : index
    %1264 = vector.load %arg8[%c0_1077, %c0_1078, %c0_1079] : memref<3x16x384xf32, #tpu.memory_space<vmem>>, vector<1x16x128xf32>
    %1265 = vector.shape_cast %1264 : vector<1x16x128xf32> to vector<16x128xf32>
    %1266 = vector.broadcast %1263 : f32 to vector<16x128xf32>
    %1267 = arith.mulf %1266, %1265 : vector<16x128xf32>
    %c7_1080 = arith.constant 7 : index
    %c7_1081 = arith.constant 7 : index
    %1268 = memref.load %arg4[%c7_1080, %c7_1081] : memref<8x29xf32, #tpu.memory_space<smem>>
    %c0_1082 = arith.constant 0 : index
    %c0_1083 = arith.constant 0 : index
    %c128_1084 = arith.constant 128 : index
    %1269 = vector.load %arg8[%c0_1082, %c0_1083, %c128_1084] : memref<3x16x384xf32, #tpu.memory_space<vmem>>, vector<1x16x128xf32>
    %1270 = vector.shape_cast %1269 : vector<1x16x128xf32> to vector<16x128xf32>
    %1271 = vector.broadcast %1268 : f32 to vector<16x128xf32>
    %1272 = arith.mulf %1271, %1270 : vector<16x128xf32>
    %1273 = arith.addf %1267, %1272 : vector<16x128xf32>
    %c7_1085 = arith.constant 7 : index
    %c8_1086 = arith.constant 8 : index
    %1274 = memref.load %arg4[%c7_1085, %c8_1086] : memref<8x29xf32, #tpu.memory_space<smem>>
    %c0_1087 = arith.constant 0 : index
    %c0_1088 = arith.constant 0 : index
    %c256_1089 = arith.constant 256 : index
    %1275 = vector.load %arg8[%c0_1087, %c0_1088, %c256_1089] : memref<3x16x384xf32, #tpu.memory_space<vmem>>, vector<1x16x128xf32>
    %1276 = vector.shape_cast %1275 : vector<1x16x128xf32> to vector<16x128xf32>
    %1277 = vector.broadcast %1274 : f32 to vector<16x128xf32>
    %1278 = arith.mulf %1277, %1276 : vector<16x128xf32>
    %1279 = arith.addf %1273, %1278 : vector<16x128xf32>
    %c7_1090 = arith.constant 7 : index
    %c15_1091 = arith.constant 15 : index
    %1280 = memref.load %arg4[%c7_1090, %c15_1091] : memref<8x29xf32, #tpu.memory_space<smem>>
    %c1_1092 = arith.constant 1 : index
    %c0_1093 = arith.constant 0 : index
    %c0_1094 = arith.constant 0 : index
    %1281 = vector.load %arg8[%c1_1092, %c0_1093, %c0_1094] : memref<3x16x384xf32, #tpu.memory_space<vmem>>, vector<1x16x128xf32>
    %1282 = vector.shape_cast %1281 : vector<1x16x128xf32> to vector<16x128xf32>
    %1283 = vector.broadcast %1280 : f32 to vector<16x128xf32>
    %1284 = arith.mulf %1283, %1282 : vector<16x128xf32>
    %1285 = arith.addf %1279, %1284 : vector<16x128xf32>
    %c7_1095 = arith.constant 7 : index
    %c16_1096 = arith.constant 16 : index
    %1286 = memref.load %arg4[%c7_1095, %c16_1096] : memref<8x29xf32, #tpu.memory_space<smem>>
    %c1_1097 = arith.constant 1 : index
    %c0_1098 = arith.constant 0 : index
    %c128_1099 = arith.constant 128 : index
    %1287 = vector.load %arg8[%c1_1097, %c0_1098, %c128_1099] : memref<3x16x384xf32, #tpu.memory_space<vmem>>, vector<1x16x128xf32>
    %1288 = vector.shape_cast %1287 : vector<1x16x128xf32> to vector<16x128xf32>
    %1289 = vector.broadcast %1286 : f32 to vector<16x128xf32>
    %1290 = arith.mulf %1289, %1288 : vector<16x128xf32>
    %1291 = arith.addf %1285, %1290 : vector<16x128xf32>
    %c7_1100 = arith.constant 7 : index
    %c17_1101 = arith.constant 17 : index
    %1292 = memref.load %arg4[%c7_1100, %c17_1101] : memref<8x29xf32, #tpu.memory_space<smem>>
    %c1_1102 = arith.constant 1 : index
    %c0_1103 = arith.constant 0 : index
    %c256_1104 = arith.constant 256 : index
    %1293 = vector.load %arg8[%c1_1102, %c0_1103, %c256_1104] : memref<3x16x384xf32, #tpu.memory_space<vmem>>, vector<1x16x128xf32>
    %1294 = vector.shape_cast %1293 : vector<1x16x128xf32> to vector<16x128xf32>
    %1295 = vector.broadcast %1292 : f32 to vector<16x128xf32>
    %1296 = arith.mulf %1295, %1294 : vector<16x128xf32>
    %1297 = arith.addf %1291, %1296 : vector<16x128xf32>
    %c7_1105 = arith.constant 7 : index
    %c24_1106 = arith.constant 24 : index
    %1298 = memref.load %arg4[%c7_1105, %c24_1106] : memref<8x29xf32, #tpu.memory_space<smem>>
    %c2_1107 = arith.constant 2 : index
    %c0_1108 = arith.constant 0 : index
    %c0_1109 = arith.constant 0 : index
    %1299 = vector.load %arg8[%c2_1107, %c0_1108, %c0_1109] : memref<3x16x384xf32, #tpu.memory_space<vmem>>, vector<1x16x128xf32>
    %1300 = vector.shape_cast %1299 : vector<1x16x128xf32> to vector<16x128xf32>
    %1301 = vector.broadcast %1298 : f32 to vector<16x128xf32>
    %1302 = arith.mulf %1301, %1300 : vector<16x128xf32>
    %1303 = arith.addf %1297, %1302 : vector<16x128xf32>
    %c7_1110 = arith.constant 7 : index
    %c25_1111 = arith.constant 25 : index
    %1304 = memref.load %arg4[%c7_1110, %c25_1111] : memref<8x29xf32, #tpu.memory_space<smem>>
    %c2_1112 = arith.constant 2 : index
    %c0_1113 = arith.constant 0 : index
    %c128_1114 = arith.constant 128 : index
    %1305 = vector.load %arg8[%c2_1112, %c0_1113, %c128_1114] : memref<3x16x384xf32, #tpu.memory_space<vmem>>, vector<1x16x128xf32>
    %1306 = vector.shape_cast %1305 : vector<1x16x128xf32> to vector<16x128xf32>
    %1307 = vector.broadcast %1304 : f32 to vector<16x128xf32>
    %1308 = arith.mulf %1307, %1306 : vector<16x128xf32>
    %1309 = arith.addf %1303, %1308 : vector<16x128xf32>
    %c7_1115 = arith.constant 7 : index
    %c26_1116 = arith.constant 26 : index
    %1310 = memref.load %arg4[%c7_1115, %c26_1116] : memref<8x29xf32, #tpu.memory_space<smem>>
    %c2_1117 = arith.constant 2 : index
    %c0_1118 = arith.constant 0 : index
    %c256_1119 = arith.constant 256 : index
    %1311 = vector.load %arg8[%c2_1117, %c0_1118, %c256_1119] : memref<3x16x384xf32, #tpu.memory_space<vmem>>, vector<1x16x128xf32>
    %1312 = vector.shape_cast %1311 : vector<1x16x128xf32> to vector<16x128xf32>
    %1313 = vector.broadcast %1310 : f32 to vector<16x128xf32>
    %1314 = arith.mulf %1313, %1312 : vector<16x128xf32>
    %1315 = arith.addf %1309, %1314 : vector<16x128xf32>
    %c32_1120 = arith.constant 32 : index
    %c896_1121 = arith.constant 896 : index
    %1316 = vector.load %arg9[%c32_1120, %c896_1121] : memref<48x1024xf32, #tpu.memory_space<vmem>>, vector<16x128xf32>
    tpu.vector_store %arg9[%c32_1120, %c896_1121], %1315 {strides = array<i32>} : memref<48x1024xf32, #tpu.memory_space<vmem>>, vector<16x128xf32>,
    %c0_1122 = arith.constant 0 : index
    %c0_1123 = arith.constant 0 : index
    %1317 = vector.load %arg6[%c0_1122, %c0_1123] : memref<1x512xf32, #tpu.memory_space<vmem>>, vector<1x512xf32>
    %c0_1124 = arith.constant 0 : index
    %c0_1125 = arith.constant 0 : index
    %1318 = vector.load %arg2[%c0_1124, %c0_1125] : memref<112x48xf32, #tpu.memory_space<vmem>>, vector<112x48xf32>
    %c0_1126 = arith.constant 0 : index
    %c0_1127 = arith.constant 0 : index
    %1319 = vector.load %arg9[%c0_1126, %c0_1127] : memref<48x1024xf32, #tpu.memory_space<vmem>>, vector<48x128xf32>
    %cst_1128 = arith.constant dense<0.000000e+00> : vector<112x128xf32>
    %1320 = tpu.matmul %1318, %1319, %cst_1128 {dimension_numbers = #tpu.dot_dimension_numbers<[1], [0], [0], [1], [0, 0, 1, 1], [], []>} : vector<112x48xf32>, vector<48x128xf32>, vector<112x128xf32> -> vector<112x128xf32>
    %1321 = vector.extract_strided_slice %1320 {offsets = [0, 0], sizes = [112, 112], strides = [1, 1]} : vector<112x128xf32> to vector<112x112xf32>
    %c0_1129 = arith.constant 0 : index
    %c27 = arith.constant 27 : index
    %1322 = memref.load %arg4[%c0_1129, %c27] : memref<8x29xf32, #tpu.memory_space<smem>>
    %1323 = vector.broadcast %1322 : f32 to vector<112x112xf32>
    %1324 = arith.addf %1321, %1323 : vector<112x112xf32>
    %c0_1130 = arith.constant 0 : index
    %c28 = arith.constant 28 : index
    %1325 = memref.load %arg4[%c0_1130, %c28] : memref<8x29xf32, #tpu.memory_space<smem>>
    %cst_1131 = arith.constant 0.000000e+00 : f32
    %1326 = vector.broadcast %cst_1131 : f32 to vector<112x112xf32>
    %1327 = arith.cmpf oge, %1324, %1326 : vector<112x112xf32>
    %1328 = vector.broadcast %1325 : f32 to vector<112x112xf32>
    %1329 = arith.mulf %1324, %1328 : vector<112x112xf32>
    %1330 = arith.select %1327, %1324, %1329 : vector<112x112xi1>, vector<112x112xf32>
    %1331 = vector.shape_cast %1330 : vector<112x112xf32> to vector<1x112x112xf32>
    %cst_1132 = arith.constant dense<0.000000e+00> : vector<1xf32>
    %1332 = vector.multi_reduction <add>, %1331, %cst_1132 [1, 2] : vector<1x112x112xf32> to vector<1xf32>
    %1333 = vector.shape_cast %1332 : vector<1xf32> to vector<1x1x1xf32>
    %1334 = vector.extract %1333[0, 0, 0] : f32 from vector<1x1x1xf32>
    %1335 = vector.broadcast %1334 : f32 to vector<1x1xf32>
    %cst_1133 = arith.constant 7.97193861E-5 : f32
    %1336 = vector.broadcast %cst_1133 : f32 to vector<1x1xf32>
    %1337 = arith.mulf %1335, %1336 : vector<1x1xf32>
    %c0_1134 = arith.constant 0 : index
    %c0_1135 = arith.constant 0 : index
    %1338 = vector.load %arg5[%c0_1134, %c0_1135] : memref<8x512xf32, #tpu.memory_space<vmem>>, vector<1x512xf32>
    %1339 = vector.broadcast %1337 : vector<1x1xf32> to vector<1x512xf32>
    %1340 = arith.mulf %1339, %1338 : vector<1x512xf32>
    %1341 = arith.addf %1317, %1340 : vector<1x512xf32>
    %c0_1136 = arith.constant 0 : index
    %c0_1137 = arith.constant 0 : index
    %1342 = vector.load %arg2[%c0_1136, %c0_1137] : memref<112x48xf32, #tpu.memory_space<vmem>>, vector<112x48xf32>
    %c0_1138 = arith.constant 0 : index
    %c128_1139 = arith.constant 128 : index
    %1343 = vector.load %arg9[%c0_1138, %c128_1139] : memref<48x1024xf32, #tpu.memory_space<vmem>>, vector<48x128xf32>
    %cst_1140 = arith.constant dense<0.000000e+00> : vector<112x128xf32>
    %1344 = tpu.matmul %1342, %1343, %cst_1140 {dimension_numbers = #tpu.dot_dimension_numbers<[1], [0], [0], [1], [0, 0, 1, 1], [], []>} : vector<112x48xf32>, vector<48x128xf32>, vector<112x128xf32> -> vector<112x128xf32>
    %1345 = vector.extract_strided_slice %1344 {offsets = [0, 0], sizes = [112, 112], strides = [1, 1]} : vector<112x128xf32> to vector<112x112xf32>
    %c1_1141 = arith.constant 1 : index
    %c27_1142 = arith.constant 27 : index
    %1346 = memref.load %arg4[%c1_1141, %c27_1142] : memref<8x29xf32, #tpu.memory_space<smem>>
    %1347 = vector.broadcast %1346 : f32 to vector<112x112xf32>
    %1348 = arith.addf %1345, %1347 : vector<112x112xf32>
    %c1_1143 = arith.constant 1 : index
    %c28_1144 = arith.constant 28 : index
    %1349 = memref.load %arg4[%c1_1143, %c28_1144] : memref<8x29xf32, #tpu.memory_space<smem>>
    %cst_1145 = arith.constant 0.000000e+00 : f32
    %1350 = vector.broadcast %cst_1145 : f32 to vector<112x112xf32>
    %1351 = arith.cmpf oge, %1348, %1350 : vector<112x112xf32>
    %1352 = vector.broadcast %1349 : f32 to vector<112x112xf32>
    %1353 = arith.mulf %1348, %1352 : vector<112x112xf32>
    %1354 = arith.select %1351, %1348, %1353 : vector<112x112xi1>, vector<112x112xf32>
    %1355 = vector.shape_cast %1354 : vector<112x112xf32> to vector<1x112x112xf32>
    %cst_1146 = arith.constant dense<0.000000e+00> : vector<1xf32>
    %1356 = vector.multi_reduction <add>, %1355, %cst_1146 [1, 2] : vector<1x112x112xf32> to vector<1xf32>
    %1357 = vector.shape_cast %1356 : vector<1xf32> to vector<1x1x1xf32>
    %1358 = vector.extract %1357[0, 0, 0] : f32 from vector<1x1x1xf32>
    %1359 = vector.broadcast %1358 : f32 to vector<1x1xf32>
    %cst_1147 = arith.constant 7.97193861E-5 : f32
    %1360 = vector.broadcast %cst_1147 : f32 to vector<1x1xf32>
    %1361 = arith.mulf %1359, %1360 : vector<1x1xf32>
    %c1_1148 = arith.constant 1 : index
    %c0_1149 = arith.constant 0 : index
    %1362 = vector.load %arg5[%c1_1148, %c0_1149] : memref<8x512xf32, #tpu.memory_space<vmem>>, vector<1x512xf32>
    %1363 = vector.broadcast %1361 : vector<1x1xf32> to vector<1x512xf32>
    %1364 = arith.mulf %1363, %1362 : vector<1x512xf32>
    %1365 = arith.addf %1341, %1364 : vector<1x512xf32>
    %c0_1150 = arith.constant 0 : index
    %c0_1151 = arith.constant 0 : index
    %1366 = vector.load %arg2[%c0_1150, %c0_1151] : memref<112x48xf32, #tpu.memory_space<vmem>>, vector<112x48xf32>
    %c0_1152 = arith.constant 0 : index
    %c256_1153 = arith.constant 256 : index
    %1367 = vector.load %arg9[%c0_1152, %c256_1153] : memref<48x1024xf32, #tpu.memory_space<vmem>>, vector<48x128xf32>
    %cst_1154 = arith.constant dense<0.000000e+00> : vector<112x128xf32>
    %1368 = tpu.matmul %1366, %1367, %cst_1154 {dimension_numbers = #tpu.dot_dimension_numbers<[1], [0], [0], [1], [0, 0, 1, 1], [], []>} : vector<112x48xf32>, vector<48x128xf32>, vector<112x128xf32> -> vector<112x128xf32>
    %1369 = vector.extract_strided_slice %1368 {offsets = [0, 0], sizes = [112, 112], strides = [1, 1]} : vector<112x128xf32> to vector<112x112xf32>
    %c2_1155 = arith.constant 2 : index
    %c27_1156 = arith.constant 27 : index
    %1370 = memref.load %arg4[%c2_1155, %c27_1156] : memref<8x29xf32, #tpu.memory_space<smem>>
    %1371 = vector.broadcast %1370 : f32 to vector<112x112xf32>
    %1372 = arith.addf %1369, %1371 : vector<112x112xf32>
    %c2_1157 = arith.constant 2 : index
    %c28_1158 = arith.constant 28 : index
    %1373 = memref.load %arg4[%c2_1157, %c28_1158] : memref<8x29xf32, #tpu.memory_space<smem>>
    %cst_1159 = arith.constant 0.000000e+00 : f32
    %1374 = vector.broadcast %cst_1159 : f32 to vector<112x112xf32>
    %1375 = arith.cmpf oge, %1372, %1374 : vector<112x112xf32>
    %1376 = vector.broadcast %1373 : f32 to vector<112x112xf32>
    %1377 = arith.mulf %1372, %1376 : vector<112x112xf32>
    %1378 = arith.select %1375, %1372, %1377 : vector<112x112xi1>, vector<112x112xf32>
    %1379 = vector.shape_cast %1378 : vector<112x112xf32> to vector<1x112x112xf32>
    %cst_1160 = arith.constant dense<0.000000e+00> : vector<1xf32>
    %1380 = vector.multi_reduction <add>, %1379, %cst_1160 [1, 2] : vector<1x112x112xf32> to vector<1xf32>
    %1381 = vector.shape_cast %1380 : vector<1xf32> to vector<1x1x1xf32>
    %1382 = vector.extract %1381[0, 0, 0] : f32 from vector<1x1x1xf32>
    %1383 = vector.broadcast %1382 : f32 to vector<1x1xf32>
    %cst_1161 = arith.constant 7.97193861E-5 : f32
    %1384 = vector.broadcast %cst_1161 : f32 to vector<1x1xf32>
    %1385 = arith.mulf %1383, %1384 : vector<1x1xf32>
    %c2_1162 = arith.constant 2 : index
    %c0_1163 = arith.constant 0 : index
    %1386 = vector.load %arg5[%c2_1162, %c0_1163] : memref<8x512xf32, #tpu.memory_space<vmem>>, vector<1x512xf32>
    %1387 = vector.broadcast %1385 : vector<1x1xf32> to vector<1x512xf32>
    %1388 = arith.mulf %1387, %1386 : vector<1x512xf32>
    %1389 = arith.addf %1365, %1388 : vector<1x512xf32>
    %c0_1164 = arith.constant 0 : index
    %c0_1165 = arith.constant 0 : index
    %1390 = vector.load %arg2[%c0_1164, %c0_1165] : memref<112x48xf32, #tpu.memory_space<vmem>>, vector<112x48xf32>
    %c0_1166 = arith.constant 0 : index
    %c384_1167 = arith.constant 384 : index
    %1391 = vector.load %arg9[%c0_1166, %c384_1167] : memref<48x1024xf32, #tpu.memory_space<vmem>>, vector<48x128xf32>
    %cst_1168 = arith.constant dense<0.000000e+00> : vector<112x128xf32>
    %1392 = tpu.matmul %1390, %1391, %cst_1168 {dimension_numbers = #tpu.dot_dimension_numbers<[1], [0], [0], [1], [0, 0, 1, 1], [], []>} : vector<112x48xf32>, vector<48x128xf32>, vector<112x128xf32> -> vector<112x128xf32>
    %1393 = vector.extract_strided_slice %1392 {offsets = [0, 0], sizes = [112, 112], strides = [1, 1]} : vector<112x128xf32> to vector<112x112xf32>
    %c3_1169 = arith.constant 3 : index
    %c27_1170 = arith.constant 27 : index
    %1394 = memref.load %arg4[%c3_1169, %c27_1170] : memref<8x29xf32, #tpu.memory_space<smem>>
    %1395 = vector.broadcast %1394 : f32 to vector<112x112xf32>
    %1396 = arith.addf %1393, %1395 : vector<112x112xf32>
    %c3_1171 = arith.constant 3 : index
    %c28_1172 = arith.constant 28 : index
    %1397 = memref.load %arg4[%c3_1171, %c28_1172] : memref<8x29xf32, #tpu.memory_space<smem>>
    %cst_1173 = arith.constant 0.000000e+00 : f32
    %1398 = vector.broadcast %cst_1173 : f32 to vector<112x112xf32>
    %1399 = arith.cmpf oge, %1396, %1398 : vector<112x112xf32>
    %1400 = vector.broadcast %1397 : f32 to vector<112x112xf32>
    %1401 = arith.mulf %1396, %1400 : vector<112x112xf32>
    %1402 = arith.select %1399, %1396, %1401 : vector<112x112xi1>, vector<112x112xf32>
    %1403 = vector.shape_cast %1402 : vector<112x112xf32> to vector<1x112x112xf32>
    %cst_1174 = arith.constant dense<0.000000e+00> : vector<1xf32>
    %1404 = vector.multi_reduction <add>, %1403, %cst_1174 [1, 2] : vector<1x112x112xf32> to vector<1xf32>
    %1405 = vector.shape_cast %1404 : vector<1xf32> to vector<1x1x1xf32>
    %1406 = vector.extract %1405[0, 0, 0] : f32 from vector<1x1x1xf32>
    %1407 = vector.broadcast %1406 : f32 to vector<1x1xf32>
    %cst_1175 = arith.constant 7.97193861E-5 : f32
    %1408 = vector.broadcast %cst_1175 : f32 to vector<1x1xf32>
    %1409 = arith.mulf %1407, %1408 : vector<1x1xf32>
    %c3_1176 = arith.constant 3 : index
    %c0_1177 = arith.constant 0 : index
    %1410 = vector.load %arg5[%c3_1176, %c0_1177] : memref<8x512xf32, #tpu.memory_space<vmem>>, vector<1x512xf32>
    %1411 = vector.broadcast %1409 : vector<1x1xf32> to vector<1x512xf32>
    %1412 = arith.mulf %1411, %1410 : vector<1x512xf32>
    %1413 = arith.addf %1389, %1412 : vector<1x512xf32>
    %c0_1178 = arith.constant 0 : index
    %c0_1179 = arith.constant 0 : index
    %1414 = vector.load %arg2[%c0_1178, %c0_1179] : memref<112x48xf32, #tpu.memory_space<vmem>>, vector<112x48xf32>
    %c0_1180 = arith.constant 0 : index
    %c512_1181 = arith.constant 512 : index
    %1415 = vector.load %arg9[%c0_1180, %c512_1181] : memref<48x1024xf32, #tpu.memory_space<vmem>>, vector<48x128xf32>
    %cst_1182 = arith.constant dense<0.000000e+00> : vector<112x128xf32>
    %1416 = tpu.matmul %1414, %1415, %cst_1182 {dimension_numbers = #tpu.dot_dimension_numbers<[1], [0], [0], [1], [0, 0, 1, 1], [], []>} : vector<112x48xf32>, vector<48x128xf32>, vector<112x128xf32> -> vector<112x128xf32>
    %1417 = vector.extract_strided_slice %1416 {offsets = [0, 0], sizes = [112, 112], strides = [1, 1]} : vector<112x128xf32> to vector<112x112xf32>
    %c4_1183 = arith.constant 4 : index
    %c27_1184 = arith.constant 27 : index
    %1418 = memref.load %arg4[%c4_1183, %c27_1184] : memref<8x29xf32, #tpu.memory_space<smem>>
    %1419 = vector.broadcast %1418 : f32 to vector<112x112xf32>
    %1420 = arith.addf %1417, %1419 : vector<112x112xf32>
    %c4_1185 = arith.constant 4 : index
    %c28_1186 = arith.constant 28 : index
    %1421 = memref.load %arg4[%c4_1185, %c28_1186] : memref<8x29xf32, #tpu.memory_space<smem>>
    %cst_1187 = arith.constant 0.000000e+00 : f32
    %1422 = vector.broadcast %cst_1187 : f32 to vector<112x112xf32>
    %1423 = arith.cmpf oge, %1420, %1422 : vector<112x112xf32>
    %1424 = vector.broadcast %1421 : f32 to vector<112x112xf32>
    %1425 = arith.mulf %1420, %1424 : vector<112x112xf32>
    %1426 = arith.select %1423, %1420, %1425 : vector<112x112xi1>, vector<112x112xf32>
    %1427 = vector.shape_cast %1426 : vector<112x112xf32> to vector<1x112x112xf32>
    %cst_1188 = arith.constant dense<0.000000e+00> : vector<1xf32>
    %1428 = vector.multi_reduction <add>, %1427, %cst_1188 [1, 2] : vector<1x112x112xf32> to vector<1xf32>
    %1429 = vector.shape_cast %1428 : vector<1xf32> to vector<1x1x1xf32>
    %1430 = vector.extract %1429[0, 0, 0] : f32 from vector<1x1x1xf32>
    %1431 = vector.broadcast %1430 : f32 to vector<1x1xf32>
    %cst_1189 = arith.constant 7.97193861E-5 : f32
    %1432 = vector.broadcast %cst_1189 : f32 to vector<1x1xf32>
    %1433 = arith.mulf %1431, %1432 : vector<1x1xf32>
    %c4_1190 = arith.constant 4 : index
    %c0_1191 = arith.constant 0 : index
    %1434 = vector.load %arg5[%c4_1190, %c0_1191] : memref<8x512xf32, #tpu.memory_space<vmem>>, vector<1x512xf32>
    %1435 = vector.broadcast %1433 : vector<1x1xf32> to vector<1x512xf32>
    %1436 = arith.mulf %1435, %1434 : vector<1x512xf32>
    %1437 = arith.addf %1413, %1436 : vector<1x512xf32>
    %c0_1192 = arith.constant 0 : index
    %c0_1193 = arith.constant 0 : index
    %1438 = vector.load %arg2[%c0_1192, %c0_1193] : memref<112x48xf32, #tpu.memory_space<vmem>>, vector<112x48xf32>
    %c0_1194 = arith.constant 0 : index
    %c640_1195 = arith.constant 640 : index
    %1439 = vector.load %arg9[%c0_1194, %c640_1195] : memref<48x1024xf32, #tpu.memory_space<vmem>>, vector<48x128xf32>
    %cst_1196 = arith.constant dense<0.000000e+00> : vector<112x128xf32>
    %1440 = tpu.matmul %1438, %1439, %cst_1196 {dimension_numbers = #tpu.dot_dimension_numbers<[1], [0], [0], [1], [0, 0, 1, 1], [], []>} : vector<112x48xf32>, vector<48x128xf32>, vector<112x128xf32> -> vector<112x128xf32>
    %1441 = vector.extract_strided_slice %1440 {offsets = [0, 0], sizes = [112, 112], strides = [1, 1]} : vector<112x128xf32> to vector<112x112xf32>
    %c5_1197 = arith.constant 5 : index
    %c27_1198 = arith.constant 27 : index
    %1442 = memref.load %arg4[%c5_1197, %c27_1198] : memref<8x29xf32, #tpu.memory_space<smem>>
    %1443 = vector.broadcast %1442 : f32 to vector<112x112xf32>
    %1444 = arith.addf %1441, %1443 : vector<112x112xf32>
    %c5_1199 = arith.constant 5 : index
    %c28_1200 = arith.constant 28 : index
    %1445 = memref.load %arg4[%c5_1199, %c28_1200] : memref<8x29xf32, #tpu.memory_space<smem>>
    %cst_1201 = arith.constant 0.000000e+00 : f32
    %1446 = vector.broadcast %cst_1201 : f32 to vector<112x112xf32>
    %1447 = arith.cmpf oge, %1444, %1446 : vector<112x112xf32>
    %1448 = vector.broadcast %1445 : f32 to vector<112x112xf32>
    %1449 = arith.mulf %1444, %1448 : vector<112x112xf32>
    %1450 = arith.select %1447, %1444, %1449 : vector<112x112xi1>, vector<112x112xf32>
    %1451 = vector.shape_cast %1450 : vector<112x112xf32> to vector<1x112x112xf32>
    %cst_1202 = arith.constant dense<0.000000e+00> : vector<1xf32>
    %1452 = vector.multi_reduction <add>, %1451, %cst_1202 [1, 2] : vector<1x112x112xf32> to vector<1xf32>
    %1453 = vector.shape_cast %1452 : vector<1xf32> to vector<1x1x1xf32>
    %1454 = vector.extract %1453[0, 0, 0] : f32 from vector<1x1x1xf32>
    %1455 = vector.broadcast %1454 : f32 to vector<1x1xf32>
    %cst_1203 = arith.constant 7.97193861E-5 : f32
    %1456 = vector.broadcast %cst_1203 : f32 to vector<1x1xf32>
    %1457 = arith.mulf %1455, %1456 : vector<1x1xf32>
    %c5_1204 = arith.constant 5 : index
    %c0_1205 = arith.constant 0 : index
    %1458 = vector.load %arg5[%c5_1204, %c0_1205] : memref<8x512xf32, #tpu.memory_space<vmem>>, vector<1x512xf32>
    %1459 = vector.broadcast %1457 : vector<1x1xf32> to vector<1x512xf32>
    %1460 = arith.mulf %1459, %1458 : vector<1x512xf32>
    %1461 = arith.addf %1437, %1460 : vector<1x512xf32>
    %c0_1206 = arith.constant 0 : index
    %c0_1207 = arith.constant 0 : index
    %1462 = vector.load %arg2[%c0_1206, %c0_1207] : memref<112x48xf32, #tpu.memory_space<vmem>>, vector<112x48xf32>
    %c0_1208 = arith.constant 0 : index
    %c768_1209 = arith.constant 768 : index
    %1463 = vector.load %arg9[%c0_1208, %c768_1209] : memref<48x1024xf32, #tpu.memory_space<vmem>>, vector<48x128xf32>
    %cst_1210 = arith.constant dense<0.000000e+00> : vector<112x128xf32>
    %1464 = tpu.matmul %1462, %1463, %cst_1210 {dimension_numbers = #tpu.dot_dimension_numbers<[1], [0], [0], [1], [0, 0, 1, 1], [], []>} : vector<112x48xf32>, vector<48x128xf32>, vector<112x128xf32> -> vector<112x128xf32>
    %1465 = vector.extract_strided_slice %1464 {offsets = [0, 0], sizes = [112, 112], strides = [1, 1]} : vector<112x128xf32> to vector<112x112xf32>
    %c6_1211 = arith.constant 6 : index
    %c27_1212 = arith.constant 27 : index
    %1466 = memref.load %arg4[%c6_1211, %c27_1212] : memref<8x29xf32, #tpu.memory_space<smem>>
    %1467 = vector.broadcast %1466 : f32 to vector<112x112xf32>
    %1468 = arith.addf %1465, %1467 : vector<112x112xf32>
    %c6_1213 = arith.constant 6 : index
    %c28_1214 = arith.constant 28 : index
    %1469 = memref.load %arg4[%c6_1213, %c28_1214] : memref<8x29xf32, #tpu.memory_space<smem>>
    %cst_1215 = arith.constant 0.000000e+00 : f32
    %1470 = vector.broadcast %cst_1215 : f32 to vector<112x112xf32>
    %1471 = arith.cmpf oge, %1468, %1470 : vector<112x112xf32>
    %1472 = vector.broadcast %1469 : f32 to vector<112x112xf32>
    %1473 = arith.mulf %1468, %1472 : vector<112x112xf32>
    %1474 = arith.select %1471, %1468, %1473 : vector<112x112xi1>, vector<112x112xf32>
    %1475 = vector.shape_cast %1474 : vector<112x112xf32> to vector<1x112x112xf32>
    %cst_1216 = arith.constant dense<0.000000e+00> : vector<1xf32>
    %1476 = vector.multi_reduction <add>, %1475, %cst_1216 [1, 2] : vector<1x112x112xf32> to vector<1xf32>
    %1477 = vector.shape_cast %1476 : vector<1xf32> to vector<1x1x1xf32>
    %1478 = vector.extract %1477[0, 0, 0] : f32 from vector<1x1x1xf32>
    %1479 = vector.broadcast %1478 : f32 to vector<1x1xf32>
    %cst_1217 = arith.constant 7.97193861E-5 : f32
    %1480 = vector.broadcast %cst_1217 : f32 to vector<1x1xf32>
    %1481 = arith.mulf %1479, %1480 : vector<1x1xf32>
    %c6_1218 = arith.constant 6 : index
    %c0_1219 = arith.constant 0 : index
    %1482 = vector.load %arg5[%c6_1218, %c0_1219] : memref<8x512xf32, #tpu.memory_space<vmem>>, vector<1x512xf32>
    %1483 = vector.broadcast %1481 : vector<1x1xf32> to vector<1x512xf32>
    %1484 = arith.mulf %1483, %1482 : vector<1x512xf32>
    %1485 = arith.addf %1461, %1484 : vector<1x512xf32>
    %c0_1220 = arith.constant 0 : index
    %c0_1221 = arith.constant 0 : index
    %1486 = vector.load %arg2[%c0_1220, %c0_1221] : memref<112x48xf32, #tpu.memory_space<vmem>>, vector<112x48xf32>
    %c0_1222 = arith.constant 0 : index
    %c896_1223 = arith.constant 896 : index
    %1487 = vector.load %arg9[%c0_1222, %c896_1223] : memref<48x1024xf32, #tpu.memory_space<vmem>>, vector<48x128xf32>
    %cst_1224 = arith.constant dense<0.000000e+00> : vector<112x128xf32>
    %1488 = tpu.matmul %1486, %1487, %cst_1224 {dimension_numbers = #tpu.dot_dimension_numbers<[1], [0], [0], [1], [0, 0, 1, 1], [], []>} : vector<112x48xf32>, vector<48x128xf32>, vector<112x128xf32> -> vector<112x128xf32>
    %1489 = vector.extract_strided_slice %1488 {offsets = [0, 0], sizes = [112, 112], strides = [1, 1]} : vector<112x128xf32> to vector<112x112xf32>
    %c7_1225 = arith.constant 7 : index
    %c27_1226 = arith.constant 27 : index
    %1490 = memref.load %arg4[%c7_1225, %c27_1226] : memref<8x29xf32, #tpu.memory_space<smem>>
    %1491 = vector.broadcast %1490 : f32 to vector<112x112xf32>
    %1492 = arith.addf %1489, %1491 : vector<112x112xf32>
    %c7_1227 = arith.constant 7 : index
    %c28_1228 = arith.constant 28 : index
    %1493 = memref.load %arg4[%c7_1227, %c28_1228] : memref<8x29xf32, #tpu.memory_space<smem>>
    %cst_1229 = arith.constant 0.000000e+00 : f32
    %1494 = vector.broadcast %cst_1229 : f32 to vector<112x112xf32>
    %1495 = arith.cmpf oge, %1492, %1494 : vector<112x112xf32>
    %1496 = vector.broadcast %1493 : f32 to vector<112x112xf32>
    %1497 = arith.mulf %1492, %1496 : vector<112x112xf32>
    %1498 = arith.select %1495, %1492, %1497 : vector<112x112xi1>, vector<112x112xf32>
    %1499 = vector.shape_cast %1498 : vector<112x112xf32> to vector<1x112x112xf32>
    %cst_1230 = arith.constant dense<0.000000e+00> : vector<1xf32>
    %1500 = vector.multi_reduction <add>, %1499, %cst_1230 [1, 2] : vector<1x112x112xf32> to vector<1xf32>
    %1501 = vector.shape_cast %1500 : vector<1xf32> to vector<1x1x1xf32>
    %1502 = vector.extract %1501[0, 0, 0] : f32 from vector<1x1x1xf32>
    %1503 = vector.broadcast %1502 : f32 to vector<1x1xf32>
    %cst_1231 = arith.constant 7.97193861E-5 : f32
    %1504 = vector.broadcast %cst_1231 : f32 to vector<1x1xf32>
    %1505 = arith.mulf %1503, %1504 : vector<1x1xf32>
    %c7_1232 = arith.constant 7 : index
    %c0_1233 = arith.constant 0 : index
    %1506 = vector.load %arg5[%c7_1232, %c0_1233] : memref<8x512xf32, #tpu.memory_space<vmem>>, vector<1x512xf32>
    %1507 = vector.broadcast %1505 : vector<1x1xf32> to vector<1x512xf32>
    %1508 = arith.mulf %1507, %1506 : vector<1x512xf32>
    %1509 = arith.addf %1485, %1508 : vector<1x512xf32>
    %1510 = arith.mulf %1509, %1509 : vector<1x512xf32>
    %1511 = vector.shape_cast %1510 : vector<1x512xf32> to vector<1x1x512xf32>
    %cst_1234 = arith.constant dense<0.000000e+00> : vector<1xf32>
    %1512 = vector.multi_reduction <add>, %1511, %cst_1234 [1, 2] : vector<1x1x512xf32> to vector<1xf32>
    %1513 = vector.shape_cast %1512 : vector<1xf32> to vector<1x1x1xf32>
    %1514 = vector.extract %1513[0, 0, 0] : f32 from vector<1x1x1xf32>
    %1515 = vector.broadcast %1514 : f32 to vector<1x1xf32>
    %1516 = math.rsqrt %1515 : vector<1x1xf32>
    %1517 = vector.broadcast %1516 : vector<1x1xf32> to vector<1x512xf32>
    %1518 = arith.mulf %1509, %1517 : vector<1x512xf32>
    %c0_1235 = arith.constant 0 : index
    %c0_1236 = arith.constant 0 : index
    %c0_1237 = arith.constant 0 : index
    %1519 = vector.load %arg7[%c0_1235, %c0_1236, %c0_1237] : memref<1x1x512xf32, #tpu.memory_space<vmem>>, vector<1x1x512xf32>
    %1520 = vector.shape_cast %1519 : vector<1x1x512xf32> to vector<1x512xf32>
    %1521 = vector.shape_cast %1518 : vector<1x512xf32> to vector<1x1x512xf32>
    tpu.vector_store %arg7[%c0_1235, %c0_1236, %c0_1237], %1521 {strides = array<i32>} : memref<1x1x512xf32, #tpu.memory_space<vmem>>, vector<1x1x512xf32>,
    return
  }
  func.func @transform_0(%arg0: i32) -> (i32, i32, i32, i32) {
    %c0_i32 = arith.constant 0 : i32
    %c0_i32_0 = arith.constant 0 : i32
    %c0_i32_1 = arith.constant 0 : i32
    %c0_i32_2 = arith.constant 0 : i32
    return %arg0, %c0_i32, %c0_i32_0, %c0_i32_1 : i32, i32, i32, i32
  }
  func.func @transform_1(%arg0: i32) -> (i32, i32) {
    %c0_i32 = arith.constant 0 : i32
    %c0_i32_0 = arith.constant 0 : i32
    %c0_i32_1 = arith.constant 0 : i32
    return %c0_i32, %c0_i32_0 : i32, i32
  }
  func.func @transform_2(%arg0: i32) -> (i32, i32) {
    %c0_i32 = arith.constant 0 : i32
    %c0_i32_0 = arith.constant 0 : i32
    %c0_i32_1 = arith.constant 0 : i32
    return %c0_i32, %c0_i32_0 : i32, i32
  }
  func.func @transform_3(%arg0: i32) -> (i32, i32) {
    %c0_i32 = arith.constant 0 : i32
    %c0_i32_0 = arith.constant 0 : i32
    %c0_i32_1 = arith.constant 0 : i32
    return %c0_i32, %c0_i32_0 : i32, i32
  }
  func.func @transform_4(%arg0: i32) -> (i32, i32) {
    %c0_i32 = arith.constant 0 : i32
    %c0_i32_0 = arith.constant 0 : i32
    %c0_i32_1 = arith.constant 0 : i32
    return %c0_i32, %c0_i32_0 : i32, i32
  }
  func.func @transform_5(%arg0: i32) -> (i32, i32) {
    %c0_i32 = arith.constant 0 : i32
    %c0_i32_0 = arith.constant 0 : i32
    %c0_i32_1 = arith.constant 0 : i32
    return %c0_i32, %c0_i32_0 : i32, i32
  }
  func.func @transform_6(%arg0: i32) -> (i32, i32, i32) {
    %c0_i32 = arith.constant 0 : i32
    %c0_i32_0 = arith.constant 0 : i32
    %c0_i32_1 = arith.constant 0 : i32
    return %arg0, %c0_i32, %c0_i32_0 : i32, i32, i32
  }
}

</mosaic_0001>

<llo_original>
// kernel: arcface_forward.1
$region0: #{arcface_forward.1}
  #allocation0 [shape = 'u32[]', space=smem, size = 0x4, offset = 0x4, fixed_abs, tag = 'smem constant byte address 0x4 - core index']
  #allocation1 [shape = 'u32[144,128]{1,0:T(1,128)}', space=vmem, size = 0x12000, scoped, tag = 'internal scratch']
  #allocation2 [shape = 'f32[3,16,384]{2,1,0:T(8,128)}', space=vmem, size = 0x12000, scoped, tag = 'scratch operand']
  #allocation3 [shape = 'f32[48,1024]{1,0:T(8,128)}', space=vmem, size = 0x30000, scoped, tag = 'scratch operand']
  %s0 = inlined_call_operand.hbm [shape: f32[2,3,16,16], index: 0, kind: input, shape index: {}]
  %s1 = inlined_call_operand.vmem [shape: f32[112,48], index: 1, kind: input, shape index: {}]
  %s2 = inlined_call_operand.vmem [shape: f32[16,384], index: 2, kind: input, shape index: {}]
  %s3 = inlined_call_operand.vmem [shape: f32[8,29], index: 3, kind: input, shape index: {}]
  %s4 = inlined_call_operand.hbm [shape: f32[8,512], index: 4, kind: input, shape index: {}]
  %s5 = inlined_call_operand.vmem [shape: f32[1,512], index: 5, kind: input, shape index: {}]
  %s6 = inlined_call_operand.vmem [shape: f32[2,1,512], index: 6, kind: output, shape index: {}]
  %s7 = sld [smem:[#allocation0]]
  $region69: #{arcface_forward.1} parent=0
    _
  %s9 = ssub.s32 1, %s7
  %s10 = scalar_select 0, %s9, %s7
  $region1: #{arcface_forward.1} parent=0
    #allocation4 [shape = 'u8[49152]{0}', space=vmem, size = 0xc000, scoped, tag = 'input window, operand 0']
    #allocation5 [shape = 's32[2]{0}', space=sflag, size = 0x8, scoped, tag = 'scoped memory for arcface_forward.1']
    #allocation6 [shape = 's32[2]{0}', space=sflag, size = 0x8, scoped, tag = 'scoped memory for arcface_forward.1']
    #allocation7 [shape = 'u8[4096]{0}', space=smem, size = 0x1000, scoped, tag = 'input window, operand 3, single buffered']
    #allocation8 [shape = 'u8[16384]{0}', space=vmem, size = 0x4000, scoped, tag = 'input window, operand 4, single buffered']
    #allocation9 [shape = 's32[1]{0}', space=sflag, size = 0x4, scoped, tag = 'scoped memory for arcface_forward.1']
    %11 = vsyncpa [#allocation5], 0
    %s12 = scalar_lea.sflag [#allocation5], 1
    %13 = vsyncpa %s12, 0
    %14 = vsyncpa [#allocation6], 0
    %15 = vsyncpa [#allocation9], 0
    loop: start=0, step=1, limit=4
    $region2: #{arcface_forward.1} parent=1 // loop_pre_header
      _
    $region3: #{arcface_forward.1} parent=1 // loop_header
      %s17 = sphi 0, %s21
      %p18 = scmp.ge.s32.totalorder %s17, 4
      %s27 = sphi 0, %s29
      %s30 = sphi 0, %s27
      %s31 = sphi 0, %s30
      %s47 = sphi 0, %s31
      %s51 = sphi 0, %s51
      %s53 = sphi 0, %s51
      %s54 = sphi 0, %s53
      %s68 = sphi 0, %s54
      %s72 = sphi 0, %s72
      %s74 = sphi 0, %s72
      %s75 = sphi 0, %s74
      %s89 = sphi 0, %s75
      %s93 = sphi 0, %s93
      %s95 = sphi 0, %s93
      %s96 = sphi 0, %s95
      %s110 = sphi 0, %s96
      %s114 = sphi 0, %s114
      %s116 = sphi 0, %s114
      %s117 = sphi 0, %s116
      %s131 = sphi 0, %s117
      %s135 = sphi 0, %s135
      %s137 = sphi 0, %s135
      %s138 = sphi 0, %s137
      %s152 = sphi 0, %s138
      %s158 = sphi 0, %s160
      %s161 = sphi 0, %s158
      %s162 = sphi 0, %s161
      %s178 = sphi 0, %s162
    $region4: #{arcface_forward.1} parent=1 // loop_header_branch
      %20 = sbr.rel (%p18) target = $region8
    $region5: #{arcface_forward.1} parent=1 // loop_body
      %s22 = ssub.s32 %s17, 1
      %s23 = ssub.s32 %s17, 2
      %s24 = sadd.s32 %s17, 1
      %s25 = ssub.s32 %s17, %s24
      %p26 = scmp.eq.s32.totalorder %s25, 0
      %s28 = sadd.s32 %s27, 1
      %s29 = scalar_select %p26, %s27, %s28
      %p32 = pneg %p26
      %p33 = scmp.eq.s32.totalorder %s17, 1
      %p34 = por %p32, %p33
      %p35 = scmp.ne.s32.totalorder %s27, %s30
      %p36 = scmp.eq.s32.totalorder %s17, 0
      %p37 = por %p35, %p36
      %p38 = scmp.ne.s32.totalorder %s27, %s30
      %p39 = scmp.eq.s32.totalorder %s22, 1
      %p40 = por %p38, %p39
      %p41 = scmp.ne.s32.totalorder %s30, %s31
      %p42 = scmp.eq.s32.totalorder %s22, 0
      %p43 = por %p41, %p42
      %p44 = scmp.ne.s32.totalorder %s30, %s31
      %p45 = scmp.eq.s32.totalorder %s23, 1
      %p46 = por %p44, %p45
      %p48 = scmp.ne.s32.totalorder %s31, %s47
      %p49 = scmp.eq.s32.totalorder %s23, 0
      %p50 = por %p48, %p49
      %s52 = sadd.s32 %s51, 1
      %p55 = scmp.eq.s32.totalorder %s17, 1
      %p56 = scmp.ne.s32.totalorder %s51, %s53
      %p57 = scmp.eq.s32.totalorder %s17, 0
      %p58 = por %p56, %p57
      %p59 = scmp.ne.s32.totalorder %s51, %s53
      %p60 = scmp.eq.s32.totalorder %s22, 1
      %p61 = por %p59, %p60
      %p62 = scmp.ne.s32.totalorder %s53, %s54
      %p63 = scmp.eq.s32.totalorder %s22, 0
      %p64 = por %p62, %p63
      %p65 = scmp.ne.s32.totalorder %s53, %s54
      %p66 = scmp.eq.s32.totalorder %s23, 1
      %p67 = por %p65, %p66
      %p69 = scmp.ne.s32.totalorder %s54, %s68
      %p70 = scmp.eq.s32.totalorder %s23, 0
      %p71 = por %p69, %p70
      %s73 = sadd.s32 %s72, 1
      %p76 = scmp.eq.s32.totalorder %s17, 1
      %p77 = scmp.ne.s32.totalorder %s72, %s74
      %p78 = scmp.eq.s32.totalorder %s17, 0
      %p79 = por %p77, %p78
      %p80 = scmp.ne.s32.totalorder %s72, %s74
      %p81 = scmp.eq.s32.totalorder %s22, 1
      %p82 = por %p80, %p81
      %p83 = scmp.ne.s32.totalorder %s74, %s75
      %p84 = scmp.eq.s32.totalorder %s22, 0
      %p85 = por %p83, %p84
      %p86 = scmp.ne.s32.totalorder %s74, %s75
      %p87 = scmp.eq.s32.totalorder %s23, 1
      %p88 = por %p86, %p87
      %p90 = scmp.ne.s32.totalorder %s75, %s89
      %p91 = scmp.eq.s32.totalorder %s23, 0
      %p92 = por %p90, %p91
      %s94 = sadd.s32 %s93, 1
      %p97 = scmp.eq.s32.totalorder %s17, 1
      %p98 = scmp.ne.s32.totalorder %s93, %s95
      %p99 = scmp.eq.s32.totalorder %s17, 0
      %p100 = por %p98, %p99
      %p101 = scmp.ne.s32.totalorder %s93, %s95
      %p102 = scmp.eq.s32.totalorder %s22, 1
      %p103 = por %p101, %p102
      %p104 = scmp.ne.s32.totalorder %s95, %s96
      %p105 = scmp.eq.s32.totalorder %s22, 0
      %p106 = por %p104, %p105
      %p107 = scmp.ne.s32.totalorder %s95, %s96
      %p108 = scmp.eq.s32.totalorder %s23, 1
      %p109 = por %p107, %p108
      %p111 = scmp.ne.s32.totalorder %s96, %s110
      %p112 = scmp.eq.s32.totalorder %s23, 0
      %p113 = por %p111, %p112
      %s115 = sadd.s32 %s114, 1
      %p118 = scmp.eq.s32.totalorder %s17, 1
      %p119 = scmp.ne.s32.totalorder %s114, %s116
      %p120 = scmp.eq.s32.totalorder %s17, 0
      %p121 = por %p119, %p120
      %p122 = scmp.ne.s32.totalorder %s114, %s116
      %p123 = scmp.eq.s32.totalorder %s22, 1
      %p124 = por %p122, %p123
      %p125 = scmp.ne.s32.totalorder %s116, %s117
      %p126 = scmp.eq.s32.totalorder %s22, 0
      %p127 = por %p125, %p126
      %p128 = scmp.ne.s32.totalorder %s116, %s117
      %p129 = scmp.eq.s32.totalorder %s23, 1
      %p130 = por %p128, %p129
      %p132 = scmp.ne.s32.totalorder %s117, %s131
      %p133 = scmp.eq.s32.totalorder %s23, 0
      %p134 = por %p132, %p133
      %s136 = sadd.s32 %s135, 1
      %p139 = scmp.eq.s32.totalorder %s17, 1
      %p140 = scmp.ne.s32.totalorder %s135, %s137
      %p141 = scmp.eq.s32.totalorder %s17, 0
      %p142 = por %p140, %p141
      %p143 = scmp.ne.s32.totalorder %s135, %s137
      %p144 = scmp.eq.s32.totalorder %s22, 1
      %p145 = por %p143, %p144
      %p146 = scmp.ne.s32.totalorder %s137, %s138
      %p147 = scmp.eq.s32.totalorder %s22, 0
      %p148 = por %p146, %p147
      %p149 = scmp.ne.s32.totalorder %s137, %s138
      %p150 = scmp.eq.s32.totalorder %s23, 1
      %p151 = por %p149, %p150
      %p153 = scmp.ne.s32.totalorder %s138, %s152
      %p154 = scmp.eq.s32.totalorder %s23, 0
      %p155 = por %p153, %p154
      %s156 = ssub.s32 %s17, %s24
      %p157 = scmp.eq.s32.totalorder %s156, 0
      %s159 = sadd.s32 %s158, 1
      %s160 = scalar_select %p157, %s158, %s159
      %p163 = pneg %p157
      %p164 = scmp.eq.s32.totalorder %s17, 1
      %p165 = por %p163, %p164
      %p166 = scmp.ne.s32.totalorder %s158, %s161
      %p167 = scmp.eq.s32.totalorder %s17, 0
      %p168 = por %p166, %p167
      %p169 = scmp.ne.s32.totalorder %s158, %s161
      %p170 = scmp.eq.s32.totalorder %s22, 1
      %p171 = por %p169, %p170
      %p172 = scmp.ne.s32.totalorder %s161, %s162
      %p173 = scmp.eq.s32.totalorder %s22, 0
      %p174 = por %p172, %p173
      %p175 = scmp.ne.s32.totalorder %s161, %s162
      %p176 = scmp.eq.s32.totalorder %s23, 1
      %p177 = por %p175, %p176
      %p179 = scmp.ne.s32.totalorder %s162, %s178
      %p180 = scmp.eq.s32.totalorder %s23, 0
      %p181 = por %p179, %p180
      %p182 = scmp.le.s32.totalorder 1, %s17
      %p183 = scmp.lt.s32.totalorder %s17, 3
      %p184 = pnand %p182, %p183
      %p185 = pneg %p184
      // Predicated region
      $region9: #{arcface_forward.1} parent=5 // pred_check
        _
      $region10: #{arcface_forward.1} parent=5 // pred_check_branch
        %187 = sbr.rel (%p184) target = $region12
      $region11: #{arcface_forward.1} parent=5 // pred_region
        %s188 = ssub.s32 %s17, 1
        // Predicated region
        $region13: #{arcface_forward.1} parent=11 // pred_check
          %p189 = pneg %p64
        $region14: #{arcface_forward.1} parent=11 // pred_check_branch
          %191 = sbr.rel (%p189) target = $region16
        $region15: #{arcface_forward.1} parent=11 // pred_region
          _
        $region16: #{arcface_forward.1} parent=11 // pred_fallthru
          _
        // Predicated region
        $region17: #{arcface_forward.1} parent=11 // pred_check
          %p192 = pneg %p85
        $region18: #{arcface_forward.1} parent=11 // pred_check_branch
          %194 = sbr.rel (%p192) target = $region20
        $region19: #{arcface_forward.1} parent=11 // pred_region
          _
        $region20: #{arcface_forward.1} parent=11 // pred_fallthru
          _
        // Predicated region
        $region21: #{arcface_forward.1} parent=11 // pred_check
          %p195 = pneg %p106
        $region22: #{arcface_forward.1} parent=11 // pred_check_branch
          %197 = sbr.rel (%p195) target = $region24
        $region23: #{arcface_forward.1} parent=11 // pred_region
          %s199 = ssub.s32 128, 128
          %200 = vsyncadd [#allocation6], %s199
          %s202 = sshll.u32 %s3, 4
          %s203 = int_to_ptr.vmem [resolvable:$true] %s202
          %205 = dma.vmem_to_smem %s203, 128, [#allocation7], [#allocation6]
        $region24: #{arcface_forward.1} parent=11 // pred_fallthru
          _
        // Predicated region
        $region25: #{arcface_forward.1} parent=11 // pred_check
          %p206 = pneg %p127
        $region26: #{arcface_forward.1} parent=11 // pred_check_branch
          %208 = sbr.rel (%p206) target = $region28
        $region27: #{arcface_forward.1} parent=11 // pred_region
          %s210 = ssub.s32 512, 512
          %211 = vsyncadd [#allocation9], %s210
          %s213 = sshll.u32 [#allocation8], 4
          %s214 = int_to_ptr.vmem [resolvable:$true] %s213
          %216 = dma.hbm_to_vmem [thread:$0]  %s4, 512, %s214, [#allocation9]
        $region28: #{arcface_forward.1} parent=11 // pred_fallthru
          _
        // Predicated region
        $region29: #{arcface_forward.1} parent=11 // pred_check
          %p217 = pneg %p148
        $region30: #{arcface_forward.1} parent=11 // pred_check_branch
          %219 = sbr.rel (%p217) target = $region32
        $region31: #{arcface_forward.1} parent=11 // pred_region
          _
        $region32: #{arcface_forward.1} parent=11 // pred_fallthru
          _
      $region12: #{arcface_forward.1} parent=5 // pred_fallthru
        _
      %p220 = scmp.lt.s32.totalorder %s17, 2
      // Predicated region
      $region33: #{arcface_forward.1} parent=5 // pred_check
        %p221 = pneg %p220
      $region34: #{arcface_forward.1} parent=5 // pred_check_branch
        %223 = sbr.rel (%p221) target = $region36
      $region35: #{arcface_forward.1} parent=5 // pred_region
        // Predicated region
        $region37: #{arcface_forward.1} parent=35 // pred_check
          %p224 = pneg %p37
        $region38: #{arcface_forward.1} parent=35 // pred_check_branch
          %226 = sbr.rel (%p224) target = $region40
        $region39: #{arcface_forward.1} parent=35 // pred_region
          %s227 = sand.u32 %s27, 1
          %s228 = scalar_lea.sflag [#allocation5], %s227
          %s229 = sand.u32 %s27, 1
          %s230 = smul.addr %s229, 48
          %s231 = scalar_lea.vmem [#allocation4], %s230
          %s233 = ssub.s32 768, 768
          %234 = vsyncadd %s228, %s233
          %s235 = smul.addr %s17, 6
          %s236 = smul.addr %s235, 128
          %s237 = scalar_lea.hbm %s0, %s236
          %s238 = sshll.u32 %s231, 4
          %s239 = int_to_ptr.vmem [resolvable:$true] %s238
          %244 = dma.hbm_to_vmem [thread:$0]  %s237, 768, %s239, %s228, 128, 128, 8
        $region40: #{arcface_forward.1} parent=35 // pred_fallthru
          _
      $region36: #{arcface_forward.1} parent=5 // pred_fallthru
        _
      %p245 = scmp.le.s32.totalorder 1, %s17
      %p246 = scmp.lt.s32.totalorder %s17, 3
      %p247 = pnand %p245, %p246
      %p248 = pneg %p247
      // Predicated region
      $region41: #{arcface_forward.1} parent=5 // pred_check
        _
      $region42: #{arcface_forward.1} parent=5 // pred_check_branch
        %250 = sbr.rel (%p247) target = $region44
      $region43: #{arcface_forward.1} parent=5 // pred_region
        %s251 = ssub.s32 %s17, 1
        %s252 = sand.u32 %s30, 1
        %s253 = scalar_lea.sflag [#allocation5], %s252
        %s254 = sand.u32 %s30, 1
        %s255 = smul.addr %s254, 48
        %s256 = scalar_lea.vmem [#allocation4], %s255
        // Predicated region
        $region45: #{arcface_forward.1} parent=43 // pred_check
          %p257 = pneg %p43
        $region46: #{arcface_forward.1} parent=43 // pred_check_branch
          %259 = sbr.rel (%p257) target = $region48
        $region47: #{arcface_forward.1} parent=43 // pred_region
          %260 = dma.done %s253, 768
        $region48: #{arcface_forward.1} parent=43 // pred_fallthru
          _
        // Predicated region
        $region49: #{arcface_forward.1} parent=43 // pred_check
          %p261 = pneg %p106
        $region50: #{arcface_forward.1} parent=43 // pred_check_branch
          %263 = sbr.rel (%p261) target = $region52
        $region51: #{arcface_forward.1} parent=43 // pred_region
          %264 = dma.done [#allocation6], 128
        $region52: #{arcface_forward.1} parent=43 // pred_fallthru
          _
        // Predicated region
        $region53: #{arcface_forward.1} parent=43 // pred_check
          %p265 = pneg %p127
        $region54: #{arcface_forward.1} parent=43 // pred_check_branch
          %267 = sbr.rel (%p265) target = $region56
        $region55: #{arcface_forward.1} parent=43 // pred_region
          %268 = dma.done [#allocation9], 512
        $region56: #{arcface_forward.1} parent=43 // pred_fallthru
          _
        %269 = sfence
        %s270 = sand.u32 %s30, 1
        %s271 = scalar_lea.sflag [#allocation5], %s270
        %s272 = sand.u32 %s30, 1
        %s273 = smul.addr %s272, 48
        %s274 = scalar_lea.vmem [#allocation4], %s273
        %p275 = pneg %p43
        %p276 = pneg %p40
        %p277 = pneg %p64
        %p278 = pneg %p61
        %p279 = pneg %p85
        %p280 = pneg %p82
        %p281 = pneg %p106
        %p282 = pneg %p103
        %p283 = pneg %p127
        %p284 = pneg %p124
        %p285 = pneg %p148
        %p286 = pneg %p145
        %p287 = pneg %p174
        %p288 = pneg %p171
        %p289 = scmp.lt.s32.totalorder %s22, 1
        %s290 = scalar_select %p289, %s22, 1
        %s291 = smul.addr %s290, 4
        %s292 = scalar_lea.vmem %s6, %s291
        %p293 = scmp.lt.s32.totalorder %s22, 1
        %s294 = scalar_select %p293, %s22, 1
        %s295 = smul.addr %s294, 4
        %s296 = scalar_lea.vmem %s6, %s295
        %v297 = vld [vmem:[%s256] sm:$0xff]
        %v298 = vld [vmem:[%s256 + $0x8] sm:$0xff]
        %v299 = vld [vmem:[%s2] sm:$0xff]
        %v300 = vld [vmem:[%s2 + $0x8] sm:$0xff]
        %v301 = vld [vmem:[%s2 + $0x10] sm:$0xff]
        %v302 = vld [vmem:[%s2 + $0x18] sm:$0xff]
        %v303 = vld [vmem:[%s2 + $0x20] sm:$0xff]
        %v304 = vld [vmem:[%s2 + $0x28] sm:$0xff]
        %vm305 = vcmask 130048
        %v307 = vsel %vm305, %v297, 0
        %v310 = vsel %vm305, %v298, 0
        %312 = vmatprep.subr.mxu0 0.0
        %313 = vmatpush1.msra.mxu0 0.0
        %314 = vmatprep.subr.mxu0 0.0
        %315 = vmatpush1.msra.mxu0 0.0
        %316 = vmatprep.subr.mxu0 0.0
        %317 = vmatpush1.msra.mxu0 0.0
        %318 = vmatprep.subr.mxu0 0.0
        %319 = vmatpush1.msra.mxu0 0.0
        %320 = vmatprep.subr.mxu0 0.0
        %321 = vmatpush1.msra.mxu0 0.0
        %322 = vmatprep.subr.mxu0 0.0
        %323 = vmatpush1.msra.mxu0 0.0
        %324 = vmatprep.subr.mxu0 0.0
        %325 = vmatpush1.msra.mxu0 0.0
        %326 = vmatprep.subr.mxu0 0.0
        %327 = vmatpush1.msra.mxu0 0.0
        %328 = vmatprep.subr.mxu0 0.0
        %329 = vmatpush1.msra.mxu0 0.0
        %330 = vmatprep.subr.mxu0 0.0
        %331 = vmatpush1.msra.mxu0 0.0
        %332 = vmatprep.subr.mxu0 0.0
        %333 = vmatpush1.msra.mxu0 0.0
        %334 = vmatprep.subr.mxu0 0.0
        %335 = vmatpush1.msra.mxu0 0.0
        %336 = vmatprep.subr.mxu0 0.0
        %337 = vmatpush1.msra.mxu0 0.0
        %338 = vmatprep.subr.mxu0 0.0
        %339 = vmatpush1.msra.mxu0 0.0
        %340 = vmatprep.subr.mxu0 %v303
        %341 = vmatpush1.msra.mxu0 %v302
        %342 = vmatprep.subr.mxu0 %v300
        %343 = vmatpush1.msra.mxu0 %v299
        %344 = vmatprep.subr.mxu0 0.0
        %345 = vmatpush2.msra.mxu0 0.0
        %346 = vmatprep.subr.mxu0 0.0
        %347 = vmatpush2.msra.mxu0 0.0
        %348 = vmatprep.subr.mxu0 0.0
        %349 = vmatpush2.msra.mxu0 0.0
        %350 = vmatprep.subr.mxu0 0.0
        %351 = vmatpush2.msra.mxu0 0.0
        %352 = vmatprep.subr.mxu0 0.0
        %353 = vmatpush2.msra.mxu0 0.0
        %354 = vmatprep.subr.mxu0 0.0
        %355 = vmatpush2.msra.mxu0 0.0
        %356 = vmatprep.subr.mxu0 0.0
        %357 = vmatpush2.msra.mxu0 0.0
        %358 = vmatprep.subr.mxu0 0.0
        %359 = vmatpush2.msra.mxu0 0.0
        %360 = vmatprep.subr.mxu0 0.0
        %361 = vmatpush2.msra.mxu0 0.0
        %362 = vmatprep.subr.mxu0 0.0
        %363 = vmatpush2.msra.mxu0 0.0
        %364 = vmatprep.subr.mxu0 0.0
        %365 = vmatpush2.msra.mxu0 0.0
        %366 = vmatprep.subr.mxu0 0.0
        %367 = vmatpush2.msra.mxu0 0.0
        %368 = vmatprep.subr.mxu0 0.0
        %369 = vmatpush2.msra.mxu0 0.0
        %370 = vmatprep.subr.mxu0 0.0
        %371 = vmatpush2.msra.mxu0 0.0
        %372 = vmatprep.subr.mxu0 0.0
        %373 = vmatpush2.msra.mxu0 0.0
        %374 = vmatprep.subr.mxu0 0.0
        %375 = vmatpush2.msra.mxu0 0.0
        %376 = vmatprep.mubr.f32.mxu0 0.0
        %377 = vmatmul.mubr.f32.gmra.mxu0 %v307
        %v378 = vpop.f32.mrf.mxu0
        %v379 = vadd.f32 0.0, %v378
        %v380 = vpop.f32.mrf.mxu0
        %v381 = vadd.f32 0.0, %v380
        %382 = vmatprep.mubr.f32.mxu0 0.0
        %383 = vmatmul.mubr.f32.gmra.mxu0 %v310
        %v384 = vpop.f32.mrf.mxu0
        %v385 = vadd.f32 0.0, %v384
        %v386 = vpop.f32.mrf.mxu0
        %v387 = vadd.f32 0.0, %v386
        %388 = vdwg.mxu0
        %389 = vmatprep.subr.mxu0 0.0
        %390 = vmatpush1.msra.mxu0 0.0
        %391 = vmatprep.subr.mxu0 0.0
        %392 = vmatpush1.msra.mxu0 0.0
        %393 = vmatprep.subr.mxu0 0.0
        %394 = vmatpush1.msra.mxu0 0.0
        %395 = vmatprep.subr.mxu0 0.0
        %396 = vmatpush1.msra.mxu0 0.0
        %397 = vmatprep.subr.mxu0 0.0
        %398 = vmatpush1.msra.mxu0 0.0
        %399 = vmatprep.subr.mxu0 0.0
        %400 = vmatpush1.msra.mxu0 0.0
        %401 = vmatprep.subr.mxu0 0.0
        %402 = vmatpush1.msra.mxu0 0.0
        %403 = vmatprep.subr.mxu0 0.0
        %404 = vmatpush1.msra.mxu0 0.0
        %405 = vmatprep.subr.mxu0 0.0
        %406 = vmatpush1.msra.mxu0 0.0
        %407 = vmatprep.subr.mxu0 0.0
        %408 = vmatpush1.msra.mxu0 0.0
        %409 = vmatprep.subr.mxu0 0.0
        %410 = vmatpush1.msra.mxu0 0.0
        %411 = vmatprep.subr.mxu0 0.0
        %412 = vmatpush1.msra.mxu0 0.0
        %413 = vmatprep.subr.mxu0 0.0
        %414 = vmatpush1.msra.mxu0 0.0
        %415 = vmatprep.subr.mxu0 0.0
        %416 = vmatpush1.msra.mxu0 0.0
        %417 = vmatprep.subr.mxu0 0.0
        %418 = vmatpush1.msra.mxu0 %v304
        %419 = vmatprep.subr.mxu0 0.0
        %420 = vmatpush1.msra.mxu0 %v301
        %421 = vmatprep.subr.mxu0 0.0
        %422 = vmatpush2.msra.mxu0 0.0
        %423 = vmatprep.subr.mxu0 0.0
        %424 = vmatpush2.msra.mxu0 0.0
        %425 = vmatprep.subr.mxu0 0.0
        %426 = vmatpush2.msra.mxu0 0.0
        %427 = vmatprep.subr.mxu0 0.0
        %428 = vmatpush2.msra.mxu0 0.0
        %429 = vmatprep.subr.mxu0 0.0
        %430 = vmatpush2.msra.mxu0 0.0
        %431 = vmatprep.subr.mxu0 0.0
        %432 = vmatpush2.msra.mxu0 0.0
        %433 = vmatprep.subr.mxu0 0.0
        %434 = vmatpush2.msra.mxu0 0.0
        %435 = vmatprep.subr.mxu0 0.0
        %436 = vmatpush2.msra.mxu0 0.0
        %437 = vmatprep.subr.mxu0 0.0
        %438 = vmatpush2.msra.mxu0 0.0
        %439 = vmatprep.subr.mxu0 0.0
        %440 = vmatpush2.msra.mxu0 0.0
        %441 = vmatprep.subr.mxu0 0.0
        %442 = vmatpush2.msra.mxu0 0.0
        %443 = vmatprep.subr.mxu0 0.0
        %444 = vmatpush2.msra.mxu0 0.0
        %445 = vmatprep.subr.mxu0 0.0
        %446 = vmatpush2.msra.mxu0 0.0
        %447 = vmatprep.subr.mxu0 0.0
        %448 = vmatpush2.msra.mxu0 0.0
        %449 = vmatprep.subr.mxu0 0.0
        %450 = vmatpush2.msra.mxu0 0.0
        %451 = vmatprep.subr.mxu0 0.0
        %452 = vmatpush2.msra.mxu0 0.0
        %453 = vmatprep.mubr.f32.mxu0 0.0
        %454 = vmatmul.mubr.f32.gmra.mxu0 %v307
        %v455 = vpop.f32.mrf.mxu0
        %v456 = vadd.f32 0.0, %v455
        %v457 = vpop.f32.mrf.mxu0
        %458 = vmatprep.mubr.f32.mxu0 0.0
        %459 = vmatmul.mubr.f32.gmra.mxu0 %v310
        %v460 = vpop.f32.mrf.mxu0
        %v461 = vadd.f32 0.0, %v460
        %v462 = vpop.f32.mrf.mxu0
        %463 = vdwg.mxu0
        %464 = vst [vmem:[#allocation2] sm:$0xff] %v379
        %465 = vst [vmem:[#allocation2 + $0x8] sm:$0xff] %v381
        %466 = vst [vmem:[#allocation2 + $0x10] sm:$0xff] %v456
        %467 = vst [vmem:[#allocation2 + $0x18] sm:$0xff] %v385
        %468 = vst [vmem:[#allocation2 + $0x20] sm:$0xff] %v387
        %469 = vst [vmem:[#allocation2 + $0x28] sm:$0xff] %v461
        %s470 = scalar_lea.vmem %s256, 16 [#allocation4]
        %v471 = vld [vmem:[%s470] sm:$0xff]
        %v472 = vld [vmem:[%s470 + $0x8] sm:$0xff]
        %v473 = vld [vmem:[%s2] sm:$0xff]
        %v474 = vld [vmem:[%s2 + $0x8] sm:$0xff]
        %v475 = vld [vmem:[%s2 + $0x10] sm:$0xff]
        %v476 = vld [vmem:[%s2 + $0x18] sm:$0xff]
        %v477 = vld [vmem:[%s2 + $0x20] sm:$0xff]
        %v478 = vld [vmem:[%s2 + $0x28] sm:$0xff]
        %v480 = vsel %vm305, %v471, 0
        %v483 = vsel %vm305, %v472, 0
        %485 = vmatprep.subr.mxu0 0.0
        %486 = vmatpush1.msra.mxu0 0.0
        %487 = vmatprep.subr.mxu0 0.0
        %488 = vmatpush1.msra.mxu0 0.0
        %489 = vmatprep.subr.mxu0 0.0
        %490 = vmatpush1.msra.mxu0 0.0
        %491 = vmatprep.subr.mxu0 0.0
        %492 = vmatpush1.msra.mxu0 0.0
        %493 = vmatprep.subr.mxu0 0.0
        %494 = vmatpush1.msra.mxu0 0.0
        %495 = vmatprep.subr.mxu0 0.0
        %496 = vmatpush1.msra.mxu0 0.0
        %497 = vmatprep.subr.mxu0 0.0
        %498 = vmatpush1.msra.mxu0 0.0
        %499 = vmatprep.subr.mxu0 0.0
        %500 = vmatpush1.msra.mxu0 0.0
        %501 = vmatprep.subr.mxu0 0.0
        %502 = vmatpush1.msra.mxu0 0.0
        %503 = vmatprep.subr.mxu0 0.0
        %504 = vmatpush1.msra.mxu0 0.0
        %505 = vmatprep.subr.mxu0 0.0
        %506 = vmatpush1.msra.mxu0 0.0
        %507 = vmatprep.subr.mxu0 0.0
        %508 = vmatpush1.msra.mxu0 0.0
        %509 = vmatprep.subr.mxu0 0.0
        %510 = vmatpush1.msra.mxu0 0.0
        %511 = vmatprep.subr.mxu0 0.0
        %512 = vmatpush1.msra.mxu0 0.0
        %513 = vmatprep.subr.mxu0 %v477
        %514 = vmatpush1.msra.mxu0 %v476
        %515 = vmatprep.subr.mxu0 %v474
        %516 = vmatpush1.msra.mxu0 %v473
        %517 = vmatprep.subr.mxu0 0.0
        %518 = vmatpush2.msra.mxu0 0.0
        %519 = vmatprep.subr.mxu0 0.0
        %520 = vmatpush2.msra.mxu0 0.0
        %521 = vmatprep.subr.mxu0 0.0
        %522 = vmatpush2.msra.mxu0 0.0
        %523 = vmatprep.subr.mxu0 0.0
        %524 = vmatpush2.msra.mxu0 0.0
        %525 = vmatprep.subr.mxu0 0.0
        %526 = vmatpush2.msra.mxu0 0.0
        %527 = vmatprep.subr.mxu0 0.0
        %528 = vmatpush2.msra.mxu0 0.0
        %529 = vmatprep.subr.mxu0 0.0
        %530 = vmatpush2.msra.mxu0 0.0
        %531 = vmatprep.subr.mxu0 0.0
        %532 = vmatpush2.msra.mxu0 0.0
        %533 = vmatprep.subr.mxu0 0.0
        %534 = vmatpush2.msra.mxu0 0.0
        %535 = vmatprep.subr.mxu0 0.0
        %536 = vmatpush2.msra.mxu0 0.0
        %537 = vmatprep.subr.mxu0 0.0
        %538 = vmatpush2.msra.mxu0 0.0
        %539 = vmatprep.subr.mxu0 0.0
        %540 = vmatpush2.msra.mxu0 0.0
        %541 = vmatprep.subr.mxu0 0.0
        %542 = vmatpush2.msra.mxu0 0.0
        %543 = vmatprep.subr.mxu0 0.0
        %544 = vmatpush2.msra.mxu0 0.0
        %545 = vmatprep.subr.mxu0 0.0
        %546 = vmatpush2.msra.mxu0 0.0
        %547 = vmatprep.subr.mxu0 0.0
        %548 = vmatpush2.msra.mxu0 0.0
        %549 = vmatprep.mubr.f32.mxu0 0.0
        %550 = vmatmul.mubr.f32.gmra.mxu0 %v480
        %v551 = vpop.f32.mrf.mxu0
        %v552 = vadd.f32 0.0, %v551
        %v553 = vpop.f32.mrf.mxu0
        %v554 = vadd.f32 0.0, %v553
        %555 = vmatprep.mubr.f32.mxu0 0.0
        %556 = vmatmul.mubr.f32.gmra.mxu0 %v483
        %v557 = vpop.f32.mrf.mxu0
        %v558 = vadd.f32 0.0, %v557
        %v559 = vpop.f32.mrf.mxu0
        %v560 = vadd.f32 0.0, %v559
        %561 = vdwg.mxu0
        %562 = vmatprep.subr.mxu0 0.0
        %563 = vmatpush1.msra.mxu0 0.0
        %564 = vmatprep.subr.mxu0 0.0
        %565 = vmatpush1.msra.mxu0 0.0
        %566 = vmatprep.subr.mxu0 0.0
        %567 = vmatpush1.msra.mxu0 0.0
        %568 = vmatprep.subr.mxu0 0.0
        %569 = vmatpush1.msra.mxu0 0.0
        %570 = vmatprep.subr.mxu0 0.0
        %571 = vmatpush1.msra.mxu0 0.0
        %572 = vmatprep.subr.mxu0 0.0
        %573 = vmatpush1.msra.mxu0 0.0
        %574 = vmatprep.subr.mxu0 0.0
        %575 = vmatpush1.msra.mxu0 0.0
        %576 = vmatprep.subr.mxu0 0.0
        %577 = vmatpush1.msra.mxu0 0.0
        %578 = vmatprep.subr.mxu0 0.0
        %579 = vmatpush1.msra.mxu0 0.0
        %580 = vmatprep.subr.mxu0 0.0
        %581 = vmatpush1.msra.mxu0 0.0
        %582 = vmatprep.subr.mxu0 0.0
        %583 = vmatpush1.msra.mxu0 0.0
        %584 = vmatprep.subr.mxu0 0.0
        %585 = vmatpush1.msra.mxu0 0.0
        %586 = vmatprep.subr.mxu0 0.0
        %587 = vmatpush1.msra.mxu0 0.0
        %588 = vmatprep.subr.mxu0 0.0
        %589 = vmatpush1.msra.mxu0 0.0
        %590 = vmatprep.subr.mxu0 0.0
        %591 = vmatpush1.msra.mxu0 %v478
        %592 = vmatprep.subr.mxu0 0.0
        %593 = vmatpush1.msra.mxu0 %v475
        %594 = vmatprep.subr.mxu0 0.0
        %595 = vmatpush2.msra.mxu0 0.0
        %596 = vmatprep.subr.mxu0 0.0
        %597 = vmatpush2.msra.mxu0 0.0
        %598 = vmatprep.subr.mxu0 0.0
        %599 = vmatpush2.msra.mxu0 0.0
        %600 = vmatprep.subr.mxu0 0.0
        %601 = vmatpush2.msra.mxu0 0.0
        %602 = vmatprep.subr.mxu0 0.0
        %603 = vmatpush2.msra.mxu0 0.0
        %604 = vmatprep.subr.mxu0 0.0
        %605 = vmatpush2.msra.mxu0 0.0
        %606 = vmatprep.subr.mxu0 0.0
        %607 = vmatpush2.msra.mxu0 0.0
        %608 = vmatprep.subr.mxu0 0.0
        %609 = vmatpush2.msra.mxu0 0.0
        %610 = vmatprep.subr.mxu0 0.0
        %611 = vmatpush2.msra.mxu0 0.0
        %612 = vmatprep.subr.mxu0 0.0
        %613 = vmatpush2.msra.mxu0 0.0
        %614 = vmatprep.subr.mxu0 0.0
        %615 = vmatpush2.msra.mxu0 0.0
        %616 = vmatprep.subr.mxu0 0.0
        %617 = vmatpush2.msra.mxu0 0.0
        %618 = vmatprep.subr.mxu0 0.0
        %619 = vmatpush2.msra.mxu0 0.0
        %620 = vmatprep.subr.mxu0 0.0
        %621 = vmatpush2.msra.mxu0 0.0
        %622 = vmatprep.subr.mxu0 0.0
        %623 = vmatpush2.msra.mxu0 0.0
        %624 = vmatprep.subr.mxu0 0.0
        %625 = vmatpush2.msra.mxu0 0.0
        %626 = vmatprep.mubr.f32.mxu0 0.0
        %627 = vmatmul.mubr.f32.gmra.mxu0 %v480
        %v628 = vpop.f32.mrf.mxu0
        %v629 = vadd.f32 0.0, %v628
        %v630 = vpop.f32.mrf.mxu0
        %631 = vmatprep.mubr.f32.mxu0 0.0
        %632 = vmatmul.mubr.f32.gmra.mxu0 %v483
        %v633 = vpop.f32.mrf.mxu0
        %v634 = vadd.f32 0.0, %v633
        %v635 = vpop.f32.mrf.mxu0
        %636 = vdwg.mxu0
        %s637 = scalar_lea.vmem [#allocation2], 48
        %638 = vst [vmem:[%s637] sm:$0xff] %v552
        %639 = vst [vmem:[%s637 + $0x8] sm:$0xff] %v554
        %640 = vst [vmem:[%s637 + $0x10] sm:$0xff] %v629
        %641 = vst [vmem:[%s637 + $0x18] sm:$0xff] %v558
        %642 = vst [vmem:[%s637 + $0x20] sm:$0xff] %v560
        %643 = vst [vmem:[%s637 + $0x28] sm:$0xff] %v634
        %s644 = scalar_lea.vmem %s256, 32 [#allocation4]
        %v645 = vld [vmem:[%s644] sm:$0xff]
        %v646 = vld [vmem:[%s644 + $0x8] sm:$0xff]
        %v647 = vld [vmem:[%s2] sm:$0xff]
        %v648 = vld [vmem:[%s2 + $0x8] sm:$0xff]
        %v649 = vld [vmem:[%s2 + $0x10] sm:$0xff]
        %v650 = vld [vmem:[%s2 + $0x18] sm:$0xff]
        %v651 = vld [vmem:[%s2 + $0x20] sm:$0xff]
        %v652 = vld [vmem:[%s2 + $0x28] sm:$0xff]
        %v654 = vsel %vm305, %v645, 0
        %v657 = vsel %vm305, %v646, 0
        %659 = vmatprep.subr.mxu0 0.0
        %660 = vmatpush1.msra.mxu0 0.0
        %661 = vmatprep.subr.mxu0 0.0
        %662 = vmatpush1.msra.mxu0 0.0
        %663 = vmatprep.subr.mxu0 0.0
        %664 = vmatpush1.msra.mxu0 0.0
        %665 = vmatprep.subr.mxu0 0.0
        %666 = vmatpush1.msra.mxu0 0.0
        %667 = vmatprep.subr.mxu0 0.0
        %668 = vmatpush1.msra.mxu0 0.0
        %669 = vmatprep.subr.mxu0 0.0
        %670 = vmatpush1.msra.mxu0 0.0
        %671 = vmatprep.subr.mxu0 0.0
        %672 = vmatpush1.msra.mxu0 0.0
        %673 = vmatprep.subr.mxu0 0.0
        %674 = vmatpush1.msra.mxu0 0.0
        %675 = vmatprep.subr.mxu0 0.0
        %676 = vmatpush1.msra.mxu0 0.0
        %677 = vmatprep.subr.mxu0 0.0
        %678 = vmatpush1.msra.mxu0 0.0
        %679 = vmatprep.subr.mxu0 0.0
        %680 = vmatpush1.msra.mxu0 0.0
        %681 = vmatprep.subr.mxu0 0.0
        %682 = vmatpush1.msra.mxu0 0.0
        %683 = vmatprep.subr.mxu0 0.0
        %684 = vmatpush1.msra.mxu0 0.0
        %685 = vmatprep.subr.mxu0 0.0
        %686 = vmatpush1.msra.mxu0 0.0
        %687 = vmatprep.subr.mxu0 %v651
        %688 = vmatpush1.msra.mxu0 %v650
        %689 = vmatprep.subr.mxu0 %v648
        %690 = vmatpush1.msra.mxu0 %v647
        %691 = vmatprep.subr.mxu0 0.0
        %692 = vmatpush2.msra.mxu0 0.0
        %693 = vmatprep.subr.mxu0 0.0
        %694 = vmatpush2.msra.mxu0 0.0
        %695 = vmatprep.subr.mxu0 0.0
        %696 = vmatpush2.msra.mxu0 0.0
        %697 = vmatprep.subr.mxu0 0.0
        %698 = vmatpush2.msra.mxu0 0.0
        %699 = vmatprep.subr.mxu0 0.0
        %700 = vmatpush2.msra.mxu0 0.0
        %701 = vmatprep.subr.mxu0 0.0
        %702 = vmatpush2.msra.mxu0 0.0
        %703 = vmatprep.subr.mxu0 0.0
        %704 = vmatpush2.msra.mxu0 0.0
        %705 = vmatprep.subr.mxu0 0.0
        %706 = vmatpush2.msra.mxu0 0.0
        %707 = vmatprep.subr.mxu0 0.0
        %708 = vmatpush2.msra.mxu0 0.0
        %709 = vmatprep.subr.mxu0 0.0
        %710 = vmatpush2.msra.mxu0 0.0
        %711 = vmatprep.subr.mxu0 0.0
        %712 = vmatpush2.msra.mxu0 0.0
        %713 = vmatprep.subr.mxu0 0.0
        %714 = vmatpush2.msra.mxu0 0.0
        %715 = vmatprep.subr.mxu0 0.0
        %716 = vmatpush2.msra.mxu0 0.0
        %717 = vmatprep.subr.mxu0 0.0
        %718 = vmatpush2.msra.mxu0 0.0
        %719 = vmatprep.subr.mxu0 0.0
        %720 = vmatpush2.msra.mxu0 0.0
        %721 = vmatprep.subr.mxu0 0.0
        %722 = vmatpush2.msra.mxu0 0.0
        %723 = vmatprep.mubr.f32.mxu0 0.0
        %724 = vmatmul.mubr.f32.gmra.mxu0 %v654
        %v725 = vpop.f32.mrf.mxu0
        %v726 = vadd.f32 0.0, %v725
        %v727 = vpop.f32.mrf.mxu0
        %v728 = vadd.f32 0.0, %v727
        %729 = vmatprep.mubr.f32.mxu0 0.0
        %730 = vmatmul.mubr.f32.gmra.mxu0 %v657
        %v731 = vpop.f32.mrf.mxu0
        %v732 = vadd.f32 0.0, %v731
        %v733 = vpop.f32.mrf.mxu0
        %v734 = vadd.f32 0.0, %v733
        %735 = vdwg.mxu0
        %736 = vmatprep.subr.mxu0 0.0
        %737 = vmatpush1.msra.mxu0 0.0
        %738 = vmatprep.subr.mxu0 0.0
        %739 = vmatpush1.msra.mxu0 0.0
        %740 = vmatprep.subr.mxu0 0.0
        %741 = vmatpush1.msra.mxu0 0.0
        %742 = vmatprep.subr.mxu0 0.0
        %743 = vmatpush1.msra.mxu0 0.0
        %744 = vmatprep.subr.mxu0 0.0
        %745 = vmatpush1.msra.mxu0 0.0
        %746 = vmatprep.subr.mxu0 0.0
        %747 = vmatpush1.msra.mxu0 0.0
        %748 = vmatprep.subr.mxu0 0.0
        %749 = vmatpush1.msra.mxu0 0.0
        %750 = vmatprep.subr.mxu0 0.0
        %751 = vmatpush1.msra.mxu0 0.0
        %752 = vmatprep.subr.mxu0 0.0
        %753 = vmatpush1.msra.mxu0 0.0
        %754 = vmatprep.subr.mxu0 0.0
        %755 = vmatpush1.msra.mxu0 0.0
        %756 = vmatprep.subr.mxu0 0.0
        %757 = vmatpush1.msra.mxu0 0.0
        %758 = vmatprep.subr.mxu0 0.0
        %759 = vmatpush1.msra.mxu0 0.0
        %760 = vmatprep.subr.mxu0 0.0
        %761 = vmatpush1.msra.mxu0 0.0
        %762 = vmatprep.subr.mxu0 0.0
        %763 = vmatpush1.msra.mxu0 0.0
        %764 = vmatprep.subr.mxu0 0.0
        %765 = vmatpush1.msra.mxu0 %v652
        %766 = vmatprep.subr.mxu0 0.0
        %767 = vmatpush1.msra.mxu0 %v649
        %768 = vmatprep.subr.mxu0 0.0
        %769 = vmatpush2.msra.mxu0 0.0
        %770 = vmatprep.subr.mxu0 0.0
        %771 = vmatpush2.msra.mxu0 0.0
        %772 = vmatprep.subr.mxu0 0.0
        %773 = vmatpush2.msra.mxu0 0.0
        %774 = vmatprep.subr.mxu0 0.0
        %775 = vmatpush2.msra.mxu0 0.0
        %776 = vmatprep.subr.mxu0 0.0
        %777 = vmatpush2.msra.mxu0 0.0
        %778 = vmatprep.subr.mxu0 0.0
        %779 = vmatpush2.msra.mxu0 0.0
        %780 = vmatprep.subr.mxu0 0.0
        %781 = vmatpush2.msra.mxu0 0.0
        %782 = vmatprep.subr.mxu0 0.0
        %783 = vmatpush2.msra.mxu0 0.0
        %784 = vmatprep.subr.mxu0 0.0
        %785 = vmatpush2.msra.mxu0 0.0
        %786 = vmatprep.subr.mxu0 0.0
        %787 = vmatpush2.msra.mxu0 0.0
        %788 = vmatprep.subr.mxu0 0.0
        %789 = vmatpush2.msra.mxu0 0.0
        %790 = vmatprep.subr.mxu0 0.0
        %791 = vmatpush2.msra.mxu0 0.0
        %792 = vmatprep.subr.mxu0 0.0
        %793 = vmatpush2.msra.mxu0 0.0
        %794 = vmatprep.subr.mxu0 0.0
        %795 = vmatpush2.msra.mxu0 0.0
        %796 = vmatprep.subr.mxu0 0.0
        %797 = vmatpush2.msra.mxu0 0.0
        %798 = vmatprep.subr.mxu0 0.0
        %799 = vmatpush2.msra.mxu0 0.0
        %800 = vmatprep.mubr.f32.mxu0 0.0
        %801 = vmatmul.mubr.f32.gmra.mxu0 %v654
        %v802 = vpop.f32.mrf.mxu0
        %v803 = vadd.f32 0.0, %v802
        %v804 = vpop.f32.mrf.mxu0
        %805 = vmatprep.mubr.f32.mxu0 0.0
        %806 = vmatmul.mubr.f32.gmra.mxu0 %v657
        %v807 = vpop.f32.mrf.mxu0
        %v808 = vadd.f32 0.0, %v807
        %v809 = vpop.f32.mrf.mxu0
        %810 = vdwg.mxu0
        %s811 = scalar_lea.vmem [#allocation2], 96
        %812 = vst [vmem:[%s811] sm:$0xff] %v726
        %813 = vst [vmem:[%s811 + $0x8] sm:$0xff] %v728
        %814 = vst [vmem:[%s811 + $0x10] sm:$0xff] %v803
        %815 = vst [vmem:[%s811 + $0x18] sm:$0xff] %v732
        %816 = vst [vmem:[%s811 + $0x20] sm:$0xff] %v734
        %817 = vst [vmem:[%s811 + $0x28] sm:$0xff] %v808
        %s818 = sld [smem:[#allocation7]]
        %v819 = vld [vmem:[#allocation2] sm:$0xff]
        %v820 = vld [vmem:[#allocation2 + $0x18] sm:$0xff]
        %v821 = vstv %s818
        %v822 = vmul.f32 %v821, %v819
        %v823 = vmul.f32 %v821, %v820
        %s824 = sld [smem:[#allocation7 + $0x1]]
        %v825 = vld [vmem:[#allocation2 + $0x8] sm:$0xff]
        %v826 = vld [vmem:[#allocation2 + $0x20] sm:$0xff]
        %v827 = vstv %s824
        %v828 = vmul.f32 %v827, %v825
        %v829 = vmul.f32 %v827, %v826
        %v830 = vadd.f32 %v822, %v828
        %v831 = vadd.f32 %v823, %v829
        %s832 = sld [smem:[#allocation7 + $0x2]]
        %v833 = vld [vmem:[#allocation2 + $0x10] sm:$0xff]
        %v834 = vld [vmem:[#allocation2 + $0x28] sm:$0xff]
        %v835 = vstv %s832
        %v836 = vmul.f32 %v835, %v833
        %v837 = vmul.f32 %v835, %v834
        %v838 = vadd.f32 %v830, %v836
        %v839 = vadd.f32 %v831, %v837
        %s840 = sld [smem:[#allocation7 + $0x9]]
        %v841 = vld [vmem:[%s637] sm:$0xff]
        %v842 = vld [vmem:[%s637 + $0x18] sm:$0xff]
        %v843 = vstv %s840
        %v844 = vmul.f32 %v843, %v841
        %v845 = vmul.f32 %v843, %v842
        %v846 = vadd.f32 %v838, %v844
        %v847 = vadd.f32 %v839, %v845
        %s848 = sld [smem:[#allocation7 + $0xa]]
        %v849 = vld [vmem:[%s637 + $0x8] sm:$0xff]
        %v850 = vld [vmem:[%s637 + $0x20] sm:$0xff]
        %v851 = vstv %s848
        %v852 = vmul.f32 %v851, %v849
        %v853 = vmul.f32 %v851, %v850
        %v854 = vadd.f32 %v846, %v852
        %v855 = vadd.f32 %v847, %v853
        %s856 = sld [smem:[#allocation7 + $0xb]]
        %v857 = vld [vmem:[%s637 + $0x10] sm:$0xff]
        %v858 = vld [vmem:[%s637 + $0x28] sm:$0xff]
        %v859 = vstv %s856
        %v860 = vmul.f32 %v859, %v857
        %v861 = vmul.f32 %v859, %v858
        %v862 = vadd.f32 %v854, %v860
        %v863 = vadd.f32 %v855, %v861
        %s864 = sld [smem:[#allocation7 + $0x12]]
        %v865 = vld [vmem:[%s811] sm:$0xff]
        %v866 = vld [vmem:[%s811 + $0x18] sm:$0xff]
        %v867 = vstv %s864
        %v868 = vmul.f32 %v867, %v865
        %v869 = vmul.f32 %v867, %v866
        %v870 = vadd.f32 %v862, %v868
        %v871 = vadd.f32 %v863, %v869
        %s872 = sld [smem:[#allocation7 + $0x13]]
        %v873 = vld [vmem:[%s811 + $0x8] sm:$0xff]
        %v874 = vld [vmem:[%s811 + $0x20] sm:$0xff]
        %v875 = vstv %s872
        %v876 = vmul.f32 %v875, %v873
        %v877 = vmul.f32 %v875, %v874
        %v878 = vadd.f32 %v870, %v876
        %v879 = vadd.f32 %v871, %v877
        %s880 = sld [smem:[#allocation7 + $0x14]]
        %v881 = vld [vmem:[%s811 + $0x10] sm:$0xff]
        %v882 = vld [vmem:[%s811 + $0x28] sm:$0xff]
        %v883 = vstv %s880
        %v884 = vmul.f32 %v883, %v881
        %v885 = vmul.f32 %v883, %v882
        %v886 = vadd.f32 %v878, %v884
        %v887 = vadd.f32 %v879, %v885
        %888 = vst [vmem:[#allocation3] sm:$0xff] %v886
        %889 = vst [vmem:[#allocation3 + $0x40] sm:$0xff] %v887
        %s890 = sld [smem:[#allocation7 + $0x3]]
        %v891 = vld [vmem:[#allocation2] sm:$0xff]
        %v892 = vld [vmem:[#allocation2 + $0x18] sm:$0xff]
        %v893 = vstv %s890
        %v894 = vmul.f32 %v893, %v891
        %v895 = vmul.f32 %v893, %v892
        %s896 = sld [smem:[#allocation7 + $0x4]]
        %v897 = vld [vmem:[#allocation2 + $0x8] sm:$0xff]
        %v898 = vld [vmem:[#allocation2 + $0x20] sm:$0xff]
        %v899 = vstv %s896
        %v900 = vmul.f32 %v899, %v897
        %v901 = vmul.f32 %v899, %v898
        %v902 = vadd.f32 %v894, %v900
        %v903 = vadd.f32 %v895, %v901
        %s904 = sld [smem:[#allocation7 + $0x5]]
        %v905 = vld [vmem:[#allocation2 + $0x10] sm:$0xff]
        %v906 = vld [vmem:[#allocation2 + $0x28] sm:$0xff]
        %v907 = vstv %s904
        %v908 = vmul.f32 %v907, %v905
        %v909 = vmul.f32 %v907, %v906
        %v910 = vadd.f32 %v902, %v908
        %v911 = vadd.f32 %v903, %v909
        %s912 = sld [smem:[#allocation7 + $0xc]]
        %v913 = vld [vmem:[%s637] sm:$0xff]
        %v914 = vld [vmem:[%s637 + $0x18] sm:$0xff]
        %v915 = vstv %s912
        %v916 = vmul.f32 %v915, %v913
        %v917 = vmul.f32 %v915, %v914
        %v918 = vadd.f32 %v910, %v916
        %v919 = vadd.f32 %v911, %v917
        %s920 = sld [smem:[#allocation7 + $0xd]]
        %v921 = vld [vmem:[%s637 + $0x8] sm:$0xff]
        %v922 = vld [vmem:[%s637 + $0x20] sm:$0xff]
        %v923 = vstv %s920
        %v924 = vmul.f32 %v923, %v921
        %v925 = vmul.f32 %v923, %v922
        %v926 = vadd.f32 %v918, %v924
        %v927 = vadd.f32 %v919, %v925
        %s928 = sld [smem:[#allocation7 + $0xe]]
        %v929 = vld [vmem:[%s637 + $0x10] sm:$0xff]
        %v930 = vld [vmem:[%s637 + $0x28] sm:$0xff]
        %v931 = vstv %s928
        %v932 = vmul.f32 %v931, %v929
        %v933 = vmul.f32 %v931, %v930
        %v934 = vadd.f32 %v926, %v932
        %v935 = vadd.f32 %v927, %v933
        %s936 = sld [smem:[#allocation7 + $0x15]]
        %v937 = vld [vmem:[%s811] sm:$0xff]
        %v938 = vld [vmem:[%s811 + $0x18] sm:$0xff]
        %v939 = vstv %s936
        %v940 = vmul.f32 %v939, %v937
        %v941 = vmul.f32 %v939, %v938
        %v942 = vadd.f32 %v934, %v940
        %v943 = vadd.f32 %v935, %v941
        %s944 = sld [smem:[#allocation7 + $0x16]]
        %v945 = vld [vmem:[%s811 + $0x8] sm:$0xff]
        %v946 = vld [vmem:[%s811 + $0x20] sm:$0xff]
        %v947 = vstv %s944
        %v948 = vmul.f32 %v947, %v945
        %v949 = vmul.f32 %v947, %v946
        %v950 = vadd.f32 %v942, %v948
        %v951 = vadd.f32 %v943, %v949
        %s952 = sld [smem:[#allocation7 + $0x17]]
        %v953 = vld [vmem:[%s811 + $0x10] sm:$0xff]
        %v954 = vld [vmem:[%s811 + $0x28] sm:$0xff]
        %v955 = vstv %s952
        %v956 = vmul.f32 %v955, %v953
        %v957 = vmul.f32 %v955, %v954
        %v958 = vadd.f32 %v950, %v956
        %v959 = vadd.f32 %v951, %v957
        %960 = vst [vmem:[#allocation3 + $0x80] sm:$0xff] %v958
        %961 = vst [vmem:[#allocation3 + $0xc0] sm:$0xff] %v959
        %s962 = sld [smem:[#allocation7 + $0x6]]
        %v963 = vld [vmem:[#allocation2] sm:$0xff]
        %v964 = vld [vmem:[#allocation2 + $0x18] sm:$0xff]
        %v965 = vstv %s962
        %v966 = vmul.f32 %v965, %v963
        %v967 = vmul.f32 %v965, %v964
        %s968 = sld [smem:[#allocation7 + $0x7]]
        %v969 = vld [vmem:[#allocation2 + $0x8] sm:$0xff]
        %v970 = vld [vmem:[#allocation2 + $0x20] sm:$0xff]
        %v971 = vstv %s968
        %v972 = vmul.f32 %v971, %v969
        %v973 = vmul.f32 %v971, %v970
        %v974 = vadd.f32 %v966, %v972
        %v975 = vadd.f32 %v967, %v973
        %s976 = sld [smem:[#allocation7 + $0x8]]
        %v977 = vld [vmem:[#allocation2 + $0x10] sm:$0xff]
        %v978 = vld [vmem:[#allocation2 + $0x28] sm:$0xff]
        %v979 = vstv %s976
        %v980 = vmul.f32 %v979, %v977
        %v981 = vmul.f32 %v979, %v978
        %v982 = vadd.f32 %v974, %v980
        %v983 = vadd.f32 %v975, %v981
        %s984 = sld [smem:[#allocation7 + $0xf]]
        %v985 = vld [vmem:[%s637] sm:$0xff]
        %v986 = vld [vmem:[%s637 + $0x18] sm:$0xff]
        %v987 = vstv %s984
        %v988 = vmul.f32 %v987, %v985
        %v989 = vmul.f32 %v987, %v986
        %v990 = vadd.f32 %v982, %v988
        %v991 = vadd.f32 %v983, %v989
        %s992 = sld [smem:[#allocation7 + $0x10]]
        %v993 = vld [vmem:[%s637 + $0x8] sm:$0xff]
        %v994 = vld [vmem:[%s637 + $0x20] sm:$0xff]
        %v995 = vstv %s992
        %v996 = vmul.f32 %v995, %v993
        %v997 = vmul.f32 %v995, %v994
        %v998 = vadd.f32 %v990, %v996
        %v999 = vadd.f32 %v991, %v997
        %s1000 = sld [smem:[#allocation7 + $0x11]]
        %v1001 = vld [vmem:[%s637 + $0x10] sm:$0xff]
        %v1002 = vld [vmem:[%s637 + $0x28] sm:$0xff]
        %v1003 = vstv %s1000
        %v1004 = vmul.f32 %v1003, %v1001
        %v1005 = vmul.f32 %v1003, %v1002
        %v1006 = vadd.f32 %v998, %v1004
        %v1007 = vadd.f32 %v999, %v1005
        %s1008 = sld [smem:[#allocation7 + $0x18]]
        %v1009 = vld [vmem:[%s811] sm:$0xff]
        %v1010 = vld [vmem:[%s811 + $0x18] sm:$0xff]
        %v1011 = vstv %s1008
        %v1012 = vmul.f32 %v1011, %v1009
        %v1013 = vmul.f32 %v1011, %v1010
        %v1014 = vadd.f32 %v1006, %v1012
        %v1015 = vadd.f32 %v1007, %v1013
        %s1016 = sld [smem:[#allocation7 + $0x19]]
        %v1017 = vld [vmem:[%s811 + $0x8] sm:$0xff]
        %v1018 = vld [vmem:[%s811 + $0x20] sm:$0xff]
        %v1019 = vstv %s1016
        %v1020 = vmul.f32 %v1019, %v1017
        %v1021 = vmul.f32 %v1019, %v1018
        %v1022 = vadd.f32 %v1014, %v1020
        %v1023 = vadd.f32 %v1015, %v1021
        %s1024 = sld [smem:[#allocation7 + $0x1a]]
        %v1025 = vld [vmem:[%s811 + $0x10] sm:$0xff]
        %v1026 = vld [vmem:[%s811 + $0x28] sm:$0xff]
        %v1027 = vstv %s1024
        %v1028 = vmul.f32 %v1027, %v1025
        %v1029 = vmul.f32 %v1027, %v1026
        %v1030 = vadd.f32 %v1022, %v1028
        %v1031 = vadd.f32 %v1023, %v1029
        %1032 = vst [vmem:[#allocation3 + $0x100] sm:$0xff] %v1030
        %1033 = vst [vmem:[#allocation3 + $0x140] sm:$0xff] %v1031
        %s1034 = sld [smem:[#allocation7 + $0x80]]
        %v1035 = vld [vmem:[#allocation2] sm:$0xff]
        %v1036 = vld [vmem:[#allocation2 + $0x18] sm:$0xff]
        %v1037 = vstv %s1034
        %v1038 = vmul.f32 %v1037, %v1035
        %v1039 = vmul.f32 %v1037, %v1036
        %s1040 = sld [smem:[#allocation7 + $0x81]]
        %v1041 = vld [vmem:[#allocation2 + $0x8] sm:$0xff]
        %v1042 = vld [vmem:[#allocation2 + $0x20] sm:$0xff]
        %v1043 = vstv %s1040
        %v1044 = vmul.f32 %v1043, %v1041
        %v1045 = vmul.f32 %v1043, %v1042
        %v1046 = vadd.f32 %v1038, %v1044
        %v1047 = vadd.f32 %v1039, %v1045
        %s1048 = sld [smem:[#allocation7 + $0x82]]
        %v1049 = vld [vmem:[#allocation2 + $0x10] sm:$0xff]
        %v1050 = vld [vmem:[#allocation2 + $0x28] sm:$0xff]
        %v1051 = vstv %s1048
        %v1052 = vmul.f32 %v1051, %v1049
        %v1053 = vmul.f32 %v1051, %v1050
        %v1054 = vadd.f32 %v1046, %v1052
        %v1055 = vadd.f32 %v1047, %v1053
        %s1056 = sld [smem:[#allocation7 + $0x89]]
        %v1057 = vld [vmem:[%s637] sm:$0xff]
        %v1058 = vld [vmem:[%s637 + $0x18] sm:$0xff]
        %v1059 = vstv %s1056
        %v1060 = vmul.f32 %v1059, %v1057
        %v1061 = vmul.f32 %v1059, %v1058
        %v1062 = vadd.f32 %v1054, %v1060
        %v1063 = vadd.f32 %v1055, %v1061
        %s1064 = sld [smem:[#allocation7 + $0x8a]]
        %v1065 = vld [vmem:[%s637 + $0x8] sm:$0xff]
        %v1066 = vld [vmem:[%s637 + $0x20] sm:$0xff]
        %v1067 = vstv %s1064
        %v1068 = vmul.f32 %v1067, %v1065
        %v1069 = vmul.f32 %v1067, %v1066
        %v1070 = vadd.f32 %v1062, %v1068
        %v1071 = vadd.f32 %v1063, %v1069
        %s1072 = sld [smem:[#allocation7 + $0x8b]]
        %v1073 = vld [vmem:[%s637 + $0x10] sm:$0xff]
        %v1074 = vld [vmem:[%s637 + $0x28] sm:$0xff]
        %v1075 = vstv %s1072
        %v1076 = vmul.f32 %v1075, %v1073
        %v1077 = vmul.f32 %v1075, %v1074
        %v1078 = vadd.f32 %v1070, %v1076
        %v1079 = vadd.f32 %v1071, %v1077
        %s1080 = sld [smem:[#allocation7 + $0x92]]
        %v1081 = vld [vmem:[%s811] sm:$0xff]
        %v1082 = vld [vmem:[%s811 + $0x18] sm:$0xff]
        %v1083 = vstv %s1080
        %v1084 = vmul.f32 %v1083, %v1081
        %v1085 = vmul.f32 %v1083, %v1082
        %v1086 = vadd.f32 %v1078, %v1084
        %v1087 = vadd.f32 %v1079, %v1085
        %s1088 = sld [smem:[#allocation7 + $0x93]]
        %v1089 = vld [vmem:[%s811 + $0x8] sm:$0xff]
        %v1090 = vld [vmem:[%s811 + $0x20] sm:$0xff]
        %v1091 = vstv %s1088
        %v1092 = vmul.f32 %v1091, %v1089
        %v1093 = vmul.f32 %v1091, %v1090
        %v1094 = vadd.f32 %v1086, %v1092
        %v1095 = vadd.f32 %v1087, %v1093
        %s1096 = sld [smem:[#allocation7 + $0x94]]
        %v1097 = vld [vmem:[%s811 + $0x10] sm:$0xff]
        %v1098 = vld [vmem:[%s811 + $0x28] sm:$0xff]
        %v1099 = vstv %s1096
        %v1100 = vmul.f32 %v1099, %v1097
        %v1101 = vmul.f32 %v1099, %v1098
        %v1102 = vadd.f32 %v1094, %v1100
        %v1103 = vadd.f32 %v1095, %v1101
        %1104 = vst [vmem:[#allocation3 + $0x8] sm:$0xff] %v1102
        %1105 = vst [vmem:[#allocation3 + $0x48] sm:$0xff] %v1103
        %s1106 = sld [smem:[#allocation7 + $0x83]]
        %v1107 = vld [vmem:[#allocation2] sm:$0xff]
        %v1108 = vld [vmem:[#allocation2 + $0x18] sm:$0xff]
        %v1109 = vstv %s1106
        %v1110 = vmul.f32 %v1109, %v1107
        %v1111 = vmul.f32 %v1109, %v1108
        %s1112 = sld [smem:[#allocation7 + $0x84]]
        %v1113 = vld [vmem:[#allocation2 + $0x8] sm:$0xff]
        %v1114 = vld [vmem:[#allocation2 + $0x20] sm:$0xff]
        %v1115 = vstv %s1112
        %v1116 = vmul.f32 %v1115, %v1113
        %v1117 = vmul.f32 %v1115, %v1114
        %v1118 = vadd.f32 %v1110, %v1116
        %v1119 = vadd.f32 %v1111, %v1117
        %s1120 = sld [smem:[#allocation7 + $0x85]]
        %v1121 = vld [vmem:[#allocation2 + $0x10] sm:$0xff]
        %v1122 = vld [vmem:[#allocation2 + $0x28] sm:$0xff]
        %v1123 = vstv %s1120
        %v1124 = vmul.f32 %v1123, %v1121
        %v1125 = vmul.f32 %v1123, %v1122
        %v1126 = vadd.f32 %v1118, %v1124
        %v1127 = vadd.f32 %v1119, %v1125
        %s1128 = sld [smem:[#allocation7 + $0x8c]]
        %v1129 = vld [vmem:[%s637] sm:$0xff]
        %v1130 = vld [vmem:[%s637 + $0x18] sm:$0xff]
        %v1131 = vstv %s1128
        %v1132 = vmul.f32 %v1131, %v1129
        %v1133 = vmul.f32 %v1131, %v1130
        %v1134 = vadd.f32 %v1126, %v1132
        %v1135 = vadd.f32 %v1127, %v1133
        %s1136 = sld [smem:[#allocation7 + $0x8d]]
        %v1137 = vld [vmem:[%s637 + $0x8] sm:$0xff]
        %v1138 = vld [vmem:[%s637 + $0x20] sm:$0xff]
        %v1139 = vstv %s1136
        %v1140 = vmul.f32 %v1139, %v1137
        %v1141 = vmul.f32 %v1139, %v1138
        %v1142 = vadd.f32 %v1134, %v1140
        %v1143 = vadd.f32 %v1135, %v1141
        %s1144 = sld [smem:[#allocation7 + $0x8e]]
        %v1145 = vld [vmem:[%s637 + $0x10] sm:$0xff]
        %v1146 = vld [vmem:[%s637 + $0x28] sm:$0xff]
        %v1147 = vstv %s1144
        %v1148 = vmul.f32 %v1147, %v1145
        %v1149 = vmul.f32 %v1147, %v1146
        %v1150 = vadd.f32 %v1142, %v1148
        %v1151 = vadd.f32 %v1143, %v1149
        %s1152 = sld [smem:[#allocation7 + $0x95]]
        %v1153 = vld [vmem:[%s811] sm:$0xff]
        %v1154 = vld [vmem:[%s811 + $0x18] sm:$0xff]
        %v1155 = vstv %s1152
        %v1156 = vmul.f32 %v1155, %v1153
        %v1157 = vmul.f32 %v1155, %v1154
        %v1158 = vadd.f32 %v1150, %v1156
        %v1159 = vadd.f32 %v1151, %v1157
        %s1160 = sld [smem:[#allocation7 + $0x96]]
        %v1161 = vld [vmem:[%s811 + $0x8] sm:$0xff]
        %v1162 = vld [vmem:[%s811 + $0x20] sm:$0xff]
        %v1163 = vstv %s1160
        %v1164 = vmul.f32 %v1163, %v1161
        %v1165 = vmul.f32 %v1163, %v1162
        %v1166 = vadd.f32 %v1158, %v1164
        %v1167 = vadd.f32 %v1159, %v1165
        %s1168 = sld [smem:[#allocation7 + $0x97]]
        %v1169 = vld [vmem:[%s811 + $0x10] sm:$0xff]
        %v1170 = vld [vmem:[%s811 + $0x28] sm:$0xff]
        %v1171 = vstv %s1168
        %v1172 = vmul.f32 %v1171, %v1169
        %v1173 = vmul.f32 %v1171, %v1170
        %v1174 = vadd.f32 %v1166, %v1172
        %v1175 = vadd.f32 %v1167, %v1173
        %1176 = vst [vmem:[#allocation3 + $0x88] sm:$0xff] %v1174
        %1177 = vst [vmem:[#allocation3 + $0xc8] sm:$0xff] %v1175
        %s1178 = sld [smem:[#allocation7 + $0x86]]
        %v1179 = vld [vmem:[#allocation2] sm:$0xff]
        %v1180 = vld [vmem:[#allocation2 + $0x18] sm:$0xff]
        %v1181 = vstv %s1178
        %v1182 = vmul.f32 %v1181, %v1179
        %v1183 = vmul.f32 %v1181, %v1180
        %s1184 = sld [smem:[#allocation7 + $0x87]]
        %v1185 = vld [vmem:[#allocation2 + $0x8] sm:$0xff]
        %v1186 = vld [vmem:[#allocation2 + $0x20] sm:$0xff]
        %v1187 = vstv %s1184
        %v1188 = vmul.f32 %v1187, %v1185
        %v1189 = vmul.f32 %v1187, %v1186
        %v1190 = vadd.f32 %v1182, %v1188
        %v1191 = vadd.f32 %v1183, %v1189
        %s1192 = sld [smem:[#allocation7 + $0x88]]
        %v1193 = vld [vmem:[#allocation2 + $0x10] sm:$0xff]
        %v1194 = vld [vmem:[#allocation2 + $0x28] sm:$0xff]
        %v1195 = vstv %s1192
        %v1196 = vmul.f32 %v1195, %v1193
        %v1197 = vmul.f32 %v1195, %v1194
        %v1198 = vadd.f32 %v1190, %v1196
        %v1199 = vadd.f32 %v1191, %v1197
        %s1200 = sld [smem:[#allocation7 + $0x8f]]
        %v1201 = vld [vmem:[%s637] sm:$0xff]
        %v1202 = vld [vmem:[%s637 + $0x18] sm:$0xff]
        %v1203 = vstv %s1200
        %v1204 = vmul.f32 %v1203, %v1201
        %v1205 = vmul.f32 %v1203, %v1202
        %v1206 = vadd.f32 %v1198, %v1204
        %v1207 = vadd.f32 %v1199, %v1205
        %s1208 = sld [smem:[#allocation7 + $0x90]]
        %v1209 = vld [vmem:[%s637 + $0x8] sm:$0xff]
        %v1210 = vld [vmem:[%s637 + $0x20] sm:$0xff]
        %v1211 = vstv %s1208
        %v1212 = vmul.f32 %v1211, %v1209
        %v1213 = vmul.f32 %v1211, %v1210
        %v1214 = vadd.f32 %v1206, %v1212
        %v1215 = vadd.f32 %v1207, %v1213
        %s1216 = sld [smem:[#allocation7 + $0x91]]
        %v1217 = vld [vmem:[%s637 + $0x10] sm:$0xff]
        %v1218 = vld [vmem:[%s637 + $0x28] sm:$0xff]
        %v1219 = vstv %s1216
        %v1220 = vmul.f32 %v1219, %v1217
        %v1221 = vmul.f32 %v1219, %v1218
        %v1222 = vadd.f32 %v1214, %v1220
        %v1223 = vadd.f32 %v1215, %v1221
        %s1224 = sld [smem:[#allocation7 + $0x98]]
        %v1225 = vld [vmem:[%s811] sm:$0xff]
        %v1226 = vld [vmem:[%s811 + $0x18] sm:$0xff]
        %v1227 = vstv %s1224
        %v1228 = vmul.f32 %v1227, %v1225
        %v1229 = vmul.f32 %v1227, %v1226
        %v1230 = vadd.f32 %v1222, %v1228
        %v1231 = vadd.f32 %v1223, %v1229
        %s1232 = sld [smem:[#allocation7 + $0x99]]
        %v1233 = vld [vmem:[%s811 + $0x8] sm:$0xff]
        %v1234 = vld [vmem:[%s811 + $0x20] sm:$0xff]
        %v1235 = vstv %s1232
        %v1236 = vmul.f32 %v1235, %v1233
        %v1237 = vmul.f32 %v1235, %v1234
        %v1238 = vadd.f32 %v1230, %v1236
        %v1239 = vadd.f32 %v1231, %v1237
        %s1240 = sld [smem:[#allocation7 + $0x9a]]
        %v1241 = vld [vmem:[%s811 + $0x10] sm:$0xff]
        %v1242 = vld [vmem:[%s811 + $0x28] sm:$0xff]
        %v1243 = vstv %s1240
        %v1244 = vmul.f32 %v1243, %v1241
        %v1245 = vmul.f32 %v1243, %v1242
        %v1246 = vadd.f32 %v1238, %v1244
        %v1247 = vadd.f32 %v1239, %v1245
        %1248 = vst [vmem:[#allocation3 + $0x108] sm:$0xff] %v1246
        %1249 = vst [vmem:[#allocation3 + $0x148] sm:$0xff] %v1247
        %s1250 = sld [smem:[#allocation7 + $0x100]]
        %v1251 = vld [vmem:[#allocation2] sm:$0xff]
        %v1252 = vld [vmem:[#allocation2 + $0x18] sm:$0xff]
        %v1253 = vstv %s1250
        %v1254 = vmul.f32 %v1253, %v1251
        %v1255 = vmul.f32 %v1253, %v1252
        %s1256 = sld [smem:[#allocation7 + $0x101]]
        %v1257 = vld [vmem:[#allocation2 + $0x8] sm:$0xff]
        %v1258 = vld [vmem:[#allocation2 + $0x20] sm:$0xff]
        %v1259 = vstv %s1256
        %v1260 = vmul.f32 %v1259, %v1257
        %v1261 = vmul.f32 %v1259, %v1258
        %v1262 = vadd.f32 %v1254, %v1260
        %v1263 = vadd.f32 %v1255, %v1261
        %s1264 = sld [smem:[#allocation7 + $0x102]]
        %v1265 = vld [vmem:[#allocation2 + $0x10] sm:$0xff]
        %v1266 = vld [vmem:[#allocation2 + $0x28] sm:$0xff]
        %v1267 = vstv %s1264
        %v1268 = vmul.f32 %v1267, %v1265
        %v1269 = vmul.f32 %v1267, %v1266
        %v1270 = vadd.f32 %v1262, %v1268
        %v1271 = vadd.f32 %v1263, %v1269
        %s1272 = sld [smem:[#allocation7 + $0x109]]
        %v1273 = vld [vmem:[%s637] sm:$0xff]
        %v1274 = vld [vmem:[%s637 + $0x18] sm:$0xff]
        %v1275 = vstv %s1272
        %v1276 = vmul.f32 %v1275, %v1273
        %v1277 = vmul.f32 %v1275, %v1274
        %v1278 = vadd.f32 %v1270, %v1276
        %v1279 = vadd.f32 %v1271, %v1277
        %s1280 = sld [smem:[#allocation7 + $0x10a]]
        %v1281 = vld [vmem:[%s637 + $0x8] sm:$0xff]
        %v1282 = vld [vmem:[%s637 + $0x20] sm:$0xff]
        %v1283 = vstv %s1280
        %v1284 = vmul.f32 %v1283, %v1281
        %v1285 = vmul.f32 %v1283, %v1282
        %v1286 = vadd.f32 %v1278, %v1284
        %v1287 = vadd.f32 %v1279, %v1285
        %s1288 = sld [smem:[#allocation7 + $0x10b]]
        %v1289 = vld [vmem:[%s637 + $0x10] sm:$0xff]
        %v1290 = vld [vmem:[%s637 + $0x28] sm:$0xff]
        %v1291 = vstv %s1288
        %v1292 = vmul.f32 %v1291, %v1289
        %v1293 = vmul.f32 %v1291, %v1290
        %v1294 = vadd.f32 %v1286, %v1292
        %v1295 = vadd.f32 %v1287, %v1293
        %s1296 = sld [smem:[#allocation7 + $0x112]]
        %v1297 = vld [vmem:[%s811] sm:$0xff]
        %v1298 = vld [vmem:[%s811 + $0x18] sm:$0xff]
        %v1299 = vstv %s1296
        %v1300 = vmul.f32 %v1299, %v1297
        %v1301 = vmul.f32 %v1299, %v1298
        %v1302 = vadd.f32 %v1294, %v1300
        %v1303 = vadd.f32 %v1295, %v1301
        %s1304 = sld [smem:[#allocation7 + $0x113]]
        %v1305 = vld [vmem:[%s811 + $0x8] sm:$0xff]
        %v1306 = vld [vmem:[%s811 + $0x20] sm:$0xff]
        %v1307 = vstv %s1304
        %v1308 = vmul.f32 %v1307, %v1305
        %v1309 = vmul.f32 %v1307, %v1306
        %v1310 = vadd.f32 %v1302, %v1308
        %v1311 = vadd.f32 %v1303, %v1309
        %s1312 = sld [smem:[#allocation7 + $0x114]]
        %v1313 = vld [vmem:[%s811 + $0x10] sm:$0xff]
        %v1314 = vld [vmem:[%s811 + $0x28] sm:$0xff]
        %v1315 = vstv %s1312
        %v1316 = vmul.f32 %v1315, %v1313
        %v1317 = vmul.f32 %v1315, %v1314
        %v1318 = vadd.f32 %v1310, %v1316
        %v1319 = vadd.f32 %v1311, %v1317
        %1320 = vst [vmem:[#allocation3 + $0x10] sm:$0xff] %v1318
        %1321 = vst [vmem:[#allocation3 + $0x50] sm:$0xff] %v1319
        %s1322 = sld [smem:[#allocation7 + $0x103]]
        %v1323 = vld [vmem:[#allocation2] sm:$0xff]
        %v1324 = vld [vmem:[#allocation2 + $0x18] sm:$0xff]
        %v1325 = vstv %s1322
        %v1326 = vmul.f32 %v1325, %v1323
        %v1327 = vmul.f32 %v1325, %v1324
        %s1328 = sld [smem:[#allocation7 + $0x104]]
        %v1329 = vld [vmem:[#allocation2 + $0x8] sm:$0xff]
        %v1330 = vld [vmem:[#allocation2 + $0x20] sm:$0xff]
        %v1331 = vstv %s1328
        %v1332 = vmul.f32 %v1331, %v1329
        %v1333 = vmul.f32 %v1331, %v1330
        %v1334 = vadd.f32 %v1326, %v1332
        %v1335 = vadd.f32 %v1327, %v1333
        %s1336 = sld [smem:[#allocation7 + $0x105]]
        %v1337 = vld [vmem:[#allocation2 + $0x10] sm:$0xff]
        %v1338 = vld [vmem:[#allocation2 + $0x28] sm:$0xff]
        %v1339 = vstv %s1336
        %v1340 = vmul.f32 %v1339, %v1337
        %v1341 = vmul.f32 %v1339, %v1338
        %v1342 = vadd.f32 %v1334, %v1340
        %v1343 = vadd.f32 %v1335, %v1341
        %s1344 = sld [smem:[#allocation7 + $0x10c]]
        %v1345 = vld [vmem:[%s637] sm:$0xff]
        %v1346 = vld [vmem:[%s637 + $0x18] sm:$0xff]
        %v1347 = vstv %s1344
        %v1348 = vmul.f32 %v1347, %v1345
        %v1349 = vmul.f32 %v1347, %v1346
        %v1350 = vadd.f32 %v1342, %v1348
        %v1351 = vadd.f32 %v1343, %v1349
        %s1352 = sld [smem:[#allocation7 + $0x10d]]
        %v1353 = vld [vmem:[%s637 + $0x8] sm:$0xff]
        %v1354 = vld [vmem:[%s637 + $0x20] sm:$0xff]
        %v1355 = vstv %s1352
        %v1356 = vmul.f32 %v1355, %v1353
        %v1357 = vmul.f32 %v1355, %v1354
        %v1358 = vadd.f32 %v1350, %v1356
        %v1359 = vadd.f32 %v1351, %v1357
        %s1360 = sld [smem:[#allocation7 + $0x10e]]
        %v1361 = vld [vmem:[%s637 + $0x10] sm:$0xff]
        %v1362 = vld [vmem:[%s637 + $0x28] sm:$0xff]
        %v1363 = vstv %s1360
        %v1364 = vmul.f32 %v1363, %v1361
        %v1365 = vmul.f32 %v1363, %v1362
        %v1366 = vadd.f32 %v1358, %v1364
        %v1367 = vadd.f32 %v1359, %v1365
        %s1368 = sld [smem:[#allocation7 + $0x115]]
        %v1369 = vld [vmem:[%s811] sm:$0xff]
        %v1370 = vld [vmem:[%s811 + $0x18] sm:$0xff]
        %v1371 = vstv %s1368
        %v1372 = vmul.f32 %v1371, %v1369
        %v1373 = vmul.f32 %v1371, %v1370
        %v1374 = vadd.f32 %v1366, %v1372
        %v1375 = vadd.f32 %v1367, %v1373
        %s1376 = sld [smem:[#allocation7 + $0x116]]
        %v1377 = vld [vmem:[%s811 + $0x8] sm:$0xff]
        %v1378 = vld [vmem:[%s811 + $0x20] sm:$0xff]
        %v1379 = vstv %s1376
        %v1380 = vmul.f32 %v1379, %v1377
        %v1381 = vmul.f32 %v1379, %v1378
        %v1382 = vadd.f32 %v1374, %v1380
        %v1383 = vadd.f32 %v1375, %v1381
        %s1384 = sld [smem:[#allocation7 + $0x117]]
        %v1385 = vld [vmem:[%s811 + $0x10] sm:$0xff]
        %v1386 = vld [vmem:[%s811 + $0x28] sm:$0xff]
        %v1387 = vstv %s1384
        %v1388 = vmul.f32 %v1387, %v1385
        %v1389 = vmul.f32 %v1387, %v1386
        %v1390 = vadd.f32 %v1382, %v1388
        %v1391 = vadd.f32 %v1383, %v1389
        %1392 = vst [vmem:[#allocation3 + $0x90] sm:$0xff] %v1390
        %1393 = vst [vmem:[#allocation3 + $0xd0] sm:$0xff] %v1391
        %s1394 = sld [smem:[#allocation7 + $0x106]]
        %v1395 = vld [vmem:[#allocation2] sm:$0xff]
        %v1396 = vld [vmem:[#allocation2 + $0x18] sm:$0xff]
        %v1397 = vstv %s1394
        %v1398 = vmul.f32 %v1397, %v1395
        %v1399 = vmul.f32 %v1397, %v1396
        %s1400 = sld [smem:[#allocation7 + $0x107]]
        %v1401 = vld [vmem:[#allocation2 + $0x8] sm:$0xff]
        %v1402 = vld [vmem:[#allocation2 + $0x20] sm:$0xff]
        %v1403 = vstv %s1400
        %v1404 = vmul.f32 %v1403, %v1401
        %v1405 = vmul.f32 %v1403, %v1402
        %v1406 = vadd.f32 %v1398, %v1404
        %v1407 = vadd.f32 %v1399, %v1405
        %s1408 = sld [smem:[#allocation7 + $0x108]]
        %v1409 = vld [vmem:[#allocation2 + $0x10] sm:$0xff]
        %v1410 = vld [vmem:[#allocation2 + $0x28] sm:$0xff]
        %v1411 = vstv %s1408
        %v1412 = vmul.f32 %v1411, %v1409
        %v1413 = vmul.f32 %v1411, %v1410
        %v1414 = vadd.f32 %v1406, %v1412
        %v1415 = vadd.f32 %v1407, %v1413
        %s1416 = sld [smem:[#allocation7 + $0x10f]]
        %v1417 = vld [vmem:[%s637] sm:$0xff]
        %v1418 = vld [vmem:[%s637 + $0x18] sm:$0xff]
        %v1419 = vstv %s1416
        %v1420 = vmul.f32 %v1419, %v1417
        %v1421 = vmul.f32 %v1419, %v1418
        %v1422 = vadd.f32 %v1414, %v1420
        %v1423 = vadd.f32 %v1415, %v1421
        %s1424 = sld [smem:[#allocation7 + $0x110]]
        %v1425 = vld [vmem:[%s637 + $0x8] sm:$0xff]
        %v1426 = vld [vmem:[%s637 + $0x20] sm:$0xff]
        %v1427 = vstv %s1424
        %v1428 = vmul.f32 %v1427, %v1425
        %v1429 = vmul.f32 %v1427, %v1426
        %v1430 = vadd.f32 %v1422, %v1428
        %v1431 = vadd.f32 %v1423, %v1429
        %s1432 = sld [smem:[#allocation7 + $0x111]]
        %v1433 = vld [vmem:[%s637 + $0x10] sm:$0xff]
        %v1434 = vld [vmem:[%s637 + $0x28] sm:$0xff]
        %v1435 = vstv %s1432
        %v1436 = vmul.f32 %v1435, %v1433
        %v1437 = vmul.f32 %v1435, %v1434
        %v1438 = vadd.f32 %v1430, %v1436
        %v1439 = vadd.f32 %v1431, %v1437
        %s1440 = sld [smem:[#allocation7 + $0x118]]
        %v1441 = vld [vmem:[%s811] sm:$0xff]
        %v1442 = vld [vmem:[%s811 + $0x18] sm:$0xff]
        %v1443 = vstv %s1440
        %v1444 = vmul.f32 %v1443, %v1441
        %v1445 = vmul.f32 %v1443, %v1442
        %v1446 = vadd.f32 %v1438, %v1444
        %v1447 = vadd.f32 %v1439, %v1445
        %s1448 = sld [smem:[#allocation7 + $0x119]]
        %v1449 = vld [vmem:[%s811 + $0x8] sm:$0xff]
        %v1450 = vld [vmem:[%s811 + $0x20] sm:$0xff]
        %v1451 = vstv %s1448
        %v1452 = vmul.f32 %v1451, %v1449
        %v1453 = vmul.f32 %v1451, %v1450
        %v1454 = vadd.f32 %v1446, %v1452
        %v1455 = vadd.f32 %v1447, %v1453
        %s1456 = sld [smem:[#allocation7 + $0x11a]]
        %v1457 = vld [vmem:[%s811 + $0x10] sm:$0xff]
        %v1458 = vld [vmem:[%s811 + $0x28] sm:$0xff]
        %v1459 = vstv %s1456
        %v1460 = vmul.f32 %v1459, %v1457
        %v1461 = vmul.f32 %v1459, %v1458
        %v1462 = vadd.f32 %v1454, %v1460
        %v1463 = vadd.f32 %v1455, %v1461
        %1464 = vst [vmem:[#allocation3 + $0x110] sm:$0xff] %v1462
        %1465 = vst [vmem:[#allocation3 + $0x150] sm:$0xff] %v1463
        %s1466 = sld [smem:[#allocation7 + $0x180]]
        %v1467 = vld [vmem:[#allocation2] sm:$0xff]
        %v1468 = vld [vmem:[#allocation2 + $0x18] sm:$0xff]
        %v1469 = vstv %s1466
        %v1470 = vmul.f32 %v1469, %v1467
        %v1471 = vmul.f32 %v1469, %v1468
        %s1472 = sld [smem:[#allocation7 + $0x181]]
        %v1473 = vld [vmem:[#allocation2 + $0x8] sm:$0xff]
        %v1474 = vld [vmem:[#allocation2 + $0x20] sm:$0xff]
        %v1475 = vstv %s1472
        %v1476 = vmul.f32 %v1475, %v1473
        %v1477 = vmul.f32 %v1475, %v1474
        %v1478 = vadd.f32 %v1470, %v1476
        %v1479 = vadd.f32 %v1471, %v1477
        %s1480 = sld [smem:[#allocation7 + $0x182]]
        %v1481 = vld [vmem:[#allocation2 + $0x10] sm:$0xff]
        %v1482 = vld [vmem:[#allocation2 + $0x28] sm:$0xff]
        %v1483 = vstv %s1480
        %v1484 = vmul.f32 %v1483, %v1481
        %v1485 = vmul.f32 %v1483, %v1482
        %v1486 = vadd.f32 %v1478, %v1484
        %v1487 = vadd.f32 %v1479, %v1485
        %s1488 = sld [smem:[#allocation7 + $0x189]]
        %v1489 = vld [vmem:[%s637] sm:$0xff]
        %v1490 = vld [vmem:[%s637 + $0x18] sm:$0xff]
        %v1491 = vstv %s1488
        %v1492 = vmul.f32 %v1491, %v1489
        %v1493 = vmul.f32 %v1491, %v1490
        %v1494 = vadd.f32 %v1486, %v1492
        %v1495 = vadd.f32 %v1487, %v1493
        %s1496 = sld [smem:[#allocation7 + $0x18a]]
        %v1497 = vld [vmem:[%s637 + $0x8] sm:$0xff]
        %v1498 = vld [vmem:[%s637 + $0x20] sm:$0xff]
        %v1499 = vstv %s1496
        %v1500 = vmul.f32 %v1499, %v1497
        %v1501 = vmul.f32 %v1499, %v1498
        %v1502 = vadd.f32 %v1494, %v1500
        %v1503 = vadd.f32 %v1495, %v1501
        %s1504 = sld [smem:[#allocation7 + $0x18b]]
        %v1505 = vld [vmem:[%s637 + $0x10] sm:$0xff]
        %v1506 = vld [vmem:[%s637 + $0x28] sm:$0xff]
        %v1507 = vstv %s1504
        %v1508 = vmul.f32 %v1507, %v1505
        %v1509 = vmul.f32 %v1507, %v1506
        %v1510 = vadd.f32 %v1502, %v1508
        %v1511 = vadd.f32 %v1503, %v1509
        %s1512 = sld [smem:[#allocation7 + $0x192]]
        %v1513 = vld [vmem:[%s811] sm:$0xff]
        %v1514 = vld [vmem:[%s811 + $0x18] sm:$0xff]
        %v1515 = vstv %s1512
        %v1516 = vmul.f32 %v1515, %v1513
        %v1517 = vmul.f32 %v1515, %v1514
        %v1518 = vadd.f32 %v1510, %v1516
        %v1519 = vadd.f32 %v1511, %v1517
        %s1520 = sld [smem:[#allocation7 + $0x193]]
        %v1521 = vld [vmem:[%s811 + $0x8] sm:$0xff]
        %v1522 = vld [vmem:[%s811 + $0x20] sm:$0xff]
        %v1523 = vstv %s1520
        %v1524 = vmul.f32 %v1523, %v1521
        %v1525 = vmul.f32 %v1523, %v1522
        %v1526 = vadd.f32 %v1518, %v1524
        %v1527 = vadd.f32 %v1519, %v1525
        %s1528 = sld [smem:[#allocation7 + $0x194]]
        %v1529 = vld [vmem:[%s811 + $0x10] sm:$0xff]
        %v1530 = vld [vmem:[%s811 + $0x28] sm:$0xff]
        %v1531 = vstv %s1528
        %v1532 = vmul.f32 %v1531, %v1529
        %v1533 = vmul.f32 %v1531, %v1530
        %v1534 = vadd.f32 %v1526, %v1532
        %v1535 = vadd.f32 %v1527, %v1533
        %1536 = vst [vmem:[#allocation3 + $0x18] sm:$0xff] %v1534
        %1537 = vst [vmem:[#allocation3 + $0x58] sm:$0xff] %v1535
        %s1538 = sld [smem:[#allocation7 + $0x183]]
        %v1539 = vld [vmem:[#allocation2] sm:$0xff]
        %v1540 = vld [vmem:[#allocation2 + $0x18] sm:$0xff]
        %v1541 = vstv %s1538
        %v1542 = vmul.f32 %v1541, %v1539
        %v1543 = vmul.f32 %v1541, %v1540
        %s1544 = sld [smem:[#allocation7 + $0x184]]
        %v1545 = vld [vmem:[#allocation2 + $0x8] sm:$0xff]
        %v1546 = vld [vmem:[#allocation2 + $0x20] sm:$0xff]
        %v1547 = vstv %s1544
        %v1548 = vmul.f32 %v1547, %v1545
        %v1549 = vmul.f32 %v1547, %v1546
        %v1550 = vadd.f32 %v1542, %v1548
        %v1551 = vadd.f32 %v1543, %v1549
        %s1552 = sld [smem:[#allocation7 + $0x185]]
        %v1553 = vld [vmem:[#allocation2 + $0x10] sm:$0xff]
        %v1554 = vld [vmem:[#allocation2 + $0x28] sm:$0xff]
        %v1555 = vstv %s1552
        %v1556 = vmul.f32 %v1555, %v1553
        %v1557 = vmul.f32 %v1555, %v1554
        %v1558 = vadd.f32 %v1550, %v1556
        %v1559 = vadd.f32 %v1551, %v1557
        %s1560 = sld [smem:[#allocation7 + $0x18c]]
        %v1561 = vld [vmem:[%s637] sm:$0xff]
        %v1562 = vld [vmem:[%s637 + $0x18] sm:$0xff]
        %v1563 = vstv %s1560
        %v1564 = vmul.f32 %v1563, %v1561
        %v1565 = vmul.f32 %v1563, %v1562
        %v1566 = vadd.f32 %v1558, %v1564
        %v1567 = vadd.f32 %v1559, %v1565
        %s1568 = sld [smem:[#allocation7 + $0x18d]]
        %v1569 = vld [vmem:[%s637 + $0x8] sm:$0xff]
        %v1570 = vld [vmem:[%s637 + $0x20] sm:$0xff]
        %v1571 = vstv %s1568
        %v1572 = vmul.f32 %v1571, %v1569
        %v1573 = vmul.f32 %v1571, %v1570
        %v1574 = vadd.f32 %v1566, %v1572
        %v1575 = vadd.f32 %v1567, %v1573
        %s1576 = sld [smem:[#allocation7 + $0x18e]]
        %v1577 = vld [vmem:[%s637 + $0x10] sm:$0xff]
        %v1578 = vld [vmem:[%s637 + $0x28] sm:$0xff]
        %v1579 = vstv %s1576
        %v1580 = vmul.f32 %v1579, %v1577
        %v1581 = vmul.f32 %v1579, %v1578
        %v1582 = vadd.f32 %v1574, %v1580
        %v1583 = vadd.f32 %v1575, %v1581
        %s1584 = sld [smem:[#allocation7 + $0x195]]
        %v1585 = vld [vmem:[%s811] sm:$0xff]
        %v1586 = vld [vmem:[%s811 + $0x18] sm:$0xff]
        %v1587 = vstv %s1584
        %v1588 = vmul.f32 %v1587, %v1585
        %v1589 = vmul.f32 %v1587, %v1586
        %v1590 = vadd.f32 %v1582, %v1588
        %v1591 = vadd.f32 %v1583, %v1589
        %s1592 = sld [smem:[#allocation7 + $0x196]]
        %v1593 = vld [vmem:[%s811 + $0x8] sm:$0xff]
        %v1594 = vld [vmem:[%s811 + $0x20] sm:$0xff]
        %v1595 = vstv %s1592
        %v1596 = vmul.f32 %v1595, %v1593
        %v1597 = vmul.f32 %v1595, %v1594
        %v1598 = vadd.f32 %v1590, %v1596
        %v1599 = vadd.f32 %v1591, %v1597
        %s1600 = sld [smem:[#allocation7 + $0x197]]
        %v1601 = vld [vmem:[%s811 + $0x10] sm:$0xff]
        %v1602 = vld [vmem:[%s811 + $0x28] sm:$0xff]
        %v1603 = vstv %s1600
        %v1604 = vmul.f32 %v1603, %v1601
        %v1605 = vmul.f32 %v1603, %v1602
        %v1606 = vadd.f32 %v1598, %v1604
        %v1607 = vadd.f32 %v1599, %v1605
        %1608 = vst [vmem:[#allocation3 + $0x98] sm:$0xff] %v1606
        %1609 = vst [vmem:[#allocation3 + $0xd8] sm:$0xff] %v1607
        %s1610 = sld [smem:[#allocation7 + $0x186]]
        %v1611 = vld [vmem:[#allocation2] sm:$0xff]
        %v1612 = vld [vmem:[#allocation2 + $0x18] sm:$0xff]
        %v1613 = vstv %s1610
        %v1614 = vmul.f32 %v1613, %v1611
        %v1615 = vmul.f32 %v1613, %v1612
        %s1616 = sld [smem:[#allocation7 + $0x187]]
        %v1617 = vld [vmem:[#allocation2 + $0x8] sm:$0xff]
        %v1618 = vld [vmem:[#allocation2 + $0x20] sm:$0xff]
        %v1619 = vstv %s1616
        %v1620 = vmul.f32 %v1619, %v1617
        %v1621 = vmul.f32 %v1619, %v1618
        %v1622 = vadd.f32 %v1614, %v1620
        %v1623 = vadd.f32 %v1615, %v1621
        %s1624 = sld [smem:[#allocation7 + $0x188]]
        %v1625 = vld [vmem:[#allocation2 + $0x10] sm:$0xff]
        %v1626 = vld [vmem:[#allocation2 + $0x28] sm:$0xff]
        %v1627 = vstv %s1624
        %v1628 = vmul.f32 %v1627, %v1625
        %v1629 = vmul.f32 %v1627, %v1626
        %v1630 = vadd.f32 %v1622, %v1628
        %v1631 = vadd.f32 %v1623, %v1629
        %s1632 = sld [smem:[#allocation7 + $0x18f]]
        %v1633 = vld [vmem:[%s637] sm:$0xff]
        %v1634 = vld [vmem:[%s637 + $0x18] sm:$0xff]
        %v1635 = vstv %s1632
        %v1636 = vmul.f32 %v1635, %v1633
        %v1637 = vmul.f32 %v1635, %v1634
        %v1638 = vadd.f32 %v1630, %v1636
        %v1639 = vadd.f32 %v1631, %v1637
        %s1640 = sld [smem:[#allocation7 + $0x190]]
        %v1641 = vld [vmem:[%s637 + $0x8] sm:$0xff]
        %v1642 = vld [vmem:[%s637 + $0x20] sm:$0xff]
        %v1643 = vstv %s1640
        %v1644 = vmul.f32 %v1643, %v1641
        %v1645 = vmul.f32 %v1643, %v1642
        %v1646 = vadd.f32 %v1638, %v1644
        %v1647 = vadd.f32 %v1639, %v1645
        %s1648 = sld [smem:[#allocation7 + $0x191]]
        %v1649 = vld [vmem:[%s637 + $0x10] sm:$0xff]
        %v1650 = vld [vmem:[%s637 + $0x28] sm:$0xff]
        %v1651 = vstv %s1648
        %v1652 = vmul.f32 %v1651, %v1649
        %v1653 = vmul.f32 %v1651, %v1650
        %v1654 = vadd.f32 %v1646, %v1652
        %v1655 = vadd.f32 %v1647, %v1653
        %s1656 = sld [smem:[#allocation7 + $0x198]]
        %v1657 = vld [vmem:[%s811] sm:$0xff]
        %v1658 = vld [vmem:[%s811 + $0x18] sm:$0xff]
        %v1659 = vstv %s1656
        %v1660 = vmul.f32 %v1659, %v1657
        %v1661 = vmul.f32 %v1659, %v1658
        %v1662 = vadd.f32 %v1654, %v1660
        %v1663 = vadd.f32 %v1655, %v1661
        %s1664 = sld [smem:[#allocation7 + $0x199]]
        %v1665 = vld [vmem:[%s811 + $0x8] sm:$0xff]
        %v1666 = vld [vmem:[%s811 + $0x20] sm:$0xff]
        %v1667 = vstv %s1664
        %v1668 = vmul.f32 %v1667, %v1665
        %v1669 = vmul.f32 %v1667, %v1666
        %v1670 = vadd.f32 %v1662, %v1668
        %v1671 = vadd.f32 %v1663, %v1669
        %s1672 = sld [smem:[#allocation7 + $0x19a]]
        %v1673 = vld [vmem:[%s811 + $0x10] sm:$0xff]
        %v1674 = vld [vmem:[%s811 + $0x28] sm:$0xff]
        %v1675 = vstv %s1672
        %v1676 = vmul.f32 %v1675, %v1673
        %v1677 = vmul.f32 %v1675, %v1674
        %v1678 = vadd.f32 %v1670, %v1676
        %v1679 = vadd.f32 %v1671, %v1677
        %1680 = vst [vmem:[#allocation3 + $0x118] sm:$0xff] %v1678
        %1681 = vst [vmem:[#allocation3 + $0x158] sm:$0xff] %v1679
        %s1682 = sld [smem:[#allocation7 + $0x200]]
        %v1683 = vld [vmem:[#allocation2] sm:$0xff]
        %v1684 = vld [vmem:[#allocation2 + $0x18] sm:$0xff]
        %v1685 = vstv %s1682
        %v1686 = vmul.f32 %v1685, %v1683
        %v1687 = vmul.f32 %v1685, %v1684
        %s1688 = sld [smem:[#allocation7 + $0x201]]
        %v1689 = vld [vmem:[#allocation2 + $0x8] sm:$0xff]
        %v1690 = vld [vmem:[#allocation2 + $0x20] sm:$0xff]
        %v1691 = vstv %s1688
        %v1692 = vmul.f32 %v1691, %v1689
        %v1693 = vmul.f32 %v1691, %v1690
        %v1694 = vadd.f32 %v1686, %v1692
        %v1695 = vadd.f32 %v1687, %v1693
        %s1696 = sld [smem:[#allocation7 + $0x202]]
        %v1697 = vld [vmem:[#allocation2 + $0x10] sm:$0xff]
        %v1698 = vld [vmem:[#allocation2 + $0x28] sm:$0xff]
        %v1699 = vstv %s1696
        %v1700 = vmul.f32 %v1699, %v1697
        %v1701 = vmul.f32 %v1699, %v1698
        %v1702 = vadd.f32 %v1694, %v1700
        %v1703 = vadd.f32 %v1695, %v1701
        %s1704 = sld [smem:[#allocation7 + $0x209]]
        %v1705 = vld [vmem:[%s637] sm:$0xff]
        %v1706 = vld [vmem:[%s637 + $0x18] sm:$0xff]
        %v1707 = vstv %s1704
        %v1708 = vmul.f32 %v1707, %v1705
        %v1709 = vmul.f32 %v1707, %v1706
        %v1710 = vadd.f32 %v1702, %v1708
        %v1711 = vadd.f32 %v1703, %v1709
        %s1712 = sld [smem:[#allocation7 + $0x20a]]
        %v1713 = vld [vmem:[%s637 + $0x8] sm:$0xff]
        %v1714 = vld [vmem:[%s637 + $0x20] sm:$0xff]
        %v1715 = vstv %s1712
        %v1716 = vmul.f32 %v1715, %v1713
        %v1717 = vmul.f32 %v1715, %v1714
        %v1718 = vadd.f32 %v1710, %v1716
        %v1719 = vadd.f32 %v1711, %v1717
        %s1720 = sld [smem:[#allocation7 + $0x20b]]
        %v1721 = vld [vmem:[%s637 + $0x10] sm:$0xff]
        %v1722 = vld [vmem:[%s637 + $0x28] sm:$0xff]
        %v1723 = vstv %s1720
        %v1724 = vmul.f32 %v1723, %v1721
        %v1725 = vmul.f32 %v1723, %v1722
        %v1726 = vadd.f32 %v1718, %v1724
        %v1727 = vadd.f32 %v1719, %v1725
        %s1728 = sld [smem:[#allocation7 + $0x212]]
        %v1729 = vld [vmem:[%s811] sm:$0xff]
        %v1730 = vld [vmem:[%s811 + $0x18] sm:$0xff]
        %v1731 = vstv %s1728
        %v1732 = vmul.f32 %v1731, %v1729
        %v1733 = vmul.f32 %v1731, %v1730
        %v1734 = vadd.f32 %v1726, %v1732
        %v1735 = vadd.f32 %v1727, %v1733
        %s1736 = sld [smem:[#allocation7 + $0x213]]
        %v1737 = vld [vmem:[%s811 + $0x8] sm:$0xff]
        %v1738 = vld [vmem:[%s811 + $0x20] sm:$0xff]
        %v1739 = vstv %s1736
        %v1740 = vmul.f32 %v1739, %v1737
        %v1741 = vmul.f32 %v1739, %v1738
        %v1742 = vadd.f32 %v1734, %v1740
        %v1743 = vadd.f32 %v1735, %v1741
        %s1744 = sld [smem:[#allocation7 + $0x214]]
        %v1745 = vld [vmem:[%s811 + $0x10] sm:$0xff]
        %v1746 = vld [vmem:[%s811 + $0x28] sm:$0xff]
        %v1747 = vstv %s1744
        %v1748 = vmul.f32 %v1747, %v1745
        %v1749 = vmul.f32 %v1747, %v1746
        %v1750 = vadd.f32 %v1742, %v1748
        %v1751 = vadd.f32 %v1743, %v1749
        %1752 = vst [vmem:[#allocation3 + $0x20] sm:$0xff] %v1750
        %1753 = vst [vmem:[#allocation3 + $0x60] sm:$0xff] %v1751
        %s1754 = sld [smem:[#allocation7 + $0x203]]
        %v1755 = vld [vmem:[#allocation2] sm:$0xff]
        %v1756 = vld [vmem:[#allocation2 + $0x18] sm:$0xff]
        %v1757 = vstv %s1754
        %v1758 = vmul.f32 %v1757, %v1755
        %v1759 = vmul.f32 %v1757, %v1756
        %s1760 = sld [smem:[#allocation7 + $0x204]]
        %v1761 = vld [vmem:[#allocation2 + $0x8] sm:$0xff]
        %v1762 = vld [vmem:[#allocation2 + $0x20] sm:$0xff]
        %v1763 = vstv %s1760
        %v1764 = vmul.f32 %v1763, %v1761
        %v1765 = vmul.f32 %v1763, %v1762
        %v1766 = vadd.f32 %v1758, %v1764
        %v1767 = vadd.f32 %v1759, %v1765
        %s1768 = sld [smem:[#allocation7 + $0x205]]
        %v1769 = vld [vmem:[#allocation2 + $0x10] sm:$0xff]
        %v1770 = vld [vmem:[#allocation2 + $0x28] sm:$0xff]
        %v1771 = vstv %s1768
        %v1772 = vmul.f32 %v1771, %v1769
        %v1773 = vmul.f32 %v1771, %v1770
        %v1774 = vadd.f32 %v1766, %v1772
        %v1775 = vadd.f32 %v1767, %v1773
        %s1776 = sld [smem:[#allocation7 + $0x20c]]
        %v1777 = vld [vmem:[%s637] sm:$0xff]
        %v1778 = vld [vmem:[%s637 + $0x18] sm:$0xff]
        %v1779 = vstv %s1776
        %v1780 = vmul.f32 %v1779, %v1777
        %v1781 = vmul.f32 %v1779, %v1778
        %v1782 = vadd.f32 %v1774, %v1780
        %v1783 = vadd.f32 %v1775, %v1781
        %s1784 = sld [smem:[#allocation7 + $0x20d]]
        %v1785 = vld [vmem:[%s637 + $0x8] sm:$0xff]
        %v1786 = vld [vmem:[%s637 + $0x20] sm:$0xff]
        %v1787 = vstv %s1784
        %v1788 = vmul.f32 %v1787, %v1785
        %v1789 = vmul.f32 %v1787, %v1786
        %v1790 = vadd.f32 %v1782, %v1788
        %v1791 = vadd.f32 %v1783, %v1789
        %s1792 = sld [smem:[#allocation7 + $0x20e]]
        %v1793 = vld [vmem:[%s637 + $0x10] sm:$0xff]
        %v1794 = vld [vmem:[%s637 + $0x28] sm:$0xff]
        %v1795 = vstv %s1792
        %v1796 = vmul.f32 %v1795, %v1793
        %v1797 = vmul.f32 %v1795, %v1794
        %v1798 = vadd.f32 %v1790, %v1796
        %v1799 = vadd.f32 %v1791, %v1797
        %s1800 = sld [smem:[#allocation7 + $0x215]]
        %v1801 = vld [vmem:[%s811] sm:$0xff]
        %v1802 = vld [vmem:[%s811 + $0x18] sm:$0xff]
        %v1803 = vstv %s1800
        %v1804 = vmul.f32 %v1803, %v1801
        %v1805 = vmul.f32 %v1803, %v1802
        %v1806 = vadd.f32 %v1798, %v1804
        %v1807 = vadd.f32 %v1799, %v1805
        %s1808 = sld [smem:[#allocation7 + $0x216]]
        %v1809 = vld [vmem:[%s811 + $0x8] sm:$0xff]
        %v1810 = vld [vmem:[%s811 + $0x20] sm:$0xff]
        %v1811 = vstv %s1808
        %v1812 = vmul.f32 %v1811, %v1809
        %v1813 = vmul.f32 %v1811, %v1810
        %v1814 = vadd.f32 %v1806, %v1812
        %v1815 = vadd.f32 %v1807, %v1813
        %s1816 = sld [smem:[#allocation7 + $0x217]]
        %v1817 = vld [vmem:[%s811 + $0x10] sm:$0xff]
        %v1818 = vld [vmem:[%s811 + $0x28] sm:$0xff]
        %v1819 = vstv %s1816
        %v1820 = vmul.f32 %v1819, %v1817
        %v1821 = vmul.f32 %v1819, %v1818
        %v1822 = vadd.f32 %v1814, %v1820
        %v1823 = vadd.f32 %v1815, %v1821
        %1824 = vst [vmem:[#allocation3 + $0xa0] sm:$0xff] %v1822
        %1825 = vst [vmem:[#allocation3 + $0xe0] sm:$0xff] %v1823
        %s1826 = sld [smem:[#allocation7 + $0x206]]
        %v1827 = vld [vmem:[#allocation2] sm:$0xff]
        %v1828 = vld [vmem:[#allocation2 + $0x18] sm:$0xff]
        %v1829 = vstv %s1826
        %v1830 = vmul.f32 %v1829, %v1827
        %v1831 = vmul.f32 %v1829, %v1828
        %s1832 = sld [smem:[#allocation7 + $0x207]]
        %v1833 = vld [vmem:[#allocation2 + $0x8] sm:$0xff]
        %v1834 = vld [vmem:[#allocation2 + $0x20] sm:$0xff]
        %v1835 = vstv %s1832
        %v1836 = vmul.f32 %v1835, %v1833
        %v1837 = vmul.f32 %v1835, %v1834
        %v1838 = vadd.f32 %v1830, %v1836
        %v1839 = vadd.f32 %v1831, %v1837
        %s1840 = sld [smem:[#allocation7 + $0x208]]
        %v1841 = vld [vmem:[#allocation2 + $0x10] sm:$0xff]
        %v1842 = vld [vmem:[#allocation2 + $0x28] sm:$0xff]
        %v1843 = vstv %s1840
        %v1844 = vmul.f32 %v1843, %v1841
        %v1845 = vmul.f32 %v1843, %v1842
        %v1846 = vadd.f32 %v1838, %v1844
        %v1847 = vadd.f32 %v1839, %v1845
        %s1848 = sld [smem:[#allocation7 + $0x20f]]
        %v1849 = vld [vmem:[%s637] sm:$0xff]
        %v1850 = vld [vmem:[%s637 + $0x18] sm:$0xff]
        %v1851 = vstv %s1848
        %v1852 = vmul.f32 %v1851, %v1849
        %v1853 = vmul.f32 %v1851, %v1850
        %v1854 = vadd.f32 %v1846, %v1852
        %v1855 = vadd.f32 %v1847, %v1853
        %s1856 = sld [smem:[#allocation7 + $0x210]]
        %v1857 = vld [vmem:[%s637 + $0x8] sm:$0xff]
        %v1858 = vld [vmem:[%s637 + $0x20] sm:$0xff]
        %v1859 = vstv %s1856
        %v1860 = vmul.f32 %v1859, %v1857
        %v1861 = vmul.f32 %v1859, %v1858
        %v1862 = vadd.f32 %v1854, %v1860
        %v1863 = vadd.f32 %v1855, %v1861
        %s1864 = sld [smem:[#allocation7 + $0x211]]
        %v1865 = vld [vmem:[%s637 + $0x10] sm:$0xff]
        %v1866 = vld [vmem:[%s637 + $0x28] sm:$0xff]
        %v1867 = vstv %s1864
        %v1868 = vmul.f32 %v1867, %v1865
        %v1869 = vmul.f32 %v1867, %v1866
        %v1870 = vadd.f32 %v1862, %v1868
        %v1871 = vadd.f32 %v1863, %v1869
        %s1872 = sld [smem:[#allocation7 + $0x218]]
        %v1873 = vld [vmem:[%s811] sm:$0xff]
        %v1874 = vld [vmem:[%s811 + $0x18] sm:$0xff]
        %v1875 = vstv %s1872
        %v1876 = vmul.f32 %v1875, %v1873
        %v1877 = vmul.f32 %v1875, %v1874
        %v1878 = vadd.f32 %v1870, %v1876
        %v1879 = vadd.f32 %v1871, %v1877
        %s1880 = sld [smem:[#allocation7 + $0x219]]
        %v1881 = vld [vmem:[%s811 + $0x8] sm:$0xff]
        %v1882 = vld [vmem:[%s811 + $0x20] sm:$0xff]
        %v1883 = vstv %s1880
        %v1884 = vmul.f32 %v1883, %v1881
        %v1885 = vmul.f32 %v1883, %v1882
        %v1886 = vadd.f32 %v1878, %v1884
        %v1887 = vadd.f32 %v1879, %v1885
        %s1888 = sld [smem:[#allocation7 + $0x21a]]
        %v1889 = vld [vmem:[%s811 + $0x10] sm:$0xff]
        %v1890 = vld [vmem:[%s811 + $0x28] sm:$0xff]
        %v1891 = vstv %s1888
        %v1892 = vmul.f32 %v1891, %v1889
        %v1893 = vmul.f32 %v1891, %v1890
        %v1894 = vadd.f32 %v1886, %v1892
        %v1895 = vadd.f32 %v1887, %v1893
        %1896 = vst [vmem:[#allocation3 + $0x120] sm:$0xff] %v1894
        %1897 = vst [vmem:[#allocation3 + $0x160] sm:$0xff] %v1895
        %s1898 = sld [smem:[#allocation7 + $0x280]]
        %v1899 = vld [vmem:[#allocation2] sm:$0xff]
        %v1900 = vld [vmem:[#allocation2 + $0x18] sm:$0xff]
        %v1901 = vstv %s1898
        %v1902 = vmul.f32 %v1901, %v1899
        %v1903 = vmul.f32 %v1901, %v1900
        %s1904 = sld [smem:[#allocation7 + $0x281]]
        %v1905 = vld [vmem:[#allocation2 + $0x8] sm:$0xff]
        %v1906 = vld [vmem:[#allocation2 + $0x20] sm:$0xff]
        %v1907 = vstv %s1904
        %v1908 = vmul.f32 %v1907, %v1905
        %v1909 = vmul.f32 %v1907, %v1906
        %v1910 = vadd.f32 %v1902, %v1908
        %v1911 = vadd.f32 %v1903, %v1909
        %s1912 = sld [smem:[#allocation7 + $0x282]]
        %v1913 = vld [vmem:[#allocation2 + $0x10] sm:$0xff]
        %v1914 = vld [vmem:[#allocation2 + $0x28] sm:$0xff]
        %v1915 = vstv %s1912
        %v1916 = vmul.f32 %v1915, %v1913
        %v1917 = vmul.f32 %v1915, %v1914
        %v1918 = vadd.f32 %v1910, %v1916
        %v1919 = vadd.f32 %v1911, %v1917
        %s1920 = sld [smem:[#allocation7 + $0x289]]
        %v1921 = vld [vmem:[%s637] sm:$0xff]
        %v1922 = vld [vmem:[%s637 + $0x18] sm:$0xff]
        %v1923 = vstv %s1920
        %v1924 = vmul.f32 %v1923, %v1921
        %v1925 = vmul.f32 %v1923, %v1922
        %v1926 = vadd.f32 %v1918, %v1924
        %v1927 = vadd.f32 %v1919, %v1925
        %s1928 = sld [smem:[#allocation7 + $0x28a]]
        %v1929 = vld [vmem:[%s637 + $0x8] sm:$0xff]
        %v1930 = vld [vmem:[%s637 + $0x20] sm:$0xff]
        %v1931 = vstv %s1928
        %v1932 = vmul.f32 %v1931, %v1929
        %v1933 = vmul.f32 %v1931, %v1930
        %v1934 = vadd.f32 %v1926, %v1932
        %v1935 = vadd.f32 %v1927, %v1933
        %s1936 = sld [smem:[#allocation7 + $0x28b]]
        %v1937 = vld [vmem:[%s637 + $0x10] sm:$0xff]
        %v1938 = vld [vmem:[%s637 + $0x28] sm:$0xff]
        %v1939 = vstv %s1936
        %v1940 = vmul.f32 %v1939, %v1937
        %v1941 = vmul.f32 %v1939, %v1938
        %v1942 = vadd.f32 %v1934, %v1940
        %v1943 = vadd.f32 %v1935, %v1941
        %s1944 = sld [smem:[#allocation7 + $0x292]]
        %v1945 = vld [vmem:[%s811] sm:$0xff]
        %v1946 = vld [vmem:[%s811 + $0x18] sm:$0xff]
        %v1947 = vstv %s1944
        %v1948 = vmul.f32 %v1947, %v1945
        %v1949 = vmul.f32 %v1947, %v1946
        %v1950 = vadd.f32 %v1942, %v1948
        %v1951 = vadd.f32 %v1943, %v1949
        %s1952 = sld [smem:[#allocation7 + $0x293]]
        %v1953 = vld [vmem:[%s811 + $0x8] sm:$0xff]
        %v1954 = vld [vmem:[%s811 + $0x20] sm:$0xff]
        %v1955 = vstv %s1952
        %v1956 = vmul.f32 %v1955, %v1953
        %v1957 = vmul.f32 %v1955, %v1954
        %v1958 = vadd.f32 %v1950, %v1956
        %v1959 = vadd.f32 %v1951, %v1957
        %s1960 = sld [smem:[#allocation7 + $0x294]]
        %v1961 = vld [vmem:[%s811 + $0x10] sm:$0xff]
        %v1962 = vld [vmem:[%s811 + $0x28] sm:$0xff]
        %v1963 = vstv %s1960
        %v1964 = vmul.f32 %v1963, %v1961
        %v1965 = vmul.f32 %v1963, %v1962
        %v1966 = vadd.f32 %v1958, %v1964
        %v1967 = vadd.f32 %v1959, %v1965
        %1968 = vst [vmem:[#allocation3 + $0x28] sm:$0xff] %v1966
        %1969 = vst [vmem:[#allocation3 + $0x68] sm:$0xff] %v1967
        %s1970 = sld [smem:[#allocation7 + $0x283]]
        %v1971 = vld [vmem:[#allocation2] sm:$0xff]
        %v1972 = vld [vmem:[#allocation2 + $0x18] sm:$0xff]
        %v1973 = vstv %s1970
        %v1974 = vmul.f32 %v1973, %v1971
        %v1975 = vmul.f32 %v1973, %v1972
        %s1976 = sld [smem:[#allocation7 + $0x284]]
        %v1977 = vld [vmem:[#allocation2 + $0x8] sm:$0xff]
        %v1978 = vld [vmem:[#allocation2 + $0x20] sm:$0xff]
        %v1979 = vstv %s1976
        %v1980 = vmul.f32 %v1979, %v1977
        %v1981 = vmul.f32 %v1979, %v1978
        %v1982 = vadd.f32 %v1974, %v1980
        %v1983 = vadd.f32 %v1975, %v1981
        %s1984 = sld [smem:[#allocation7 + $0x285]]
        %v1985 = vld [vmem:[#allocation2 + $0x10] sm:$0xff]
        %v1986 = vld [vmem:[#allocation2 + $0x28] sm:$0xff]
        %v1987 = vstv %s1984
        %v1988 = vmul.f32 %v1987, %v1985
        %v1989 = vmul.f32 %v1987, %v1986
        %v1990 = vadd.f32 %v1982, %v1988
        %v1991 = vadd.f32 %v1983, %v1989
        %s1992 = sld [smem:[#allocation7 + $0x28c]]
        %v1993 = vld [vmem:[%s637] sm:$0xff]
        %v1994 = vld [vmem:[%s637 + $0x18] sm:$0xff]
        %v1995 = vstv %s1992
        %v1996 = vmul.f32 %v1995, %v1993
        %v1997 = vmul.f32 %v1995, %v1994
        %v1998 = vadd.f32 %v1990, %v1996
        %v1999 = vadd.f32 %v1991, %v1997
        %s2000 = sld [smem:[#allocation7 + $0x28d]]
        %v2001 = vld [vmem:[%s637 + $0x8] sm:$0xff]
        %v2002 = vld [vmem:[%s637 + $0x20] sm:$0xff]
        %v2003 = vstv %s2000
        %v2004 = vmul.f32 %v2003, %v2001
        %v2005 = vmul.f32 %v2003, %v2002
        %v2006 = vadd.f32 %v1998, %v2004
        %v2007 = vadd.f32 %v1999, %v2005
        %s2008 = sld [smem:[#allocation7 + $0x28e]]
        %v2009 = vld [vmem:[%s637 + $0x10] sm:$0xff]
        %v2010 = vld [vmem:[%s637 + $0x28] sm:$0xff]
        %v2011 = vstv %s2008
        %v2012 = vmul.f32 %v2011, %v2009
        %v2013 = vmul.f32 %v2011, %v2010
        %v2014 = vadd.f32 %v2006, %v2012
        %v2015 = vadd.f32 %v2007, %v2013
        %s2016 = sld [smem:[#allocation7 + $0x295]]
        %v2017 = vld [vmem:[%s811] sm:$0xff]
        %v2018 = vld [vmem:[%s811 + $0x18] sm:$0xff]
        %v2019 = vstv %s2016
        %v2020 = vmul.f32 %v2019, %v2017
        %v2021 = vmul.f32 %v2019, %v2018
        %v2022 = vadd.f32 %v2014, %v2020
        %v2023 = vadd.f32 %v2015, %v2021
        %s2024 = sld [smem:[#allocation7 + $0x296]]
        %v2025 = vld [vmem:[%s811 + $0x8] sm:$0xff]
        %v2026 = vld [vmem:[%s811 + $0x20] sm:$0xff]
        %v2027 = vstv %s2024
        %v2028 = vmul.f32 %v2027, %v2025
        %v2029 = vmul.f32 %v2027, %v2026
        %v2030 = vadd.f32 %v2022, %v2028
        %v2031 = vadd.f32 %v2023, %v2029
        %s2032 = sld [smem:[#allocation7 + $0x297]]
        %v2033 = vld [vmem:[%s811 + $0x10] sm:$0xff]
        %v2034 = vld [vmem:[%s811 + $0x28] sm:$0xff]
        %v2035 = vstv %s2032
        %v2036 = vmul.f32 %v2035, %v2033
        %v2037 = vmul.f32 %v2035, %v2034
        %v2038 = vadd.f32 %v2030, %v2036
        %v2039 = vadd.f32 %v2031, %v2037
        %2040 = vst [vmem:[#allocation3 + $0xa8] sm:$0xff] %v2038
        %2041 = vst [vmem:[#allocation3 + $0xe8] sm:$0xff] %v2039
        %s2042 = sld [smem:[#allocation7 + $0x286]]
        %v2043 = vld [vmem:[#allocation2] sm:$0xff]
        %v2044 = vld [vmem:[#allocation2 + $0x18] sm:$0xff]
        %v2045 = vstv %s2042
        %v2046 = vmul.f32 %v2045, %v2043
        %v2047 = vmul.f32 %v2045, %v2044
        %s2048 = sld [smem:[#allocation7 + $0x287]]
        %v2049 = vld [vmem:[#allocation2 + $0x8] sm:$0xff]
        %v2050 = vld [vmem:[#allocation2 + $0x20] sm:$0xff]
        %v2051 = vstv %s2048
        %v2052 = vmul.f32 %v2051, %v2049
        %v2053 = vmul.f32 %v2051, %v2050
        %v2054 = vadd.f32 %v2046, %v2052
        %v2055 = vadd.f32 %v2047, %v2053
        %s2056 = sld [smem:[#allocation7 + $0x288]]
        %v2057 = vld [vmem:[#allocation2 + $0x10] sm:$0xff]
        %v2058 = vld [vmem:[#allocation2 + $0x28] sm:$0xff]
        %v2059 = vstv %s2056
        %v2060 = vmul.f32 %v2059, %v2057
        %v2061 = vmul.f32 %v2059, %v2058
        %v2062 = vadd.f32 %v2054, %v2060
        %v2063 = vadd.f32 %v2055, %v2061
        %s2064 = sld [smem:[#allocation7 + $0x28f]]
        %v2065 = vld [vmem:[%s637] sm:$0xff]
        %v2066 = vld [vmem:[%s637 + $0x18] sm:$0xff]
        %v2067 = vstv %s2064
        %v2068 = vmul.f32 %v2067, %v2065
        %v2069 = vmul.f32 %v2067, %v2066
        %v2070 = vadd.f32 %v2062, %v2068
        %v2071 = vadd.f32 %v2063, %v2069
        %s2072 = sld [smem:[#allocation7 + $0x290]]
        %v2073 = vld [vmem:[%s637 + $0x8] sm:$0xff]
        %v2074 = vld [vmem:[%s637 + $0x20] sm:$0xff]
        %v2075 = vstv %s2072
        %v2076 = vmul.f32 %v2075, %v2073
        %v2077 = vmul.f32 %v2075, %v2074
        %v2078 = vadd.f32 %v2070, %v2076
        %v2079 = vadd.f32 %v2071, %v2077
        %s2080 = sld [smem:[#allocation7 + $0x291]]
        %v2081 = vld [vmem:[%s637 + $0x10] sm:$0xff]
        %v2082 = vld [vmem:[%s637 + $0x28] sm:$0xff]
        %v2083 = vstv %s2080
        %v2084 = vmul.f32 %v2083, %v2081
        %v2085 = vmul.f32 %v2083, %v2082
        %v2086 = vadd.f32 %v2078, %v2084
        %v2087 = vadd.f32 %v2079, %v2085
        %s2088 = sld [smem:[#allocation7 + $0x298]]
        %v2089 = vld [vmem:[%s811] sm:$0xff]
        %v2090 = vld [vmem:[%s811 + $0x18] sm:$0xff]
        %v2091 = vstv %s2088
        %v2092 = vmul.f32 %v2091, %v2089
        %v2093 = vmul.f32 %v2091, %v2090
        %v2094 = vadd.f32 %v2086, %v2092
        %v2095 = vadd.f32 %v2087, %v2093
        %s2096 = sld [smem:[#allocation7 + $0x299]]
        %v2097 = vld [vmem:[%s811 + $0x8] sm:$0xff]
        %v2098 = vld [vmem:[%s811 + $0x20] sm:$0xff]
        %v2099 = vstv %s2096
        %v2100 = vmul.f32 %v2099, %v2097
        %v2101 = vmul.f32 %v2099, %v2098
        %v2102 = vadd.f32 %v2094, %v2100
        %v2103 = vadd.f32 %v2095, %v2101
        %s2104 = sld [smem:[#allocation7 + $0x29a]]
        %v2105 = vld [vmem:[%s811 + $0x10] sm:$0xff]
        %v2106 = vld [vmem:[%s811 + $0x28] sm:$0xff]
        %v2107 = vstv %s2104
        %v2108 = vmul.f32 %v2107, %v2105
        %v2109 = vmul.f32 %v2107, %v2106
        %v2110 = vadd.f32 %v2102, %v2108
        %v2111 = vadd.f32 %v2103, %v2109
        %2112 = vst [vmem:[#allocation3 + $0x128] sm:$0xff] %v2110
        %2113 = vst [vmem:[#allocation3 + $0x168] sm:$0xff] %v2111
        %s2114 = sld [smem:[#allocation7 + $0x300]]
        %v2115 = vld [vmem:[#allocation2] sm:$0xff]
        %v2116 = vld [vmem:[#allocation2 + $0x18] sm:$0xff]
        %v2117 = vstv %s2114
        %v2118 = vmul.f32 %v2117, %v2115
        %v2119 = vmul.f32 %v2117, %v2116
        %s2120 = sld [smem:[#allocation7 + $0x301]]
        %v2121 = vld [vmem:[#allocation2 + $0x8] sm:$0xff]
        %v2122 = vld [vmem:[#allocation2 + $0x20] sm:$0xff]
        %v2123 = vstv %s2120
        %v2124 = vmul.f32 %v2123, %v2121
        %v2125 = vmul.f32 %v2123, %v2122
        %v2126 = vadd.f32 %v2118, %v2124
        %v2127 = vadd.f32 %v2119, %v2125
        %s2128 = sld [smem:[#allocation7 + $0x302]]
        %v2129 = vld [vmem:[#allocation2 + $0x10] sm:$0xff]
        %v2130 = vld [vmem:[#allocation2 + $0x28] sm:$0xff]
        %v2131 = vstv %s2128
        %v2132 = vmul.f32 %v2131, %v2129
        %v2133 = vmul.f32 %v2131, %v2130
        %v2134 = vadd.f32 %v2126, %v2132
        %v2135 = vadd.f32 %v2127, %v2133
        %s2136 = sld [smem:[#allocation7 + $0x309]]
        %v2137 = vld [vmem:[%s637] sm:$0xff]
        %v2138 = vld [vmem:[%s637 + $0x18] sm:$0xff]
        %v2139 = vstv %s2136
        %v2140 = vmul.f32 %v2139, %v2137
        %v2141 = vmul.f32 %v2139, %v2138
        %v2142 = vadd.f32 %v2134, %v2140
        %v2143 = vadd.f32 %v2135, %v2141
        %s2144 = sld [smem:[#allocation7 + $0x30a]]
        %v2145 = vld [vmem:[%s637 + $0x8] sm:$0xff]
        %v2146 = vld [vmem:[%s637 + $0x20] sm:$0xff]
        %v2147 = vstv %s2144
        %v2148 = vmul.f32 %v2147, %v2145
        %v2149 = vmul.f32 %v2147, %v2146
        %v2150 = vadd.f32 %v2142, %v2148
        %v2151 = vadd.f32 %v2143, %v2149
        %s2152 = sld [smem:[#allocation7 + $0x30b]]
        %v2153 = vld [vmem:[%s637 + $0x10] sm:$0xff]
        %v2154 = vld [vmem:[%s637 + $0x28] sm:$0xff]
        %v2155 = vstv %s2152
        %v2156 = vmul.f32 %v2155, %v2153
        %v2157 = vmul.f32 %v2155, %v2154
        %v2158 = vadd.f32 %v2150, %v2156
        %v2159 = vadd.f32 %v2151, %v2157
        %s2160 = sld [smem:[#allocation7 + $0x312]]
        %v2161 = vld [vmem:[%s811] sm:$0xff]
        %v2162 = vld [vmem:[%s811 + $0x18] sm:$0xff]
        %v2163 = vstv %s2160
        %v2164 = vmul.f32 %v2163, %v2161
        %v2165 = vmul.f32 %v2163, %v2162
        %v2166 = vadd.f32 %v2158, %v2164
        %v2167 = vadd.f32 %v2159, %v2165
        %s2168 = sld [smem:[#allocation7 + $0x313]]
        %v2169 = vld [vmem:[%s811 + $0x8] sm:$0xff]
        %v2170 = vld [vmem:[%s811 + $0x20] sm:$0xff]
        %v2171 = vstv %s2168
        %v2172 = vmul.f32 %v2171, %v2169
        %v2173 = vmul.f32 %v2171, %v2170
        %v2174 = vadd.f32 %v2166, %v2172
        %v2175 = vadd.f32 %v2167, %v2173
        %s2176 = sld [smem:[#allocation7 + $0x314]]
        %v2177 = vld [vmem:[%s811 + $0x10] sm:$0xff]
        %v2178 = vld [vmem:[%s811 + $0x28] sm:$0xff]
        %v2179 = vstv %s2176
        %v2180 = vmul.f32 %v2179, %v2177
        %v2181 = vmul.f32 %v2179, %v2178
        %v2182 = vadd.f32 %v2174, %v2180
        %v2183 = vadd.f32 %v2175, %v2181
        %2184 = vst [vmem:[#allocation3 + $0x30] sm:$0xff] %v2182
        %2185 = vst [vmem:[#allocation3 + $0x70] sm:$0xff] %v2183
        %s2186 = sld [smem:[#allocation7 + $0x303]]
        %v2187 = vld [vmem:[#allocation2] sm:$0xff]
        %v2188 = vld [vmem:[#allocation2 + $0x18] sm:$0xff]
        %v2189 = vstv %s2186
        %v2190 = vmul.f32 %v2189, %v2187
        %v2191 = vmul.f32 %v2189, %v2188
        %s2192 = sld [smem:[#allocation7 + $0x304]]
        %v2193 = vld [vmem:[#allocation2 + $0x8] sm:$0xff]
        %v2194 = vld [vmem:[#allocation2 + $0x20] sm:$0xff]
        %v2195 = vstv %s2192
        %v2196 = vmul.f32 %v2195, %v2193
        %v2197 = vmul.f32 %v2195, %v2194
        %v2198 = vadd.f32 %v2190, %v2196
        %v2199 = vadd.f32 %v2191, %v2197
        %s2200 = sld [smem:[#allocation7 + $0x305]]
        %v2201 = vld [vmem:[#allocation2 + $0x10] sm:$0xff]
        %v2202 = vld [vmem:[#allocation2 + $0x28] sm:$0xff]
        %v2203 = vstv %s2200
        %v2204 = vmul.f32 %v2203, %v2201
        %v2205 = vmul.f32 %v2203, %v2202
        %v2206 = vadd.f32 %v2198, %v2204
        %v2207 = vadd.f32 %v2199, %v2205
        %s2208 = sld [smem:[#allocation7 + $0x30c]]
        %v2209 = vld [vmem:[%s637] sm:$0xff]
        %v2210 = vld [vmem:[%s637 + $0x18] sm:$0xff]
        %v2211 = vstv %s2208
        %v2212 = vmul.f32 %v2211, %v2209
        %v2213 = vmul.f32 %v2211, %v2210
        %v2214 = vadd.f32 %v2206, %v2212
        %v2215 = vadd.f32 %v2207, %v2213
        %s2216 = sld [smem:[#allocation7 + $0x30d]]
        %v2217 = vld [vmem:[%s637 + $0x8] sm:$0xff]
        %v2218 = vld [vmem:[%s637 + $0x20] sm:$0xff]
        %v2219 = vstv %s2216
        %v2220 = vmul.f32 %v2219, %v2217
        %v2221 = vmul.f32 %v2219, %v2218
        %v2222 = vadd.f32 %v2214, %v2220
        %v2223 = vadd.f32 %v2215, %v2221
        %s2224 = sld [smem:[#allocation7 + $0x30e]]
        %v2225 = vld [vmem:[%s637 + $0x10] sm:$0xff]
        %v2226 = vld [vmem:[%s637 + $0x28] sm:$0xff]
        %v2227 = vstv %s2224
        %v2228 = vmul.f32 %v2227, %v2225
        %v2229 = vmul.f32 %v2227, %v2226
        %v2230 = vadd.f32 %v2222, %v2228
        %v2231 = vadd.f32 %v2223, %v2229
        %s2232 = sld [smem:[#allocation7 + $0x315]]
        %v2233 = vld [vmem:[%s811] sm:$0xff]
        %v2234 = vld [vmem:[%s811 + $0x18] sm:$0xff]
        %v2235 = vstv %s2232
        %v2236 = vmul.f32 %v2235, %v2233
        %v2237 = vmul.f32 %v2235, %v2234
        %v2238 = vadd.f32 %v2230, %v2236
        %v2239 = vadd.f32 %v2231, %v2237
        %s2240 = sld [smem:[#allocation7 + $0x316]]
        %v2241 = vld [vmem:[%s811 + $0x8] sm:$0xff]
        %v2242 = vld [vmem:[%s811 + $0x20] sm:$0xff]
        %v2243 = vstv %s2240
        %v2244 = vmul.f32 %v2243, %v2241
        %v2245 = vmul.f32 %v2243, %v2242
        %v2246 = vadd.f32 %v2238, %v2244
        %v2247 = vadd.f32 %v2239, %v2245
        %s2248 = sld [smem:[#allocation7 + $0x317]]
        %v2249 = vld [vmem:[%s811 + $0x10] sm:$0xff]
        %v2250 = vld [vmem:[%s811 + $0x28] sm:$0xff]
        %v2251 = vstv %s2248
        %v2252 = vmul.f32 %v2251, %v2249
        %v2253 = vmul.f32 %v2251, %v2250
        %v2254 = vadd.f32 %v2246, %v2252
        %v2255 = vadd.f32 %v2247, %v2253
        %2256 = vst [vmem:[#allocation3 + $0xb0] sm:$0xff] %v2254
        %2257 = vst [vmem:[#allocation3 + $0xf0] sm:$0xff] %v2255
        %s2258 = sld [smem:[#allocation7 + $0x306]]
        %v2259 = vld [vmem:[#allocation2] sm:$0xff]
        %v2260 = vld [vmem:[#allocation2 + $0x18] sm:$0xff]
        %v2261 = vstv %s2258
        %v2262 = vmul.f32 %v2261, %v2259
        %v2263 = vmul.f32 %v2261, %v2260
        %s2264 = sld [smem:[#allocation7 + $0x307]]
        %v2265 = vld [vmem:[#allocation2 + $0x8] sm:$0xff]
        %v2266 = vld [vmem:[#allocation2 + $0x20] sm:$0xff]
        %v2267 = vstv %s2264
        %v2268 = vmul.f32 %v2267, %v2265
        %v2269 = vmul.f32 %v2267, %v2266
        %v2270 = vadd.f32 %v2262, %v2268
        %v2271 = vadd.f32 %v2263, %v2269
        %s2272 = sld [smem:[#allocation7 + $0x308]]
        %v2273 = vld [vmem:[#allocation2 + $0x10] sm:$0xff]
        %v2274 = vld [vmem:[#allocation2 + $0x28] sm:$0xff]
        %v2275 = vstv %s2272
        %v2276 = vmul.f32 %v2275, %v2273
        %v2277 = vmul.f32 %v2275, %v2274
        %v2278 = vadd.f32 %v2270, %v2276
        %v2279 = vadd.f32 %v2271, %v2277
        %s2280 = sld [smem:[#allocation7 + $0x30f]]
        %v2281 = vld [vmem:[%s637] sm:$0xff]
        %v2282 = vld [vmem:[%s637 + $0x18] sm:$0xff]
        %v2283 = vstv %s2280
        %v2284 = vmul.f32 %v2283, %v2281
        %v2285 = vmul.f32 %v2283, %v2282
        %v2286 = vadd.f32 %v2278, %v2284
        %v2287 = vadd.f32 %v2279, %v2285
        %s2288 = sld [smem:[#allocation7 + $0x310]]
        %v2289 = vld [vmem:[%s637 + $0x8] sm:$0xff]
        %v2290 = vld [vmem:[%s637 + $0x20] sm:$0xff]
        %v2291 = vstv %s2288
        %v2292 = vmul.f32 %v2291, %v2289
        %v2293 = vmul.f32 %v2291, %v2290
        %v2294 = vadd.f32 %v2286, %v2292
        %v2295 = vadd.f32 %v2287, %v2293
        %s2296 = sld [smem:[#allocation7 + $0x311]]
        %v2297 = vld [vmem:[%s637 + $0x10] sm:$0xff]
        %v2298 = vld [vmem:[%s637 + $0x28] sm:$0xff]
        %v2299 = vstv %s2296
        %v2300 = vmul.f32 %v2299, %v2297
        %v2301 = vmul.f32 %v2299, %v2298
        %v2302 = vadd.f32 %v2294, %v2300
        %v2303 = vadd.f32 %v2295, %v2301
        %s2304 = sld [smem:[#allocation7 + $0x318]]
        %v2305 = vld [vmem:[%s811] sm:$0xff]
        %v2306 = vld [vmem:[%s811 + $0x18] sm:$0xff]
        %v2307 = vstv %s2304
        %v2308 = vmul.f32 %v2307, %v2305
        %v2309 = vmul.f32 %v2307, %v2306
        %v2310 = vadd.f32 %v2302, %v2308
        %v2311 = vadd.f32 %v2303, %v2309
        %s2312 = sld [smem:[#allocation7 + $0x319]]
        %v2313 = vld [vmem:[%s811 + $0x8] sm:$0xff]
        %v2314 = vld [vmem:[%s811 + $0x20] sm:$0xff]
        %v2315 = vstv %s2312
        %v2316 = vmul.f32 %v2315, %v2313
        %v2317 = vmul.f32 %v2315, %v2314
        %v2318 = vadd.f32 %v2310, %v2316
        %v2319 = vadd.f32 %v2311, %v2317
        %s2320 = sld [smem:[#allocation7 + $0x31a]]
        %v2321 = vld [vmem:[%s811 + $0x10] sm:$0xff]
        %v2322 = vld [vmem:[%s811 + $0x28] sm:$0xff]
        %v2323 = vstv %s2320
        %v2324 = vmul.f32 %v2323, %v2321
        %v2325 = vmul.f32 %v2323, %v2322
        %v2326 = vadd.f32 %v2318, %v2324
        %v2327 = vadd.f32 %v2319, %v2325
        %2328 = vst [vmem:[#allocation3 + $0x130] sm:$0xff] %v2326
        %2329 = vst [vmem:[#allocation3 + $0x170] sm:$0xff] %v2327
        %s2330 = sld [smem:[#allocation7 + $0x380]]
        %v2331 = vld [vmem:[#allocation2] sm:$0xff]
        %v2332 = vld [vmem:[#allocation2 + $0x18] sm:$0xff]
        %v2333 = vstv %s2330
        %v2334 = vmul.f32 %v2333, %v2331
        %v2335 = vmul.f32 %v2333, %v2332
        %s2336 = sld [smem:[#allocation7 + $0x381]]
        %v2337 = vld [vmem:[#allocation2 + $0x8] sm:$0xff]
        %v2338 = vld [vmem:[#allocation2 + $0x20] sm:$0xff]
        %v2339 = vstv %s2336
        %v2340 = vmul.f32 %v2339, %v2337
        %v2341 = vmul.f32 %v2339, %v2338
        %v2342 = vadd.f32 %v2334, %v2340
        %v2343 = vadd.f32 %v2335, %v2341
        %s2344 = sld [smem:[#allocation7 + $0x382]]
        %v2345 = vld [vmem:[#allocation2 + $0x10] sm:$0xff]
        %v2346 = vld [vmem:[#allocation2 + $0x28] sm:$0xff]
        %v2347 = vstv %s2344
        %v2348 = vmul.f32 %v2347, %v2345
        %v2349 = vmul.f32 %v2347, %v2346
        %v2350 = vadd.f32 %v2342, %v2348
        %v2351 = vadd.f32 %v2343, %v2349
        %s2352 = sld [smem:[#allocation7 + $0x389]]
        %v2353 = vld [vmem:[%s637] sm:$0xff]
        %v2354 = vld [vmem:[%s637 + $0x18] sm:$0xff]
        %v2355 = vstv %s2352
        %v2356 = vmul.f32 %v2355, %v2353
        %v2357 = vmul.f32 %v2355, %v2354
        %v2358 = vadd.f32 %v2350, %v2356
        %v2359 = vadd.f32 %v2351, %v2357
        %s2360 = sld [smem:[#allocation7 + $0x38a]]
        %v2361 = vld [vmem:[%s637 + $0x8] sm:$0xff]
        %v2362 = vld [vmem:[%s637 + $0x20] sm:$0xff]
        %v2363 = vstv %s2360
        %v2364 = vmul.f32 %v2363, %v2361
        %v2365 = vmul.f32 %v2363, %v2362
        %v2366 = vadd.f32 %v2358, %v2364
        %v2367 = vadd.f32 %v2359, %v2365
        %s2368 = sld [smem:[#allocation7 + $0x38b]]
        %v2369 = vld [vmem:[%s637 + $0x10] sm:$0xff]
        %v2370 = vld [vmem:[%s637 + $0x28] sm:$0xff]
        %v2371 = vstv %s2368
        %v2372 = vmul.f32 %v2371, %v2369
        %v2373 = vmul.f32 %v2371, %v2370
        %v2374 = vadd.f32 %v2366, %v2372
        %v2375 = vadd.f32 %v2367, %v2373
        %s2376 = sld [smem:[#allocation7 + $0x392]]
        %v2377 = vld [vmem:[%s811] sm:$0xff]
        %v2378 = vld [vmem:[%s811 + $0x18] sm:$0xff]
        %v2379 = vstv %s2376
        %v2380 = vmul.f32 %v2379, %v2377
        %v2381 = vmul.f32 %v2379, %v2378
        %v2382 = vadd.f32 %v2374, %v2380
        %v2383 = vadd.f32 %v2375, %v2381
        %s2384 = sld [smem:[#allocation7 + $0x393]]
        %v2385 = vld [vmem:[%s811 + $0x8] sm:$0xff]
        %v2386 = vld [vmem:[%s811 + $0x20] sm:$0xff]
        %v2387 = vstv %s2384
        %v2388 = vmul.f32 %v2387, %v2385
        %v2389 = vmul.f32 %v2387, %v2386
        %v2390 = vadd.f32 %v2382, %v2388
        %v2391 = vadd.f32 %v2383, %v2389
        %s2392 = sld [smem:[#allocation7 + $0x394]]
        %v2393 = vld [vmem:[%s811 + $0x10] sm:$0xff]
        %v2394 = vld [vmem:[%s811 + $0x28] sm:$0xff]
        %v2395 = vstv %s2392
        %v2396 = vmul.f32 %v2395, %v2393
        %v2397 = vmul.f32 %v2395, %v2394
        %v2398 = vadd.f32 %v2390, %v2396
        %v2399 = vadd.f32 %v2391, %v2397
        %2400 = vst [vmem:[#allocation3 + $0x38] sm:$0xff] %v2398
        %2401 = vst [vmem:[#allocation3 + $0x78] sm:$0xff] %v2399
        %s2402 = sld [smem:[#allocation7 + $0x383]]
        %v2403 = vld [vmem:[#allocation2] sm:$0xff]
        %v2404 = vld [vmem:[#allocation2 + $0x18] sm:$0xff]
        %v2405 = vstv %s2402
        %v2406 = vmul.f32 %v2405, %v2403
        %v2407 = vmul.f32 %v2405, %v2404
        %s2408 = sld [smem:[#allocation7 + $0x384]]
        %v2409 = vld [vmem:[#allocation2 + $0x8] sm:$0xff]
        %v2410 = vld [vmem:[#allocation2 + $0x20] sm:$0xff]
        %v2411 = vstv %s2408
        %v2412 = vmul.f32 %v2411, %v2409
        %v2413 = vmul.f32 %v2411, %v2410
        %v2414 = vadd.f32 %v2406, %v2412
        %v2415 = vadd.f32 %v2407, %v2413
        %s2416 = sld [smem:[#allocation7 + $0x385]]
        %v2417 = vld [vmem:[#allocation2 + $0x10] sm:$0xff]
        %v2418 = vld [vmem:[#allocation2 + $0x28] sm:$0xff]
        %v2419 = vstv %s2416
        %v2420 = vmul.f32 %v2419, %v2417
        %v2421 = vmul.f32 %v2419, %v2418
        %v2422 = vadd.f32 %v2414, %v2420
        %v2423 = vadd.f32 %v2415, %v2421
        %s2424 = sld [smem:[#allocation7 + $0x38c]]
        %v2425 = vld [vmem:[%s637] sm:$0xff]
        %v2426 = vld [vmem:[%s637 + $0x18] sm:$0xff]
        %v2427 = vstv %s2424
        %v2428 = vmul.f32 %v2427, %v2425
        %v2429 = vmul.f32 %v2427, %v2426
        %v2430 = vadd.f32 %v2422, %v2428
        %v2431 = vadd.f32 %v2423, %v2429
        %s2432 = sld [smem:[#allocation7 + $0x38d]]
        %v2433 = vld [vmem:[%s637 + $0x8] sm:$0xff]
        %v2434 = vld [vmem:[%s637 + $0x20] sm:$0xff]
        %v2435 = vstv %s2432
        %v2436 = vmul.f32 %v2435, %v2433
        %v2437 = vmul.f32 %v2435, %v2434
        %v2438 = vadd.f32 %v2430, %v2436
        %v2439 = vadd.f32 %v2431, %v2437
        %s2440 = sld [smem:[#allocation7 + $0x38e]]
        %v2441 = vld [vmem:[%s637 + $0x10] sm:$0xff]
        %v2442 = vld [vmem:[%s637 + $0x28] sm:$0xff]
        %v2443 = vstv %s2440
        %v2444 = vmul.f32 %v2443, %v2441
        %v2445 = vmul.f32 %v2443, %v2442
        %v2446 = vadd.f32 %v2438, %v2444
        %v2447 = vadd.f32 %v2439, %v2445
        %s2448 = sld [smem:[#allocation7 + $0x395]]
        %v2449 = vld [vmem:[%s811] sm:$0xff]
        %v2450 = vld [vmem:[%s811 + $0x18] sm:$0xff]
        %v2451 = vstv %s2448
        %v2452 = vmul.f32 %v2451, %v2449
        %v2453 = vmul.f32 %v2451, %v2450
        %v2454 = vadd.f32 %v2446, %v2452
        %v2455 = vadd.f32 %v2447, %v2453
        %s2456 = sld [smem:[#allocation7 + $0x396]]
        %v2457 = vld [vmem:[%s811 + $0x8] sm:$0xff]
        %v2458 = vld [vmem:[%s811 + $0x20] sm:$0xff]
        %v2459 = vstv %s2456
        %v2460 = vmul.f32 %v2459, %v2457
        %v2461 = vmul.f32 %v2459, %v2458
        %v2462 = vadd.f32 %v2454, %v2460
        %v2463 = vadd.f32 %v2455, %v2461
        %s2464 = sld [smem:[#allocation7 + $0x397]]
        %v2465 = vld [vmem:[%s811 + $0x10] sm:$0xff]
        %v2466 = vld [vmem:[%s811 + $0x28] sm:$0xff]
        %v2467 = vstv %s2464
        %v2468 = vmul.f32 %v2467, %v2465
        %v2469 = vmul.f32 %v2467, %v2466
        %v2470 = vadd.f32 %v2462, %v2468
        %v2471 = vadd.f32 %v2463, %v2469
        %2472 = vst [vmem:[#allocation3 + $0xb8] sm:$0xff] %v2470
        %2473 = vst [vmem:[#allocation3 + $0xf8] sm:$0xff] %v2471
        %s2474 = sld [smem:[#allocation7 + $0x386]]
        %v2475 = vld [vmem:[#allocation2] sm:$0xff]
        %v2476 = vld [vmem:[#allocation2 + $0x18] sm:$0xff]
        %v2477 = vstv %s2474
        %v2478 = vmul.f32 %v2477, %v2475
        %v2479 = vmul.f32 %v2477, %v2476
        %s2480 = sld [smem:[#allocation7 + $0x387]]
        %v2481 = vld [vmem:[#allocation2 + $0x8] sm:$0xff]
        %v2482 = vld [vmem:[#allocation2 + $0x20] sm:$0xff]
        %v2483 = vstv %s2480
        %v2484 = vmul.f32 %v2483, %v2481
        %v2485 = vmul.f32 %v2483, %v2482
        %v2486 = vadd.f32 %v2478, %v2484
        %v2487 = vadd.f32 %v2479, %v2485
        %s2488 = sld [smem:[#allocation7 + $0x388]]
        %v2489 = vld [vmem:[#allocation2 + $0x10] sm:$0xff]
        %v2490 = vld [vmem:[#allocation2 + $0x28] sm:$0xff]
        %v2491 = vstv %s2488
        %v2492 = vmul.f32 %v2491, %v2489
        %v2493 = vmul.f32 %v2491, %v2490
        %v2494 = vadd.f32 %v2486, %v2492
        %v2495 = vadd.f32 %v2487, %v2493
        %s2496 = sld [smem:[#allocation7 + $0x38f]]
        %v2497 = vld [vmem:[%s637] sm:$0xff]
        %v2498 = vld [vmem:[%s637 + $0x18] sm:$0xff]
        %v2499 = vstv %s2496
        %v2500 = vmul.f32 %v2499, %v2497
        %v2501 = vmul.f32 %v2499, %v2498
        %v2502 = vadd.f32 %v2494, %v2500
        %v2503 = vadd.f32 %v2495, %v2501
        %s2504 = sld [smem:[#allocation7 + $0x390]]
        %v2505 = vld [vmem:[%s637 + $0x8] sm:$0xff]
        %v2506 = vld [vmem:[%s637 + $0x20] sm:$0xff]
        %v2507 = vstv %s2504
        %v2508 = vmul.f32 %v2507, %v2505
        %v2509 = vmul.f32 %v2507, %v2506
        %v2510 = vadd.f32 %v2502, %v2508
        %v2511 = vadd.f32 %v2503, %v2509
        %s2512 = sld [smem:[#allocation7 + $0x391]]
        %v2513 = vld [vmem:[%s637 + $0x10] sm:$0xff]
        %v2514 = vld [vmem:[%s637 + $0x28] sm:$0xff]
        %v2515 = vstv %s2512
        %v2516 = vmul.f32 %v2515, %v2513
        %v2517 = vmul.f32 %v2515, %v2514
        %v2518 = vadd.f32 %v2510, %v2516
        %v2519 = vadd.f32 %v2511, %v2517
        %s2520 = sld [smem:[#allocation7 + $0x398]]
        %v2521 = vld [vmem:[%s811] sm:$0xff]
        %v2522 = vld [vmem:[%s811 + $0x18] sm:$0xff]
        %v2523 = vstv %s2520
        %v2524 = vmul.f32 %v2523, %v2521
        %v2525 = vmul.f32 %v2523, %v2522
        %v2526 = vadd.f32 %v2518, %v2524
        %v2527 = vadd.f32 %v2519, %v2525
        %s2528 = sld [smem:[#allocation7 + $0x399]]
        %v2529 = vld [vmem:[%s811 + $0x8] sm:$0xff]
        %v2530 = vld [vmem:[%s811 + $0x20] sm:$0xff]
        %v2531 = vstv %s2528
        %v2532 = vmul.f32 %v2531, %v2529
        %v2533 = vmul.f32 %v2531, %v2530
        %v2534 = vadd.f32 %v2526, %v2532
        %v2535 = vadd.f32 %v2527, %v2533
        %s2536 = sld [smem:[#allocation7 + $0x39a]]
        %v2537 = vld [vmem:[%s811 + $0x10] sm:$0xff]
        %v2538 = vld [vmem:[%s811 + $0x28] sm:$0xff]
        %v2539 = vstv %s2536
        %v2540 = vmul.f32 %v2539, %v2537
        %v2541 = vmul.f32 %v2539, %v2538
        %v2542 = vadd.f32 %v2534, %v2540
        %v2543 = vadd.f32 %v2535, %v2541
        %2544 = vst [vmem:[#allocation3 + $0x138] sm:$0xff] %v2542
        %2545 = vst [vmem:[#allocation3 + $0x178] sm:$0xff] %v2543
        %v2546 = vld [vmem:[%s5] sm:$0xf]
        %v2547 = vld [vmem:[%s1] sm:$0xff]
        %v2548 = vld [vmem:[%s1 + $0x8] sm:$0xff]
        %v2549 = vld [vmem:[%s1 + $0x10] sm:$0xff]
        %v2550 = vld [vmem:[%s1 + $0x18] sm:$0xff]
        %v2551 = vld [vmem:[%s1 + $0x20] sm:$0xff]
        %v2552 = vld [vmem:[%s1 + $0x28] sm:$0xff]
        %v2553 = vld [vmem:[%s1 + $0x30] sm:$0xff]
        %v2554 = vld [vmem:[%s1 + $0x38] sm:$0xff]
        %v2555 = vld [vmem:[%s1 + $0x40] sm:$0xff]
        %v2556 = vld [vmem:[%s1 + $0x48] sm:$0xff]
        %v2557 = vld [vmem:[%s1 + $0x50] sm:$0xff]
        %v2558 = vld [vmem:[%s1 + $0x58] sm:$0xff]
        %v2559 = vld [vmem:[%s1 + $0x60] sm:$0xff]
        %v2560 = vld [vmem:[%s1 + $0x68] sm:$0xff]
        %v2561 = vld [vmem:[#allocation3] sm:$0xff]
        %v2562 = vld [vmem:[#allocation3 + $0x40] sm:$0xff]
        %v2563 = vld [vmem:[#allocation3 + $0x80] sm:$0xff]
        %v2564 = vld [vmem:[#allocation3 + $0xc0] sm:$0xff]
        %v2565 = vld [vmem:[#allocation3 + $0x100] sm:$0xff]
        %v2566 = vld [vmem:[#allocation3 + $0x140] sm:$0xff]
        %vm2567 = vcmask 392192
        %v2569 = vsel %vm2567, %v2547, 0
        %v2572 = vsel %vm2567, %v2548, 0
        %v2575 = vsel %vm2567, %v2549, 0
        %v2578 = vsel %vm2567, %v2550, 0
        %v2581 = vsel %vm2567, %v2551, 0
        %v2584 = vsel %vm2567, %v2552, 0
        %v2587 = vsel %vm2567, %v2553, 0
        %v2590 = vsel %vm2567, %v2554, 0
        %v2593 = vsel %vm2567, %v2555, 0
        %v2596 = vsel %vm2567, %v2556, 0
        %v2599 = vsel %vm2567, %v2557, 0
        %v2602 = vsel %vm2567, %v2558, 0
        %v2605 = vsel %vm2567, %v2559, 0
        %v2608 = vsel %vm2567, %v2560, 0
        %2610 = vmatprep.subr.mxu0 0.0
        %2611 = vmatpush1.msra.mxu0 0.0
        %2612 = vmatprep.subr.mxu0 0.0
        %2613 = vmatpush1.msra.mxu0 0.0
        %2614 = vmatprep.subr.mxu0 0.0
        %2615 = vmatpush1.msra.mxu0 0.0
        %2616 = vmatprep.subr.mxu0 0.0
        %2617 = vmatpush1.msra.mxu0 0.0
        %2618 = vmatprep.subr.mxu0 0.0
        %2619 = vmatpush1.msra.mxu0 0.0
        %2620 = vmatprep.subr.mxu0 0.0
        %2621 = vmatpush1.msra.mxu0 0.0
        %2622 = vmatprep.subr.mxu0 0.0
        %2623 = vmatpush1.msra.mxu0 0.0
        %2624 = vmatprep.subr.mxu0 0.0
        %2625 = vmatpush1.msra.mxu0 0.0
        %2626 = vmatprep.subr.mxu0 0.0
        %2627 = vmatpush1.msra.mxu0 0.0
        %2628 = vmatprep.subr.mxu0 0.0
        %2629 = vmatpush1.msra.mxu0 0.0
        %2630 = vmatprep.subr.mxu0 0.0
        %2631 = vmatpush1.msra.mxu0 %v2566
        %2632 = vmatprep.subr.mxu0 0.0
        %2633 = vmatpush1.msra.mxu0 %v2565
        %2634 = vmatprep.subr.mxu0 0.0
        %2635 = vmatpush1.msra.mxu0 %v2564
        %2636 = vmatprep.subr.mxu0 0.0
        %2637 = vmatpush1.msra.mxu0 %v2563
        %2638 = vmatprep.subr.mxu0 0.0
        %2639 = vmatpush1.msra.mxu0 %v2562
        %2640 = vmatprep.subr.mxu0 0.0
        %2641 = vmatpush1.msra.mxu0 %v2561
        %2642 = vmatprep.subr.mxu0 0.0
        %2643 = vmatpush2.msra.mxu0 0.0
        %2644 = vmatprep.subr.mxu0 0.0
        %2645 = vmatpush2.msra.mxu0 0.0
        %2646 = vmatprep.subr.mxu0 0.0
        %2647 = vmatpush2.msra.mxu0 0.0
        %2648 = vmatprep.subr.mxu0 0.0
        %2649 = vmatpush2.msra.mxu0 0.0
        %2650 = vmatprep.subr.mxu0 0.0
        %2651 = vmatpush2.msra.mxu0 0.0
        %2652 = vmatprep.subr.mxu0 0.0
        %2653 = vmatpush2.msra.mxu0 0.0
        %2654 = vmatprep.subr.mxu0 0.0
        %2655 = vmatpush2.msra.mxu0 0.0
        %2656 = vmatprep.subr.mxu0 0.0
        %2657 = vmatpush2.msra.mxu0 0.0
        %2658 = vmatprep.subr.mxu0 0.0
        %2659 = vmatpush2.msra.mxu0 0.0
        %2660 = vmatprep.subr.mxu0 0.0
        %2661 = vmatpush2.msra.mxu0 0.0
        %2662 = vmatprep.subr.mxu0 0.0
        %2663 = vmatpush2.msra.mxu0 0.0
        %2664 = vmatprep.subr.mxu0 0.0
        %2665 = vmatpush2.msra.mxu0 0.0
        %2666 = vmatprep.subr.mxu0 0.0
        %2667 = vmatpush2.msra.mxu0 0.0
        %2668 = vmatprep.subr.mxu0 0.0
        %2669 = vmatpush2.msra.mxu0 0.0
        %2670 = vmatprep.subr.mxu0 0.0
        %2671 = vmatpush2.msra.mxu0 0.0
        %2672 = vmatprep.subr.mxu0 0.0
        %2673 = vmatpush2.msra.mxu0 0.0
        %2674 = vmatprep.mubr.f32.mxu0 0.0
        %2675 = vmatmul.mubr.f32.gmra.mxu0 %v2569
        %v2676 = vpop.f32.mrf.mxu0
        %v2677 = vadd.f32 0.0, %v2676
        %v2678 = vpop.f32.mrf.mxu0
        %2679 = vmatprep.mubr.f32.mxu0 0.0
        %2680 = vmatmul.mubr.f32.gmra.mxu0 %v2572
        %v2681 = vpop.f32.mrf.mxu0
        %v2682 = vadd.f32 0.0, %v2681
        %v2683 = vpop.f32.mrf.mxu0
        %2684 = vmatprep.mubr.f32.mxu0 0.0
        %2685 = vmatmul.mubr.f32.gmra.mxu0 %v2575
        %v2686 = vpop.f32.mrf.mxu0
        %v2687 = vadd.f32 0.0, %v2686
        %v2688 = vpop.f32.mrf.mxu0
        %2689 = vmatprep.mubr.f32.mxu0 0.0
        %2690 = vmatmul.mubr.f32.gmra.mxu0 %v2578
        %v2691 = vpop.f32.mrf.mxu0
        %v2692 = vadd.f32 0.0, %v2691
        %v2693 = vpop.f32.mrf.mxu0
        %2694 = vmatprep.mubr.f32.mxu0 0.0
        %2695 = vmatmul.mubr.f32.gmra.mxu0 %v2581
        %v2696 = vpop.f32.mrf.mxu0
        %v2697 = vadd.f32 0.0, %v2696
        %v2698 = vpop.f32.mrf.mxu0
        %2699 = vmatprep.mubr.f32.mxu0 0.0
        %2700 = vmatmul.mubr.f32.gmra.mxu0 %v2584
        %v2701 = vpop.f32.mrf.mxu0
        %v2702 = vadd.f32 0.0, %v2701
        %v2703 = vpop.f32.mrf.mxu0
        %2704 = vmatprep.mubr.f32.mxu0 0.0
        %2705 = vmatmul.mubr.f32.gmra.mxu0 %v2587
        %v2706 = vpop.f32.mrf.mxu0
        %v2707 = vadd.f32 0.0, %v2706
        %v2708 = vpop.f32.mrf.mxu0
        %2709 = vmatprep.mubr.f32.mxu0 0.0
        %2710 = vmatmul.mubr.f32.gmra.mxu0 %v2590
        %v2711 = vpop.f32.mrf.mxu0
        %v2712 = vadd.f32 0.0, %v2711
        %v2713 = vpop.f32.mrf.mxu0
        %2714 = vmatprep.mubr.f32.mxu0 0.0
        %2715 = vmatmul.mubr.f32.gmra.mxu0 %v2593
        %v2716 = vpop.f32.mrf.mxu0
        %v2717 = vadd.f32 0.0, %v2716
        %v2718 = vpop.f32.mrf.mxu0
        %2719 = vmatprep.mubr.f32.mxu0 0.0
        %2720 = vmatmul.mubr.f32.gmra.mxu0 %v2596
        %v2721 = vpop.f32.mrf.mxu0
        %v2722 = vadd.f32 0.0, %v2721
        %v2723 = vpop.f32.mrf.mxu0
        %2724 = vmatprep.mubr.f32.mxu0 0.0
        %2725 = vmatmul.mubr.f32.gmra.mxu0 %v2599
        %v2726 = vpop.f32.mrf.mxu0
        %v2727 = vadd.f32 0.0, %v2726
        %v2728 = vpop.f32.mrf.mxu0
        %2729 = vmatprep.mubr.f32.mxu0 0.0
        %2730 = vmatmul.mubr.f32.gmra.mxu0 %v2602
        %v2731 = vpop.f32.mrf.mxu0
        %v2732 = vadd.f32 0.0, %v2731
        %v2733 = vpop.f32.mrf.mxu0
        %2734 = vmatprep.mubr.f32.mxu0 0.0
        %2735 = vmatmul.mubr.f32.gmra.mxu0 %v2605
        %v2736 = vpop.f32.mrf.mxu0
        %v2737 = vadd.f32 0.0, %v2736
        %v2738 = vpop.f32.mrf.mxu0
        %2739 = vmatprep.mubr.f32.mxu0 0.0
        %2740 = vmatmul.mubr.f32.gmra.mxu0 %v2608
        %v2741 = vpop.f32.mrf.mxu0
        %v2742 = vadd.f32 0.0, %v2741
        %v2743 = vpop.f32.mrf.mxu0
        %2744 = vdwg.mxu0
        %s2745 = sld [smem:[#allocation7 + $0x1b]]
        %v2746 = vstv %s2745
        %v2747 = vadd.f32 %v2677, %v2746
        %v2748 = vadd.f32 %v2682, %v2746
        %v2749 = vadd.f32 %v2687, %v2746
        %v2750 = vadd.f32 %v2692, %v2746
        %v2751 = vadd.f32 %v2697, %v2746
        %v2752 = vadd.f32 %v2702, %v2746
        %v2753 = vadd.f32 %v2707, %v2746
        %v2754 = vadd.f32 %v2712, %v2746
        %v2755 = vadd.f32 %v2717, %v2746
        %v2756 = vadd.f32 %v2722, %v2746
        %v2757 = vadd.f32 %v2727, %v2746
        %v2758 = vadd.f32 %v2732, %v2746
        %v2759 = vadd.f32 %v2737, %v2746
        %v2760 = vadd.f32 %v2742, %v2746
        %s2761 = sld [smem:[#allocation7 + $0x1c]]
        %vm2762 = vcmp.ge.f32.partialorder %v2747, 0.0
        %vm2763 = vcmp.ge.f32.partialorder %v2748, 0.0
        %vm2764 = vcmp.ge.f32.partialorder %v2749, 0.0
        %vm2765 = vcmp.ge.f32.partialorder %v2750, 0.0
        %vm2766 = vcmp.ge.f32.partialorder %v2751, 0.0
        %vm2767 = vcmp.ge.f32.partialorder %v2752, 0.0
        %vm2768 = vcmp.ge.f32.partialorder %v2753, 0.0
        %vm2769 = vcmp.ge.f32.partialorder %v2754, 0.0
        %vm2770 = vcmp.ge.f32.partialorder %v2755, 0.0
        %vm2771 = vcmp.ge.f32.partialorder %v2756, 0.0
        %vm2772 = vcmp.ge.f32.partialorder %v2757, 0.0
        %vm2773 = vcmp.ge.f32.partialorder %v2758, 0.0
        %vm2774 = vcmp.ge.f32.partialorder %v2759, 0.0
        %vm2775 = vcmp.ge.f32.partialorder %v2760, 0.0
        %v2776 = vstv %s2761
        %v2777 = vmul.f32 %v2747, %v2776
        %v2778 = vmul.f32 %v2748, %v2776
        %v2779 = vmul.f32 %v2749, %v2776
        %v2780 = vmul.f32 %v2750, %v2776
        %v2781 = vmul.f32 %v2751, %v2776
        %v2782 = vmul.f32 %v2752, %v2776
        %v2783 = vmul.f32 %v2753, %v2776
        %v2784 = vmul.f32 %v2754, %v2776
        %v2785 = vmul.f32 %v2755, %v2776
        %v2786 = vmul.f32 %v2756, %v2776
        %v2787 = vmul.f32 %v2757, %v2776
        %v2788 = vmul.f32 %v2758, %v2776
        %v2789 = vmul.f32 %v2759, %v2776
        %v2790 = vmul.f32 %v2760, %v2776
        %v2791 = vsel %vm2762, %v2747, %v2777
        %v2792 = vsel %vm2763, %v2748, %v2778
        %v2793 = vsel %vm2764, %v2749, %v2779
        %v2794 = vsel %vm2765, %v2750, %v2780
        %v2795 = vsel %vm2766, %v2751, %v2781
        %v2796 = vsel %vm2767, %v2752, %v2782
        %v2797 = vsel %vm2768, %v2753, %v2783
        %v2798 = vsel %vm2769, %v2754, %v2784
        %v2799 = vsel %vm2770, %v2755, %v2785
        %v2800 = vsel %vm2771, %v2756, %v2786
        %v2801 = vsel %vm2772, %v2757, %v2787
        %v2802 = vsel %vm2773, %v2758, %v2788
        %v2803 = vsel %vm2774, %v2759, %v2789
        %v2804 = vsel %vm2775, %v2760, %v2790
        %vm2805 = vcmask 916480
        %v2806 = vsel %vm2805, %v2791, 0.0
        %v2807 = vsel %vm2805, %v2792, 0.0
        %v2808 = vadd.f32 %v2806, %v2807
        %v2809 = vsel %vm2805, %v2793, 0.0
        %v2810 = vadd.f32 %v2808, %v2809
        %v2811 = vsel %vm2805, %v2794, 0.0
        %v2812 = vadd.f32 %v2810, %v2811
        %v2813 = vsel %vm2805, %v2795, 0.0
        %v2814 = vadd.f32 %v2812, %v2813
        %v2815 = vsel %vm2805, %v2796, 0.0
        %v2816 = vadd.f32 %v2814, %v2815
        %v2817 = vsel %vm2805, %v2797, 0.0
        %v2818 = vadd.f32 %v2816, %v2817
        %v2819 = vsel %vm2805, %v2798, 0.0
        %v2820 = vadd.f32 %v2818, %v2819
        %v2821 = vsel %vm2805, %v2799, 0.0
        %v2822 = vadd.f32 %v2820, %v2821
        %v2823 = vsel %vm2805, %v2800, 0.0
        %v2824 = vadd.f32 %v2822, %v2823
        %v2825 = vsel %vm2805, %v2801, 0.0
        %v2826 = vadd.f32 %v2824, %v2825
        %v2827 = vsel %vm2805, %v2802, 0.0
        %v2828 = vadd.f32 %v2826, %v2827
        %v2829 = vsel %vm2805, %v2803, 0.0
        %v2830 = vadd.f32 %v2828, %v2829
        %v2831 = vsel %vm2805, %v2804, 0.0
        %v2832 = vadd.f32 %v2830, %v2831
        %2833 = vadd.xlane.f32.xlu0 %v2832
        %v2834 = vpop.xlane.xlu0 %2833
        %v2835 = vrot.slane %v2834, 4
        %v2836 = vadd.f32 %v2834, %v2835
        %v2837 = vrot.slane %v2836, 2
        %v2838 = vadd.f32 %v2836, %v2837
        %v2839 = vrot.slane %v2838, 1
        %v2840 = vadd.f32 %v2838, %v2839
        %s2841 = vtos %v2840
        %v2842 = vstv %s2841
        %v2843 = vmul.f32 %v2842, 7.9719386e-05
        %v2844 = vld [vmem:[#allocation8] ss:$8 sm:$0xf]
        %v2845 = vmul.f32 %v2843, %v2844
        %v2846 = vadd.f32 %v2546, %v2845
        %v2847 = vld [vmem:[#allocation3 + $0x8] sm:$0xff]
        %v2848 = vld [vmem:[#allocation3 + $0x48] sm:$0xff]
        %v2849 = vld [vmem:[#allocation3 + $0x88] sm:$0xff]
        %v2850 = vld [vmem:[#allocation3 + $0xc8] sm:$0xff]
        %v2851 = vld [vmem:[#allocation3 + $0x108] sm:$0xff]
        %v2852 = vld [vmem:[#allocation3 + $0x148] sm:$0xff]
        %2853 = vmatprep.subr.mxu0 0.0
        %2854 = vmatpush1.msra.mxu0 0.0
        %2855 = vmatprep.subr.mxu0 0.0
        %2856 = vmatpush1.msra.mxu0 0.0
        %2857 = vmatprep.subr.mxu0 0.0
        %2858 = vmatpush1.msra.mxu0 0.0
        %2859 = vmatprep.subr.mxu0 0.0
        %2860 = vmatpush1.msra.mxu0 0.0
        %2861 = vmatprep.subr.mxu0 0.0
        %2862 = vmatpush1.msra.mxu0 0.0
        %2863 = vmatprep.subr.mxu0 0.0
        %2864 = vmatpush1.msra.mxu0 0.0
        %2865 = vmatprep.subr.mxu0 0.0
        %2866 = vmatpush1.msra.mxu0 0.0
        %2867 = vmatprep.subr.mxu0 0.0
        %2868 = vmatpush1.msra.mxu0 0.0
        %2869 = vmatprep.subr.mxu0 0.0
        %2870 = vmatpush1.msra.mxu0 0.0
        %2871 = vmatprep.subr.mxu0 0.0
        %2872 = vmatpush1.msra.mxu0 0.0
        %2873 = vmatprep.subr.mxu0 0.0
        %2874 = vmatpush1.msra.mxu0 %v2852
        %2875 = vmatprep.subr.mxu0 0.0
        %2876 = vmatpush1.msra.mxu0 %v2851
        %2877 = vmatprep.subr.mxu0 0.0
        %2878 = vmatpush1.msra.mxu0 %v2850
        %2879 = vmatprep.subr.mxu0 0.0
        %2880 = vmatpush1.msra.mxu0 %v2849
        %2881 = vmatprep.subr.mxu0 0.0
        %2882 = vmatpush1.msra.mxu0 %v2848
        %2883 = vmatprep.subr.mxu0 0.0
        %2884 = vmatpush1.msra.mxu0 %v2847
        %2885 = vmatprep.subr.mxu0 0.0
        %2886 = vmatpush2.msra.mxu0 0.0
        %2887 = vmatprep.subr.mxu0 0.0
        %2888 = vmatpush2.msra.mxu0 0.0
        %2889 = vmatprep.subr.mxu0 0.0
        %2890 = vmatpush2.msra.mxu0 0.0
        %2891 = vmatprep.subr.mxu0 0.0
        %2892 = vmatpush2.msra.mxu0 0.0
        %2893 = vmatprep.subr.mxu0 0.0
        %2894 = vmatpush2.msra.mxu0 0.0
        %2895 = vmatprep.subr.mxu0 0.0
        %2896 = vmatpush2.msra.mxu0 0.0
        %2897 = vmatprep.subr.mxu0 0.0
        %2898 = vmatpush2.msra.mxu0 0.0
        %2899 = vmatprep.subr.mxu0 0.0
        %2900 = vmatpush2.msra.mxu0 0.0
        %2901 = vmatprep.subr.mxu0 0.0
        %2902 = vmatpush2.msra.mxu0 0.0
        %2903 = vmatprep.subr.mxu0 0.0
        %2904 = vmatpush2.msra.mxu0 0.0
        %2905 = vmatprep.subr.mxu0 0.0
        %2906 = vmatpush2.msra.mxu0 0.0
        %2907 = vmatprep.subr.mxu0 0.0
        %2908 = vmatpush2.msra.mxu0 0.0
        %2909 = vmatprep.subr.mxu0 0.0
        %2910 = vmatpush2.msra.mxu0 0.0
        %2911 = vmatprep.subr.mxu0 0.0
        %2912 = vmatpush2.msra.mxu0 0.0
        %2913 = vmatprep.subr.mxu0 0.0
        %2914 = vmatpush2.msra.mxu0 0.0
        %2915 = vmatprep.subr.mxu0 0.0
        %2916 = vmatpush2.msra.mxu0 0.0
        %2917 = vmatprep.mubr.f32.mxu0 0.0
        %2918 = vmatmul.mubr.f32.gmra.mxu0 %v2569
        %v2919 = vpop.f32.mrf.mxu0
        %v2920 = vadd.f32 0.0, %v2919
        %v2921 = vpop.f32.mrf.mxu0
        %2922 = vmatprep.mubr.f32.mxu0 0.0
        %2923 = vmatmul.mubr.f32.gmra.mxu0 %v2572
        %v2924 = vpop.f32.mrf.mxu0
        %v2925 = vadd.f32 0.0, %v2924
        %v2926 = vpop.f32.mrf.mxu0
        %2927 = vmatprep.mubr.f32.mxu0 0.0
        %2928 = vmatmul.mubr.f32.gmra.mxu0 %v2575
        %v2929 = vpop.f32.mrf.mxu0
        %v2930 = vadd.f32 0.0, %v2929
        %v2931 = vpop.f32.mrf.mxu0
        %2932 = vmatprep.mubr.f32.mxu0 0.0
        %2933 = vmatmul.mubr.f32.gmra.mxu0 %v2578
        %v2934 = vpop.f32.mrf.mxu0
        %v2935 = vadd.f32 0.0, %v2934
        %v2936 = vpop.f32.mrf.mxu0
        %2937 = vmatprep.mubr.f32.mxu0 0.0
        %2938 = vmatmul.mubr.f32.gmra.mxu0 %v2581
        %v2939 = vpop.f32.mrf.mxu0
        %v2940 = vadd.f32 0.0, %v2939
        %v2941 = vpop.f32.mrf.mxu0
        %2942 = vmatprep.mubr.f32.mxu0 0.0
        %2943 = vmatmul.mubr.f32.gmra.mxu0 %v2584
        %v2944 = vpop.f32.mrf.mxu0
        %v2945 = vadd.f32 0.0, %v2944
        %v2946 = vpop.f32.mrf.mxu0
        %2947 = vmatprep.mubr.f32.mxu0 0.0
        %2948 = vmatmul.mubr.f32.gmra.mxu0 %v2587
        %v2949 = vpop.f32.mrf.mxu0
        %v2950 = vadd.f32 0.0, %v2949
        %v2951 = vpop.f32.mrf.mxu0
        %2952 = vmatprep.mubr.f32.mxu0 0.0
        %2953 = vmatmul.mubr.f32.gmra.mxu0 %v2590
        %v2954 = vpop.f32.mrf.mxu0
        %v2955 = vadd.f32 0.0, %v2954
        %v2956 = vpop.f32.mrf.mxu0
        %2957 = vmatprep.mubr.f32.mxu0 0.0
        %2958 = vmatmul.mubr.f32.gmra.mxu0 %v2593
        %v2959 = vpop.f32.mrf.mxu0
        %v2960 = vadd.f32 0.0, %v2959
        %v2961 = vpop.f32.mrf.mxu0
        %2962 = vmatprep.mubr.f32.mxu0 0.0
        %2963 = vmatmul.mubr.f32.gmra.mxu0 %v2596
        %v2964 = vpop.f32.mrf.mxu0
        %v2965 = vadd.f32 0.0, %v2964
        %v2966 = vpop.f32.mrf.mxu0
        %2967 = vmatprep.mubr.f32.mxu0 0.0
        %2968 = vmatmul.mubr.f32.gmra.mxu0 %v2599
        %v2969 = vpop.f32.mrf.mxu0
        %v2970 = vadd.f32 0.0, %v2969
        %v2971 = vpop.f32.mrf.mxu0
        %2972 = vmatprep.mubr.f32.mxu0 0.0
        %2973 = vmatmul.mubr.f32.gmra.mxu0 %v2602
        %v2974 = vpop.f32.mrf.mxu0
        %v2975 = vadd.f32 0.0, %v2974
        %v2976 = vpop.f32.mrf.mxu0
        %2977 = vmatprep.mubr.f32.mxu0 0.0
        %2978 = vmatmul.mubr.f32.gmra.mxu0 %v2605
        %v2979 = vpop.f32.mrf.mxu0
        %v2980 = vadd.f32 0.0, %v2979
        %v2981 = vpop.f32.mrf.mxu0
        %2982 = vmatprep.mubr.f32.mxu0 0.0
        %2983 = vmatmul.mubr.f32.gmra.mxu0 %v2608
        %v2984 = vpop.f32.mrf.mxu0
        %v2985 = vadd.f32 0.0, %v2984
        %v2986 = vpop.f32.mrf.mxu0
        %2987 = vdwg.mxu0
        %s2988 = sld [smem:[#allocation7 + $0x9b]]
        %v2989 = vstv %s2988
        %v2990 = vadd.f32 %v2920, %v2989
        %v2991 = vadd.f32 %v2925, %v2989
        %v2992 = vadd.f32 %v2930, %v2989
        %v2993 = vadd.f32 %v2935, %v2989
        %v2994 = vadd.f32 %v2940, %v2989
        %v2995 = vadd.f32 %v2945, %v2989
        %v2996 = vadd.f32 %v2950, %v2989
        %v2997 = vadd.f32 %v2955, %v2989
        %v2998 = vadd.f32 %v2960, %v2989
        %v2999 = vadd.f32 %v2965, %v2989
        %v3000 = vadd.f32 %v2970, %v2989
        %v3001 = vadd.f32 %v2975, %v2989
        %v3002 = vadd.f32 %v2980, %v2989
        %v3003 = vadd.f32 %v2985, %v2989
        %s3004 = sld [smem:[#allocation7 + $0x9c]]
        %vm3005 = vcmp.ge.f32.partialorder %v2990, 0.0
        %vm3006 = vcmp.ge.f32.partialorder %v2991, 0.0
        %vm3007 = vcmp.ge.f32.partialorder %v2992, 0.0
        %vm3008 = vcmp.ge.f32.partialorder %v2993, 0.0
        %vm3009 = vcmp.ge.f32.partialorder %v2994, 0.0
        %vm3010 = vcmp.ge.f32.partialorder %v2995, 0.0
        %vm3011 = vcmp.ge.f32.partialorder %v2996, 0.0
        %vm3012 = vcmp.ge.f32.partialorder %v2997, 0.0
        %vm3013 = vcmp.ge.f32.partialorder %v2998, 0.0
        %vm3014 = vcmp.ge.f32.partialorder %v2999, 0.0
        %vm3015 = vcmp.ge.f32.partialorder %v3000, 0.0
        %vm3016 = vcmp.ge.f32.partialorder %v3001, 0.0
        %vm3017 = vcmp.ge.f32.partialorder %v3002, 0.0
        %vm3018 = vcmp.ge.f32.partialorder %v3003, 0.0
        %v3019 = vstv %s3004
        %v3020 = vmul.f32 %v2990, %v3019
        %v3021 = vmul.f32 %v2991, %v3019
        %v3022 = vmul.f32 %v2992, %v3019
        %v3023 = vmul.f32 %v2993, %v3019
        %v3024 = vmul.f32 %v2994, %v3019
        %v3025 = vmul.f32 %v2995, %v3019
        %v3026 = vmul.f32 %v2996, %v3019
        %v3027 = vmul.f32 %v2997, %v3019
        %v3028 = vmul.f32 %v2998, %v3019
        %v3029 = vmul.f32 %v2999, %v3019
        %v3030 = vmul.f32 %v3000, %v3019
        %v3031 = vmul.f32 %v3001, %v3019
        %v3032 = vmul.f32 %v3002, %v3019
        %v3033 = vmul.f32 %v3003, %v3019
        %v3034 = vsel %vm3005, %v2990, %v3020
        %v3035 = vsel %vm3006, %v2991, %v3021
        %v3036 = vsel %vm3007, %v2992, %v3022
        %v3037 = vsel %vm3008, %v2993, %v3023
        %v3038 = vsel %vm3009, %v2994, %v3024
        %v3039 = vsel %vm3010, %v2995, %v3025
        %v3040 = vsel %vm3011, %v2996, %v3026
        %v3041 = vsel %vm3012, %v2997, %v3027
        %v3042 = vsel %vm3013, %v2998, %v3028
        %v3043 = vsel %vm3014, %v2999, %v3029
        %v3044 = vsel %vm3015, %v3000, %v3030
        %v3045 = vsel %vm3016, %v3001, %v3031
        %v3046 = vsel %vm3017, %v3002, %v3032
        %v3047 = vsel %vm3018, %v3003, %v3033
        %v3048 = vsel %vm2805, %v3034, 0.0
        %v3049 = vsel %vm2805, %v3035, 0.0
        %v3050 = vadd.f32 %v3048, %v3049
        %v3051 = vsel %vm2805, %v3036, 0.0
        %v3052 = vadd.f32 %v3050, %v3051
        %v3053 = vsel %vm2805, %v3037, 0.0
        %v3054 = vadd.f32 %v3052, %v3053
        %v3055 = vsel %vm2805, %v3038, 0.0
        %v3056 = vadd.f32 %v3054, %v3055
        %v3057 = vsel %vm2805, %v3039, 0.0
        %v3058 = vadd.f32 %v3056, %v3057
        %v3059 = vsel %vm2805, %v3040, 0.0
        %v3060 = vadd.f32 %v3058, %v3059
        %v3061 = vsel %vm2805, %v3041, 0.0
        %v3062 = vadd.f32 %v3060, %v3061
        %v3063 = vsel %vm2805, %v3042, 0.0
        %v3064 = vadd.f32 %v3062, %v3063
        %v3065 = vsel %vm2805, %v3043, 0.0
        %v3066 = vadd.f32 %v3064, %v3065
        %v3067 = vsel %vm2805, %v3044, 0.0
        %v3068 = vadd.f32 %v3066, %v3067
        %v3069 = vsel %vm2805, %v3045, 0.0
        %v3070 = vadd.f32 %v3068, %v3069
        %v3071 = vsel %vm2805, %v3046, 0.0
        %v3072 = vadd.f32 %v3070, %v3071
        %v3073 = vsel %vm2805, %v3047, 0.0
        %v3074 = vadd.f32 %v3072, %v3073
        %3075 = vadd.xlane.f32.xlu0 %v3074
        %v3076 = vpop.xlane.xlu0 %3075
        %v3077 = vrot.slane %v3076, 4
        %v3078 = vadd.f32 %v3076, %v3077
        %v3079 = vrot.slane %v3078, 2
        %v3080 = vadd.f32 %v3078, %v3079
        %v3081 = vrot.slane %v3080, 1
        %v3082 = vadd.f32 %v3080, %v3081
        %s3083 = vtos %v3082
        %v3084 = vstv %s3083
        %v3085 = vmul.f32 %v3084, 7.9719386e-05
        %s3086 = scalar_lea.vmem [#allocation8], 1
        %v3087 = vld [vmem:[%s3086] ss:$8 sm:$0xf]
        %v3088 = vmul.f32 %v3085, %v3087
        %v3089 = vadd.f32 %v2846, %v3088
        %v3090 = vld [vmem:[#allocation3 + $0x10] sm:$0xff]
        %v3091 = vld [vmem:[#allocation3 + $0x50] sm:$0xff]
        %v3092 = vld [vmem:[#allocation3 + $0x90] sm:$0xff]
        %v3093 = vld [vmem:[#allocation3 + $0xd0] sm:$0xff]
        %v3094 = vld [vmem:[#allocation3 + $0x110] sm:$0xff]
        %v3095 = vld [vmem:[#allocation3 + $0x150] sm:$0xff]
        %3096 = vmatprep.subr.mxu0 0.0
        %3097 = vmatpush1.msra.mxu0 0.0
        %3098 = vmatprep.subr.mxu0 0.0
        %3099 = vmatpush1.msra.mxu0 0.0
        %3100 = vmatprep.subr.mxu0 0.0
        %3101 = vmatpush1.msra.mxu0 0.0
        %3102 = vmatprep.subr.mxu0 0.0
        %3103 = vmatpush1.msra.mxu0 0.0
        %3104 = vmatprep.subr.mxu0 0.0
        %3105 = vmatpush1.msra.mxu0 0.0
        %3106 = vmatprep.subr.mxu0 0.0
        %3107 = vmatpush1.msra.mxu0 0.0
        %3108 = vmatprep.subr.mxu0 0.0
        %3109 = vmatpush1.msra.mxu0 0.0
        %3110 = vmatprep.subr.mxu0 0.0
        %3111 = vmatpush1.msra.mxu0 0.0
        %3112 = vmatprep.subr.mxu0 0.0
        %3113 = vmatpush1.msra.mxu0 0.0
        %3114 = vmatprep.subr.mxu0 0.0
        %3115 = vmatpush1.msra.mxu0 0.0
        %3116 = vmatprep.subr.mxu0 0.0
        %3117 = vmatpush1.msra.mxu0 %v3095
        %3118 = vmatprep.subr.mxu0 0.0
        %3119 = vmatpush1.msra.mxu0 %v3094
        %3120 = vmatprep.subr.mxu0 0.0
        %3121 = vmatpush1.msra.mxu0 %v3093
        %3122 = vmatprep.subr.mxu0 0.0
        %3123 = vmatpush1.msra.mxu0 %v3092
        %3124 = vmatprep.subr.mxu0 0.0
        %3125 = vmatpush1.msra.mxu0 %v3091
        %3126 = vmatprep.subr.mxu0 0.0
        %3127 = vmatpush1.msra.mxu0 %v3090
        %3128 = vmatprep.subr.mxu0 0.0
        %3129 = vmatpush2.msra.mxu0 0.0
        %3130 = vmatprep.subr.mxu0 0.0
        %3131 = vmatpush2.msra.mxu0 0.0
        %3132 = vmatprep.subr.mxu0 0.0
        %3133 = vmatpush2.msra.mxu0 0.0
        %3134 = vmatprep.subr.mxu0 0.0
        %3135 = vmatpush2.msra.mxu0 0.0
        %3136 = vmatprep.subr.mxu0 0.0
        %3137 = vmatpush2.msra.mxu0 0.0
        %3138 = vmatprep.subr.mxu0 0.0
        %3139 = vmatpush2.msra.mxu0 0.0
        %3140 = vmatprep.subr.mxu0 0.0
        %3141 = vmatpush2.msra.mxu0 0.0
        %3142 = vmatprep.subr.mxu0 0.0
        %3143 = vmatpush2.msra.mxu0 0.0
        %3144 = vmatprep.subr.mxu0 0.0
        %3145 = vmatpush2.msra.mxu0 0.0
        %3146 = vmatprep.subr.mxu0 0.0
        %3147 = vmatpush2.msra.mxu0 0.0
        %3148 = vmatprep.subr.mxu0 0.0
        %3149 = vmatpush2.msra.mxu0 0.0
        %3150 = vmatprep.subr.mxu0 0.0
        %3151 = vmatpush2.msra.mxu0 0.0
        %3152 = vmatprep.subr.mxu0 0.0
        %3153 = vmatpush2.msra.mxu0 0.0
        %3154 = vmatprep.subr.mxu0 0.0
        %3155 = vmatpush2.msra.mxu0 0.0
        %3156 = vmatprep.subr.mxu0 0.0
        %3157 = vmatpush2.msra.mxu0 0.0
        %3158 = vmatprep.subr.mxu0 0.0
        %3159 = vmatpush2.msra.mxu0 0.0
        %3160 = vmatprep.mubr.f32.mxu0 0.0
        %3161 = vmatmul.mubr.f32.gmra.mxu0 %v2569
        %v3162 = vpop.f32.mrf.mxu0
        %v3163 = vadd.f32 0.0, %v3162
        %v3164 = vpop.f32.mrf.mxu0
        %3165 = vmatprep.mubr.f32.mxu0 0.0
        %3166 = vmatmul.mubr.f32.gmra.mxu0 %v2572
        %v3167 = vpop.f32.mrf.mxu0
        %v3168 = vadd.f32 0.0, %v3167
        %v3169 = vpop.f32.mrf.mxu0
        %3170 = vmatprep.mubr.f32.mxu0 0.0
        %3171 = vmatmul.mubr.f32.gmra.mxu0 %v2575
        %v3172 = vpop.f32.mrf.mxu0
        %v3173 = vadd.f32 0.0, %v3172
        %v3174 = vpop.f32.mrf.mxu0
        %3175 = vmatprep.mubr.f32.mxu0 0.0
        %3176 = vmatmul.mubr.f32.gmra.mxu0 %v2578
        %v3177 = vpop.f32.mrf.mxu0
        %v3178 = vadd.f32 0.0, %v3177
        %v3179 = vpop.f32.mrf.mxu0
        %3180 = vmatprep.mubr.f32.mxu0 0.0
        %3181 = vmatmul.mubr.f32.gmra.mxu0 %v2581
        %v3182 = vpop.f32.mrf.mxu0
        %v3183 = vadd.f32 0.0, %v3182
        %v3184 = vpop.f32.mrf.mxu0
        %3185 = vmatprep.mubr.f32.mxu0 0.0
        %3186 = vmatmul.mubr.f32.gmra.mxu0 %v2584
        %v3187 = vpop.f32.mrf.mxu0
        %v3188 = vadd.f32 0.0, %v3187
        %v3189 = vpop.f32.mrf.mxu0
        %3190 = vmatprep.mubr.f32.mxu0 0.0
        %3191 = vmatmul.mubr.f32.gmra.mxu0 %v2587
        %v3192 = vpop.f32.mrf.mxu0
        %v3193 = vadd.f32 0.0, %v3192
        %v3194 = vpop.f32.mrf.mxu0
        %3195 = vmatprep.mubr.f32.mxu0 0.0
        %3196 = vmatmul.mubr.f32.gmra.mxu0 %v2590
        %v3197 = vpop.f32.mrf.mxu0
        %v3198 = vadd.f32 0.0, %v3197
        %v3199 = vpop.f32.mrf.mxu0
        %3200 = vmatprep.mubr.f32.mxu0 0.0
        %3201 = vmatmul.mubr.f32.gmra.mxu0 %v2593
        %v3202 = vpop.f32.mrf.mxu0
        %v3203 = vadd.f32 0.0, %v3202
        %v3204 = vpop.f32.mrf.mxu0
        %3205 = vmatprep.mubr.f32.mxu0 0.0
        %3206 = vmatmul.mubr.f32.gmra.mxu0 %v2596
        %v3207 = vpop.f32.mrf.mxu0
        %v3208 = vadd.f32 0.0, %v3207
        %v3209 = vpop.f32.mrf.mxu0
        %3210 = vmatprep.mubr.f32.mxu0 0.0
        %3211 = vmatmul.mubr.f32.gmra.mxu0 %v2599
        %v3212 = vpop.f32.mrf.mxu0
        %v3213 = vadd.f32 0.0, %v3212
        %v3214 = vpop.f32.mrf.mxu0
        %3215 = vmatprep.mubr.f32.mxu0 0.0
        %3216 = vmatmul.mubr.f32.gmra.mxu0 %v2602
        %v3217 = vpop.f32.mrf.mxu0
        %v3218 = vadd.f32 0.0, %v3217
        %v3219 = vpop.f32.mrf.mxu0
        %3220 = vmatprep.mubr.f32.mxu0 0.0
        %3221 = vmatmul.mubr.f32.gmra.mxu0 %v2605
        %v3222 = vpop.f32.mrf.mxu0
        %v3223 = vadd.f32 0.0, %v3222
        %v3224 = vpop.f32.mrf.mxu0
        %3225 = vmatprep.mubr.f32.mxu0 0.0
        %3226 = vmatmul.mubr.f32.gmra.mxu0 %v2608
        %v3227 = vpop.f32.mrf.mxu0
        %v3228 = vadd.f32 0.0, %v3227
        %v3229 = vpop.f32.mrf.mxu0
        %3230 = vdwg.mxu0
        %s3231 = sld [smem:[#allocation7 + $0x11b]]
        %v3232 = vstv %s3231
        %v3233 = vadd.f32 %v3163, %v3232
        %v3234 = vadd.f32 %v3168, %v3232
        %v3235 = vadd.f32 %v3173, %v3232
        %v3236 = vadd.f32 %v3178, %v3232
        %v3237 = vadd.f32 %v3183, %v3232
        %v3238 = vadd.f32 %v3188, %v3232
        %v3239 = vadd.f32 %v3193, %v3232
        %v3240 = vadd.f32 %v3198, %v3232
        %v3241 = vadd.f32 %v3203, %v3232
        %v3242 = vadd.f32 %v3208, %v3232
        %v3243 = vadd.f32 %v3213, %v3232
        %v3244 = vadd.f32 %v3218, %v3232
        %v3245 = vadd.f32 %v3223, %v3232
        %v3246 = vadd.f32 %v3228, %v3232
        %s3247 = sld [smem:[#allocation7 + $0x11c]]
        %vm3248 = vcmp.ge.f32.partialorder %v3233, 0.0
        %vm3249 = vcmp.ge.f32.partialorder %v3234, 0.0
        %vm3250 = vcmp.ge.f32.partialorder %v3235, 0.0
        %vm3251 = vcmp.ge.f32.partialorder %v3236, 0.0
        %vm3252 = vcmp.ge.f32.partialorder %v3237, 0.0
        %vm3253 = vcmp.ge.f32.partialorder %v3238, 0.0
        %vm3254 = vcmp.ge.f32.partialorder %v3239, 0.0
        %vm3255 = vcmp.ge.f32.partialorder %v3240, 0.0
        %vm3256 = vcmp.ge.f32.partialorder %v3241, 0.0
        %vm3257 = vcmp.ge.f32.partialorder %v3242, 0.0
        %vm3258 = vcmp.ge.f32.partialorder %v3243, 0.0
        %vm3259 = vcmp.ge.f32.partialorder %v3244, 0.0
        %vm3260 = vcmp.ge.f32.partialorder %v3245, 0.0
        %vm3261 = vcmp.ge.f32.partialorder %v3246, 0.0
        %v3262 = vstv %s3247
        %v3263 = vmul.f32 %v3233, %v3262
        %v3264 = vmul.f32 %v3234, %v3262
        %v3265 = vmul.f32 %v3235, %v3262
        %v3266 = vmul.f32 %v3236, %v3262
        %v3267 = vmul.f32 %v3237, %v3262
        %v3268 = vmul.f32 %v3238, %v3262
        %v3269 = vmul.f32 %v3239, %v3262
        %v3270 = vmul.f32 %v3240, %v3262
        %v3271 = vmul.f32 %v3241, %v3262
        %v3272 = vmul.f32 %v3242, %v3262
        %v3273 = vmul.f32 %v3243, %v3262
        %v3274 = vmul.f32 %v3244, %v3262
        %v3275 = vmul.f32 %v3245, %v3262
        %v3276 = vmul.f32 %v3246, %v3262
        %v3277 = vsel %vm3248, %v3233, %v3263
        %v3278 = vsel %vm3249, %v3234, %v3264
        %v3279 = vsel %vm3250, %v3235, %v3265
        %v3280 = vsel %vm3251, %v3236, %v3266
        %v3281 = vsel %vm3252, %v3237, %v3267
        %v3282 = vsel %vm3253, %v3238, %v3268
        %v3283 = vsel %vm3254, %v3239, %v3269
        %v3284 = vsel %vm3255, %v3240, %v3270
        %v3285 = vsel %vm3256, %v3241, %v3271
        %v3286 = vsel %vm3257, %v3242, %v3272
        %v3287 = vsel %vm3258, %v3243, %v3273
        %v3288 = vsel %vm3259, %v3244, %v3274
        %v3289 = vsel %vm3260, %v3245, %v3275
        %v3290 = vsel %vm3261, %v3246, %v3276
        %v3291 = vsel %vm2805, %v3277, 0.0
        %v3292 = vsel %vm2805, %v3278, 0.0
        %v3293 = vadd.f32 %v3291, %v3292
        %v3294 = vsel %vm2805, %v3279, 0.0
        %v3295 = vadd.f32 %v3293, %v3294
        %v3296 = vsel %vm2805, %v3280, 0.0
        %v3297 = vadd.f32 %v3295, %v3296
        %v3298 = vsel %vm2805, %v3281, 0.0
        %v3299 = vadd.f32 %v3297, %v3298
        %v3300 = vsel %vm2805, %v3282, 0.0
        %v3301 = vadd.f32 %v3299, %v3300
        %v3302 = vsel %vm2805, %v3283, 0.0
        %v3303 = vadd.f32 %v3301, %v3302
        %v3304 = vsel %vm2805, %v3284, 0.0
        %v3305 = vadd.f32 %v3303, %v3304
        %v3306 = vsel %vm2805, %v3285, 0.0
        %v3307 = vadd.f32 %v3305, %v3306
        %v3308 = vsel %vm2805, %v3286, 0.0
        %v3309 = vadd.f32 %v3307, %v3308
        %v3310 = vsel %vm2805, %v3287, 0.0
        %v3311 = vadd.f32 %v3309, %v3310
        %v3312 = vsel %vm2805, %v3288, 0.0
        %v3313 = vadd.f32 %v3311, %v3312
        %v3314 = vsel %vm2805, %v3289, 0.0
        %v3315 = vadd.f32 %v3313, %v3314
        %v3316 = vsel %vm2805, %v3290, 0.0
        %v3317 = vadd.f32 %v3315, %v3316
        %3318 = vadd.xlane.f32.xlu0 %v3317
        %v3319 = vpop.xlane.xlu0 %3318
        %v3320 = vrot.slane %v3319, 4
        %v3321 = vadd.f32 %v3319, %v3320
        %v3322 = vrot.slane %v3321, 2
        %v3323 = vadd.f32 %v3321, %v3322
        %v3324 = vrot.slane %v3323, 1
        %v3325 = vadd.f32 %v3323, %v3324
        %s3326 = vtos %v3325
        %v3327 = vstv %s3326
        %v3328 = vmul.f32 %v3327, 7.9719386e-05
        %s3329 = scalar_lea.vmem [#allocation8], 2
        %v3330 = vld [vmem:[%s3329] ss:$8 sm:$0xf]
        %v3331 = vmul.f32 %v3328, %v3330
        %v3332 = vadd.f32 %v3089, %v3331
        %v3333 = vld [vmem:[#allocation3 + $0x18] sm:$0xff]
        %v3334 = vld [vmem:[#allocation3 + $0x58] sm:$0xff]
        %v3335 = vld [vmem:[#allocation3 + $0x98] sm:$0xff]
        %v3336 = vld [vmem:[#allocation3 + $0xd8] sm:$0xff]
        %v3337 = vld [vmem:[#allocation3 + $0x118] sm:$0xff]
        %v3338 = vld [vmem:[#allocation3 + $0x158] sm:$0xff]
        %3339 = vmatprep.subr.mxu0 0.0
        %3340 = vmatpush1.msra.mxu0 0.0
        %3341 = vmatprep.subr.mxu0 0.0
        %3342 = vmatpush1.msra.mxu0 0.0
        %3343 = vmatprep.subr.mxu0 0.0
        %3344 = vmatpush1.msra.mxu0 0.0
        %3345 = vmatprep.subr.mxu0 0.0
        %3346 = vmatpush1.msra.mxu0 0.0
        %3347 = vmatprep.subr.mxu0 0.0
        %3348 = vmatpush1.msra.mxu0 0.0
        %3349 = vmatprep.subr.mxu0 0.0
        %3350 = vmatpush1.msra.mxu0 0.0
        %3351 = vmatprep.subr.mxu0 0.0
        %3352 = vmatpush1.msra.mxu0 0.0
        %3353 = vmatprep.subr.mxu0 0.0
        %3354 = vmatpush1.msra.mxu0 0.0
        %3355 = vmatprep.subr.mxu0 0.0
        %3356 = vmatpush1.msra.mxu0 0.0
        %3357 = vmatprep.subr.mxu0 0.0
        %3358 = vmatpush1.msra.mxu0 0.0
        %3359 = vmatprep.subr.mxu0 0.0
        %3360 = vmatpush1.msra.mxu0 %v3338
        %3361 = vmatprep.subr.mxu0 0.0
        %3362 = vmatpush1.msra.mxu0 %v3337
        %3363 = vmatprep.subr.mxu0 0.0
        %3364 = vmatpush1.msra.mxu0 %v3336
        %3365 = vmatprep.subr.mxu0 0.0
        %3366 = vmatpush1.msra.mxu0 %v3335
        %3367 = vmatprep.subr.mxu0 0.0
        %3368 = vmatpush1.msra.mxu0 %v3334
        %3369 = vmatprep.subr.mxu0 0.0
        %3370 = vmatpush1.msra.mxu0 %v3333
        %3371 = vmatprep.subr.mxu0 0.0
        %3372 = vmatpush2.msra.mxu0 0.0
        %3373 = vmatprep.subr.mxu0 0.0
        %3374 = vmatpush2.msra.mxu0 0.0
        %3375 = vmatprep.subr.mxu0 0.0
        %3376 = vmatpush2.msra.mxu0 0.0
        %3377 = vmatprep.subr.mxu0 0.0
        %3378 = vmatpush2.msra.mxu0 0.0
        %3379 = vmatprep.subr.mxu0 0.0
        %3380 = vmatpush2.msra.mxu0 0.0
        %3381 = vmatprep.subr.mxu0 0.0
        %3382 = vmatpush2.msra.mxu0 0.0
        %3383 = vmatprep.subr.mxu0 0.0
        %3384 = vmatpush2.msra.mxu0 0.0
        %3385 = vmatprep.subr.mxu0 0.0
        %3386 = vmatpush2.msra.mxu0 0.0
        %3387 = vmatprep.subr.mxu0 0.0
        %3388 = vmatpush2.msra.mxu0 0.0
        %3389 = vmatprep.subr.mxu0 0.0
        %3390 = vmatpush2.msra.mxu0 0.0
        %3391 = vmatprep.subr.mxu0 0.0
        %3392 = vmatpush2.msra.mxu0 0.0
        %3393 = vmatprep.subr.mxu0 0.0
        %3394 = vmatpush2.msra.mxu0 0.0
        %3395 = vmatprep.subr.mxu0 0.0
        %3396 = vmatpush2.msra.mxu0 0.0
        %3397 = vmatprep.subr.mxu0 0.0
        %3398 = vmatpush2.msra.mxu0 0.0
        %3399 = vmatprep.subr.mxu0 0.0
        %3400 = vmatpush2.msra.mxu0 0.0
        %3401 = vmatprep.subr.mxu0 0.0
        %3402 = vmatpush2.msra.mxu0 0.0
        %3403 = vmatprep.mubr.f32.mxu0 0.0
        %3404 = vmatmul.mubr.f32.gmra.mxu0 %v2569
        %v3405 = vpop.f32.mrf.mxu0
        %v3406 = vadd.f32 0.0, %v3405
        %v3407 = vpop.f32.mrf.mxu0
        %3408 = vmatprep.mubr.f32.mxu0 0.0
        %3409 = vmatmul.mubr.f32.gmra.mxu0 %v2572
        %v3410 = vpop.f32.mrf.mxu0
        %v3411 = vadd.f32 0.0, %v3410
        %v3412 = vpop.f32.mrf.mxu0
        %3413 = vmatprep.mubr.f32.mxu0 0.0
        %3414 = vmatmul.mubr.f32.gmra.mxu0 %v2575
        %v3415 = vpop.f32.mrf.mxu0
        %v3416 = vadd.f32 0.0, %v3415
        %v3417 = vpop.f32.mrf.mxu0
        %3418 = vmatprep.mubr.f32.mxu0 0.0
        %3419 = vmatmul.mubr.f32.gmra.mxu0 %v2578
        %v3420 = vpop.f32.mrf.mxu0
        %v3421 = vadd.f32 0.0, %v3420
        %v3422 = vpop.f32.mrf.mxu0
        %3423 = vmatprep.mubr.f32.mxu0 0.0
        %3424 = vmatmul.mubr.f32.gmra.mxu0 %v2581
        %v3425 = vpop.f32.mrf.mxu0
        %v3426 = vadd.f32 0.0, %v3425
        %v3427 = vpop.f32.mrf.mxu0
        %3428 = vmatprep.mubr.f32.mxu0 0.0
        %3429 = vmatmul.mubr.f32.gmra.mxu0 %v2584
        %v3430 = vpop.f32.mrf.mxu0
        %v3431 = vadd.f32 0.0, %v3430
        %v3432 = vpop.f32.mrf.mxu0
        %3433 = vmatprep.mubr.f32.mxu0 0.0
        %3434 = vmatmul.mubr.f32.gmra.mxu0 %v2587
        %v3435 = vpop.f32.mrf.mxu0
        %v3436 = vadd.f32 0.0, %v3435
        %v3437 = vpop.f32.mrf.mxu0
        %3438 = vmatprep.mubr.f32.mxu0 0.0
        %3439 = vmatmul.mubr.f32.gmra.mxu0 %v2590
        %v3440 = vpop.f32.mrf.mxu0
        %v3441 = vadd.f32 0.0, %v3440
        %v3442 = vpop.f32.mrf.mxu0
        %3443 = vmatprep.mubr.f32.mxu0 0.0
        %3444 = vmatmul.mubr.f32.gmra.mxu0 %v2593
        %v3445 = vpop.f32.mrf.mxu0
        %v3446 = vadd.f32 0.0, %v3445
        %v3447 = vpop.f32.mrf.mxu0
        %3448 = vmatprep.mubr.f32.mxu0 0.0
        %3449 = vmatmul.mubr.f32.gmra.mxu0 %v2596
        %v3450 = vpop.f32.mrf.mxu0
        %v3451 = vadd.f32 0.0, %v3450
        %v3452 = vpop.f32.mrf.mxu0
        %3453 = vmatprep.mubr.f32.mxu0 0.0
        %3454 = vmatmul.mubr.f32.gmra.mxu0 %v2599
        %v3455 = vpop.f32.mrf.mxu0
        %v3456 = vadd.f32 0.0, %v3455
        %v3457 = vpop.f32.mrf.mxu0
        %3458 = vmatprep.mubr.f32.mxu0 0.0
        %3459 = vmatmul.mubr.f32.gmra.mxu0 %v2602
        %v3460 = vpop.f32.mrf.mxu0
        %v3461 = vadd.f32 0.0, %v3460
        %v3462 = vpop.f32.mrf.mxu0
        %3463 = vmatprep.mubr.f32.mxu0 0.0
        %3464 = vmatmul.mubr.f32.gmra.mxu0 %v2605
        %v3465 = vpop.f32.mrf.mxu0
        %v3466 = vadd.f32 0.0, %v3465
        %v3467 = vpop.f32.mrf.mxu0
        %3468 = vmatprep.mubr.f32.mxu0 0.0
        %3469 = vmatmul.mubr.f32.gmra.mxu0 %v2608
        %v3470 = vpop.f32.mrf.mxu0
        %v3471 = vadd.f32 0.0, %v3470
        %v3472 = vpop.f32.mrf.mxu0
        %3473 = vdwg.mxu0
        %s3474 = sld [smem:[#allocation7 + $0x19b]]
        %v3475 = vstv %s3474
        %v3476 = vadd.f32 %v3406, %v3475
        %v3477 = vadd.f32 %v3411, %v3475
        %v3478 = vadd.f32 %v3416, %v3475
        %v3479 = vadd.f32 %v3421, %v3475
        %v3480 = vadd.f32 %v3426, %v3475
        %v3481 = vadd.f32 %v3431, %v3475
        %v3482 = vadd.f32 %v3436, %v3475
        %v3483 = vadd.f32 %v3441, %v3475
        %v3484 = vadd.f32 %v3446, %v3475
        %v3485 = vadd.f32 %v3451, %v3475
        %v3486 = vadd.f32 %v3456, %v3475
        %v3487 = vadd.f32 %v3461, %v3475
        %v3488 = vadd.f32 %v3466, %v3475
        %v3489 = vadd.f32 %v3471, %v3475
        %s3490 = sld [smem:[#allocation7 + $0x19c]]
        %vm3491 = vcmp.ge.f32.partialorder %v3476, 0.0
        %vm3492 = vcmp.ge.f32.partialorder %v3477, 0.0
        %vm3493 = vcmp.ge.f32.partialorder %v3478, 0.0
        %vm3494 = vcmp.ge.f32.partialorder %v3479, 0.0
        %vm3495 = vcmp.ge.f32.partialorder %v3480, 0.0
        %vm3496 = vcmp.ge.f32.partialorder %v3481, 0.0
        %vm3497 = vcmp.ge.f32.partialorder %v3482, 0.0
        %vm3498 = vcmp.ge.f32.partialorder %v3483, 0.0
        %vm3499 = vcmp.ge.f32.partialorder %v3484, 0.0
        %vm3500 = vcmp.ge.f32.partialorder %v3485, 0.0
        %vm3501 = vcmp.ge.f32.partialorder %v3486, 0.0
        %vm3502 = vcmp.ge.f32.partialorder %v3487, 0.0
        %vm3503 = vcmp.ge.f32.partialorder %v3488, 0.0
        %vm3504 = vcmp.ge.f32.partialorder %v3489, 0.0
        %v3505 = vstv %s3490
        %v3506 = vmul.f32 %v3476, %v3505
        %v3507 = vmul.f32 %v3477, %v3505
        %v3508 = vmul.f32 %v3478, %v3505
        %v3509 = vmul.f32 %v3479, %v3505
        %v3510 = vmul.f32 %v3480, %v3505
        %v3511 = vmul.f32 %v3481, %v3505
        %v3512 = vmul.f32 %v3482, %v3505
        %v3513 = vmul.f32 %v3483, %v3505
        %v3514 = vmul.f32 %v3484, %v3505
        %v3515 = vmul.f32 %v3485, %v3505
        %v3516 = vmul.f32 %v3486, %v3505
        %v3517 = vmul.f32 %v3487, %v3505
        %v3518 = vmul.f32 %v3488, %v3505
        %v3519 = vmul.f32 %v3489, %v3505
        %v3520 = vsel %vm3491, %v3476, %v3506
        %v3521 = vsel %vm3492, %v3477, %v3507
        %v3522 = vsel %vm3493, %v3478, %v3508
        %v3523 = vsel %vm3494, %v3479, %v3509
        %v3524 = vsel %vm3495, %v3480, %v3510
        %v3525 = vsel %vm3496, %v3481, %v3511
        %v3526 = vsel %vm3497, %v3482, %v3512
        %v3527 = vsel %vm3498, %v3483, %v3513
        %v3528 = vsel %vm3499, %v3484, %v3514
        %v3529 = vsel %vm3500, %v3485, %v3515
        %v3530 = vsel %vm3501, %v3486, %v3516
        %v3531 = vsel %vm3502, %v3487, %v3517
        %v3532 = vsel %vm3503, %v3488, %v3518
        %v3533 = vsel %vm3504, %v3489, %v3519
        %v3534 = vsel %vm2805, %v3520, 0.0
        %v3535 = vsel %vm2805, %v3521, 0.0
        %v3536 = vadd.f32 %v3534, %v3535
        %v3537 = vsel %vm2805, %v3522, 0.0
        %v3538 = vadd.f32 %v3536, %v3537
        %v3539 = vsel %vm2805, %v3523, 0.0
        %v3540 = vadd.f32 %v3538, %v3539
        %v3541 = vsel %vm2805, %v3524, 0.0
        %v3542 = vadd.f32 %v3540, %v3541
        %v3543 = vsel %vm2805, %v3525, 0.0
        %v3544 = vadd.f32 %v3542, %v3543
        %v3545 = vsel %vm2805, %v3526, 0.0
        %v3546 = vadd.f32 %v3544, %v3545
        %v3547 = vsel %vm2805, %v3527, 0.0
        %v3548 = vadd.f32 %v3546, %v3547
        %v3549 = vsel %vm2805, %v3528, 0.0
        %v3550 = vadd.f32 %v3548, %v3549
        %v3551 = vsel %vm2805, %v3529, 0.0
        %v3552 = vadd.f32 %v3550, %v3551
        %v3553 = vsel %vm2805, %v3530, 0.0
        %v3554 = vadd.f32 %v3552, %v3553
        %v3555 = vsel %vm2805, %v3531, 0.0
        %v3556 = vadd.f32 %v3554, %v3555
        %v3557 = vsel %vm2805, %v3532, 0.0
        %v3558 = vadd.f32 %v3556, %v3557
        %v3559 = vsel %vm2805, %v3533, 0.0
        %v3560 = vadd.f32 %v3558, %v3559
        %3561 = vadd.xlane.f32.xlu0 %v3560
        %v3562 = vpop.xlane.xlu0 %3561
        %v3563 = vrot.slane %v3562, 4
        %v3564 = vadd.f32 %v3562, %v3563
        %v3565 = vrot.slane %v3564, 2
        %v3566 = vadd.f32 %v3564, %v3565
        %v3567 = vrot.slane %v3566, 1
        %v3568 = vadd.f32 %v3566, %v3567
        %s3569 = vtos %v3568
        %v3570 = vstv %s3569
        %v3571 = vmul.f32 %v3570, 7.9719386e-05
        %s3572 = scalar_lea.vmem [#allocation8], 3
        %v3573 = vld [vmem:[%s3572] ss:$8 sm:$0xf]
        %v3574 = vmul.f32 %v3571, %v3573
        %v3575 = vadd.f32 %v3332, %v3574
        %v3576 = vld [vmem:[#allocation3 + $0x20] sm:$0xff]
        %v3577 = vld [vmem:[#allocation3 + $0x60] sm:$0xff]
        %v3578 = vld [vmem:[#allocation3 + $0xa0] sm:$0xff]
        %v3579 = vld [vmem:[#allocation3 + $0xe0] sm:$0xff]
        %v3580 = vld [vmem:[#allocation3 + $0x120] sm:$0xff]
        %v3581 = vld [vmem:[#allocation3 + $0x160] sm:$0xff]
        %3582 = vmatprep.subr.mxu0 0.0
        %3583 = vmatpush1.msra.mxu0 0.0
        %3584 = vmatprep.subr.mxu0 0.0
        %3585 = vmatpush1.msra.mxu0 0.0
        %3586 = vmatprep.subr.mxu0 0.0
        %3587 = vmatpush1.msra.mxu0 0.0
        %3588 = vmatprep.subr.mxu0 0.0
        %3589 = vmatpush1.msra.mxu0 0.0
        %3590 = vmatprep.subr.mxu0 0.0
        %3591 = vmatpush1.msra.mxu0 0.0
        %3592 = vmatprep.subr.mxu0 0.0
        %3593 = vmatpush1.msra.mxu0 0.0
        %3594 = vmatprep.subr.mxu0 0.0
        %3595 = vmatpush1.msra.mxu0 0.0
        %3596 = vmatprep.subr.mxu0 0.0
        %3597 = vmatpush1.msra.mxu0 0.0
        %3598 = vmatprep.subr.mxu0 0.0
        %3599 = vmatpush1.msra.mxu0 0.0
        %3600 = vmatprep.subr.mxu0 0.0
        %3601 = vmatpush1.msra.mxu0 0.0
        %3602 = vmatprep.subr.mxu0 0.0
        %3603 = vmatpush1.msra.mxu0 %v3581
        %3604 = vmatprep.subr.mxu0 0.0
        %3605 = vmatpush1.msra.mxu0 %v3580
        %3606 = vmatprep.subr.mxu0 0.0
        %3607 = vmatpush1.msra.mxu0 %v3579
        %3608 = vmatprep.subr.mxu0 0.0
        %3609 = vmatpush1.msra.mxu0 %v3578
        %3610 = vmatprep.subr.mxu0 0.0
        %3611 = vmatpush1.msra.mxu0 %v3577
        %3612 = vmatprep.subr.mxu0 0.0
        %3613 = vmatpush1.msra.mxu0 %v3576
        %3614 = vmatprep.subr.mxu0 0.0
        %3615 = vmatpush2.msra.mxu0 0.0
        %3616 = vmatprep.subr.mxu0 0.0
        %3617 = vmatpush2.msra.mxu0 0.0
        %3618 = vmatprep.subr.mxu0 0.0
        %3619 = vmatpush2.msra.mxu0 0.0
        %3620 = vmatprep.subr.mxu0 0.0
        %3621 = vmatpush2.msra.mxu0 0.0
        %3622 = vmatprep.subr.mxu0 0.0
        %3623 = vmatpush2.msra.mxu0 0.0
        %3624 = vmatprep.subr.mxu0 0.0
        %3625 = vmatpush2.msra.mxu0 0.0
        %3626 = vmatprep.subr.mxu0 0.0
        %3627 = vmatpush2.msra.mxu0 0.0
        %3628 = vmatprep.subr.mxu0 0.0
        %3629 = vmatpush2.msra.mxu0 0.0
        %3630 = vmatprep.subr.mxu0 0.0
        %3631 = vmatpush2.msra.mxu0 0.0
        %3632 = vmatprep.subr.mxu0 0.0
        %3633 = vmatpush2.msra.mxu0 0.0
        %3634 = vmatprep.subr.mxu0 0.0
        %3635 = vmatpush2.msra.mxu0 0.0
        %3636 = vmatprep.subr.mxu0 0.0
        %3637 = vmatpush2.msra.mxu0 0.0
        %3638 = vmatprep.subr.mxu0 0.0
        %3639 = vmatpush2.msra.mxu0 0.0
        %3640 = vmatprep.subr.mxu0 0.0
        %3641 = vmatpush2.msra.mxu0 0.0
        %3642 = vmatprep.subr.mxu0 0.0
        %3643 = vmatpush2.msra.mxu0 0.0
        %3644 = vmatprep.subr.mxu0 0.0
        %3645 = vmatpush2.msra.mxu0 0.0
        %3646 = vmatprep.mubr.f32.mxu0 0.0
        %3647 = vmatmul.mubr.f32.gmra.mxu0 %v2569
        %v3648 = vpop.f32.mrf.mxu0
        %v3649 = vadd.f32 0.0, %v3648
        %v3650 = vpop.f32.mrf.mxu0
        %3651 = vmatprep.mubr.f32.mxu0 0.0
        %3652 = vmatmul.mubr.f32.gmra.mxu0 %v2572
        %v3653 = vpop.f32.mrf.mxu0
        %v3654 = vadd.f32 0.0, %v3653
        %v3655 = vpop.f32.mrf.mxu0
        %3656 = vmatprep.mubr.f32.mxu0 0.0
        %3657 = vmatmul.mubr.f32.gmra.mxu0 %v2575
        %v3658 = vpop.f32.mrf.mxu0
        %v3659 = vadd.f32 0.0, %v3658
        %v3660 = vpop.f32.mrf.mxu0
        %3661 = vmatprep.mubr.f32.mxu0 0.0
        %3662 = vmatmul.mubr.f32.gmra.mxu0 %v2578
        %v3663 = vpop.f32.mrf.mxu0
        %v3664 = vadd.f32 0.0, %v3663
        %v3665 = vpop.f32.mrf.mxu0
        %3666 = vmatprep.mubr.f32.mxu0 0.0
        %3667 = vmatmul.mubr.f32.gmra.mxu0 %v2581
        %v3668 = vpop.f32.mrf.mxu0
        %v3669 = vadd.f32 0.0, %v3668
        %v3670 = vpop.f32.mrf.mxu0
        %3671 = vmatprep.mubr.f32.mxu0 0.0
        %3672 = vmatmul.mubr.f32.gmra.mxu0 %v2584
        %v3673 = vpop.f32.mrf.mxu0
        %v3674 = vadd.f32 0.0, %v3673
        %v3675 = vpop.f32.mrf.mxu0
        %3676 = vmatprep.mubr.f32.mxu0 0.0
        %3677 = vmatmul.mubr.f32.gmra.mxu0 %v2587
        %v3678 = vpop.f32.mrf.mxu0
        %v3679 = vadd.f32 0.0, %v3678
        %v3680 = vpop.f32.mrf.mxu0
        %3681 = vmatprep.mubr.f32.mxu0 0.0
        %3682 = vmatmul.mubr.f32.gmra.mxu0 %v2590
        %v3683 = vpop.f32.mrf.mxu0
        %v3684 = vadd.f32 0.0, %v3683
        %v3685 = vpop.f32.mrf.mxu0
        %3686 = vmatprep.mubr.f32.mxu0 0.0
        %3687 = vmatmul.mubr.f32.gmra.mxu0 %v2593
        %v3688 = vpop.f32.mrf.mxu0
        %v3689 = vadd.f32 0.0, %v3688
        %v3690 = vpop.f32.mrf.mxu0
        %3691 = vmatprep.mubr.f32.mxu0 0.0
        %3692 = vmatmul.mubr.f32.gmra.mxu0 %v2596
        %v3693 = vpop.f32.mrf.mxu0
        %v3694 = vadd.f32 0.0, %v3693
        %v3695 = vpop.f32.mrf.mxu0
        %3696 = vmatprep.mubr.f32.mxu0 0.0
        %3697 = vmatmul.mubr.f32.gmra.mxu0 %v2599
        %v3698 = vpop.f32.mrf.mxu0
        %v3699 = vadd.f32 0.0, %v3698
        %v3700 = vpop.f32.mrf.mxu0
        %3701 = vmatprep.mubr.f32.mxu0 0.0
        %3702 = vmatmul.mubr.f32.gmra.mxu0 %v2602
        %v3703 = vpop.f32.mrf.mxu0
        %v3704 = vadd.f32 0.0, %v3703
        %v3705 = vpop.f32.mrf.mxu0
        %3706 = vmatprep.mubr.f32.mxu0 0.0
        %3707 = vmatmul.mubr.f32.gmra.mxu0 %v2605
        %v3708 = vpop.f32.mrf.mxu0
        %v3709 = vadd.f32 0.0, %v3708
        %v3710 = vpop.f32.mrf.mxu0
        %3711 = vmatprep.mubr.f32.mxu0 0.0
        %3712 = vmatmul.mubr.f32.gmra.mxu0 %v2608
        %v3713 = vpop.f32.mrf.mxu0
        %v3714 = vadd.f32 0.0, %v3713
        %v3715 = vpop.f32.mrf.mxu0
        %3716 = vdwg.mxu0
        %s3717 = sld [smem:[#allocation7 + $0x21b]]
        %v3718 = vstv %s3717
        %v3719 = vadd.f32 %v3649, %v3718
        %v3720 = vadd.f32 %v3654, %v3718
        %v3721 = vadd.f32 %v3659, %v3718
        %v3722 = vadd.f32 %v3664, %v3718
        %v3723 = vadd.f32 %v3669, %v3718
        %v3724 = vadd.f32 %v3674, %v3718
        %v3725 = vadd.f32 %v3679, %v3718
        %v3726 = vadd.f32 %v3684, %v3718
        %v3727 = vadd.f32 %v3689, %v3718
        %v3728 = vadd.f32 %v3694, %v3718
        %v3729 = vadd.f32 %v3699, %v3718
        %v3730 = vadd.f32 %v3704, %v3718
        %v3731 = vadd.f32 %v3709, %v3718
        %v3732 = vadd.f32 %v3714, %v3718
        %s3733 = sld [smem:[#allocation7 + $0x21c]]
        %vm3734 = vcmp.ge.f32.partialorder %v3719, 0.0
        %vm3735 = vcmp.ge.f32.partialorder %v3720, 0.0
        %vm3736 = vcmp.ge.f32.partialorder %v3721, 0.0
        %vm3737 = vcmp.ge.f32.partialorder %v3722, 0.0
        %vm3738 = vcmp.ge.f32.partialorder %v3723, 0.0
        %vm3739 = vcmp.ge.f32.partialorder %v3724, 0.0
        %vm3740 = vcmp.ge.f32.partialorder %v3725, 0.0
        %vm3741 = vcmp.ge.f32.partialorder %v3726, 0.0
        %vm3742 = vcmp.ge.f32.partialorder %v3727, 0.0
        %vm3743 = vcmp.ge.f32.partialorder %v3728, 0.0
        %vm3744 = vcmp.ge.f32.partialorder %v3729, 0.0
        %vm3745 = vcmp.ge.f32.partialorder %v3730, 0.0
        %vm3746 = vcmp.ge.f32.partialorder %v3731, 0.0
        %vm3747 = vcmp.ge.f32.partialorder %v3732, 0.0
        %v3748 = vstv %s3733
        %v3749 = vmul.f32 %v3719, %v3748
        %v3750 = vmul.f32 %v3720, %v3748
        %v3751 = vmul.f32 %v3721, %v3748
        %v3752 = vmul.f32 %v3722, %v3748
        %v3753 = vmul.f32 %v3723, %v3748
        %v3754 = vmul.f32 %v3724, %v3748
        %v3755 = vmul.f32 %v3725, %v3748
        %v3756 = vmul.f32 %v3726, %v3748
        %v3757 = vmul.f32 %v3727, %v3748
        %v3758 = vmul.f32 %v3728, %v3748
        %v3759 = vmul.f32 %v3729, %v3748
        %v3760 = vmul.f32 %v3730, %v3748
        %v3761 = vmul.f32 %v3731, %v3748
        %v3762 = vmul.f32 %v3732, %v3748
        %v3763 = vsel %vm3734, %v3719, %v3749
        %v3764 = vsel %vm3735, %v3720, %v3750
        %v3765 = vsel %vm3736, %v3721, %v3751
        %v3766 = vsel %vm3737, %v3722, %v3752
        %v3767 = vsel %vm3738, %v3723, %v3753
        %v3768 = vsel %vm3739, %v3724, %v3754
        %v3769 = vsel %vm3740, %v3725, %v3755
        %v3770 = vsel %vm3741, %v3726, %v3756
        %v3771 = vsel %vm3742, %v3727, %v3757
        %v3772 = vsel %vm3743, %v3728, %v3758
        %v3773 = vsel %vm3744, %v3729, %v3759
        %v3774 = vsel %vm3745, %v3730, %v3760
        %v3775 = vsel %vm3746, %v3731, %v3761
        %v3776 = vsel %vm3747, %v3732, %v3762
        %v3777 = vsel %vm2805, %v3763, 0.0
        %v3778 = vsel %vm2805, %v3764, 0.0
        %v3779 = vadd.f32 %v3777, %v3778
        %v3780 = vsel %vm2805, %v3765, 0.0
        %v3781 = vadd.f32 %v3779, %v3780
        %v3782 = vsel %vm2805, %v3766, 0.0
        %v3783 = vadd.f32 %v3781, %v3782
        %v3784 = vsel %vm2805, %v3767, 0.0
        %v3785 = vadd.f32 %v3783, %v3784
        %v3786 = vsel %vm2805, %v3768, 0.0
        %v3787 = vadd.f32 %v3785, %v3786
        %v3788 = vsel %vm2805, %v3769, 0.0
        %v3789 = vadd.f32 %v3787, %v3788
        %v3790 = vsel %vm2805, %v3770, 0.0
        %v3791 = vadd.f32 %v3789, %v3790
        %v3792 = vsel %vm2805, %v3771, 0.0
        %v3793 = vadd.f32 %v3791, %v3792
        %v3794 = vsel %vm2805, %v3772, 0.0
        %v3795 = vadd.f32 %v3793, %v3794
        %v3796 = vsel %vm2805, %v3773, 0.0
        %v3797 = vadd.f32 %v3795, %v3796
        %v3798 = vsel %vm2805, %v3774, 0.0
        %v3799 = vadd.f32 %v3797, %v3798
        %v3800 = vsel %vm2805, %v3775, 0.0
        %v3801 = vadd.f32 %v3799, %v3800
        %v3802 = vsel %vm2805, %v3776, 0.0
        %v3803 = vadd.f32 %v3801, %v3802
        %3804 = vadd.xlane.f32.xlu0 %v3803
        %v3805 = vpop.xlane.xlu0 %3804
        %v3806 = vrot.slane %v3805, 4
        %v3807 = vadd.f32 %v3805, %v3806
        %v3808 = vrot.slane %v3807, 2
        %v3809 = vadd.f32 %v3807, %v3808
        %v3810 = vrot.slane %v3809, 1
        %v3811 = vadd.f32 %v3809, %v3810
        %s3812 = vtos %v3811
        %v3813 = vstv %s3812
        %v3814 = vmul.f32 %v3813, 7.9719386e-05
        %s3815 = scalar_lea.vmem [#allocation8], 4
        %v3816 = vld [vmem:[%s3815] ss:$8 sm:$0xf]
        %v3817 = vmul.f32 %v3814, %v3816
        %v3818 = vadd.f32 %v3575, %v3817
        %v3819 = vld [vmem:[#allocation3 + $0x28] sm:$0xff]
        %v3820 = vld [vmem:[#allocation3 + $0x68] sm:$0xff]
        %v3821 = vld [vmem:[#allocation3 + $0xa8] sm:$0xff]
        %v3822 = vld [vmem:[#allocation3 + $0xe8] sm:$0xff]
        %v3823 = vld [vmem:[#allocation3 + $0x128] sm:$0xff]
        %v3824 = vld [vmem:[#allocation3 + $0x168] sm:$0xff]
        %3825 = vmatprep.subr.mxu0 0.0
        %3826 = vmatpush1.msra.mxu0 0.0
        %3827 = vmatprep.subr.mxu0 0.0
        %3828 = vmatpush1.msra.mxu0 0.0
        %3829 = vmatprep.subr.mxu0 0.0
        %3830 = vmatpush1.msra.mxu0 0.0
        %3831 = vmatprep.subr.mxu0 0.0
        %3832 = vmatpush1.msra.mxu0 0.0
        %3833 = vmatprep.subr.mxu0 0.0
        %3834 = vmatpush1.msra.mxu0 0.0
        %3835 = vmatprep.subr.mxu0 0.0
        %3836 = vmatpush1.msra.mxu0 0.0
        %3837 = vmatprep.subr.mxu0 0.0
        %3838 = vmatpush1.msra.mxu0 0.0
        %3839 = vmatprep.subr.mxu0 0.0
        %3840 = vmatpush1.msra.mxu0 0.0
        %3841 = vmatprep.subr.mxu0 0.0
        %3842 = vmatpush1.msra.mxu0 0.0
        %3843 = vmatprep.subr.mxu0 0.0
        %3844 = vmatpush1.msra.mxu0 0.0
        %3845 = vmatprep.subr.mxu0 0.0
        %3846 = vmatpush1.msra.mxu0 %v3824
        %3847 = vmatprep.subr.mxu0 0.0
        %3848 = vmatpush1.msra.mxu0 %v3823
        %3849 = vmatprep.subr.mxu0 0.0
        %3850 = vmatpush1.msra.mxu0 %v3822
        %3851 = vmatprep.subr.mxu0 0.0
        %3852 = vmatpush1.msra.mxu0 %v3821
        %3853 = vmatprep.subr.mxu0 0.0
        %3854 = vmatpush1.msra.mxu0 %v3820
        %3855 = vmatprep.subr.mxu0 0.0
        %3856 = vmatpush1.msra.mxu0 %v3819
        %3857 = vmatprep.subr.mxu0 0.0
        %3858 = vmatpush2.msra.mxu0 0.0
        %3859 = vmatprep.subr.mxu0 0.0
        %3860 = vmatpush2.msra.mxu0 0.0
        %3861 = vmatprep.subr.mxu0 0.0
        %3862 = vmatpush2.msra.mxu0 0.0
        %3863 = vmatprep.subr.mxu0 0.0
        %3864 = vmatpush2.msra.mxu0 0.0
        %3865 = vmatprep.subr.mxu0 0.0
        %3866 = vmatpush2.msra.mxu0 0.0
        %3867 = vmatprep.subr.mxu0 0.0
        %3868 = vmatpush2.msra.mxu0 0.0
        %3869 = vmatprep.subr.mxu0 0.0
        %3870 = vmatpush2.msra.mxu0 0.0
        %3871 = vmatprep.subr.mxu0 0.0
        %3872 = vmatpush2.msra.mxu0 0.0
        %3873 = vmatprep.subr.mxu0 0.0
        %3874 = vmatpush2.msra.mxu0 0.0
        %3875 = vmatprep.subr.mxu0 0.0
        %3876 = vmatpush2.msra.mxu0 0.0
        %3877 = vmatprep.subr.mxu0 0.0
        %3878 = vmatpush2.msra.mxu0 0.0
        %3879 = vmatprep.subr.mxu0 0.0
        %3880 = vmatpush2.msra.mxu0 0.0
        %3881 = vmatprep.subr.mxu0 0.0
        %3882 = vmatpush2.msra.mxu0 0.0
        %3883 = vmatprep.subr.mxu0 0.0
        %3884 = vmatpush2.msra.mxu0 0.0
        %3885 = vmatprep.subr.mxu0 0.0
        %3886 = vmatpush2.msra.mxu0 0.0
        %3887 = vmatprep.subr.mxu0 0.0
        %3888 = vmatpush2.msra.mxu0 0.0
        %3889 = vmatprep.mubr.f32.mxu0 0.0
        %3890 = vmatmul.mubr.f32.gmra.mxu0 %v2569
        %v3891 = vpop.f32.mrf.mxu0
        %v3892 = vadd.f32 0.0, %v3891
        %v3893 = vpop.f32.mrf.mxu0
        %3894 = vmatprep.mubr.f32.mxu0 0.0
        %3895 = vmatmul.mubr.f32.gmra.mxu0 %v2572
        %v3896 = vpop.f32.mrf.mxu0
        %v3897 = vadd.f32 0.0, %v3896
        %v3898 = vpop.f32.mrf.mxu0
        %3899 = vmatprep.mubr.f32.mxu0 0.0
        %3900 = vmatmul.mubr.f32.gmra.mxu0 %v2575
        %v3901 = vpop.f32.mrf.mxu0
        %v3902 = vadd.f32 0.0, %v3901
        %v3903 = vpop.f32.mrf.mxu0
        %3904 = vmatprep.mubr.f32.mxu0 0.0
        %3905 = vmatmul.mubr.f32.gmra.mxu0 %v2578
        %v3906 = vpop.f32.mrf.mxu0
        %v3907 = vadd.f32 0.0, %v3906
        %v3908 = vpop.f32.mrf.mxu0
        %3909 = vmatprep.mubr.f32.mxu0 0.0
        %3910 = vmatmul.mubr.f32.gmra.mxu0 %v2581
        %v3911 = vpop.f32.mrf.mxu0
        %v3912 = vadd.f32 0.0, %v3911
        %v3913 = vpop.f32.mrf.mxu0
        %3914 = vmatprep.mubr.f32.mxu0 0.0
        %3915 = vmatmul.mubr.f32.gmra.mxu0 %v2584
        %v3916 = vpop.f32.mrf.mxu0
        %v3917 = vadd.f32 0.0, %v3916
        %v3918 = vpop.f32.mrf.mxu0
        %3919 = vmatprep.mubr.f32.mxu0 0.0
        %3920 = vmatmul.mubr.f32.gmra.mxu0 %v2587
        %v3921 = vpop.f32.mrf.mxu0
        %v3922 = vadd.f32 0.0, %v3921
        %v3923 = vpop.f32.mrf.mxu0
        %3924 = vmatprep.mubr.f32.mxu0 0.0
        %3925 = vmatmul.mubr.f32.gmra.mxu0 %v2590
        %v3926 = vpop.f32.mrf.mxu0
        %v3927 = vadd.f32 0.0, %v3926
        %v3928 = vpop.f32.mrf.mxu0
        %3929 = vmatprep.mubr.f32.mxu0 0.0
        %3930 = vmatmul.mubr.f32.gmra.mxu0 %v2593
        %v3931 = vpop.f32.mrf.mxu0
        %v3932 = vadd.f32 0.0, %v3931
        %v3933 = vpop.f32.mrf.mxu0
        %3934 = vmatprep.mubr.f32.mxu0 0.0
        %3935 = vmatmul.mubr.f32.gmra.mxu0 %v2596
        %v3936 = vpop.f32.mrf.mxu0
        %v3937 = vadd.f32 0.0, %v3936
        %v3938 = vpop.f32.mrf.mxu0
        %3939 = vmatprep.mubr.f32.mxu0 0.0
        %3940 = vmatmul.mubr.f32.gmra.mxu0 %v2599
        %v3941 = vpop.f32.mrf.mxu0
        %v3942 = vadd.f32 0.0, %v3941
        %v3943 = vpop.f32.mrf.mxu0
        %3944 = vmatprep.mubr.f32.mxu0 0.0
        %3945 = vmatmul.mubr.f32.gmra.mxu0 %v2602
        %v3946 = vpop.f32.mrf.mxu0
        %v3947 = vadd.f32 0.0, %v3946
        %v3948 = vpop.f32.mrf.mxu0
        %3949 = vmatprep.mubr.f32.mxu0 0.0
        %3950 = vmatmul.mubr.f32.gmra.mxu0 %v2605
        %v3951 = vpop.f32.mrf.mxu0
        %v3952 = vadd.f32 0.0, %v3951
        %v3953 = vpop.f32.mrf.mxu0
        %3954 = vmatprep.mubr.f32.mxu0 0.0
        %3955 = vmatmul.mubr.f32.gmra.mxu0 %v2608
        %v3956 = vpop.f32.mrf.mxu0
        %v3957 = vadd.f32 0.0, %v3956
        %v3958 = vpop.f32.mrf.mxu0
        %3959 = vdwg.mxu0
        %s3960 = sld [smem:[#allocation7 + $0x29b]]
        %v3961 = vstv %s3960
        %v3962 = vadd.f32 %v3892, %v3961
        %v3963 = vadd.f32 %v3897, %v3961
        %v3964 = vadd.f32 %v3902, %v3961
        %v3965 = vadd.f32 %v3907, %v3961
        %v3966 = vadd.f32 %v3912, %v3961
        %v3967 = vadd.f32 %v3917, %v3961
        %v3968 = vadd.f32 %v3922, %v3961
        %v3969 = vadd.f32 %v3927, %v3961
        %v3970 = vadd.f32 %v3932, %v3961
        %v3971 = vadd.f32 %v3937, %v3961
        %v3972 = vadd.f32 %v3942, %v3961
        %v3973 = vadd.f32 %v3947, %v3961
        %v3974 = vadd.f32 %v3952, %v3961
        %v3975 = vadd.f32 %v3957, %v3961
        %s3976 = sld [smem:[#allocation7 + $0x29c]]
        %vm3977 = vcmp.ge.f32.partialorder %v3962, 0.0
        %vm3978 = vcmp.ge.f32.partialorder %v3963, 0.0
        %vm3979 = vcmp.ge.f32.partialorder %v3964, 0.0
        %vm3980 = vcmp.ge.f32.partialorder %v3965, 0.0
        %vm3981 = vcmp.ge.f32.partialorder %v3966, 0.0
        %vm3982 = vcmp.ge.f32.partialorder %v3967, 0.0
        %vm3983 = vcmp.ge.f32.partialorder %v3968, 0.0
        %vm3984 = vcmp.ge.f32.partialorder %v3969, 0.0
        %vm3985 = vcmp.ge.f32.partialorder %v3970, 0.0
        %vm3986 = vcmp.ge.f32.partialorder %v3971, 0.0
        %vm3987 = vcmp.ge.f32.partialorder %v3972, 0.0
        %vm3988 = vcmp.ge.f32.partialorder %v3973, 0.0
        %vm3989 = vcmp.ge.f32.partialorder %v3974, 0.0
        %vm3990 = vcmp.ge.f32.partialorder %v3975, 0.0
        %v3991 = vstv %s3976
        %v3992 = vmul.f32 %v3962, %v3991
        %v3993 = vmul.f32 %v3963, %v3991
        %v3994 = vmul.f32 %v3964, %v3991
        %v3995 = vmul.f32 %v3965, %v3991
        %v3996 = vmul.f32 %v3966, %v3991
        %v3997 = vmul.f32 %v3967, %v3991
        %v3998 = vmul.f32 %v3968, %v3991
        %v3999 = vmul.f32 %v3969, %v3991
        %v4000 = vmul.f32 %v3970, %v3991
        %v4001 = vmul.f32 %v3971, %v3991
        %v4002 = vmul.f32 %v3972, %v3991
        %v4003 = vmul.f32 %v3973, %v3991
        %v4004 = vmul.f32 %v3974, %v3991
        %v4005 = vmul.f32 %v3975, %v3991
        %v4006 = vsel %vm3977, %v3962, %v3992
        %v4007 = vsel %vm3978, %v3963, %v3993
        %v4008 = vsel %vm3979, %v3964, %v3994
        %v4009 = vsel %vm3980, %v3965, %v3995
        %v4010 = vsel %vm3981, %v3966, %v3996
        %v4011 = vsel %vm3982, %v3967, %v3997
        %v4012 = vsel %vm3983, %v3968, %v3998
        %v4013 = vsel %vm3984, %v3969, %v3999
        %v4014 = vsel %vm3985, %v3970, %v4000
        %v4015 = vsel %vm3986, %v3971, %v4001
        %v4016 = vsel %vm3987, %v3972, %v4002
        %v4017 = vsel %vm3988, %v3973, %v4003
        %v4018 = vsel %vm3989, %v3974, %v4004
        %v4019 = vsel %vm3990, %v3975, %v4005
        %v4020 = vsel %vm2805, %v4006, 0.0
        %v4021 = vsel %vm2805, %v4007, 0.0
        %v4022 = vadd.f32 %v4020, %v4021
        %v4023 = vsel %vm2805, %v4008, 0.0
        %v4024 = vadd.f32 %v4022, %v4023
        %v4025 = vsel %vm2805, %v4009, 0.0
        %v4026 = vadd.f32 %v4024, %v4025
        %v4027 = vsel %vm2805, %v4010, 0.0
        %v4028 = vadd.f32 %v4026, %v4027
        %v4029 = vsel %vm2805, %v4011, 0.0
        %v4030 = vadd.f32 %v4028, %v4029
        %v4031 = vsel %vm2805, %v4012, 0.0
        %v4032 = vadd.f32 %v4030, %v4031
        %v4033 = vsel %vm2805, %v4013, 0.0
        %v4034 = vadd.f32 %v4032, %v4033
        %v4035 = vsel %vm2805, %v4014, 0.0
        %v4036 = vadd.f32 %v4034, %v4035
        %v4037 = vsel %vm2805, %v4015, 0.0
        %v4038 = vadd.f32 %v4036, %v4037
        %v4039 = vsel %vm2805, %v4016, 0.0
        %v4040 = vadd.f32 %v4038, %v4039
        %v4041 = vsel %vm2805, %v4017, 0.0
        %v4042 = vadd.f32 %v4040, %v4041
        %v4043 = vsel %vm2805, %v4018, 0.0
        %v4044 = vadd.f32 %v4042, %v4043
        %v4045 = vsel %vm2805, %v4019, 0.0
        %v4046 = vadd.f32 %v4044, %v4045
        %4047 = vadd.xlane.f32.xlu0 %v4046
        %v4048 = vpop.xlane.xlu0 %4047
        %v4049 = vrot.slane %v4048, 4
        %v4050 = vadd.f32 %v4048, %v4049
        %v4051 = vrot.slane %v4050, 2
        %v4052 = vadd.f32 %v4050, %v4051
        %v4053 = vrot.slane %v4052, 1
        %v4054 = vadd.f32 %v4052, %v4053
        %s4055 = vtos %v4054
        %v4056 = vstv %s4055
        %v4057 = vmul.f32 %v4056, 7.9719386e-05
        %s4058 = scalar_lea.vmem [#allocation8], 5
        %v4059 = vld [vmem:[%s4058] ss:$8 sm:$0xf]
        %v4060 = vmul.f32 %v4057, %v4059
        %v4061 = vadd.f32 %v3818, %v4060
        %v4062 = vld [vmem:[#allocation3 + $0x30] sm:$0xff]
        %v4063 = vld [vmem:[#allocation3 + $0x70] sm:$0xff]
        %v4064 = vld [vmem:[#allocation3 + $0xb0] sm:$0xff]
        %v4065 = vld [vmem:[#allocation3 + $0xf0] sm:$0xff]
        %v4066 = vld [vmem:[#allocation3 + $0x130] sm:$0xff]
        %v4067 = vld [vmem:[#allocation3 + $0x170] sm:$0xff]
        %4068 = vmatprep.subr.mxu0 0.0
        %4069 = vmatpush1.msra.mxu0 0.0
        %4070 = vmatprep.subr.mxu0 0.0
        %4071 = vmatpush1.msra.mxu0 0.0
        %4072 = vmatprep.subr.mxu0 0.0
        %4073 = vmatpush1.msra.mxu0 0.0
        %4074 = vmatprep.subr.mxu0 0.0
        %4075 = vmatpush1.msra.mxu0 0.0
        %4076 = vmatprep.subr.mxu0 0.0
        %4077 = vmatpush1.msra.mxu0 0.0
        %4078 = vmatprep.subr.mxu0 0.0
        %4079 = vmatpush1.msra.mxu0 0.0
        %4080 = vmatprep.subr.mxu0 0.0
        %4081 = vmatpush1.msra.mxu0 0.0
        %4082 = vmatprep.subr.mxu0 0.0
        %4083 = vmatpush1.msra.mxu0 0.0
        %4084 = vmatprep.subr.mxu0 0.0
        %4085 = vmatpush1.msra.mxu0 0.0
        %4086 = vmatprep.subr.mxu0 0.0
        %4087 = vmatpush1.msra.mxu0 0.0
        %4088 = vmatprep.subr.mxu0 0.0
        %4089 = vmatpush1.msra.mxu0 %v4067
        %4090 = vmatprep.subr.mxu0 0.0
        %4091 = vmatpush1.msra.mxu0 %v4066
        %4092 = vmatprep.subr.mxu0 0.0
        %4093 = vmatpush1.msra.mxu0 %v4065
        %4094 = vmatprep.subr.mxu0 0.0
        %4095 = vmatpush1.msra.mxu0 %v4064
        %4096 = vmatprep.subr.mxu0 0.0
        %4097 = vmatpush1.msra.mxu0 %v4063
        %4098 = vmatprep.subr.mxu0 0.0
        %4099 = vmatpush1.msra.mxu0 %v4062
        %4100 = vmatprep.subr.mxu0 0.0
        %4101 = vmatpush2.msra.mxu0 0.0
        %4102 = vmatprep.subr.mxu0 0.0
        %4103 = vmatpush2.msra.mxu0 0.0
        %4104 = vmatprep.subr.mxu0 0.0
        %4105 = vmatpush2.msra.mxu0 0.0
        %4106 = vmatprep.subr.mxu0 0.0
        %4107 = vmatpush2.msra.mxu0 0.0
        %4108 = vmatprep.subr.mxu0 0.0
        %4109 = vmatpush2.msra.mxu0 0.0
        %4110 = vmatprep.subr.mxu0 0.0
        %4111 = vmatpush2.msra.mxu0 0.0
        %4112 = vmatprep.subr.mxu0 0.0
        %4113 = vmatpush2.msra.mxu0 0.0
        %4114 = vmatprep.subr.mxu0 0.0
        %4115 = vmatpush2.msra.mxu0 0.0
        %4116 = vmatprep.subr.mxu0 0.0
        %4117 = vmatpush2.msra.mxu0 0.0
        %4118 = vmatprep.subr.mxu0 0.0
        %4119 = vmatpush2.msra.mxu0 0.0
        %4120 = vmatprep.subr.mxu0 0.0
        %4121 = vmatpush2.msra.mxu0 0.0
        %4122 = vmatprep.subr.mxu0 0.0
        %4123 = vmatpush2.msra.mxu0 0.0
        %4124 = vmatprep.subr.mxu0 0.0
        %4125 = vmatpush2.msra.mxu0 0.0
        %4126 = vmatprep.subr.mxu0 0.0
        %4127 = vmatpush2.msra.mxu0 0.0
        %4128 = vmatprep.subr.mxu0 0.0
        %4129 = vmatpush2.msra.mxu0 0.0
        %4130 = vmatprep.subr.mxu0 0.0
        %4131 = vmatpush2.msra.mxu0 0.0
        %4132 = vmatprep.mubr.f32.mxu0 0.0
        %4133 = vmatmul.mubr.f32.gmra.mxu0 %v2569
        %v4134 = vpop.f32.mrf.mxu0
        %v4135 = vadd.f32 0.0, %v4134
        %v4136 = vpop.f32.mrf.mxu0
        %4137 = vmatprep.mubr.f32.mxu0 0.0
        %4138 = vmatmul.mubr.f32.gmra.mxu0 %v2572
        %v4139 = vpop.f32.mrf.mxu0
        %v4140 = vadd.f32 0.0, %v4139
        %v4141 = vpop.f32.mrf.mxu0
        %4142 = vmatprep.mubr.f32.mxu0 0.0
        %4143 = vmatmul.mubr.f32.gmra.mxu0 %v2575
        %v4144 = vpop.f32.mrf.mxu0
        %v4145 = vadd.f32 0.0, %v4144
        %v4146 = vpop.f32.mrf.mxu0
        %4147 = vmatprep.mubr.f32.mxu0 0.0
        %4148 = vmatmul.mubr.f32.gmra.mxu0 %v2578
        %v4149 = vpop.f32.mrf.mxu0
        %v4150 = vadd.f32 0.0, %v4149
        %v4151 = vpop.f32.mrf.mxu0
        %4152 = vmatprep.mubr.f32.mxu0 0.0
        %4153 = vmatmul.mubr.f32.gmra.mxu0 %v2581
        %v4154 = vpop.f32.mrf.mxu0
        %v4155 = vadd.f32 0.0, %v4154
        %v4156 = vpop.f32.mrf.mxu0
        %4157 = vmatprep.mubr.f32.mxu0 0.0
        %4158 = vmatmul.mubr.f32.gmra.mxu0 %v2584
        %v4159 = vpop.f32.mrf.mxu0
        %v4160 = vadd.f32 0.0, %v4159
        %v4161 = vpop.f32.mrf.mxu0
        %4162 = vmatprep.mubr.f32.mxu0 0.0
        %4163 = vmatmul.mubr.f32.gmra.mxu0 %v2587
        %v4164 = vpop.f32.mrf.mxu0
        %v4165 = vadd.f32 0.0, %v4164
        %v4166 = vpop.f32.mrf.mxu0
        %4167 = vmatprep.mubr.f32.mxu0 0.0
        %4168 = vmatmul.mubr.f32.gmra.mxu0 %v2590
        %v4169 = vpop.f32.mrf.mxu0
        %v4170 = vadd.f32 0.0, %v4169
        %v4171 = vpop.f32.mrf.mxu0
        %4172 = vmatprep.mubr.f32.mxu0 0.0
        %4173 = vmatmul.mubr.f32.gmra.mxu0 %v2593
        %v4174 = vpop.f32.mrf.mxu0
        %v4175 = vadd.f32 0.0, %v4174
        %v4176 = vpop.f32.mrf.mxu0
        %4177 = vmatprep.mubr.f32.mxu0 0.0
        %4178 = vmatmul.mubr.f32.gmra.mxu0 %v2596
        %v4179 = vpop.f32.mrf.mxu0
        %v4180 = vadd.f32 0.0, %v4179
        %v4181 = vpop.f32.mrf.mxu0
        %4182 = vmatprep.mubr.f32.mxu0 0.0
        %4183 = vmatmul.mubr.f32.gmra.mxu0 %v2599
        %v4184 = vpop.f32.mrf.mxu0
        %v4185 = vadd.f32 0.0, %v4184
        %v4186 = vpop.f32.mrf.mxu0
        %4187 = vmatprep.mubr.f32.mxu0 0.0
        %4188 = vmatmul.mubr.f32.gmra.mxu0 %v2602
        %v4189 = vpop.f32.mrf.mxu0
        %v4190 = vadd.f32 0.0, %v4189
        %v4191 = vpop.f32.mrf.mxu0
        %4192 = vmatprep.mubr.f32.mxu0 0.0
        %4193 = vmatmul.mubr.f32.gmra.mxu0 %v2605
        %v4194 = vpop.f32.mrf.mxu0
        %v4195 = vadd.f32 0.0, %v4194
        %v4196 = vpop.f32.mrf.mxu0
        %4197 = vmatprep.mubr.f32.mxu0 0.0
        %4198 = vmatmul.mubr.f32.gmra.mxu0 %v2608
        %v4199 = vpop.f32.mrf.mxu0
        %v4200 = vadd.f32 0.0, %v4199
        %v4201 = vpop.f32.mrf.mxu0
        %4202 = vdwg.mxu0
        %s4203 = sld [smem:[#allocation7 + $0x31b]]
        %v4204 = vstv %s4203
        %v4205 = vadd.f32 %v4135, %v4204
        %v4206 = vadd.f32 %v4140, %v4204
        %v4207 = vadd.f32 %v4145, %v4204
        %v4208 = vadd.f32 %v4150, %v4204
        %v4209 = vadd.f32 %v4155, %v4204
        %v4210 = vadd.f32 %v4160, %v4204
        %v4211 = vadd.f32 %v4165, %v4204
        %v4212 = vadd.f32 %v4170, %v4204
        %v4213 = vadd.f32 %v4175, %v4204
        %v4214 = vadd.f32 %v4180, %v4204
        %v4215 = vadd.f32 %v4185, %v4204
        %v4216 = vadd.f32 %v4190, %v4204
        %v4217 = vadd.f32 %v4195, %v4204
        %v4218 = vadd.f32 %v4200, %v4204
        %s4219 = sld [smem:[#allocation7 + $0x31c]]
        %vm4220 = vcmp.ge.f32.partialorder %v4205, 0.0
        %vm4221 = vcmp.ge.f32.partialorder %v4206, 0.0
        %vm4222 = vcmp.ge.f32.partialorder %v4207, 0.0
        %vm4223 = vcmp.ge.f32.partialorder %v4208, 0.0
        %vm4224 = vcmp.ge.f32.partialorder %v4209, 0.0
        %vm4225 = vcmp.ge.f32.partialorder %v4210, 0.0
        %vm4226 = vcmp.ge.f32.partialorder %v4211, 0.0
        %vm4227 = vcmp.ge.f32.partialorder %v4212, 0.0
        %vm4228 = vcmp.ge.f32.partialorder %v4213, 0.0
        %vm4229 = vcmp.ge.f32.partialorder %v4214, 0.0
        %vm4230 = vcmp.ge.f32.partialorder %v4215, 0.0
        %vm4231 = vcmp.ge.f32.partialorder %v4216, 0.0
        %vm4232 = vcmp.ge.f32.partialorder %v4217, 0.0
        %vm4233 = vcmp.ge.f32.partialorder %v4218, 0.0
        %v4234 = vstv %s4219
        %v4235 = vmul.f32 %v4205, %v4234
        %v4236 = vmul.f32 %v4206, %v4234
        %v4237 = vmul.f32 %v4207, %v4234
        %v4238 = vmul.f32 %v4208, %v4234
        %v4239 = vmul.f32 %v4209, %v4234
        %v4240 = vmul.f32 %v4210, %v4234
        %v4241 = vmul.f32 %v4211, %v4234
        %v4242 = vmul.f32 %v4212, %v4234
        %v4243 = vmul.f32 %v4213, %v4234
        %v4244 = vmul.f32 %v4214, %v4234
        %v4245 = vmul.f32 %v4215, %v4234
        %v4246 = vmul.f32 %v4216, %v4234
        %v4247 = vmul.f32 %v4217, %v4234
        %v4248 = vmul.f32 %v4218, %v4234
        %v4249 = vsel %vm4220, %v4205, %v4235
        %v4250 = vsel %vm4221, %v4206, %v4236
        %v4251 = vsel %vm4222, %v4207, %v4237
        %v4252 = vsel %vm4223, %v4208, %v4238
        %v4253 = vsel %vm4224, %v4209, %v4239
        %v4254 = vsel %vm4225, %v4210, %v4240
        %v4255 = vsel %vm4226, %v4211, %v4241
        %v4256 = vsel %vm4227, %v4212, %v4242
        %v4257 = vsel %vm4228, %v4213, %v4243
        %v4258 = vsel %vm4229, %v4214, %v4244
        %v4259 = vsel %vm4230, %v4215, %v4245
        %v4260 = vsel %vm4231, %v4216, %v4246
        %v4261 = vsel %vm4232, %v4217, %v4247
        %v4262 = vsel %vm4233, %v4218, %v4248
        %v4263 = vsel %vm2805, %v4249, 0.0
        %v4264 = vsel %vm2805, %v4250, 0.0
        %v4265 = vadd.f32 %v4263, %v4264
        %v4266 = vsel %vm2805, %v4251, 0.0
        %v4267 = vadd.f32 %v4265, %v4266
        %v4268 = vsel %vm2805, %v4252, 0.0
        %v4269 = vadd.f32 %v4267, %v4268
        %v4270 = vsel %vm2805, %v4253, 0.0
        %v4271 = vadd.f32 %v4269, %v4270
        %v4272 = vsel %vm2805, %v4254, 0.0
        %v4273 = vadd.f32 %v4271, %v4272
        %v4274 = vsel %vm2805, %v4255, 0.0
        %v4275 = vadd.f32 %v4273, %v4274
        %v4276 = vsel %vm2805, %v4256, 0.0
        %v4277 = vadd.f32 %v4275, %v4276
        %v4278 = vsel %vm2805, %v4257, 0.0
        %v4279 = vadd.f32 %v4277, %v4278
        %v4280 = vsel %vm2805, %v4258, 0.0
        %v4281 = vadd.f32 %v4279, %v4280
        %v4282 = vsel %vm2805, %v4259, 0.0
        %v4283 = vadd.f32 %v4281, %v4282
        %v4284 = vsel %vm2805, %v4260, 0.0
        %v4285 = vadd.f32 %v4283, %v4284
        %v4286 = vsel %vm2805, %v4261, 0.0
        %v4287 = vadd.f32 %v4285, %v4286
        %v4288 = vsel %vm2805, %v4262, 0.0
        %v4289 = vadd.f32 %v4287, %v4288
        %4290 = vadd.xlane.f32.xlu0 %v4289
        %v4291 = vpop.xlane.xlu0 %4290
        %v4292 = vrot.slane %v4291, 4
        %v4293 = vadd.f32 %v4291, %v4292
        %v4294 = vrot.slane %v4293, 2
        %v4295 = vadd.f32 %v4293, %v4294
        %v4296 = vrot.slane %v4295, 1
        %v4297 = vadd.f32 %v4295, %v4296
        %s4298 = vtos %v4297
        %v4299 = vstv %s4298
        %v4300 = vmul.f32 %v4299, 7.9719386e-05
        %s4301 = scalar_lea.vmem [#allocation8], 6
        %v4302 = vld [vmem:[%s4301] ss:$8 sm:$0xf]
        %v4303 = vmul.f32 %v4300, %v4302
        %v4304 = vadd.f32 %v4061, %v4303
        %v4305 = vld [vmem:[#allocation3 + $0x38] sm:$0xff]
        %v4306 = vld [vmem:[#allocation3 + $0x78] sm:$0xff]
        %v4307 = vld [vmem:[#allocation3 + $0xb8] sm:$0xff]
        %v4308 = vld [vmem:[#allocation3 + $0xf8] sm:$0xff]
        %v4309 = vld [vmem:[#allocation3 + $0x138] sm:$0xff]
        %v4310 = vld [vmem:[#allocation3 + $0x178] sm:$0xff]
        %4311 = vmatprep.subr.mxu0 0.0
        %4312 = vmatpush1.msra.mxu0 0.0
        %4313 = vmatprep.subr.mxu0 0.0
        %4314 = vmatpush1.msra.mxu0 0.0
        %4315 = vmatprep.subr.mxu0 0.0
        %4316 = vmatpush1.msra.mxu0 0.0
        %4317 = vmatprep.subr.mxu0 0.0
        %4318 = vmatpush1.msra.mxu0 0.0
        %4319 = vmatprep.subr.mxu0 0.0
        %4320 = vmatpush1.msra.mxu0 0.0
        %4321 = vmatprep.subr.mxu0 0.0
        %4322 = vmatpush1.msra.mxu0 0.0
        %4323 = vmatprep.subr.mxu0 0.0
        %4324 = vmatpush1.msra.mxu0 0.0
        %4325 = vmatprep.subr.mxu0 0.0
        %4326 = vmatpush1.msra.mxu0 0.0
        %4327 = vmatprep.subr.mxu0 0.0
        %4328 = vmatpush1.msra.mxu0 0.0
        %4329 = vmatprep.subr.mxu0 0.0
        %4330 = vmatpush1.msra.mxu0 0.0
        %4331 = vmatprep.subr.mxu0 0.0
        %4332 = vmatpush1.msra.mxu0 %v4310
        %4333 = vmatprep.subr.mxu0 0.0
        %4334 = vmatpush1.msra.mxu0 %v4309
        %4335 = vmatprep.subr.mxu0 0.0
        %4336 = vmatpush1.msra.mxu0 %v4308
        %4337 = vmatprep.subr.mxu0 0.0
        %4338 = vmatpush1.msra.mxu0 %v4307
        %4339 = vmatprep.subr.mxu0 0.0
        %4340 = vmatpush1.msra.mxu0 %v4306
        %4341 = vmatprep.subr.mxu0 0.0
        %4342 = vmatpush1.msra.mxu0 %v4305
        %4343 = vmatprep.subr.mxu0 0.0
        %4344 = vmatpush2.msra.mxu0 0.0
        %4345 = vmatprep.subr.mxu0 0.0
        %4346 = vmatpush2.msra.mxu0 0.0
        %4347 = vmatprep.subr.mxu0 0.0
        %4348 = vmatpush2.msra.mxu0 0.0
        %4349 = vmatprep.subr.mxu0 0.0
        %4350 = vmatpush2.msra.mxu0 0.0
        %4351 = vmatprep.subr.mxu0 0.0
        %4352 = vmatpush2.msra.mxu0 0.0
        %4353 = vmatprep.subr.mxu0 0.0
        %4354 = vmatpush2.msra.mxu0 0.0
        %4355 = vmatprep.subr.mxu0 0.0
        %4356 = vmatpush2.msra.mxu0 0.0
        %4357 = vmatprep.subr.mxu0 0.0
        %4358 = vmatpush2.msra.mxu0 0.0
        %4359 = vmatprep.subr.mxu0 0.0
        %4360 = vmatpush2.msra.mxu0 0.0
        %4361 = vmatprep.subr.mxu0 0.0
        %4362 = vmatpush2.msra.mxu0 0.0
        %4363 = vmatprep.subr.mxu0 0.0
        %4364 = vmatpush2.msra.mxu0 0.0
        %4365 = vmatprep.subr.mxu0 0.0
        %4366 = vmatpush2.msra.mxu0 0.0
        %4367 = vmatprep.subr.mxu0 0.0
        %4368 = vmatpush2.msra.mxu0 0.0
        %4369 = vmatprep.subr.mxu0 0.0
        %4370 = vmatpush2.msra.mxu0 0.0
        %4371 = vmatprep.subr.mxu0 0.0
        %4372 = vmatpush2.msra.mxu0 0.0
        %4373 = vmatprep.subr.mxu0 0.0
        %4374 = vmatpush2.msra.mxu0 0.0
        %4375 = vmatprep.mubr.f32.mxu0 0.0
        %4376 = vmatmul.mubr.f32.gmra.mxu0 %v2569
        %v4377 = vpop.f32.mrf.mxu0
        %v4378 = vadd.f32 0.0, %v4377
        %v4379 = vpop.f32.mrf.mxu0
        %4380 = vmatprep.mubr.f32.mxu0 0.0
        %4381 = vmatmul.mubr.f32.gmra.mxu0 %v2572
        %v4382 = vpop.f32.mrf.mxu0
        %v4383 = vadd.f32 0.0, %v4382
        %v4384 = vpop.f32.mrf.mxu0
        %4385 = vmatprep.mubr.f32.mxu0 0.0
        %4386 = vmatmul.mubr.f32.gmra.mxu0 %v2575
        %v4387 = vpop.f32.mrf.mxu0
        %v4388 = vadd.f32 0.0, %v4387
        %v4389 = vpop.f32.mrf.mxu0
        %4390 = vmatprep.mubr.f32.mxu0 0.0
        %4391 = vmatmul.mubr.f32.gmra.mxu0 %v2578
        %v4392 = vpop.f32.mrf.mxu0
        %v4393 = vadd.f32 0.0, %v4392
        %v4394 = vpop.f32.mrf.mxu0
        %4395 = vmatprep.mubr.f32.mxu0 0.0
        %4396 = vmatmul.mubr.f32.gmra.mxu0 %v2581
        %v4397 = vpop.f32.mrf.mxu0
        %v4398 = vadd.f32 0.0, %v4397
        %v4399 = vpop.f32.mrf.mxu0
        %4400 = vmatprep.mubr.f32.mxu0 0.0
        %4401 = vmatmul.mubr.f32.gmra.mxu0 %v2584
        %v4402 = vpop.f32.mrf.mxu0
        %v4403 = vadd.f32 0.0, %v4402
        %v4404 = vpop.f32.mrf.mxu0
        %4405 = vmatprep.mubr.f32.mxu0 0.0
        %4406 = vmatmul.mubr.f32.gmra.mxu0 %v2587
        %v4407 = vpop.f32.mrf.mxu0
        %v4408 = vadd.f32 0.0, %v4407
        %v4409 = vpop.f32.mrf.mxu0
        %4410 = vmatprep.mubr.f32.mxu0 0.0
        %4411 = vmatmul.mubr.f32.gmra.mxu0 %v2590
        %v4412 = vpop.f32.mrf.mxu0
        %v4413 = vadd.f32 0.0, %v4412
        %v4414 = vpop.f32.mrf.mxu0
        %4415 = vmatprep.mubr.f32.mxu0 0.0
        %4416 = vmatmul.mubr.f32.gmra.mxu0 %v2593
        %v4417 = vpop.f32.mrf.mxu0
        %v4418 = vadd.f32 0.0, %v4417
        %v4419 = vpop.f32.mrf.mxu0
        %4420 = vmatprep.mubr.f32.mxu0 0.0
        %4421 = vmatmul.mubr.f32.gmra.mxu0 %v2596
        %v4422 = vpop.f32.mrf.mxu0
        %v4423 = vadd.f32 0.0, %v4422
        %v4424 = vpop.f32.mrf.mxu0
        %4425 = vmatprep.mubr.f32.mxu0 0.0
        %4426 = vmatmul.mubr.f32.gmra.mxu0 %v2599
        %v4427 = vpop.f32.mrf.mxu0
        %v4428 = vadd.f32 0.0, %v4427
        %v4429 = vpop.f32.mrf.mxu0
        %4430 = vmatprep.mubr.f32.mxu0 0.0
        %4431 = vmatmul.mubr.f32.gmra.mxu0 %v2602
        %v4432 = vpop.f32.mrf.mxu0
        %v4433 = vadd.f32 0.0, %v4432
        %v4434 = vpop.f32.mrf.mxu0
        %4435 = vmatprep.mubr.f32.mxu0 0.0
        %4436 = vmatmul.mubr.f32.gmra.mxu0 %v2605
        %v4437 = vpop.f32.mrf.mxu0
        %v4438 = vadd.f32 0.0, %v4437
        %v4439 = vpop.f32.mrf.mxu0
        %4440 = vmatprep.mubr.f32.mxu0 0.0
        %4441 = vmatmul.mubr.f32.gmra.mxu0 %v2608
        %v4442 = vpop.f32.mrf.mxu0
        %v4443 = vadd.f32 0.0, %v4442
        %v4444 = vpop.f32.mrf.mxu0
        %4445 = vdwg.mxu0
        %s4446 = sld [smem:[#allocation7 + $0x39b]]
        %v4447 = vstv %s4446
        %v4448 = vadd.f32 %v4378, %v4447
        %v4449 = vadd.f32 %v4383, %v4447
        %v4450 = vadd.f32 %v4388, %v4447
        %v4451 = vadd.f32 %v4393, %v4447
        %v4452 = vadd.f32 %v4398, %v4447
        %v4453 = vadd.f32 %v4403, %v4447
        %v4454 = vadd.f32 %v4408, %v4447
        %v4455 = vadd.f32 %v4413, %v4447
        %v4456 = vadd.f32 %v4418, %v4447
        %v4457 = vadd.f32 %v4423, %v4447
        %v4458 = vadd.f32 %v4428, %v4447
        %v4459 = vadd.f32 %v4433, %v4447
        %v4460 = vadd.f32 %v4438, %v4447
        %v4461 = vadd.f32 %v4443, %v4447
        %s4462 = sld [smem:[#allocation7 + $0x39c]]
        %vm4463 = vcmp.ge.f32.partialorder %v4448, 0.0
        %vm4464 = vcmp.ge.f32.partialorder %v4449, 0.0
        %vm4465 = vcmp.ge.f32.partialorder %v4450, 0.0
        %vm4466 = vcmp.ge.f32.partialorder %v4451, 0.0
        %vm4467 = vcmp.ge.f32.partialorder %v4452, 0.0
        %vm4468 = vcmp.ge.f32.partialorder %v4453, 0.0
        %vm4469 = vcmp.ge.f32.partialorder %v4454, 0.0
        %vm4470 = vcmp.ge.f32.partialorder %v4455, 0.0
        %vm4471 = vcmp.ge.f32.partialorder %v4456, 0.0
        %vm4472 = vcmp.ge.f32.partialorder %v4457, 0.0
        %vm4473 = vcmp.ge.f32.partialorder %v4458, 0.0
        %vm4474 = vcmp.ge.f32.partialorder %v4459, 0.0
        %vm4475 = vcmp.ge.f32.partialorder %v4460, 0.0
        %vm4476 = vcmp.ge.f32.partialorder %v4461, 0.0
        %v4477 = vstv %s4462
        %v4478 = vmul.f32 %v4448, %v4477
        %v4479 = vmul.f32 %v4449, %v4477
        %v4480 = vmul.f32 %v4450, %v4477
        %v4481 = vmul.f32 %v4451, %v4477
        %v4482 = vmul.f32 %v4452, %v4477
        %v4483 = vmul.f32 %v4453, %v4477
        %v4484 = vmul.f32 %v4454, %v4477
        %v4485 = vmul.f32 %v4455, %v4477
        %v4486 = vmul.f32 %v4456, %v4477
        %v4487 = vmul.f32 %v4457, %v4477
        %v4488 = vmul.f32 %v4458, %v4477
        %v4489 = vmul.f32 %v4459, %v4477
        %v4490 = vmul.f32 %v4460, %v4477
        %v4491 = vmul.f32 %v4461, %v4477
        %v4492 = vsel %vm4463, %v4448, %v4478
        %v4493 = vsel %vm4464, %v4449, %v4479
        %v4494 = vsel %vm4465, %v4450, %v4480
        %v4495 = vsel %vm4466, %v4451, %v4481
        %v4496 = vsel %vm4467, %v4452, %v4482
        %v4497 = vsel %vm4468, %v4453, %v4483
        %v4498 = vsel %vm4469, %v4454, %v4484
        %v4499 = vsel %vm4470, %v4455, %v4485
        %v4500 = vsel %vm4471, %v4456, %v4486
        %v4501 = vsel %vm4472, %v4457, %v4487
        %v4502 = vsel %vm4473, %v4458, %v4488
        %v4503 = vsel %vm4474, %v4459, %v4489
        %v4504 = vsel %vm4475, %v4460, %v4490
        %v4505 = vsel %vm4476, %v4461, %v4491
        %v4506 = vsel %vm2805, %v4492, 0.0
        %v4507 = vsel %vm2805, %v4493, 0.0
        %v4508 = vadd.f32 %v4506, %v4507
        %v4509 = vsel %vm2805, %v4494, 0.0
        %v4510 = vadd.f32 %v4508, %v4509
        %v4511 = vsel %vm2805, %v4495, 0.0
        %v4512 = vadd.f32 %v4510, %v4511
        %v4513 = vsel %vm2805, %v4496, 0.0
        %v4514 = vadd.f32 %v4512, %v4513
        %v4515 = vsel %vm2805, %v4497, 0.0
        %v4516 = vadd.f32 %v4514, %v4515
        %v4517 = vsel %vm2805, %v4498, 0.0
        %v4518 = vadd.f32 %v4516, %v4517
        %v4519 = vsel %vm2805, %v4499, 0.0
        %v4520 = vadd.f32 %v4518, %v4519
        %v4521 = vsel %vm2805, %v4500, 0.0
        %v4522 = vadd.f32 %v4520, %v4521
        %v4523 = vsel %vm2805, %v4501, 0.0
        %v4524 = vadd.f32 %v4522, %v4523
        %v4525 = vsel %vm2805, %v4502, 0.0
        %v4526 = vadd.f32 %v4524, %v4525
        %v4527 = vsel %vm2805, %v4503, 0.0
        %v4528 = vadd.f32 %v4526, %v4527
        %v4529 = vsel %vm2805, %v4504, 0.0
        %v4530 = vadd.f32 %v4528, %v4529
        %v4531 = vsel %vm2805, %v4505, 0.0
        %v4532 = vadd.f32 %v4530, %v4531
        %4533 = vadd.xlane.f32.xlu0 %v4532
        %v4534 = vpop.xlane.xlu0 %4533
        %v4535 = vrot.slane %v4534, 4
        %v4536 = vadd.f32 %v4534, %v4535
        %v4537 = vrot.slane %v4536, 2
        %v4538 = vadd.f32 %v4536, %v4537
        %v4539 = vrot.slane %v4538, 1
        %v4540 = vadd.f32 %v4538, %v4539
        %s4541 = vtos %v4540
        %v4542 = vstv %s4541
        %v4543 = vmul.f32 %v4542, 7.9719386e-05
        %s4544 = scalar_lea.vmem [#allocation8], 7
        %v4545 = vld [vmem:[%s4544] ss:$8 sm:$0xf]
        %v4546 = vmul.f32 %v4543, %v4545
        %v4547 = vadd.f32 %v4304, %v4546
        %v4548 = vmul.f32 %v4547, %v4547
        %v4550 = vlaneseq
        %v4551 = vshrl.u32 %v4550, 7
        %v4552 = vsub.s32 0, %v4551
        %v4553 = vrot.slane %v4548, %v4552
        %v4554 = vlaneseq
        %v4555 = vshrl.u32 %v4554, 7
        %v4556 = vsub.s32 1, %v4555
        %v4557 = vrot.slane %v4548, %v4556
        %v4558 = vlaneseq
        %v4559 = vshrl.u32 %v4558, 7
        %v4560 = vsub.s32 2, %v4559
        %v4561 = vrot.slane %v4548, %v4560
        %v4562 = vlaneseq
        %v4563 = vshrl.u32 %v4562, 7
        %v4564 = vsub.s32 3, %v4563
        %v4565 = vrot.slane %v4548, %v4564
        %vm4570 = vcmask 1040384
        %v4571 = vsel %vm4570, %v4553, 0.0
        %v4572 = vsel %vm4570, %v4557, 0.0
        %v4573 = vadd.f32 %v4571, %v4572
        %v4574 = vsel %vm4570, %v4561, 0.0
        %v4575 = vadd.f32 %v4573, %v4574
        %v4576 = vsel %vm4570, %v4565, 0.0
        %v4577 = vadd.f32 %v4575, %v4576
        %4578 = vadd.xlane.f32.xlu0 %v4577
        %v4579 = vpop.xlane.xlu0 %4578
        %v4580 = vrot.slane %v4579, 4
        %v4581 = vadd.f32 %v4579, %v4580
        %v4582 = vrot.slane %v4581, 2
        %v4583 = vadd.f32 %v4581, %v4582
        %v4584 = vrot.slane %v4583, 1
        %v4585 = vadd.f32 %v4583, %v4584
        %s4586 = vtos %v4585
        %v4587 = vstv %s4586
        %v4588 = vrsqrt.pop %v4587
        %v4589 = vmul.f32 %v4547, %v4588
        %v4590 = vlaneseq
        %vm4591 = vcmp.ge.s32.totalorder %v4590, 0
        %vm4592 = vcmp.lt.s32.totalorder %v4590, 512
        %vm4593 = vmand %vm4591, %vm4592
        %4594 = vst.msk [vmem:[%s296] sm:$0xf] %vm4593, %v4589
        %p4595 = scmp.lt.s32.totalorder %s22, 1
        %s4596 = scalar_select %p4595, %s22, 1
        %s4597 = smul.addr %s4596, 4
        %s4598 = scalar_lea.vmem %s6, %s4597
        // Predicated region
        $region57: #{arcface_forward.1} parent=43 // pred_check
          %p4599 = pneg %p171
        $region58: #{arcface_forward.1} parent=43 // pred_check_branch
          %4601 = sbr.rel (%p4599) target = $region60
        $region59: #{arcface_forward.1} parent=43 // pred_region
          _
        $region60: #{arcface_forward.1} parent=43 // pred_fallthru
          _
      $region44: #{arcface_forward.1} parent=5 // pred_fallthru
        _
      %p4602 = scmp.le.s32.totalorder 2, %s17
      // Predicated region
      $region61: #{arcface_forward.1} parent=5 // pred_check
        %p4603 = pneg %p4602
      $region62: #{arcface_forward.1} parent=5 // pred_check_branch
        %4605 = sbr.rel (%p4603) target = $region64
      $region63: #{arcface_forward.1} parent=5 // pred_region
        %s4606 = ssub.s32 %s17, 2
        // Predicated region
        $region65: #{arcface_forward.1} parent=63 // pred_check
          %p4607 = pneg %p177
        $region66: #{arcface_forward.1} parent=63 // pred_check_branch
          %4609 = sbr.rel (%p4607) target = $region68
        $region67: #{arcface_forward.1} parent=63 // pred_region
          %p4610 = scmp.lt.s32.totalorder %s23, 1
          %s4611 = scalar_select %p4610, %s23, 1
          %s4612 = smul.addr %s4611, 4
          %s4613 = scalar_lea.vmem %s6, %s4612
        $region68: #{arcface_forward.1} parent=63 // pred_fallthru
          _
      $region64: #{arcface_forward.1} parent=5 // pred_fallthru
        _
    $region6: #{arcface_forward.1} parent=1 // loop_footer
      %s21 = sadd.s32 1, %s17
    $region7: #{arcface_forward.1} parent=1 // loop_footer_branch
      %16 = sbr.rel target = $region3
    $region8: #{arcface_forward.1} parent=1 // loop_exit
      _
    %4614 = vsyncpa [#allocation5], 1
    %s4615 = scalar_lea.sflag [#allocation5], 1
    %4616 = vsyncpa %s4615, 1
    %4617 = vsyncpa [#allocation9], 1
    %4618 = vsyncpa [#allocation6], 1
    %s4619 = scalar_lea.sflag [#allocation6], 1
    %4620 = vsyncpa %s4619, 1

</llo_original>
